<compile_context>
chip_gen: v7x
topology: tpu7x:2x2x1
jax: 0.10.0
libtpu: 0.0.40
codegen_flags: <defaults>
</compile_context>

<pallas_src>
import functools

import jax
import jax.numpy as jnp
from jax import lax
from jax.experimental import pallas as pl
from jax.experimental.pallas import tpu as pltpu

LN_EPS = 1e-5  # PyTorch nn.LayerNorm default


def _round_up(x, m):
    return ((x + m - 1) // m) * m


def _cdiv(a, b):
    return (a + b - 1) // b


def _layernorm(x, gamma, beta):
    # f32 statistics / normalization (keep elementwise math off bf16).
    mean = jnp.mean(x, axis=-1, keepdims=True)
    var = jnp.mean((x - mean) * (x - mean), axis=-1, keepdims=True)
    return (x - mean) * lax.rsqrt(var + LN_EPS) * gamma + beta


def _classifier_kernel(
    img_ref, txt_ref,
    w1i_ref, w1t_ref, b1_ref, g1_ref, be1_ref,
    w2_ref, b2_ref, g2_ref, be2_ref,
    w3_ref, b3_ref, g3_ref, be3_ref,
    wh_ref, bh_ref,
    out_ref,
):
    # ---- layer 1: concat split into two bf16 dots summed into a f32 acc ----
    # (img/txt refs are already bf16 -> half the activation DMA bytes)
    h = (jnp.dot(img_ref[...], w1i_ref[...], preferred_element_type=jnp.float32)
         + jnp.dot(txt_ref[...], w1t_ref[...], preferred_element_type=jnp.float32)
         + b1_ref[...])
    h = jnp.maximum(_layernorm(h, g1_ref[...], be1_ref[...]), 0.0)

    # ---- layer 2 ----
    h = (jnp.dot(h.astype(jnp.bfloat16), w2_ref[...],
                 preferred_element_type=jnp.float32) + b2_ref[...])
    h = jnp.maximum(_layernorm(h, g2_ref[...], be2_ref[...]), 0.0)

    # ---- layer 3 ----
    h = (jnp.dot(h.astype(jnp.bfloat16), w3_ref[...],
                 preferred_element_type=jnp.float32) + b3_ref[...])
    h = jnp.maximum(_layernorm(h, g3_ref[...], be3_ref[...]), 0.0)

    # ---- fused classification heads (single matmul, 4 columns) ----
    # columns: 0 = multi[:,1], 1 = text[:,1], 2 = image[:,1], 3 = 0
    y = (jnp.dot(h.astype(jnp.bfloat16), wh_ref[...],
                 preferred_element_type=jnp.float32) + bh_ref[...])

    # final_logits[:,3] = 1 - clamp(col0+col1+col2, 0, 1), computed from the
    # SAME f32 values as columns 0..2 (exact consistency) via a masked lane
    # reduction + lane select; single full-width store, no 1-lane slicing.
    col = lax.broadcasted_iota(jnp.int32, y.shape, 1)
    s = jnp.sum(jnp.where(col < 3, y, 0.0), axis=-1, keepdims=True)
    out_ref[...] = jnp.where(col == 3, 1.0 - jnp.clip(s, 0.0, 1.0), y)


def _prepare_params(params, h_img):
    """Split w1, fuse the three heads (+ zero 4th column), cast to bf16."""
    w1 = params["w1"]
    wm1 = params["wm"][:, 1:2]
    wt1 = params["wt"][:, 1:2]
    wi1 = params["wi"][:, 1:2]
    bm1 = params["bm"][:, 1:2]
    bt1 = params["bt"][:, 1:2]
    bi1 = params["bi"][:, 1:2]
    wh = jnp.concatenate([wm1, wt1, wi1, jnp.zeros_like(wm1)], axis=1)  # [512,4]
    bh = jnp.concatenate([bm1, bt1, bi1, jnp.zeros_like(bm1)], axis=1)  # [1,4]
    return {
        "w1i": w1[:h_img].astype(jnp.bfloat16),
        "w1t": w1[h_img:].astype(jnp.bfloat16),
        "b1": params["b1"], "g1": params["g1"], "be1": params["be1"],
        "w2": params["w2"].astype(jnp.bfloat16),
        "b2": params["b2"], "g2": params["g2"], "be2": params["be2"],
        "w3": params["w3"].astype(jnp.bfloat16),
        "b3": params["b3"], "g3": params["g3"], "be3": params["be3"],
        "wh": wh.astype(jnp.bfloat16),
        "bh": bh,
    }


@functools.partial(jax.jit, static_argnames=("block_b", "single_buffer_weights"))
def sarcasm_forward(image_features, text_features, params, *, block_b=512,
                    single_buffer_weights=True):
    """Fused projector + heads forward pass.

    image_features: [B, H_img] f32 (image-encoder CLS features)
    text_features : [B, H_txt] f32 (text-encoder CLS features)
    returns       : [B, 4] f32 final logits
    """
    B, h_img = image_features.shape
    prep = _prepare_params(params, h_img)

    # Cast activations to bf16 once upstream -> halves the dominant per-row
    # HBM->VMEM DMA stream (weights are amortized over the batch).
    img = image_features.astype(jnp.bfloat16)
    txt = text_features.astype(jnp.bfloat16)

    # Balanced batch tiling: bb is a multiple of 8 and the last tile is nearly
    # full (<= 7 padded rows per tile instead of up to a whole dead tile).
    num_tiles = max(1, _cdiv(B, block_b))
    # v7x has 2 TensorCores: once per-TC work exceeds the per-TC weight-DMA
    # cost (a few hundred rows), make sure the "parallel" batch axis has >= 2
    # grid steps so both cores are used (harmless extra step on v5e/v6e).
    if num_tiles == 1 and B >= 512:
        num_tiles = 2
    bb = _round_up(_cdiv(B, num_tiles), 8)
    b_pad = num_tiles * bb
    if b_pad != B:
        img = jnp.pad(img, ((0, b_pad - B), (0, 0)))
        txt = jnp.pad(txt, ((0, b_pad - B), (0, 0)))

    weight_args = (
        prep["w1i"], prep["w1t"], prep["b1"], prep["g1"], prep["be1"],
        prep["w2"], prep["b2"], prep["g2"], prep["be2"],
        prep["w3"], prep["b3"], prep["g3"], prep["be3"],
        prep["wh"], prep["bh"],
    )
    # Constant block index -> weights stay VMEM-resident, never re-DMA'd.
    # Single-buffer them (they are never re-fetched) to free ~5 MiB of VMEM.
    if single_buffer_weights:
        weight_specs = [
            pl.BlockSpec(tuple(w.shape), lambda i: (0, 0),
                         pipeline_mode=pl.Buffered(1))
            for w in weight_args
        ]
    else:
        weight_specs = [pl.BlockSpec(tuple(w.shape), lambda i: (0, 0))
                        for w in weight_args]

    out = pl.pallas_call(
        _classifier_kernel,
        out_shape=jax.ShapeDtypeStruct((b_pad, 4), jnp.float32),
        grid=(num_tiles,),
        in_specs=[
            pl.BlockSpec((bb, img.shape[1]), lambda i: (i, 0)),
            pl.BlockSpec((bb, txt.shape[1]), lambda i: (i, 0)),
            *weight_specs,
        ],
        out_specs=pl.BlockSpec((bb, 4), lambda i: (i, 0)),
        compiler_params=pltpu.CompilerParams(
            dimension_semantics=("parallel",),
            # Keep depth-2 pipelining at full tile size even on v5e's 16 MiB
            # scoped default; 48 MiB leaves headroom on v7x's 64 MiB physical.
            vmem_limit_bytes=48 * 1024 * 1024,
        ),
    )(img, txt, *weight_args)
    return out[:B]


def init_params(key, hidden_img, hidden_txt):
    """Deterministic synthetic parameters matching the module's shapes.

    Linear weights use (in, out) layout with x @ W (transpose of nn.Linear).
    """
    combined = hidden_img + hidden_txt
    dims = [(combined, 1024), (1024, 768), (768, 512)]
    keys = jax.random.split(key, 16)
    p = {}
    for idx, (din, dout) in enumerate(dims, start=1):
        p[f"w{idx}"] = (jax.random.normal(keys[2 * idx - 2], (din, dout),
                                          jnp.float32) * 0.02)
        p[f"b{idx}"] = (jax.random.normal(keys[2 * idx - 1], (1, dout),
                                          jnp.float32) * 0.01)
        p[f"g{idx}"] = jnp.ones((1, dout), jnp.float32)
        p[f"be{idx}"] = jnp.zeros((1, dout), jnp.float32)
    for name, k in zip(("t", "i", "m"), keys[8:11]):
        p[f"w{name}"] = jax.random.normal(k, (512, 2), jnp.float32) * 0.02
        p[f"b{name}"] = jnp.zeros((1, 2), jnp.float32)
    return p


def _reference_forward_bf16(image_features, text_features, params):
    """Pure-JAX reference using identical bf16-cast weights / fused heads."""
    h_img = image_features.shape[1]
    prep = _prepare_params(params, h_img)
    h = (jnp.dot(image_features.astype(jnp.bfloat16), prep["w1i"],
                 preferred_element_type=jnp.float32)
         + jnp.dot(text_features.astype(jnp.bfloat16), prep["w1t"],
                   preferred_element_type=jnp.float32)
         + prep["b1"])
    h = jnp.maximum(_layernorm(h, prep["g1"], prep["be1"]), 0.0)
    h = (jnp.dot(h.astype(jnp.bfloat16), prep["w2"],
                 preferred_element_type=jnp.float32) + prep["b2"])
    h = jnp.maximum(_layernorm(h, prep["g2"], prep["be2"]), 0.0)
    h = (jnp.dot(h.astype(jnp.bfloat16), prep["w3"],
                 preferred_element_type=jnp.float32) + prep["b3"])
    h = jnp.maximum(_layernorm(h, prep["g3"], prep["be3"]), 0.0)
    y = (jnp.dot(h.astype(jnp.bfloat16), prep["wh"],
                 preferred_element_type=jnp.float32) + prep["bh"])
    s = y[:, 0:1] + y[:, 1:2] + y[:, 2:3]
    last = 1.0 - jnp.clip(s, 0.0, 1.0)
    return jnp.concatenate([y[:, :3], last], axis=1)


def _reference_forward_f32(image_features, text_features, p):
    """Pure f32 reference with the original (unfused) torch semantics."""
    x = jnp.concatenate([image_features, text_features], axis=-1)
    for i in (1, 2, 3):
        x = x @ p[f"w{i}"] + p[f"b{i}"]
        x = jnp.maximum(_layernorm(x, p[f"g{i}"], p[f"be{i}"]), 0.0)
    tl = x @ p["wt"] + p["bt"]
    il = x @ p["wi"] + p["bi"]
    ml = x @ p["wm"] + p["bm"]
    last = 1.0 - jnp.clip(ml[:, 1] + tl[:, 1] + il[:, 1], 0.0, 1.0)
    return jnp.stack([ml[:, 1], tl[:, 1], il[:, 1], last], axis=1)


if __name__ == "__main__":
    B = 8            # batch
    H_IMG = 64       # synthetic image-encoder hidden size
    H_TXT = 64       # synthetic text-encoder hidden size

    key = jax.random.PRNGKey(0)
    k_img, k_txt, k_par = jax.random.split(key, 3)

    image_features = jax.random.normal(k_img, (B, H_IMG), jnp.float32)
    text_features = jax.random.normal(k_txt, (B, H_TXT), jnp.float32)
    params = init_params(k_par, H_IMG, H_TXT)

    try:
        logits = sarcasm_forward(image_features, text_features, params)
        logits = jax.block_until_ready(logits)
    except Exception:
        # pipeline_mode=pl.Buffered(1) (single-buffered resident weights) is a
        # newer Mosaic feature; fall back to default double-buffering if this
        # JAX/libtpu build does not support it.
        logits = sarcasm_forward(image_features, text_features, params,
                                 single_buffer_weights=False)
        logits = jax.block_until_ready(logits)

    ref_bf16 = _reference_forward_bf16(image_features, text_features, params)
    ref_f32 = _reference_forward_f32(image_features, text_features, params)

    assert logits.shape == (B, 4)
    # Tight check against a reference using identical bf16 weights / fusion.
    assert jnp.allclose(logits, ref_bf16, atol=2e-3, rtol=2e-3)
    # Loose sanity check against the full-f32 torch-semantics reference.
    assert jnp.allclose(logits, ref_f32, atol=5e-2, rtol=5e-2)

    print("KERNEL_OK")
</pallas_src>

<mosaic_0001>
module attributes {stable_mosaic.version = 11 : i64} {
  func.func @_classifier_kernel(%arg0: i32, %arg1: memref<8x64xbf16, #tpu.memory_space<vmem>>, %arg2: memref<8x64xbf16, #tpu.memory_space<vmem>>, %arg3: memref<64x1024xbf16, #tpu.memory_space<vmem>>, %arg4: memref<64x1024xbf16, #tpu.memory_space<vmem>>, %arg5: memref<1x1024xf32, #tpu.memory_space<vmem>>, %arg6: memref<1x1024xf32, #tpu.memory_space<vmem>>, %arg7: memref<1x1024xf32, #tpu.memory_space<vmem>>, %arg8: memref<1024x768xbf16, #tpu.memory_space<vmem>>, %arg9: memref<1x768xf32, #tpu.memory_space<vmem>>, %arg10: memref<1x768xf32, #tpu.memory_space<vmem>>, %arg11: memref<1x768xf32, #tpu.memory_space<vmem>>, %arg12: memref<768x512xbf16, #tpu.memory_space<vmem>>, %arg13: memref<1x512xf32, #tpu.memory_space<vmem>>, %arg14: memref<1x512xf32, #tpu.memory_space<vmem>>, %arg15: memref<1x512xf32, #tpu.memory_space<vmem>>, %arg16: memref<512x4xbf16, #tpu.memory_space<vmem>>, %arg17: memref<1x4xf32, #tpu.memory_space<vmem>>, %arg18: memref<8x4xf32, #tpu.memory_space<vmem>>) attributes {dimension_semantics = [#tpu.dimension_semantics<parallel>], iteration_bounds = array<i64: 1>, scalar_prefetch = 0 : i64, scratch_operands = 0 : i64, tpu.core_type = #tpu.core_type<tc>, window_params = [{transform_indices = @transform_0, window_bounds = array<i64: 8, 64>}, {transform_indices = @transform_1, window_bounds = array<i64: 8, 64>}, {pipeline_mode = #tpu.pipeline_mode<synchronous>, transform_indices = @transform_2, window_bounds = array<i64: 64, 1024>}, {pipeline_mode = #tpu.pipeline_mode<synchronous>, transform_indices = @transform_3, window_bounds = array<i64: 64, 1024>}, {pipeline_mode = #tpu.pipeline_mode<synchronous>, transform_indices = @transform_4, window_bounds = array<i64: 1, 1024>}, {pipeline_mode = #tpu.pipeline_mode<synchronous>, transform_indices = @transform_5, window_bounds = array<i64: 1, 1024>}, {pipeline_mode = #tpu.pipeline_mode<synchronous>, transform_indices = @transform_6, window_bounds = array<i64: 1, 1024>}, {pipeline_mode = #tpu.pipeline_mode<synchronous>, transform_indices = @transform_7, window_bounds = array<i64: 1024, 768>}, {pipeline_mode = #tpu.pipeline_mode<synchronous>, transform_indices = @transform_8, window_bounds = array<i64: 1, 768>}, {pipeline_mode = #tpu.pipeline_mode<synchronous>, transform_indices = @transform_9, window_bounds = array<i64: 1, 768>}, {pipeline_mode = #tpu.pipeline_mode<synchronous>, transform_indices = @transform_10, window_bounds = array<i64: 1, 768>}, {pipeline_mode = #tpu.pipeline_mode<synchronous>, transform_indices = @transform_11, window_bounds = array<i64: 768, 512>}, {pipeline_mode = #tpu.pipeline_mode<synchronous>, transform_indices = @transform_12, window_bounds = array<i64: 1, 512>}, {pipeline_mode = #tpu.pipeline_mode<synchronous>, transform_indices = @transform_13, window_bounds = array<i64: 1, 512>}, {pipeline_mode = #tpu.pipeline_mode<synchronous>, transform_indices = @transform_14, window_bounds = array<i64: 1, 512>}, {pipeline_mode = #tpu.pipeline_mode<synchronous>, transform_indices = @transform_15, window_bounds = array<i64: 512, 4>}, {pipeline_mode = #tpu.pipeline_mode<synchronous>, transform_indices = @transform_16, window_bounds = array<i64: 1, 4>}, {transform_indices = @transform_17, window_bounds = array<i64: 8, 4>}]} {
    %c0 = arith.constant 0 : index
    %c0_0 = arith.constant 0 : index
    %0 = vector.load %arg1[%c0, %c0_0] : memref<8x64xbf16, #tpu.memory_space<vmem>>, vector<8x64xbf16>
    %c0_1 = arith.constant 0 : index
    %c0_2 = arith.constant 0 : index
    %1 = vector.load %arg3[%c0_1, %c0_2] : memref<64x1024xbf16, #tpu.memory_space<vmem>>, vector<64x1024xbf16>
    %cst = arith.constant dense<0.000000e+00> : vector<8x1024xf32>
    %2 = tpu.matmul %0, %1, %cst {dimension_numbers = #tpu.dot_dimension_numbers<[1], [0], [0], [1], [0, 0, 1, 1], [], []>} : vector<8x64xbf16>, vector<64x1024xbf16>, vector<8x1024xf32> -> vector<8x1024xf32>
    %c0_3 = arith.constant 0 : index
    %c0_4 = arith.constant 0 : index
    %3 = vector.load %arg2[%c0_3, %c0_4] : memref<8x64xbf16, #tpu.memory_space<vmem>>, vector<8x64xbf16>
    %c0_5 = arith.constant 0 : index
    %c0_6 = arith.constant 0 : index
    %4 = vector.load %arg4[%c0_5, %c0_6] : memref<64x1024xbf16, #tpu.memory_space<vmem>>, vector<64x1024xbf16>
    %cst_7 = arith.constant dense<0.000000e+00> : vector<8x1024xf32>
    %5 = tpu.matmul %3, %4, %cst_7 {dimension_numbers = #tpu.dot_dimension_numbers<[1], [0], [0], [1], [0, 0, 1, 1], [], []>} : vector<8x64xbf16>, vector<64x1024xbf16>, vector<8x1024xf32> -> vector<8x1024xf32>
    %6 = arith.addf %2, %5 : vector<8x1024xf32>
    %c0_8 = arith.constant 0 : index
    %c0_9 = arith.constant 0 : index
    %7 = vector.load %arg5[%c0_8, %c0_9] : memref<1x1024xf32, #tpu.memory_space<vmem>>, vector<1x1024xf32>
    %8 = vector.broadcast %7 : vector<1x1024xf32> to vector<8x1024xf32>
    %9 = arith.addf %6, %8 : vector<8x1024xf32>
    %c0_10 = arith.constant 0 : index
    %c0_11 = arith.constant 0 : index
    %10 = vector.load %arg6[%c0_10, %c0_11] : memref<1x1024xf32, #tpu.memory_space<vmem>>, vector<1x1024xf32>
    %c0_12 = arith.constant 0 : index
    %c0_13 = arith.constant 0 : index
    %11 = vector.load %arg7[%c0_12, %c0_13] : memref<1x1024xf32, #tpu.memory_space<vmem>>, vector<1x1024xf32>
    %cst_14 = arith.constant dense<0.000000e+00> : vector<8xf32>
    %12 = vector.multi_reduction <add>, %9, %cst_14 [1] : vector<8x1024xf32> to vector<8xf32>
    %13 = vector.shape_cast %12 : vector<8xf32> to vector<8x1xf32>
    %cst_15 = arith.constant 1.024000e+03 : f32
    %14 = vector.broadcast %cst_15 : f32 to vector<8x1xf32>
    %15 = arith.divf %13, %14 : vector<8x1xf32>
    %16 = vector.broadcast %15 : vector<8x1xf32> to vector<8x1024xf32>
    %17 = arith.subf %9, %16 : vector<8x1024xf32>
    %18 = vector.broadcast %15 : vector<8x1xf32> to vector<8x1024xf32>
    %19 = arith.subf %9, %18 : vector<8x1024xf32>
    %20 = arith.mulf %17, %19 : vector<8x1024xf32>
    %cst_16 = arith.constant dense<0.000000e+00> : vector<8xf32>
    %21 = vector.multi_reduction <add>, %20, %cst_16 [1] : vector<8x1024xf32> to vector<8xf32>
    %22 = vector.shape_cast %21 : vector<8xf32> to vector<8x1xf32>
    %cst_17 = arith.constant 1.024000e+03 : f32
    %23 = vector.broadcast %cst_17 : f32 to vector<8x1xf32>
    %24 = arith.divf %22, %23 : vector<8x1xf32>
    %25 = vector.broadcast %15 : vector<8x1xf32> to vector<8x1024xf32>
    %26 = arith.subf %9, %25 : vector<8x1024xf32>
    %cst_18 = arith.constant 9.99999974E-6 : f32
    %27 = vector.broadcast %cst_18 : f32 to vector<8x1xf32>
    %28 = arith.addf %24, %27 : vector<8x1xf32>
    %29 = math.rsqrt %28 : vector<8x1xf32>
    %30 = vector.broadcast %29 : vector<8x1xf32> to vector<8x1024xf32>
    %31 = arith.mulf %26, %30 : vector<8x1024xf32>
    %32 = vector.broadcast %10 : vector<1x1024xf32> to vector<8x1024xf32>
    %33 = arith.mulf %31, %32 : vector<8x1024xf32>
    %34 = vector.broadcast %11 : vector<1x1024xf32> to vector<8x1024xf32>
    %35 = arith.addf %33, %34 : vector<8x1024xf32>
    %cst_19 = arith.constant 0.000000e+00 : f32
    %36 = vector.broadcast %cst_19 : f32 to vector<8x1024xf32>
    %37 = arith.maximumf %35, %36 : vector<8x1024xf32>
    %38 = arith.truncf %37 : vector<8x1024xf32> to vector<8x1024xbf16>
    %c0_20 = arith.constant 0 : index
    %c0_21 = arith.constant 0 : index
    %39 = vector.load %arg8[%c0_20, %c0_21] : memref<1024x768xbf16, #tpu.memory_space<vmem>>, vector<1024x768xbf16>
    %cst_22 = arith.constant dense<0.000000e+00> : vector<8x768xf32>
    %40 = tpu.matmul %38, %39, %cst_22 {dimension_numbers = #tpu.dot_dimension_numbers<[1], [0], [0], [1], [0, 0, 1, 1], [], []>} : vector<8x1024xbf16>, vector<1024x768xbf16>, vector<8x768xf32> -> vector<8x768xf32>
    %c0_23 = arith.constant 0 : index
    %c0_24 = arith.constant 0 : index
    %41 = vector.load %arg9[%c0_23, %c0_24] : memref<1x768xf32, #tpu.memory_space<vmem>>, vector<1x768xf32>
    %42 = vector.broadcast %41 : vector<1x768xf32> to vector<8x768xf32>
    %43 = arith.addf %40, %42 : vector<8x768xf32>
    %c0_25 = arith.constant 0 : index
    %c0_26 = arith.constant 0 : index
    %44 = vector.load %arg10[%c0_25, %c0_26] : memref<1x768xf32, #tpu.memory_space<vmem>>, vector<1x768xf32>
    %c0_27 = arith.constant 0 : index
    %c0_28 = arith.constant 0 : index
    %45 = vector.load %arg11[%c0_27, %c0_28] : memref<1x768xf32, #tpu.memory_space<vmem>>, vector<1x768xf32>
    %cst_29 = arith.constant dense<0.000000e+00> : vector<8xf32>
    %46 = vector.multi_reduction <add>, %43, %cst_29 [1] : vector<8x768xf32> to vector<8xf32>
    %47 = vector.shape_cast %46 : vector<8xf32> to vector<8x1xf32>
    %cst_30 = arith.constant 7.680000e+02 : f32
    %48 = vector.broadcast %cst_30 : f32 to vector<8x1xf32>
    %49 = arith.divf %47, %48 : vector<8x1xf32>
    %50 = vector.broadcast %49 : vector<8x1xf32> to vector<8x768xf32>
    %51 = arith.subf %43, %50 : vector<8x768xf32>
    %52 = vector.broadcast %49 : vector<8x1xf32> to vector<8x768xf32>
    %53 = arith.subf %43, %52 : vector<8x768xf32>
    %54 = arith.mulf %51, %53 : vector<8x768xf32>
    %cst_31 = arith.constant dense<0.000000e+00> : vector<8xf32>
    %55 = vector.multi_reduction <add>, %54, %cst_31 [1] : vector<8x768xf32> to vector<8xf32>
    %56 = vector.shape_cast %55 : vector<8xf32> to vector<8x1xf32>
    %cst_32 = arith.constant 7.680000e+02 : f32
    %57 = vector.broadcast %cst_32 : f32 to vector<8x1xf32>
    %58 = arith.divf %56, %57 : vector<8x1xf32>
    %59 = vector.broadcast %49 : vector<8x1xf32> to vector<8x768xf32>
    %60 = arith.subf %43, %59 : vector<8x768xf32>
    %cst_33 = arith.constant 9.99999974E-6 : f32
    %61 = vector.broadcast %cst_33 : f32 to vector<8x1xf32>
    %62 = arith.addf %58, %61 : vector<8x1xf32>
    %63 = math.rsqrt %62 : vector<8x1xf32>
    %64 = vector.broadcast %63 : vector<8x1xf32> to vector<8x768xf32>
    %65 = arith.mulf %60, %64 : vector<8x768xf32>
    %66 = vector.broadcast %44 : vector<1x768xf32> to vector<8x768xf32>
    %67 = arith.mulf %65, %66 : vector<8x768xf32>
    %68 = vector.broadcast %45 : vector<1x768xf32> to vector<8x768xf32>
    %69 = arith.addf %67, %68 : vector<8x768xf32>
    %cst_34 = arith.constant 0.000000e+00 : f32
    %70 = vector.broadcast %cst_34 : f32 to vector<8x768xf32>
    %71 = arith.maximumf %69, %70 : vector<8x768xf32>
    %72 = arith.truncf %71 : vector<8x768xf32> to vector<8x768xbf16>
    %c0_35 = arith.constant 0 : index
    %c0_36 = arith.constant 0 : index
    %73 = vector.load %arg12[%c0_35, %c0_36] : memref<768x512xbf16, #tpu.memory_space<vmem>>, vector<768x512xbf16>
    %cst_37 = arith.constant dense<0.000000e+00> : vector<8x512xf32>
    %74 = tpu.matmul %72, %73, %cst_37 {dimension_numbers = #tpu.dot_dimension_numbers<[1], [0], [0], [1], [0, 0, 1, 1], [], []>} : vector<8x768xbf16>, vector<768x512xbf16>, vector<8x512xf32> -> vector<8x512xf32>
    %c0_38 = arith.constant 0 : index
    %c0_39 = arith.constant 0 : index
    %75 = vector.load %arg13[%c0_38, %c0_39] : memref<1x512xf32, #tpu.memory_space<vmem>>, vector<1x512xf32>
    %76 = vector.broadcast %75 : vector<1x512xf32> to vector<8x512xf32>
    %77 = arith.addf %74, %76 : vector<8x512xf32>
    %c0_40 = arith.constant 0 : index
    %c0_41 = arith.constant 0 : index
    %78 = vector.load %arg14[%c0_40, %c0_41] : memref<1x512xf32, #tpu.memory_space<vmem>>, vector<1x512xf32>
    %c0_42 = arith.constant 0 : index
    %c0_43 = arith.constant 0 : index
    %79 = vector.load %arg15[%c0_42, %c0_43] : memref<1x512xf32, #tpu.memory_space<vmem>>, vector<1x512xf32>
    %cst_44 = arith.constant dense<0.000000e+00> : vector<8xf32>
    %80 = vector.multi_reduction <add>, %77, %cst_44 [1] : vector<8x512xf32> to vector<8xf32>
    %81 = vector.shape_cast %80 : vector<8xf32> to vector<8x1xf32>
    %cst_45 = arith.constant 5.120000e+02 : f32
    %82 = vector.broadcast %cst_45 : f32 to vector<8x1xf32>
    %83 = arith.divf %81, %82 : vector<8x1xf32>
    %84 = vector.broadcast %83 : vector<8x1xf32> to vector<8x512xf32>
    %85 = arith.subf %77, %84 : vector<8x512xf32>
    %86 = vector.broadcast %83 : vector<8x1xf32> to vector<8x512xf32>
    %87 = arith.subf %77, %86 : vector<8x512xf32>
    %88 = arith.mulf %85, %87 : vector<8x512xf32>
    %cst_46 = arith.constant dense<0.000000e+00> : vector<8xf32>
    %89 = vector.multi_reduction <add>, %88, %cst_46 [1] : vector<8x512xf32> to vector<8xf32>
    %90 = vector.shape_cast %89 : vector<8xf32> to vector<8x1xf32>
    %cst_47 = arith.constant 5.120000e+02 : f32
    %91 = vector.broadcast %cst_47 : f32 to vector<8x1xf32>
    %92 = arith.divf %90, %91 : vector<8x1xf32>
    %93 = vector.broadcast %83 : vector<8x1xf32> to vector<8x512xf32>
    %94 = arith.subf %77, %93 : vector<8x512xf32>
    %cst_48 = arith.constant 9.99999974E-6 : f32
    %95 = vector.broadcast %cst_48 : f32 to vector<8x1xf32>
    %96 = arith.addf %92, %95 : vector<8x1xf32>
    %97 = math.rsqrt %96 : vector<8x1xf32>
    %98 = vector.broadcast %97 : vector<8x1xf32> to vector<8x512xf32>
    %99 = arith.mulf %94, %98 : vector<8x512xf32>
    %100 = vector.broadcast %78 : vector<1x512xf32> to vector<8x512xf32>
    %101 = arith.mulf %99, %100 : vector<8x512xf32>
    %102 = vector.broadcast %79 : vector<1x512xf32> to vector<8x512xf32>
    %103 = arith.addf %101, %102 : vector<8x512xf32>
    %cst_49 = arith.constant 0.000000e+00 : f32
    %104 = vector.broadcast %cst_49 : f32 to vector<8x512xf32>
    %105 = arith.maximumf %103, %104 : vector<8x512xf32>
    %106 = arith.truncf %105 : vector<8x512xf32> to vector<8x512xbf16>
    %c0_50 = arith.constant 0 : index
    %c0_51 = arith.constant 0 : index
    %107 = vector.load %arg16[%c0_50, %c0_51] : memref<512x4xbf16, #tpu.memory_space<vmem>>, vector<512x4xbf16>
    %cst_52 = arith.constant dense<0.000000e+00> : vector<8x4xf32>
    %108 = tpu.matmul %106, %107, %cst_52 {dimension_numbers = #tpu.dot_dimension_numbers<[1], [0], [0], [1], [0, 0, 1, 1], [], []>} : vector<8x512xbf16>, vector<512x4xbf16>, vector<8x4xf32> -> vector<8x4xf32>
    %c0_53 = arith.constant 0 : index
    %c0_54 = arith.constant 0 : index
    %109 = vector.load %arg17[%c0_53, %c0_54] : memref<1x4xf32, #tpu.memory_space<vmem>>, vector<1x4xf32>
    %110 = vector.broadcast %109 : vector<1x4xf32> to vector<8x4xf32>
    %111 = arith.addf %108, %110 : vector<8x4xf32>
    %112 = tpu.iota {dimensions = array<i32: 1>} : vector<8x4xi32>
    %c3_i32 = arith.constant 3 : i32
    %113 = vector.broadcast %c3_i32 : i32 to vector<8x4xi32>
    %114 = arith.cmpi slt, %112, %113 : vector<8x4xi32>
    %cst_55 = arith.constant 0.000000e+00 : f32
    %115 = vector.broadcast %cst_55 : f32 to vector<8x4xf32>
    %116 = arith.select %114, %111, %115 : vector<8x4xi1>, vector<8x4xf32>
    %cst_56 = arith.constant dense<0.000000e+00> : vector<8xf32>
    %117 = vector.multi_reduction <add>, %116, %cst_56 [1] : vector<8x4xf32> to vector<8xf32>
    %118 = vector.shape_cast %117 : vector<8xf32> to vector<8x1xf32>
    %c3_i32_57 = arith.constant 3 : i32
    %119 = vector.broadcast %c3_i32_57 : i32 to vector<8x4xi32>
    %120 = arith.cmpi eq, %112, %119 : vector<8x4xi32>
    %cst_58 = arith.constant 0.000000e+00 : f32
    %cst_59 = arith.constant 1.000000e+00 : f32
    %121 = vector.broadcast %cst_58 : f32 to vector<8x1xf32>
    %122 = arith.maximumf %121, %118 : vector<8x1xf32>
    %123 = vector.broadcast %cst_59 : f32 to vector<8x1xf32>
    %124 = arith.minimumf %123, %122 : vector<8x1xf32>
    %cst_60 = arith.constant 1.000000e+00 : f32
    %125 = vector.broadcast %cst_60 : f32 to vector<8x1xf32>
    %126 = arith.subf %125, %124 : vector<8x1xf32>
    %127 = vector.shape_cast %126 : vector<8x1xf32> to vector<8x1xf32>
    %128 = vector.broadcast %127 : vector<8x1xf32> to vector<8x4xf32>
    %129 = arith.select %120, %128, %111 : vector<8x4xi1>, vector<8x4xf32>
    %c0_61 = arith.constant 0 : index
    %c0_62 = arith.constant 0 : index
    %130 = vector.load %arg18[%c0_61, %c0_62] : memref<8x4xf32, #tpu.memory_space<vmem>>, vector<8x4xf32>
    tpu.vector_store %arg18[%c0_61, %c0_62], %129 {strides = array<i32>} : memref<8x4xf32, #tpu.memory_space<vmem>>, vector<8x4xf32>,
    return
  }
  func.func @transform_0(%arg0: i32) -> (i32, i32) {
    %c0_i32 = arith.constant 0 : i32
    %c0_i32_0 = arith.constant 0 : i32
    return %arg0, %c0_i32 : i32, i32
  }
  func.func @transform_1(%arg0: i32) -> (i32, i32) {
    %c0_i32 = arith.constant 0 : i32
    %c0_i32_0 = arith.constant 0 : i32
    return %arg0, %c0_i32 : i32, i32
  }
  func.func @transform_2(%arg0: i32) -> (i32, i32) {
    %c0_i32 = arith.constant 0 : i32
    %c0_i32_0 = arith.constant 0 : i32
    %c0_i32_1 = arith.constant 0 : i32
    return %c0_i32, %c0_i32_0 : i32, i32
  }
  func.func @transform_3(%arg0: i32) -> (i32, i32) {
    %c0_i32 = arith.constant 0 : i32
    %c0_i32_0 = arith.constant 0 : i32
    %c0_i32_1 = arith.constant 0 : i32
    return %c0_i32, %c0_i32_0 : i32, i32
  }
  func.func @transform_4(%arg0: i32) -> (i32, i32) {
    %c0_i32 = arith.constant 0 : i32
    %c0_i32_0 = arith.constant 0 : i32
    %c0_i32_1 = arith.constant 0 : i32
    return %c0_i32, %c0_i32_0 : i32, i32
  }
  func.func @transform_5(%arg0: i32) -> (i32, i32) {
    %c0_i32 = arith.constant 0 : i32
    %c0_i32_0 = arith.constant 0 : i32
    %c0_i32_1 = arith.constant 0 : i32
    return %c0_i32, %c0_i32_0 : i32, i32
  }
  func.func @transform_6(%arg0: i32) -> (i32, i32) {
    %c0_i32 = arith.constant 0 : i32
    %c0_i32_0 = arith.constant 0 : i32
    %c0_i32_1 = arith.constant 0 : i32
    return %c0_i32, %c0_i32_0 : i32, i32
  }
  func.func @transform_7(%arg0: i32) -> (i32, i32) {
    %c0_i32 = arith.constant 0 : i32
    %c0_i32_0 = arith.constant 0 : i32
    %c0_i32_1 = arith.constant 0 : i32
    return %c0_i32, %c0_i32_0 : i32, i32
  }
  func.func @transform_8(%arg0: i32) -> (i32, i32) {
    %c0_i32 = arith.constant 0 : i32
    %c0_i32_0 = arith.constant 0 : i32
    %c0_i32_1 = arith.constant 0 : i32
    return %c0_i32, %c0_i32_0 : i32, i32
  }
  func.func @transform_9(%arg0: i32) -> (i32, i32) {
    %c0_i32 = arith.constant 0 : i32
    %c0_i32_0 = arith.constant 0 : i32
    %c0_i32_1 = arith.constant 0 : i32
    return %c0_i32, %c0_i32_0 : i32, i32
  }
  func.func @transform_10(%arg0: i32) -> (i32, i32) {
    %c0_i32 = arith.constant 0 : i32
    %c0_i32_0 = arith.constant 0 : i32
    %c0_i32_1 = arith.constant 0 : i32
    return %c0_i32, %c0_i32_0 : i32, i32
  }
  func.func @transform_11(%arg0: i32) -> (i32, i32) {
    %c0_i32 = arith.constant 0 : i32
    %c0_i32_0 = arith.constant 0 : i32
    %c0_i32_1 = arith.constant 0 : i32
    return %c0_i32, %c0_i32_0 : i32, i32
  }
  func.func @transform_12(%arg0: i32) -> (i32, i32) {
    %c0_i32 = arith.constant 0 : i32
    %c0_i32_0 = arith.constant 0 : i32
    %c0_i32_1 = arith.constant 0 : i32
    return %c0_i32, %c0_i32_0 : i32, i32
  }
  func.func @transform_13(%arg0: i32) -> (i32, i32) {
    %c0_i32 = arith.constant 0 : i32
    %c0_i32_0 = arith.constant 0 : i32
    %c0_i32_1 = arith.constant 0 : i32
    return %c0_i32, %c0_i32_0 : i32, i32
  }
  func.func @transform_14(%arg0: i32) -> (i32, i32) {
    %c0_i32 = arith.constant 0 : i32
    %c0_i32_0 = arith.constant 0 : i32
    %c0_i32_1 = arith.constant 0 : i32
    return %c0_i32, %c0_i32_0 : i32, i32
  }
  func.func @transform_15(%arg0: i32) -> (i32, i32) {
    %c0_i32 = arith.constant 0 : i32
    %c0_i32_0 = arith.constant 0 : i32
    %c0_i32_1 = arith.constant 0 : i32
    return %c0_i32, %c0_i32_0 : i32, i32
  }
  func.func @transform_16(%arg0: i32) -> (i32, i32) {
    %c0_i32 = arith.constant 0 : i32
    %c0_i32_0 = arith.constant 0 : i32
    %c0_i32_1 = arith.constant 0 : i32
    return %c0_i32, %c0_i32_0 : i32, i32
  }
  func.func @transform_17(%arg0: i32) -> (i32, i32) {
    %c0_i32 = arith.constant 0 : i32
    %c0_i32_0 = arith.constant 0 : i32
    return %arg0, %c0_i32 : i32, i32
  }
}

module attributes {stable_mosaic.version = 11 : i64} {
  func.func @_classifier_kernel(%arg0: i32, %arg1: memref<8x64xbf16, #tpu.memory_space<vmem>>, %arg2: memref<8x64xbf16, #tpu.memory_space<vmem>>, %arg3: memref<64x1024xbf16, #tpu.memory_space<vmem>>, %arg4: memref<64x1024xbf16, #tpu.memory_space<vmem>>, %arg5: memref<1x1024xf32, #tpu.memory_space<vmem>>, %arg6: memref<1x1024xf32, #tpu.memory_space<vmem>>, %arg7: memref<1x1024xf32, #tpu.memory_space<vmem>>, %arg8: memref<1024x768xbf16, #tpu.memory_space<vmem>>, %arg9: memref<1x768xf32, #tpu.memory_space<vmem>>, %arg10: memref<1x768xf32, #tpu.memory_space<vmem>>, %arg11: memref<1x768xf32, #tpu.memory_space<vmem>>, %arg12: memref<768x512xbf16, #tpu.memory_space<vmem>>, %arg13: memref<1x512xf32, #tpu.memory_space<vmem>>, %arg14: memref<1x512xf32, #tpu.memory_space<vmem>>, %arg15: memref<1x512xf32, #tpu.memory_space<vmem>>, %arg16: memref<512x4xbf16, #tpu.memory_space<vmem>>, %arg17: memref<1x4xf32, #tpu.memory_space<vmem>>, %arg18: memref<8x4xf32, #tpu.memory_space<vmem>>) attributes {dimension_semantics = [#tpu.dimension_semantics<parallel>], iteration_bounds = array<i64: 1>, scalar_prefetch = 0 : i64, scratch_operands = 0 : i64, tpu.core_type = #tpu.core_type<tc>, window_params = [{transform_indices = @transform_0, window_bounds = array<i64: 8, 64>}, {transform_indices = @transform_1, window_bounds = array<i64: 8, 64>}, {pipeline_mode = #tpu.pipeline_mode<synchronous>, transform_indices = @transform_2, window_bounds = array<i64: 64, 1024>}, {pipeline_mode = #tpu.pipeline_mode<synchronous>, transform_indices = @transform_3, window_bounds = array<i64: 64, 1024>}, {pipeline_mode = #tpu.pipeline_mode<synchronous>, transform_indices = @transform_4, window_bounds = array<i64: 1, 1024>}, {pipeline_mode = #tpu.pipeline_mode<synchronous>, transform_indices = @transform_5, window_bounds = array<i64: 1, 1024>}, {pipeline_mode = #tpu.pipeline_mode<synchronous>, transform_indices = @transform_6, window_bounds = array<i64: 1, 1024>}, {pipeline_mode = #tpu.pipeline_mode<synchronous>, transform_indices = @transform_7, window_bounds = array<i64: 1024, 768>}, {pipeline_mode = #tpu.pipeline_mode<synchronous>, transform_indices = @transform_8, window_bounds = array<i64: 1, 768>}, {pipeline_mode = #tpu.pipeline_mode<synchronous>, transform_indices = @transform_9, window_bounds = array<i64: 1, 768>}, {pipeline_mode = #tpu.pipeline_mode<synchronous>, transform_indices = @transform_10, window_bounds = array<i64: 1, 768>}, {pipeline_mode = #tpu.pipeline_mode<synchronous>, transform_indices = @transform_11, window_bounds = array<i64: 768, 512>}, {pipeline_mode = #tpu.pipeline_mode<synchronous>, transform_indices = @transform_12, window_bounds = array<i64: 1, 512>}, {pipeline_mode = #tpu.pipeline_mode<synchronous>, transform_indices = @transform_13, window_bounds = array<i64: 1, 512>}, {pipeline_mode = #tpu.pipeline_mode<synchronous>, transform_indices = @transform_14, window_bounds = array<i64: 1, 512>}, {pipeline_mode = #tpu.pipeline_mode<synchronous>, transform_indices = @transform_15, window_bounds = array<i64: 512, 4>}, {pipeline_mode = #tpu.pipeline_mode<synchronous>, transform_indices = @transform_16, window_bounds = array<i64: 1, 4>}, {transform_indices = @transform_17, window_bounds = array<i64: 8, 4>}]} {
    %c0 = arith.constant 0 : index
    %c0_0 = arith.constant 0 : index
    %0 = vector.load %arg1[%c0, %c0_0] : memref<8x64xbf16, #tpu.memory_space<vmem>>, vector<8x64xbf16>
    %c0_1 = arith.constant 0 : index
    %c0_2 = arith.constant 0 : index
    %1 = vector.load %arg3[%c0_1, %c0_2] : memref<64x1024xbf16, #tpu.memory_space<vmem>>, vector<64x1024xbf16>
    %cst = arith.constant dense<0.000000e+00> : vector<8x1024xf32>
    %2 = tpu.matmul %0, %1, %cst {dimension_numbers = #tpu.dot_dimension_numbers<[1], [0], [0], [1], [0, 0, 1, 1], [], []>} : vector<8x64xbf16>, vector<64x1024xbf16>, vector<8x1024xf32> -> vector<8x1024xf32>
    %c0_3 = arith.constant 0 : index
    %c0_4 = arith.constant 0 : index
    %3 = vector.load %arg2[%c0_3, %c0_4] : memref<8x64xbf16, #tpu.memory_space<vmem>>, vector<8x64xbf16>
    %c0_5 = arith.constant 0 : index
    %c0_6 = arith.constant 0 : index
    %4 = vector.load %arg4[%c0_5, %c0_6] : memref<64x1024xbf16, #tpu.memory_space<vmem>>, vector<64x1024xbf16>
    %cst_7 = arith.constant dense<0.000000e+00> : vector<8x1024xf32>
    %5 = tpu.matmul %3, %4, %cst_7 {dimension_numbers = #tpu.dot_dimension_numbers<[1], [0], [0], [1], [0, 0, 1, 1], [], []>} : vector<8x64xbf16>, vector<64x1024xbf16>, vector<8x1024xf32> -> vector<8x1024xf32>
    %6 = arith.addf %2, %5 : vector<8x1024xf32>
    %c0_8 = arith.constant 0 : index
    %c0_9 = arith.constant 0 : index
    %7 = vector.load %arg5[%c0_8, %c0_9] : memref<1x1024xf32, #tpu.memory_space<vmem>>, vector<1x1024xf32>
    %8 = vector.broadcast %7 : vector<1x1024xf32> to vector<8x1024xf32>
    %9 = arith.addf %6, %8 : vector<8x1024xf32>
    %c0_10 = arith.constant 0 : index
    %c0_11 = arith.constant 0 : index
    %10 = vector.load %arg6[%c0_10, %c0_11] : memref<1x1024xf32, #tpu.memory_space<vmem>>, vector<1x1024xf32>
    %c0_12 = arith.constant 0 : index
    %c0_13 = arith.constant 0 : index
    %11 = vector.load %arg7[%c0_12, %c0_13] : memref<1x1024xf32, #tpu.memory_space<vmem>>, vector<1x1024xf32>
    %cst_14 = arith.constant dense<0.000000e+00> : vector<8xf32>
    %12 = vector.multi_reduction <add>, %9, %cst_14 [1] : vector<8x1024xf32> to vector<8xf32>
    %13 = vector.shape_cast %12 : vector<8xf32> to vector<8x1xf32>
    %cst_15 = arith.constant 1.024000e+03 : f32
    %14 = vector.broadcast %cst_15 : f32 to vector<8x1xf32>
    %15 = arith.divf %13, %14 : vector<8x1xf32>
    %16 = vector.broadcast %15 : vector<8x1xf32> to vector<8x1024xf32>
    %17 = arith.subf %9, %16 : vector<8x1024xf32>
    %18 = vector.broadcast %15 : vector<8x1xf32> to vector<8x1024xf32>
    %19 = arith.subf %9, %18 : vector<8x1024xf32>
    %20 = arith.mulf %17, %19 : vector<8x1024xf32>
    %cst_16 = arith.constant dense<0.000000e+00> : vector<8xf32>
    %21 = vector.multi_reduction <add>, %20, %cst_16 [1] : vector<8x1024xf32> to vector<8xf32>
    %22 = vector.shape_cast %21 : vector<8xf32> to vector<8x1xf32>
    %cst_17 = arith.constant 1.024000e+03 : f32
    %23 = vector.broadcast %cst_17 : f32 to vector<8x1xf32>
    %24 = arith.divf %22, %23 : vector<8x1xf32>
    %25 = vector.broadcast %15 : vector<8x1xf32> to vector<8x1024xf32>
    %26 = arith.subf %9, %25 : vector<8x1024xf32>
    %cst_18 = arith.constant 9.99999974E-6 : f32
    %27 = vector.broadcast %cst_18 : f32 to vector<8x1xf32>
    %28 = arith.addf %24, %27 : vector<8x1xf32>
    %29 = math.rsqrt %28 : vector<8x1xf32>
    %30 = vector.broadcast %29 : vector<8x1xf32> to vector<8x1024xf32>
    %31 = arith.mulf %26, %30 : vector<8x1024xf32>
    %32 = vector.broadcast %10 : vector<1x1024xf32> to vector<8x1024xf32>
    %33 = arith.mulf %31, %32 : vector<8x1024xf32>
    %34 = vector.broadcast %11 : vector<1x1024xf32> to vector<8x1024xf32>
    %35 = arith.addf %33, %34 : vector<8x1024xf32>
    %cst_19 = arith.constant 0.000000e+00 : f32
    %36 = vector.broadcast %cst_19 : f32 to vector<8x1024xf32>
    %37 = arith.maximumf %35, %36 : vector<8x1024xf32>
    %38 = arith.truncf %37 : vector<8x1024xf32> to vector<8x1024xbf16>
    %c0_20 = arith.constant 0 : index
    %c0_21 = arith.constant 0 : index
    %39 = vector.load %arg8[%c0_20, %c0_21] : memref<1024x768xbf16, #tpu.memory_space<vmem>>, vector<1024x768xbf16>
    %cst_22 = arith.constant dense<0.000000e+00> : vector<8x768xf32>
    %40 = tpu.matmul %38, %39, %cst_22 {dimension_numbers = #tpu.dot_dimension_numbers<[1], [0], [0], [1], [0, 0, 1, 1], [], []>} : vector<8x1024xbf16>, vector<1024x768xbf16>, vector<8x768xf32> -> vector<8x768xf32>
    %c0_23 = arith.constant 0 : index
    %c0_24 = arith.constant 0 : index
    %41 = vector.load %arg9[%c0_23, %c0_24] : memref<1x768xf32, #tpu.memory_space<vmem>>, vector<1x768xf32>
    %42 = vector.broadcast %41 : vector<1x768xf32> to vector<8x768xf32>
    %43 = arith.addf %40, %42 : vector<8x768xf32>
    %c0_25 = arith.constant 0 : index
    %c0_26 = arith.constant 0 : index
    %44 = vector.load %arg10[%c0_25, %c0_26] : memref<1x768xf32, #tpu.memory_space<vmem>>, vector<1x768xf32>
    %c0_27 = arith.constant 0 : index
    %c0_28 = arith.constant 0 : index
    %45 = vector.load %arg11[%c0_27, %c0_28] : memref<1x768xf32, #tpu.memory_space<vmem>>, vector<1x768xf32>
    %cst_29 = arith.constant dense<0.000000e+00> : vector<8xf32>
    %46 = vector.multi_reduction <add>, %43, %cst_29 [1] : vector<8x768xf32> to vector<8xf32>
    %47 = vector.shape_cast %46 : vector<8xf32> to vector<8x1xf32>
    %cst_30 = arith.constant 7.680000e+02 : f32
    %48 = vector.broadcast %cst_30 : f32 to vector<8x1xf32>
    %49 = arith.divf %47, %48 : vector<8x1xf32>
    %50 = vector.broadcast %49 : vector<8x1xf32> to vector<8x768xf32>
    %51 = arith.subf %43, %50 : vector<8x768xf32>
    %52 = vector.broadcast %49 : vector<8x1xf32> to vector<8x768xf32>
    %53 = arith.subf %43, %52 : vector<8x768xf32>
    %54 = arith.mulf %51, %53 : vector<8x768xf32>
    %cst_31 = arith.constant dense<0.000000e+00> : vector<8xf32>
    %55 = vector.multi_reduction <add>, %54, %cst_31 [1] : vector<8x768xf32> to vector<8xf32>
    %56 = vector.shape_cast %55 : vector<8xf32> to vector<8x1xf32>
    %cst_32 = arith.constant 7.680000e+02 : f32
    %57 = vector.broadcast %cst_32 : f32 to vector<8x1xf32>
    %58 = arith.divf %56, %57 : vector<8x1xf32>
    %59 = vector.broadcast %49 : vector<8x1xf32> to vector<8x768xf32>
    %60 = arith.subf %43, %59 : vector<8x768xf32>
    %cst_33 = arith.constant 9.99999974E-6 : f32
    %61 = vector.broadcast %cst_33 : f32 to vector<8x1xf32>
    %62 = arith.addf %58, %61 : vector<8x1xf32>
    %63 = math.rsqrt %62 : vector<8x1xf32>
    %64 = vector.broadcast %63 : vector<8x1xf32> to vector<8x768xf32>
    %65 = arith.mulf %60, %64 : vector<8x768xf32>
    %66 = vector.broadcast %44 : vector<1x768xf32> to vector<8x768xf32>
    %67 = arith.mulf %65, %66 : vector<8x768xf32>
    %68 = vector.broadcast %45 : vector<1x768xf32> to vector<8x768xf32>
    %69 = arith.addf %67, %68 : vector<8x768xf32>
    %cst_34 = arith.constant 0.000000e+00 : f32
    %70 = vector.broadcast %cst_34 : f32 to vector<8x768xf32>
    %71 = arith.maximumf %69, %70 : vector<8x768xf32>
    %72 = arith.truncf %71 : vector<8x768xf32> to vector<8x768xbf16>
    %c0_35 = arith.constant 0 : index
    %c0_36 = arith.constant 0 : index
    %73 = vector.load %arg12[%c0_35, %c0_36] : memref<768x512xbf16, #tpu.memory_space<vmem>>, vector<768x512xbf16>
    %cst_37 = arith.constant dense<0.000000e+00> : vector<8x512xf32>
    %74 = tpu.matmul %72, %73, %cst_37 {dimension_numbers = #tpu.dot_dimension_numbers<[1], [0], [0], [1], [0, 0, 1, 1], [], []>} : vector<8x768xbf16>, vector<768x512xbf16>, vector<8x512xf32> -> vector<8x512xf32>
    %c0_38 = arith.constant 0 : index
    %c0_39 = arith.constant 0 : index
    %75 = vector.load %arg13[%c0_38, %c0_39] : memref<1x512xf32, #tpu.memory_space<vmem>>, vector<1x512xf32>
    %76 = vector.broadcast %75 : vector<1x512xf32> to vector<8x512xf32>
    %77 = arith.addf %74, %76 : vector<8x512xf32>
    %c0_40 = arith.constant 0 : index
    %c0_41 = arith.constant 0 : index
    %78 = vector.load %arg14[%c0_40, %c0_41] : memref<1x512xf32, #tpu.memory_space<vmem>>, vector<1x512xf32>
    %c0_42 = arith.constant 0 : index
    %c0_43 = arith.constant 0 : index
    %79 = vector.load %arg15[%c0_42, %c0_43] : memref<1x512xf32, #tpu.memory_space<vmem>>, vector<1x512xf32>
    %cst_44 = arith.constant dense<0.000000e+00> : vector<8xf32>
    %80 = vector.multi_reduction <add>, %77, %cst_44 [1] : vector<8x512xf32> to vector<8xf32>
    %81 = vector.shape_cast %80 : vector<8xf32> to vector<8x1xf32>
    %cst_45 = arith.constant 5.120000e+02 : f32
    %82 = vector.broadcast %cst_45 : f32 to vector<8x1xf32>
    %83 = arith.divf %81, %82 : vector<8x1xf32>
    %84 = vector.broadcast %83 : vector<8x1xf32> to vector<8x512xf32>
    %85 = arith.subf %77, %84 : vector<8x512xf32>
    %86 = vector.broadcast %83 : vector<8x1xf32> to vector<8x512xf32>
    %87 = arith.subf %77, %86 : vector<8x512xf32>
    %88 = arith.mulf %85, %87 : vector<8x512xf32>
    %cst_46 = arith.constant dense<0.000000e+00> : vector<8xf32>
    %89 = vector.multi_reduction <add>, %88, %cst_46 [1] : vector<8x512xf32> to vector<8xf32>
    %90 = vector.shape_cast %89 : vector<8xf32> to vector<8x1xf32>
    %cst_47 = arith.constant 5.120000e+02 : f32
    %91 = vector.broadcast %cst_47 : f32 to vector<8x1xf32>
    %92 = arith.divf %90, %91 : vector<8x1xf32>
    %93 = vector.broadcast %83 : vector<8x1xf32> to vector<8x512xf32>
    %94 = arith.subf %77, %93 : vector<8x512xf32>
    %cst_48 = arith.constant 9.99999974E-6 : f32
    %95 = vector.broadcast %cst_48 : f32 to vector<8x1xf32>
    %96 = arith.addf %92, %95 : vector<8x1xf32>
    %97 = math.rsqrt %96 : vector<8x1xf32>
    %98 = vector.broadcast %97 : vector<8x1xf32> to vector<8x512xf32>
    %99 = arith.mulf %94, %98 : vector<8x512xf32>
    %100 = vector.broadcast %78 : vector<1x512xf32> to vector<8x512xf32>
    %101 = arith.mulf %99, %100 : vector<8x512xf32>
    %102 = vector.broadcast %79 : vector<1x512xf32> to vector<8x512xf32>
    %103 = arith.addf %101, %102 : vector<8x512xf32>
    %cst_49 = arith.constant 0.000000e+00 : f32
    %104 = vector.broadcast %cst_49 : f32 to vector<8x512xf32>
    %105 = arith.maximumf %103, %104 : vector<8x512xf32>
    %106 = arith.truncf %105 : vector<8x512xf32> to vector<8x512xbf16>
    %c0_50 = arith.constant 0 : index
    %c0_51 = arith.constant 0 : index
    %107 = vector.load %arg16[%c0_50, %c0_51] : memref<512x4xbf16, #tpu.memory_space<vmem>>, vector<512x4xbf16>
    %cst_52 = arith.constant dense<0.000000e+00> : vector<8x4xf32>
    %108 = tpu.matmul %106, %107, %cst_52 {dimension_numbers = #tpu.dot_dimension_numbers<[1], [0], [0], [1], [0, 0, 1, 1], [], []>} : vector<8x512xbf16>, vector<512x4xbf16>, vector<8x4xf32> -> vector<8x4xf32>
    %c0_53 = arith.constant 0 : index
    %c0_54 = arith.constant 0 : index
    %109 = vector.load %arg17[%c0_53, %c0_54] : memref<1x4xf32, #tpu.memory_space<vmem>>, vector<1x4xf32>
    %110 = vector.broadcast %109 : vector<1x4xf32> to vector<8x4xf32>
    %111 = arith.addf %108, %110 : vector<8x4xf32>
    %112 = tpu.iota {dimensions = array<i32: 1>} : vector<8x4xi32>
    %c3_i32 = arith.constant 3 : i32
    %113 = vector.broadcast %c3_i32 : i32 to vector<8x4xi32>
    %114 = arith.cmpi slt, %112, %113 : vector<8x4xi32>
    %cst_55 = arith.constant 0.000000e+00 : f32
    %115 = vector.broadcast %cst_55 : f32 to vector<8x4xf32>
    %116 = arith.select %114, %111, %115 : vector<8x4xi1>, vector<8x4xf32>
    %cst_56 = arith.constant dense<0.000000e+00> : vector<8xf32>
    %117 = vector.multi_reduction <add>, %116, %cst_56 [1] : vector<8x4xf32> to vector<8xf32>
    %118 = vector.shape_cast %117 : vector<8xf32> to vector<8x1xf32>
    %c3_i32_57 = arith.constant 3 : i32
    %119 = vector.broadcast %c3_i32_57 : i32 to vector<8x4xi32>
    %120 = arith.cmpi eq, %112, %119 : vector<8x4xi32>
    %cst_58 = arith.constant 0.000000e+00 : f32
    %cst_59 = arith.constant 1.000000e+00 : f32
    %121 = vector.broadcast %cst_58 : f32 to vector<8x1xf32>
    %122 = arith.maximumf %121, %118 : vector<8x1xf32>
    %123 = vector.broadcast %cst_59 : f32 to vector<8x1xf32>
    %124 = arith.minimumf %123, %122 : vector<8x1xf32>
    %cst_60 = arith.constant 1.000000e+00 : f32
    %125 = vector.broadcast %cst_60 : f32 to vector<8x1xf32>
    %126 = arith.subf %125, %124 : vector<8x1xf32>
    %127 = vector.shape_cast %126 : vector<8x1xf32> to vector<8x1xf32>
    %128 = vector.broadcast %127 : vector<8x1xf32> to vector<8x4xf32>
    %129 = arith.select %120, %128, %111 : vector<8x4xi1>, vector<8x4xf32>
    %c0_61 = arith.constant 0 : index
    %c0_62 = arith.constant 0 : index
    %130 = vector.load %arg18[%c0_61, %c0_62] : memref<8x4xf32, #tpu.memory_space<vmem>>, vector<8x4xf32>
    tpu.vector_store %arg18[%c0_61, %c0_62], %129 {strides = array<i32>} : memref<8x4xf32, #tpu.memory_space<vmem>>, vector<8x4xf32>,
    return
  }
  func.func @transform_0(%arg0: i32) -> (i32, i32) {
    %c0_i32 = arith.constant 0 : i32
    %c0_i32_0 = arith.constant 0 : i32
    return %arg0, %c0_i32 : i32, i32
  }
  func.func @transform_1(%arg0: i32) -> (i32, i32) {
    %c0_i32 = arith.constant 0 : i32
    %c0_i32_0 = arith.constant 0 : i32
    return %arg0, %c0_i32 : i32, i32
  }
  func.func @transform_2(%arg0: i32) -> (i32, i32) {
    %c0_i32 = arith.constant 0 : i32
    %c0_i32_0 = arith.constant 0 : i32
    %c0_i32_1 = arith.constant 0 : i32
    return %c0_i32, %c0_i32_0 : i32, i32
  }
  func.func @transform_3(%arg0: i32) -> (i32, i32) {
    %c0_i32 = arith.constant 0 : i32
    %c0_i32_0 = arith.constant 0 : i32
    %c0_i32_1 = arith.constant 0 : i32
    return %c0_i32, %c0_i32_0 : i32, i32
  }
  func.func @transform_4(%arg0: i32) -> (i32, i32) {
    %c0_i32 = arith.constant 0 : i32
    %c0_i32_0 = arith.constant 0 : i32
    %c0_i32_1 = arith.constant 0 : i32
    return %c0_i32, %c0_i32_0 : i32, i32
  }
  func.func @transform_5(%arg0: i32) -> (i32, i32) {
    %c0_i32 = arith.constant 0 : i32
    %c0_i32_0 = arith.constant 0 : i32
    %c0_i32_1 = arith.constant 0 : i32
    return %c0_i32, %c0_i32_0 : i32, i32
  }
  func.func @transform_6(%arg0: i32) -> (i32, i32) {
    %c0_i32 = arith.constant 0 : i32
    %c0_i32_0 = arith.constant 0 : i32
    %c0_i32_1 = arith.constant 0 : i32
    return %c0_i32, %c0_i32_0 : i32, i32
  }
  func.func @transform_7(%arg0: i32) -> (i32, i32) {
    %c0_i32 = arith.constant 0 : i32
    %c0_i32_0 = arith.constant 0 : i32
    %c0_i32_1 = arith.constant 0 : i32
    return %c0_i32, %c0_i32_0 : i32, i32
  }
  func.func @transform_8(%arg0: i32) -> (i32, i32) {
    %c0_i32 = arith.constant 0 : i32
    %c0_i32_0 = arith.constant 0 : i32
    %c0_i32_1 = arith.constant 0 : i32
    return %c0_i32, %c0_i32_0 : i32, i32
  }
  func.func @transform_9(%arg0: i32) -> (i32, i32) {
    %c0_i32 = arith.constant 0 : i32
    %c0_i32_0 = arith.constant 0 : i32
    %c0_i32_1 = arith.constant 0 : i32
    return %c0_i32, %c0_i32_0 : i32, i32
  }
  func.func @transform_10(%arg0: i32) -> (i32, i32) {
    %c0_i32 = arith.constant 0 : i32
    %c0_i32_0 = arith.constant 0 : i32
    %c0_i32_1 = arith.constant 0 : i32
    return %c0_i32, %c0_i32_0 : i32, i32
  }
  func.func @transform_11(%arg0: i32) -> (i32, i32) {
    %c0_i32 = arith.constant 0 : i32
    %c0_i32_0 = arith.constant 0 : i32
    %c0_i32_1 = arith.constant 0 : i32
    return %c0_i32, %c0_i32_0 : i32, i32
  }
  func.func @transform_12(%arg0: i32) -> (i32, i32) {
    %c0_i32 = arith.constant 0 : i32
    %c0_i32_0 = arith.constant 0 : i32
    %c0_i32_1 = arith.constant 0 : i32
    return %c0_i32, %c0_i32_0 : i32, i32
  }
  func.func @transform_13(%arg0: i32) -> (i32, i32) {
    %c0_i32 = arith.constant 0 : i32
    %c0_i32_0 = arith.constant 0 : i32
    %c0_i32_1 = arith.constant 0 : i32
    return %c0_i32, %c0_i32_0 : i32, i32
  }
  func.func @transform_14(%arg0: i32) -> (i32, i32) {
    %c0_i32 = arith.constant 0 : i32
    %c0_i32_0 = arith.constant 0 : i32
    %c0_i32_1 = arith.constant 0 : i32
    return %c0_i32, %c0_i32_0 : i32, i32
  }
  func.func @transform_15(%arg0: i32) -> (i32, i32) {
    %c0_i32 = arith.constant 0 : i32
    %c0_i32_0 = arith.constant 0 : i32
    %c0_i32_1 = arith.constant 0 : i32
    return %c0_i32, %c0_i32_0 : i32, i32
  }
  func.func @transform_16(%arg0: i32) -> (i32, i32) {
    %c0_i32 = arith.constant 0 : i32
    %c0_i32_0 = arith.constant 0 : i32
    %c0_i32_1 = arith.constant 0 : i32
    return %c0_i32, %c0_i32_0 : i32, i32
  }
  func.func @transform_17(%arg0: i32) -> (i32, i32) {
    %c0_i32 = arith.constant 0 : i32
    %c0_i32_0 = arith.constant 0 : i32
    return %arg0, %c0_i32 : i32, i32
  }
}

</mosaic_0001>

<llo_original>
// kernel: sarcasm_forward.1
$region0: #{sarcasm_forward.1}
  #allocation0 [shape = 'u32[]', space=smem, size = 0x4, offset = 0x4, fixed_abs, tag = 'smem constant byte address 0x4 - core index']
  #allocation1 [shape = 'u32[144,128]{1,0:T(1,128)}', space=vmem, size = 0x12000, scoped, tag = 'internal scratch']
  %s0 = inlined_call_operand.vmem [shape: bf16[8,64], index: 0, kind: input, shape index: {}]
  %s1 = inlined_call_operand.vmem [shape: bf16[8,64], index: 1, kind: input, shape index: {}]
  %s2 = inlined_call_operand.vmem [shape: bf16[64,1024], index: 2, kind: input, shape index: {}]
  %s3 = inlined_call_operand.vmem [shape: bf16[64,1024], index: 3, kind: input, shape index: {}]
  %s4 = inlined_call_operand.vmem [shape: f32[1,1024], index: 4, kind: input, shape index: {}]
  %s5 = inlined_call_operand.vmem [shape: f32[1,1024], index: 5, kind: input, shape index: {}]
  %s6 = inlined_call_operand.vmem [shape: f32[1,1024], index: 6, kind: input, shape index: {}]
  %s7 = inlined_call_operand.vmem [shape: bf16[1024,768], index: 7, kind: input, shape index: {}]
  %s8 = inlined_call_operand.vmem [shape: f32[1,768], index: 8, kind: input, shape index: {}]
  %s9 = inlined_call_operand.vmem [shape: f32[1,768], index: 9, kind: input, shape index: {}]
  %s10 = inlined_call_operand.vmem [shape: f32[1,768], index: 10, kind: input, shape index: {}]
  %s11 = inlined_call_operand.vmem [shape: bf16[768,512], index: 11, kind: input, shape index: {}]
  %s12 = inlined_call_operand.vmem [shape: f32[1,512], index: 12, kind: input, shape index: {}]
  %s13 = inlined_call_operand.vmem [shape: f32[1,512], index: 13, kind: input, shape index: {}]
  %s14 = inlined_call_operand.vmem [shape: f32[1,512], index: 14, kind: input, shape index: {}]
  %s15 = inlined_call_operand.vmem [shape: bf16[512,4], index: 15, kind: input, shape index: {}]
  %s16 = inlined_call_operand.vmem [shape: f32[1,4], index: 16, kind: input, shape index: {}]
  %s17 = inlined_call_operand.vmem [shape: f32[8,4], index: 17, kind: output, shape index: {}]
  %s18 = sld [smem:[#allocation0]]
  $region78: #{sarcasm_forward.1} parent=0
    _
  %s20 = ssub.s32 1, %s18
  %s21 = scalar_select 0, %s20, %s18
  // Predicated region
  $region2: #{sarcasm_forward.1} parent=0 // pred_check
    _
  $region3: #{sarcasm_forward.1} parent=0 // pred_check_branch
    %23 = sbr.rel (0) target = $region5
  $region4: #{sarcasm_forward.1} parent=0 // pred_region
    _
  $region5: #{sarcasm_forward.1} parent=0 // pred_fallthru
    _
  // Predicated region
  $region6: #{sarcasm_forward.1} parent=0 // pred_check
    _
  $region7: #{sarcasm_forward.1} parent=0 // pred_check_branch
    %25 = sbr.rel (0) target = $region9
  $region8: #{sarcasm_forward.1} parent=0 // pred_region
    _
  $region9: #{sarcasm_forward.1} parent=0 // pred_fallthru
    _
  // Predicated region
  $region10: #{sarcasm_forward.1} parent=0 // pred_check
    _
  $region11: #{sarcasm_forward.1} parent=0 // pred_check_branch
    %27 = sbr.rel (0) target = $region13
  $region12: #{sarcasm_forward.1} parent=0 // pred_region
    _
  $region13: #{sarcasm_forward.1} parent=0 // pred_fallthru
    _
  // Predicated region
  $region14: #{sarcasm_forward.1} parent=0 // pred_check
    _
  $region15: #{sarcasm_forward.1} parent=0 // pred_check_branch
    %29 = sbr.rel (0) target = $region17
  $region16: #{sarcasm_forward.1} parent=0 // pred_region
    _
  $region17: #{sarcasm_forward.1} parent=0 // pred_fallthru
    _
  // Predicated region
  $region18: #{sarcasm_forward.1} parent=0 // pred_check
    _
  $region19: #{sarcasm_forward.1} parent=0 // pred_check_branch
    %31 = sbr.rel (0) target = $region21
  $region20: #{sarcasm_forward.1} parent=0 // pred_region
    _
  $region21: #{sarcasm_forward.1} parent=0 // pred_fallthru
    _
  // Predicated region
  $region22: #{sarcasm_forward.1} parent=0 // pred_check
    _
  $region23: #{sarcasm_forward.1} parent=0 // pred_check_branch
    %33 = sbr.rel (0) target = $region25
  $region24: #{sarcasm_forward.1} parent=0 // pred_region
    _
  $region25: #{sarcasm_forward.1} parent=0 // pred_fallthru
    _
  // Predicated region
  $region26: #{sarcasm_forward.1} parent=0 // pred_check
    _
  $region27: #{sarcasm_forward.1} parent=0 // pred_check_branch
    %35 = sbr.rel (0) target = $region29
  $region28: #{sarcasm_forward.1} parent=0 // pred_region
    _
  $region29: #{sarcasm_forward.1} parent=0 // pred_fallthru
    _
  // Predicated region
  $region30: #{sarcasm_forward.1} parent=0 // pred_check
    _
  $region31: #{sarcasm_forward.1} parent=0 // pred_check_branch
    %37 = sbr.rel (0) target = $region33
  $region32: #{sarcasm_forward.1} parent=0 // pred_region
    _
  $region33: #{sarcasm_forward.1} parent=0 // pred_fallthru
    _
  // Predicated region
  $region34: #{sarcasm_forward.1} parent=0 // pred_check
    _
  $region35: #{sarcasm_forward.1} parent=0 // pred_check_branch
    %39 = sbr.rel (0) target = $region37
  $region36: #{sarcasm_forward.1} parent=0 // pred_region
    _
  $region37: #{sarcasm_forward.1} parent=0 // pred_fallthru
    _
  // Predicated region
  $region38: #{sarcasm_forward.1} parent=0 // pred_check
    _
  $region39: #{sarcasm_forward.1} parent=0 // pred_check_branch
    %41 = sbr.rel (0) target = $region41
  $region40: #{sarcasm_forward.1} parent=0 // pred_region
    _
  $region41: #{sarcasm_forward.1} parent=0 // pred_fallthru
    _
  // Predicated region
  $region42: #{sarcasm_forward.1} parent=0 // pred_check
    _
  $region43: #{sarcasm_forward.1} parent=0 // pred_check_branch
    %43 = sbr.rel (0) target = $region45
  $region44: #{sarcasm_forward.1} parent=0 // pred_region
    _
  $region45: #{sarcasm_forward.1} parent=0 // pred_fallthru
    _
  // Predicated region
  $region46: #{sarcasm_forward.1} parent=0 // pred_check
    _
  $region47: #{sarcasm_forward.1} parent=0 // pred_check_branch
    %45 = sbr.rel (0) target = $region49
  $region48: #{sarcasm_forward.1} parent=0 // pred_region
    _
  $region49: #{sarcasm_forward.1} parent=0 // pred_fallthru
    _
  // Predicated region
  $region50: #{sarcasm_forward.1} parent=0 // pred_check
    _
  $region51: #{sarcasm_forward.1} parent=0 // pred_check_branch
    %47 = sbr.rel (0) target = $region53
  $region52: #{sarcasm_forward.1} parent=0 // pred_region
    _
  $region53: #{sarcasm_forward.1} parent=0 // pred_fallthru
    _
  // Predicated region
  $region54: #{sarcasm_forward.1} parent=0 // pred_check
    _
  $region55: #{sarcasm_forward.1} parent=0 // pred_check_branch
    %49 = sbr.rel (0) target = $region57
  $region56: #{sarcasm_forward.1} parent=0 // pred_region
    _
  $region57: #{sarcasm_forward.1} parent=0 // pred_fallthru
    _
  // Predicated region
  $region58: #{sarcasm_forward.1} parent=0 // pred_check
    _
  $region59: #{sarcasm_forward.1} parent=0 // pred_check_branch
    %51 = sbr.rel (0) target = $region61
  $region60: #{sarcasm_forward.1} parent=0 // pred_region
    _
  $region61: #{sarcasm_forward.1} parent=0 // pred_fallthru
    _
  // Predicated region
  $region62: #{sarcasm_forward.1} parent=0 // pred_check
    _
  $region63: #{sarcasm_forward.1} parent=0 // pred_check_branch
    %53 = sbr.rel (0) target = $region65
  $region64: #{sarcasm_forward.1} parent=0 // pred_region
    _
  $region65: #{sarcasm_forward.1} parent=0 // pred_fallthru
    _
  // Predicated region
  $region66: #{sarcasm_forward.1} parent=0 // pred_check
    _
  $region67: #{sarcasm_forward.1} parent=0 // pred_check_branch
    %55 = sbr.rel (0) target = $region69
  $region68: #{sarcasm_forward.1} parent=0 // pred_region
    _
  $region69: #{sarcasm_forward.1} parent=0 // pred_fallthru
    _
  %v57 = vld [vmem:[%s0] sm:$0xf]
  %v58 = vld [vmem:[%s2] sm:$0xff]
  %v59 = vld [vmem:[%s2 + $0x8] sm:$0xff]
  %v60 = vld [vmem:[%s2 + $0x10] sm:$0xff]
  %v61 = vld [vmem:[%s2 + $0x18] sm:$0xff]
  %v62 = vld [vmem:[%s2 + $0x20] sm:$0xff]
  %v63 = vld [vmem:[%s2 + $0x28] sm:$0xff]
  %v64 = vld [vmem:[%s2 + $0x30] sm:$0xff]
  %v65 = vld [vmem:[%s2 + $0x38] sm:$0xff]
  %v66 = vld [vmem:[%s2 + $0x40] sm:$0xff]
  %v67 = vld [vmem:[%s2 + $0x48] sm:$0xff]
  %v68 = vld [vmem:[%s2 + $0x50] sm:$0xff]
  %v69 = vld [vmem:[%s2 + $0x58] sm:$0xff]
  %v70 = vld [vmem:[%s2 + $0x60] sm:$0xff]
  %v71 = vld [vmem:[%s2 + $0x68] sm:$0xff]
  %v72 = vld [vmem:[%s2 + $0x70] sm:$0xff]
  %v73 = vld [vmem:[%s2 + $0x78] sm:$0xff]
  %v74 = vld [vmem:[%s2 + $0x80] sm:$0xff]
  %v75 = vld [vmem:[%s2 + $0x88] sm:$0xff]
  %v76 = vld [vmem:[%s2 + $0x90] sm:$0xff]
  %v77 = vld [vmem:[%s2 + $0x98] sm:$0xff]
  %v78 = vld [vmem:[%s2 + $0xa0] sm:$0xff]
  %v79 = vld [vmem:[%s2 + $0xa8] sm:$0xff]
  %v80 = vld [vmem:[%s2 + $0xb0] sm:$0xff]
  %v81 = vld [vmem:[%s2 + $0xb8] sm:$0xff]
  %v82 = vld [vmem:[%s2 + $0xc0] sm:$0xff]
  %v83 = vld [vmem:[%s2 + $0xc8] sm:$0xff]
  %v84 = vld [vmem:[%s2 + $0xd0] sm:$0xff]
  %v85 = vld [vmem:[%s2 + $0xd8] sm:$0xff]
  %v86 = vld [vmem:[%s2 + $0xe0] sm:$0xff]
  %v87 = vld [vmem:[%s2 + $0xe8] sm:$0xff]
  %v88 = vld [vmem:[%s2 + $0xf0] sm:$0xff]
  %v89 = vld [vmem:[%s2 + $0xf8] sm:$0xff]
  %v90 = vld [vmem:[%s1] sm:$0xf]
  %v91 = vld [vmem:[%s3] sm:$0xff]
  %v92 = vld [vmem:[%s3 + $0x8] sm:$0xff]
  %v93 = vld [vmem:[%s3 + $0x10] sm:$0xff]
  %v94 = vld [vmem:[%s3 + $0x18] sm:$0xff]
  %v95 = vld [vmem:[%s3 + $0x20] sm:$0xff]
  %v96 = vld [vmem:[%s3 + $0x28] sm:$0xff]
  %v97 = vld [vmem:[%s3 + $0x30] sm:$0xff]
  %v98 = vld [vmem:[%s3 + $0x38] sm:$0xff]
  %v99 = vld [vmem:[%s3 + $0x40] sm:$0xff]
  %v100 = vld [vmem:[%s3 + $0x48] sm:$0xff]
  %v101 = vld [vmem:[%s3 + $0x50] sm:$0xff]
  %v102 = vld [vmem:[%s3 + $0x58] sm:$0xff]
  %v103 = vld [vmem:[%s3 + $0x60] sm:$0xff]
  %v104 = vld [vmem:[%s3 + $0x68] sm:$0xff]
  %v105 = vld [vmem:[%s3 + $0x70] sm:$0xff]
  %v106 = vld [vmem:[%s3 + $0x78] sm:$0xff]
  %v107 = vld [vmem:[%s3 + $0x80] sm:$0xff]
  %v108 = vld [vmem:[%s3 + $0x88] sm:$0xff]
  %v109 = vld [vmem:[%s3 + $0x90] sm:$0xff]
  %v110 = vld [vmem:[%s3 + $0x98] sm:$0xff]
  %v111 = vld [vmem:[%s3 + $0xa0] sm:$0xff]
  %v112 = vld [vmem:[%s3 + $0xa8] sm:$0xff]
  %v113 = vld [vmem:[%s3 + $0xb0] sm:$0xff]
  %v114 = vld [vmem:[%s3 + $0xb8] sm:$0xff]
  %v115 = vld [vmem:[%s3 + $0xc0] sm:$0xff]
  %v116 = vld [vmem:[%s3 + $0xc8] sm:$0xff]
  %v117 = vld [vmem:[%s3 + $0xd0] sm:$0xff]
  %v118 = vld [vmem:[%s3 + $0xd8] sm:$0xff]
  %v119 = vld [vmem:[%s3 + $0xe0] sm:$0xff]
  %v120 = vld [vmem:[%s3 + $0xe8] sm:$0xff]
  %v121 = vld [vmem:[%s3 + $0xf0] sm:$0xff]
  %v122 = vld [vmem:[%s3 + $0xf8] sm:$0xff]
  %v155 = vunpack.c.l.b16 %v91
  %v156 = vunpack.c.h.b16 %v91
  %v157 = vunpack.c.l.b16 %v92
  %v158 = vunpack.c.h.b16 %v92
  %v159 = vunpack.c.l.b16 %v93
  %v160 = vunpack.c.h.b16 %v93
  %v161 = vunpack.c.l.b16 %v94
  %v162 = vunpack.c.h.b16 %v94
  %v163 = vunpack.c.l.b16 %v95
  %v164 = vunpack.c.h.b16 %v95
  %v165 = vunpack.c.l.b16 %v96
  %v166 = vunpack.c.h.b16 %v96
  %v167 = vunpack.c.l.b16 %v97
  %v168 = vunpack.c.h.b16 %v97
  %v169 = vunpack.c.l.b16 %v98
  %v170 = vunpack.c.h.b16 %v98
  %v171 = vunpack.c.l.b16 %v99
  %v172 = vunpack.c.h.b16 %v99
  %v173 = vunpack.c.l.b16 %v100
  %v174 = vunpack.c.h.b16 %v100
  %v175 = vunpack.c.l.b16 %v101
  %v176 = vunpack.c.h.b16 %v101
  %v177 = vunpack.c.l.b16 %v102
  %v178 = vunpack.c.h.b16 %v102
  %v179 = vunpack.c.l.b16 %v103
  %v180 = vunpack.c.h.b16 %v103
  %v181 = vunpack.c.l.b16 %v104
  %v182 = vunpack.c.h.b16 %v104
  %v183 = vunpack.c.l.b16 %v105
  %v184 = vunpack.c.h.b16 %v105
  %v185 = vunpack.c.l.b16 %v106
  %v186 = vunpack.c.h.b16 %v106
  %v187 = vunpack.c.l.b16 %v107
  %v188 = vunpack.c.h.b16 %v107
  %v189 = vunpack.c.l.b16 %v108
  %v190 = vunpack.c.h.b16 %v108
  %v191 = vunpack.c.l.b16 %v109
  %v192 = vunpack.c.h.b16 %v109
  %v193 = vunpack.c.l.b16 %v110
  %v194 = vunpack.c.h.b16 %v110
  %v195 = vunpack.c.l.b16 %v111
  %v196 = vunpack.c.h.b16 %v111
  %v197 = vunpack.c.l.b16 %v112
  %v198 = vunpack.c.h.b16 %v112
  %v199 = vunpack.c.l.b16 %v113
  %v200 = vunpack.c.h.b16 %v113
  %v201 = vunpack.c.l.b16 %v114
  %v202 = vunpack.c.h.b16 %v114
  %v203 = vunpack.c.l.b16 %v115
  %v204 = vunpack.c.h.b16 %v115
  %v205 = vunpack.c.l.b16 %v116
  %v206 = vunpack.c.h.b16 %v116
  %v207 = vunpack.c.l.b16 %v117
  %v208 = vunpack.c.h.b16 %v117
  %v209 = vunpack.c.l.b16 %v118
  %v210 = vunpack.c.h.b16 %v118
  %v211 = vunpack.c.l.b16 %v119
  %v212 = vunpack.c.h.b16 %v119
  %v213 = vunpack.c.l.b16 %v120
  %v214 = vunpack.c.h.b16 %v120
  %v215 = vunpack.c.l.b16 %v121
  %v216 = vunpack.c.h.b16 %v121
  %v217 = vunpack.c.l.b16 %v122
  %v218 = vunpack.c.h.b16 %v122
  %v219 = vpack.c.b16 %v163, %v155
  %v220 = vpack.c.b16 %v164, %v156
  %v221 = vpack.c.b16 %v165, %v157
  %v222 = vpack.c.b16 %v166, %v158
  %v223 = vpack.c.b16 %v167, %v159
  %v224 = vpack.c.b16 %v168, %v160
  %v225 = vpack.c.b16 %v169, %v161
  %v226 = vpack.c.b16 %v170, %v162
  %v227 = vpack.c.b16 %v179, %v171
  %v228 = vpack.c.b16 %v180, %v172
  %v229 = vpack.c.b16 %v181, %v173
  %v230 = vpack.c.b16 %v182, %v174
  %v231 = vpack.c.b16 %v183, %v175
  %v232 = vpack.c.b16 %v184, %v176
  %v233 = vpack.c.b16 %v185, %v177
  %v234 = vpack.c.b16 %v186, %v178
  %v235 = vpack.c.b16 %v195, %v187
  %v236 = vpack.c.b16 %v196, %v188
  %v237 = vpack.c.b16 %v197, %v189
  %v238 = vpack.c.b16 %v198, %v190
  %v239 = vpack.c.b16 %v199, %v191
  %v240 = vpack.c.b16 %v200, %v192
  %v241 = vpack.c.b16 %v201, %v193
  %v242 = vpack.c.b16 %v202, %v194
  %v243 = vpack.c.b16 %v211, %v203
  %v244 = vpack.c.b16 %v212, %v204
  %v245 = vpack.c.b16 %v213, %v205
  %v246 = vpack.c.b16 %v214, %v206
  %v247 = vpack.c.b16 %v215, %v207
  %v248 = vpack.c.b16 %v216, %v208
  %v249 = vpack.c.b16 %v217, %v209
  %v250 = vpack.c.b16 %v218, %v210
  %vm283 = vcmask 523264
  %v285 = vsel %vm283, %v90, 0
  %287 = vmatprep.subr.bf16.mxu0 %v220
  %288 = vmatpush1.bf16.msra.mxu0 %v219
  %289 = vmatprep.subr.bf16.mxu0 %v228
  %290 = vmatpush1.bf16.msra.mxu0 %v227
  %291 = vmatprep.subr.bf16.mxu0 %v236
  %292 = vmatpush1.bf16.msra.mxu0 %v235
  %293 = vmatprep.subr.bf16.mxu0 %v244
  %294 = vmatpush1.bf16.msra.mxu0 %v243
  %295 = vmatprep.subr.bf16.mxu0 0
  %296 = vmatpush1.bf16.msra.mxu0 0
  %297 = vmatprep.subr.bf16.mxu0 0
  %298 = vmatpush1.bf16.msra.mxu0 0
  %299 = vmatprep.subr.bf16.mxu0 0
  %300 = vmatpush1.bf16.msra.mxu0 0
  %301 = vmatprep.subr.bf16.mxu0 0
  %302 = vmatpush1.bf16.msra.mxu0 0
  %303 = vmatprep.subr.bf16.mxu0 0
  %304 = vmatpush1.bf16.msra.mxu0 0
  %305 = vmatprep.subr.bf16.mxu0 0
  %306 = vmatpush1.bf16.msra.mxu0 0
  %307 = vmatprep.subr.bf16.mxu0 0
  %308 = vmatpush1.bf16.msra.mxu0 0
  %309 = vmatprep.subr.bf16.mxu0 0
  %310 = vmatpush1.bf16.msra.mxu0 0
  %311 = vmatprep.subr.bf16.mxu0 0
  %312 = vmatpush1.bf16.msra.mxu0 0
  %313 = vmatprep.subr.bf16.mxu0 0
  %314 = vmatpush1.bf16.msra.mxu0 0
  %315 = vmatprep.subr.bf16.mxu0 0
  %316 = vmatpush1.bf16.msra.mxu0 0
  %317 = vmatprep.subr.bf16.mxu0 0
  %318 = vmatpush1.bf16.msra.mxu0 0
  %319 = vmatprep.mubr.bf16.mxu0 0
  %320 = vmatmul.mubr.bf16.gmra.mrb[0].mxu0 %v285
  %v321 = vpop.f32.mrb[0].mxu0
  %v322 = vadd.f32 0.0, %v321
  %v323 = vpop.f32.mrb[0].mxu0
  %v324 = vadd.f32 0.0, %v323
  %v325 = vpop.f32.mrb[0].mxu0
  %v326 = vpop.f32.mrb[0].mxu0
  %327 = vdwg.mxu0
  %328 = vmatprep.subr.bf16.mxu0 %v222
  %329 = vmatpush1.bf16.msra.mxu0 %v221
  %330 = vmatprep.subr.bf16.mxu0 %v230
  %331 = vmatpush1.bf16.msra.mxu0 %v229
  %332 = vmatprep.subr.bf16.mxu0 %v238
  %333 = vmatpush1.bf16.msra.mxu0 %v237
  %334 = vmatprep.subr.bf16.mxu0 %v246
  %335 = vmatpush1.bf16.msra.mxu0 %v245
  %336 = vmatprep.subr.bf16.mxu0 0
  %337 = vmatpush1.bf16.msra.mxu0 0
  %338 = vmatprep.subr.bf16.mxu0 0
  %339 = vmatpush1.bf16.msra.mxu0 0
  %340 = vmatprep.subr.bf16.mxu0 0
  %341 = vmatpush1.bf16.msra.mxu0 0
  %342 = vmatprep.subr.bf16.mxu0 0
  %343 = vmatpush1.bf16.msra.mxu0 0
  %344 = vmatprep.subr.bf16.mxu0 0
  %345 = vmatpush1.bf16.msra.mxu0 0
  %346 = vmatprep.subr.bf16.mxu0 0
  %347 = vmatpush1.bf16.msra.mxu0 0
  %348 = vmatprep.subr.bf16.mxu0 0
  %349 = vmatpush1.bf16.msra.mxu0 0
  %350 = vmatprep.subr.bf16.mxu0 0
  %351 = vmatpush1.bf16.msra.mxu0 0
  %352 = vmatprep.subr.bf16.mxu0 0
  %353 = vmatpush1.bf16.msra.mxu0 0
  %354 = vmatprep.subr.bf16.mxu0 0
  %355 = vmatpush1.bf16.msra.mxu0 0
  %356 = vmatprep.subr.bf16.mxu0 0
  %357 = vmatpush1.bf16.msra.mxu0 0
  %358 = vmatprep.subr.bf16.mxu0 0
  %359 = vmatpush1.bf16.msra.mxu0 0
  %360 = vmatprep.mubr.bf16.mxu0 0
  %361 = vmatmul.mubr.bf16.gmra.mrb[0].mxu0 %v285
  %v362 = vpop.f32.mrb[0].mxu0
  %v363 = vadd.f32 0.0, %v362
  %v364 = vpop.f32.mrb[0].mxu0
  %v365 = vadd.f32 0.0, %v364
  %v366 = vpop.f32.mrb[0].mxu0
  %v367 = vpop.f32.mrb[0].mxu0
  %368 = vdwg.mxu0
  %369 = vmatprep.subr.bf16.mxu0 %v224
  %370 = vmatpush1.bf16.msra.mxu0 %v223
  %371 = vmatprep.subr.bf16.mxu0 %v232
  %372 = vmatpush1.bf16.msra.mxu0 %v231
  %373 = vmatprep.subr.bf16.mxu0 %v240
  %374 = vmatpush1.bf16.msra.mxu0 %v239
  %375 = vmatprep.subr.bf16.mxu0 %v248
  %376 = vmatpush1.bf16.msra.mxu0 %v247
  %377 = vmatprep.subr.bf16.mxu0 0
  %378 = vmatpush1.bf16.msra.mxu0 0
  %379 = vmatprep.subr.bf16.mxu0 0
  %380 = vmatpush1.bf16.msra.mxu0 0
  %381 = vmatprep.subr.bf16.mxu0 0
  %382 = vmatpush1.bf16.msra.mxu0 0
  %383 = vmatprep.subr.bf16.mxu0 0
  %384 = vmatpush1.bf16.msra.mxu0 0
  %385 = vmatprep.subr.bf16.mxu0 0
  %386 = vmatpush1.bf16.msra.mxu0 0
  %387 = vmatprep.subr.bf16.mxu0 0
  %388 = vmatpush1.bf16.msra.mxu0 0
  %389 = vmatprep.subr.bf16.mxu0 0
  %390 = vmatpush1.bf16.msra.mxu0 0
  %391 = vmatprep.subr.bf16.mxu0 0
  %392 = vmatpush1.bf16.msra.mxu0 0
  %393 = vmatprep.subr.bf16.mxu0 0
  %394 = vmatpush1.bf16.msra.mxu0 0
  %395 = vmatprep.subr.bf16.mxu0 0
  %396 = vmatpush1.bf16.msra.mxu0 0
  %397 = vmatprep.subr.bf16.mxu0 0
  %398 = vmatpush1.bf16.msra.mxu0 0
  %399 = vmatprep.subr.bf16.mxu0 0
  %400 = vmatpush1.bf16.msra.mxu0 0
  %401 = vmatprep.mubr.bf16.mxu0 0
  %402 = vmatmul.mubr.bf16.gmra.mrb[0].mxu0 %v285
  %v403 = vpop.f32.mrb[0].mxu0
  %v404 = vadd.f32 0.0, %v403
  %v405 = vpop.f32.mrb[0].mxu0
  %v406 = vadd.f32 0.0, %v405
  %v407 = vpop.f32.mrb[0].mxu0
  %v408 = vpop.f32.mrb[0].mxu0
  %409 = vdwg.mxu0
  %410 = vmatprep.subr.bf16.mxu0 %v226
  %411 = vmatpush1.bf16.msra.mxu0 %v225
  %412 = vmatprep.subr.bf16.mxu0 %v234
  %413 = vmatpush1.bf16.msra.mxu0 %v233
  %414 = vmatprep.subr.bf16.mxu0 %v242
  %415 = vmatpush1.bf16.msra.mxu0 %v241
  %416 = vmatprep.subr.bf16.mxu0 %v250
  %417 = vmatpush1.bf16.msra.mxu0 %v249
  %418 = vmatprep.subr.bf16.mxu0 0
  %419 = vmatpush1.bf16.msra.mxu0 0
  %420 = vmatprep.subr.bf16.mxu0 0
  %421 = vmatpush1.bf16.msra.mxu0 0
  %422 = vmatprep.subr.bf16.mxu0 0
  %423 = vmatpush1.bf16.msra.mxu0 0
  %424 = vmatprep.subr.bf16.mxu0 0
  %425 = vmatpush1.bf16.msra.mxu0 0
  %426 = vmatprep.subr.bf16.mxu0 0
  %427 = vmatpush1.bf16.msra.mxu0 0
  %428 = vmatprep.subr.bf16.mxu0 0
  %429 = vmatpush1.bf16.msra.mxu0 0
  %430 = vmatprep.subr.bf16.mxu0 0
  %431 = vmatpush1.bf16.msra.mxu0 0
  %432 = vmatprep.subr.bf16.mxu0 0
  %433 = vmatpush1.bf16.msra.mxu0 0
  %434 = vmatprep.subr.bf16.mxu0 0
  %435 = vmatpush1.bf16.msra.mxu0 0
  %436 = vmatprep.subr.bf16.mxu0 0
  %437 = vmatpush1.bf16.msra.mxu0 0
  %438 = vmatprep.subr.bf16.mxu0 0
  %439 = vmatpush1.bf16.msra.mxu0 0
  %440 = vmatprep.subr.bf16.mxu0 0
  %441 = vmatpush1.bf16.msra.mxu0 0
  %442 = vmatprep.mubr.bf16.mxu0 0
  %443 = vmatmul.mubr.bf16.gmra.mrb[0].mxu0 %v285
  %v444 = vpop.f32.mrb[0].mxu0
  %v445 = vadd.f32 0.0, %v444
  %v446 = vpop.f32.mrb[0].mxu0
  %v447 = vadd.f32 0.0, %v446
  %v448 = vpop.f32.mrb[0].mxu0
  %v449 = vpop.f32.mrb[0].mxu0
  %450 = vdwg.mxu0
  %v483 = vunpack.c.l.b16 %v58
  %v484 = vunpack.c.h.b16 %v58
  %v485 = vunpack.c.l.b16 %v59
  %v486 = vunpack.c.h.b16 %v59
  %v487 = vunpack.c.l.b16 %v60
  %v488 = vunpack.c.h.b16 %v60
  %v489 = vunpack.c.l.b16 %v61
  %v490 = vunpack.c.h.b16 %v61
  %v491 = vunpack.c.l.b16 %v62
  %v492 = vunpack.c.h.b16 %v62
  %v493 = vunpack.c.l.b16 %v63
  %v494 = vunpack.c.h.b16 %v63
  %v495 = vunpack.c.l.b16 %v64
  %v496 = vunpack.c.h.b16 %v64
  %v497 = vunpack.c.l.b16 %v65
  %v498 = vunpack.c.h.b16 %v65
  %v499 = vunpack.c.l.b16 %v66
  %v500 = vunpack.c.h.b16 %v66
  %v501 = vunpack.c.l.b16 %v67
  %v502 = vunpack.c.h.b16 %v67
  %v503 = vunpack.c.l.b16 %v68
  %v504 = vunpack.c.h.b16 %v68
  %v505 = vunpack.c.l.b16 %v69
  %v506 = vunpack.c.h.b16 %v69
  %v507 = vunpack.c.l.b16 %v70
  %v508 = vunpack.c.h.b16 %v70
  %v509 = vunpack.c.l.b16 %v71
  %v510 = vunpack.c.h.b16 %v71
  %v511 = vunpack.c.l.b16 %v72
  %v512 = vunpack.c.h.b16 %v72
  %v513 = vunpack.c.l.b16 %v73
  %v514 = vunpack.c.h.b16 %v73
  %v515 = vunpack.c.l.b16 %v74
  %v516 = vunpack.c.h.b16 %v74
  %v517 = vunpack.c.l.b16 %v75
  %v518 = vunpack.c.h.b16 %v75
  %v519 = vunpack.c.l.b16 %v76
  %v520 = vunpack.c.h.b16 %v76
  %v521 = vunpack.c.l.b16 %v77
  %v522 = vunpack.c.h.b16 %v77
  %v523 = vunpack.c.l.b16 %v78
  %v524 = vunpack.c.h.b16 %v78
  %v525 = vunpack.c.l.b16 %v79
  %v526 = vunpack.c.h.b16 %v79
  %v527 = vunpack.c.l.b16 %v80
  %v528 = vunpack.c.h.b16 %v80
  %v529 = vunpack.c.l.b16 %v81
  %v530 = vunpack.c.h.b16 %v81
  %v531 = vunpack.c.l.b16 %v82
  %v532 = vunpack.c.h.b16 %v82
  %v533 = vunpack.c.l.b16 %v83
  %v534 = vunpack.c.h.b16 %v83
  %v535 = vunpack.c.l.b16 %v84
  %v536 = vunpack.c.h.b16 %v84
  %v537 = vunpack.c.l.b16 %v85
  %v538 = vunpack.c.h.b16 %v85
  %v539 = vunpack.c.l.b16 %v86
  %v540 = vunpack.c.h.b16 %v86
  %v541 = vunpack.c.l.b16 %v87
  %v542 = vunpack.c.h.b16 %v87
  %v543 = vunpack.c.l.b16 %v88
  %v544 = vunpack.c.h.b16 %v88
  %v545 = vunpack.c.l.b16 %v89
  %v546 = vunpack.c.h.b16 %v89
  %v547 = vpack.c.b16 %v491, %v483
  %v548 = vpack.c.b16 %v492, %v484
  %v549 = vpack.c.b16 %v493, %v485
  %v550 = vpack.c.b16 %v494, %v486
  %v551 = vpack.c.b16 %v495, %v487
  %v552 = vpack.c.b16 %v496, %v488
  %v553 = vpack.c.b16 %v497, %v489
  %v554 = vpack.c.b16 %v498, %v490
  %v555 = vpack.c.b16 %v507, %v499
  %v556 = vpack.c.b16 %v508, %v500
  %v557 = vpack.c.b16 %v509, %v501
  %v558 = vpack.c.b16 %v510, %v502
  %v559 = vpack.c.b16 %v511, %v503
  %v560 = vpack.c.b16 %v512, %v504
  %v561 = vpack.c.b16 %v513, %v505
  %v562 = vpack.c.b16 %v514, %v506
  %v563 = vpack.c.b16 %v523, %v515
  %v564 = vpack.c.b16 %v524, %v516
  %v565 = vpack.c.b16 %v525, %v517
  %v566 = vpack.c.b16 %v526, %v518
  %v567 = vpack.c.b16 %v527, %v519
  %v568 = vpack.c.b16 %v528, %v520
  %v569 = vpack.c.b16 %v529, %v521
  %v570 = vpack.c.b16 %v530, %v522
  %v571 = vpack.c.b16 %v539, %v531
  %v572 = vpack.c.b16 %v540, %v532
  %v573 = vpack.c.b16 %v541, %v533
  %v574 = vpack.c.b16 %v542, %v534
  %v575 = vpack.c.b16 %v543, %v535
  %v576 = vpack.c.b16 %v544, %v536
  %v577 = vpack.c.b16 %v545, %v537
  %v578 = vpack.c.b16 %v546, %v538
  %v612 = vsel %vm283, %v57, 0
  %614 = vmatprep.subr.bf16.mxu0 %v548
  %615 = vmatpush1.bf16.msra.mxu0 %v547
  %616 = vmatprep.subr.bf16.mxu0 %v556
  %617 = vmatpush1.bf16.msra.mxu0 %v555
  %618 = vmatprep.subr.bf16.mxu0 %v564
  %619 = vmatpush1.bf16.msra.mxu0 %v563
  %620 = vmatprep.subr.bf16.mxu0 %v572
  %621 = vmatpush1.bf16.msra.mxu0 %v571
  %622 = vmatprep.subr.bf16.mxu0 0
  %623 = vmatpush1.bf16.msra.mxu0 0
  %624 = vmatprep.subr.bf16.mxu0 0
  %625 = vmatpush1.bf16.msra.mxu0 0
  %626 = vmatprep.subr.bf16.mxu0 0
  %627 = vmatpush1.bf16.msra.mxu0 0
  %628 = vmatprep.subr.bf16.mxu0 0
  %629 = vmatpush1.bf16.msra.mxu0 0
  %630 = vmatprep.subr.bf16.mxu0 0
  %631 = vmatpush1.bf16.msra.mxu0 0
  %632 = vmatprep.subr.bf16.mxu0 0
  %633 = vmatpush1.bf16.msra.mxu0 0
  %634 = vmatprep.subr.bf16.mxu0 0
  %635 = vmatpush1.bf16.msra.mxu0 0
  %636 = vmatprep.subr.bf16.mxu0 0
  %637 = vmatpush1.bf16.msra.mxu0 0
  %638 = vmatprep.subr.bf16.mxu0 0
  %639 = vmatpush1.bf16.msra.mxu0 0
  %640 = vmatprep.subr.bf16.mxu0 0
  %641 = vmatpush1.bf16.msra.mxu0 0
  %642 = vmatprep.subr.bf16.mxu0 0
  %643 = vmatpush1.bf16.msra.mxu0 0
  %644 = vmatprep.subr.bf16.mxu0 0
  %645 = vmatpush1.bf16.msra.mxu0 0
  %646 = vmatprep.mubr.bf16.mxu0 0
  %647 = vmatmul.mubr.bf16.gmra.mrb[0].mxu0 %v612
  %v648 = vpop.f32.mrb[0].mxu0
  %v649 = vadd.f32 %v322, %v648
  %v650 = vpop.f32.mrb[0].mxu0
  %v651 = vadd.f32 %v324, %v650
  %v652 = vpop.f32.mrb[0].mxu0
  %v653 = vpop.f32.mrb[0].mxu0
  %654 = vdwg.mxu0
  %655 = vmatprep.subr.bf16.mxu0 %v550
  %656 = vmatpush1.bf16.msra.mxu0 %v549
  %657 = vmatprep.subr.bf16.mxu0 %v558
  %658 = vmatpush1.bf16.msra.mxu0 %v557
  %659 = vmatprep.subr.bf16.mxu0 %v566
  %660 = vmatpush1.bf16.msra.mxu0 %v565
  %661 = vmatprep.subr.bf16.mxu0 %v574
  %662 = vmatpush1.bf16.msra.mxu0 %v573
  %663 = vmatprep.subr.bf16.mxu0 0
  %664 = vmatpush1.bf16.msra.mxu0 0
  %665 = vmatprep.subr.bf16.mxu0 0
  %666 = vmatpush1.bf16.msra.mxu0 0
  %667 = vmatprep.subr.bf16.mxu0 0
  %668 = vmatpush1.bf16.msra.mxu0 0
  %669 = vmatprep.subr.bf16.mxu0 0
  %670 = vmatpush1.bf16.msra.mxu0 0
  %671 = vmatprep.subr.bf16.mxu0 0
  %672 = vmatpush1.bf16.msra.mxu0 0
  %673 = vmatprep.subr.bf16.mxu0 0
  %674 = vmatpush1.bf16.msra.mxu0 0
  %675 = vmatprep.subr.bf16.mxu0 0
  %676 = vmatpush1.bf16.msra.mxu0 0
  %677 = vmatprep.subr.bf16.mxu0 0
  %678 = vmatpush1.bf16.msra.mxu0 0
  %679 = vmatprep.subr.bf16.mxu0 0
  %680 = vmatpush1.bf16.msra.mxu0 0
  %681 = vmatprep.subr.bf16.mxu0 0
  %682 = vmatpush1.bf16.msra.mxu0 0
  %683 = vmatprep.subr.bf16.mxu0 0
  %684 = vmatpush1.bf16.msra.mxu0 0
  %685 = vmatprep.subr.bf16.mxu0 0
  %686 = vmatpush1.bf16.msra.mxu0 0
  %687 = vmatprep.mubr.bf16.mxu0 0
  %688 = vmatmul.mubr.bf16.gmra.mrb[0].mxu0 %v612
  %v689 = vpop.f32.mrb[0].mxu0
  %v690 = vadd.f32 %v363, %v689
  %v691 = vpop.f32.mrb[0].mxu0
  %v692 = vadd.f32 %v365, %v691
  %v693 = vpop.f32.mrb[0].mxu0
  %v694 = vpop.f32.mrb[0].mxu0
  %695 = vdwg.mxu0
  %696 = vmatprep.subr.bf16.mxu0 %v552
  %697 = vmatpush1.bf16.msra.mxu0 %v551
  %698 = vmatprep.subr.bf16.mxu0 %v560
  %699 = vmatpush1.bf16.msra.mxu0 %v559
  %700 = vmatprep.subr.bf16.mxu0 %v568
  %701 = vmatpush1.bf16.msra.mxu0 %v567
  %702 = vmatprep.subr.bf16.mxu0 %v576
  %703 = vmatpush1.bf16.msra.mxu0 %v575
  %704 = vmatprep.subr.bf16.mxu0 0
  %705 = vmatpush1.bf16.msra.mxu0 0
  %706 = vmatprep.subr.bf16.mxu0 0
  %707 = vmatpush1.bf16.msra.mxu0 0
  %708 = vmatprep.subr.bf16.mxu0 0
  %709 = vmatpush1.bf16.msra.mxu0 0
  %710 = vmatprep.subr.bf16.mxu0 0
  %711 = vmatpush1.bf16.msra.mxu0 0
  %712 = vmatprep.subr.bf16.mxu0 0
  %713 = vmatpush1.bf16.msra.mxu0 0
  %714 = vmatprep.subr.bf16.mxu0 0
  %715 = vmatpush1.bf16.msra.mxu0 0
  %716 = vmatprep.subr.bf16.mxu0 0
  %717 = vmatpush1.bf16.msra.mxu0 0
  %718 = vmatprep.subr.bf16.mxu0 0
  %719 = vmatpush1.bf16.msra.mxu0 0
  %720 = vmatprep.subr.bf16.mxu0 0
  %721 = vmatpush1.bf16.msra.mxu0 0
  %722 = vmatprep.subr.bf16.mxu0 0
  %723 = vmatpush1.bf16.msra.mxu0 0
  %724 = vmatprep.subr.bf16.mxu0 0
  %725 = vmatpush1.bf16.msra.mxu0 0
  %726 = vmatprep.subr.bf16.mxu0 0
  %727 = vmatpush1.bf16.msra.mxu0 0
  %728 = vmatprep.mubr.bf16.mxu0 0
  %729 = vmatmul.mubr.bf16.gmra.mrb[0].mxu0 %v612
  %v730 = vpop.f32.mrb[0].mxu0
  %v731 = vadd.f32 %v404, %v730
  %v732 = vpop.f32.mrb[0].mxu0
  %v733 = vadd.f32 %v406, %v732
  %v734 = vpop.f32.mrb[0].mxu0
  %v735 = vpop.f32.mrb[0].mxu0
  %736 = vdwg.mxu0
  %737 = vmatprep.subr.bf16.mxu0 %v554
  %738 = vmatpush1.bf16.msra.mxu0 %v553
  %739 = vmatprep.subr.bf16.mxu0 %v562
  %740 = vmatpush1.bf16.msra.mxu0 %v561
  %741 = vmatprep.subr.bf16.mxu0 %v570
  %742 = vmatpush1.bf16.msra.mxu0 %v569
  %743 = vmatprep.subr.bf16.mxu0 %v578
  %744 = vmatpush1.bf16.msra.mxu0 %v577
  %745 = vmatprep.subr.bf16.mxu0 0
  %746 = vmatpush1.bf16.msra.mxu0 0
  %747 = vmatprep.subr.bf16.mxu0 0
  %748 = vmatpush1.bf16.msra.mxu0 0
  %749 = vmatprep.subr.bf16.mxu0 0
  %750 = vmatpush1.bf16.msra.mxu0 0
  %751 = vmatprep.subr.bf16.mxu0 0
  %752 = vmatpush1.bf16.msra.mxu0 0
  %753 = vmatprep.subr.bf16.mxu0 0
  %754 = vmatpush1.bf16.msra.mxu0 0
  %755 = vmatprep.subr.bf16.mxu0 0
  %756 = vmatpush1.bf16.msra.mxu0 0
  %757 = vmatprep.subr.bf16.mxu0 0
  %758 = vmatpush1.bf16.msra.mxu0 0
  %759 = vmatprep.subr.bf16.mxu0 0
  %760 = vmatpush1.bf16.msra.mxu0 0
  %761 = vmatprep.subr.bf16.mxu0 0
  %762 = vmatpush1.bf16.msra.mxu0 0
  %763 = vmatprep.subr.bf16.mxu0 0
  %764 = vmatpush1.bf16.msra.mxu0 0
  %765 = vmatprep.subr.bf16.mxu0 0
  %766 = vmatpush1.bf16.msra.mxu0 0
  %767 = vmatprep.subr.bf16.mxu0 0
  %768 = vmatpush1.bf16.msra.mxu0 0
  %769 = vmatprep.mubr.bf16.mxu0 0
  %770 = vmatmul.mubr.bf16.gmra.mrb[0].mxu0 %v612
  %v771 = vpop.f32.mrb[0].mxu0
  %v772 = vadd.f32 %v445, %v771
  %v773 = vpop.f32.mrb[0].mxu0
  %v774 = vadd.f32 %v447, %v773
  %v775 = vpop.f32.mrb[0].mxu0
  %v776 = vpop.f32.mrb[0].mxu0
  %777 = vdwg.mxu0
  %v778 = vld [vmem:[%s4] sm:$0xff]
  %v780 = vlaneseq
  %v781 = vshrl.u32 %v780, 7
  %v782 = vsub.s32 0, %v781
  %v783 = vrot.slane %v778, %v782
  %v784 = vlaneseq
  %v785 = vshrl.u32 %v784, 7
  %v786 = vsub.s32 1, %v785
  %v787 = vrot.slane %v778, %v786
  %v788 = vlaneseq
  %v789 = vshrl.u32 %v788, 7
  %v790 = vsub.s32 2, %v789
  %v791 = vrot.slane %v778, %v790
  %v792 = vlaneseq
  %v793 = vshrl.u32 %v792, 7
  %v794 = vsub.s32 3, %v793
  %v795 = vrot.slane %v778, %v794
  %v796 = vlaneseq
  %v797 = vshrl.u32 %v796, 7
  %v798 = vsub.s32 4, %v797
  %v799 = vrot.slane %v778, %v798
  %v800 = vlaneseq
  %v801 = vshrl.u32 %v800, 7
  %v802 = vsub.s32 5, %v801
  %v803 = vrot.slane %v778, %v802
  %v804 = vlaneseq
  %v805 = vshrl.u32 %v804, 7
  %v806 = vsub.s32 6, %v805
  %v807 = vrot.slane %v778, %v806
  %v808 = vlaneseq
  %v809 = vshrl.u32 %v808, 7
  %v810 = vsub.s32 7, %v809
  %v811 = vrot.slane %v778, %v810
  %v820 = vadd.f32 %v649, %v783
  %v821 = vadd.f32 %v651, %v787
  %v822 = vadd.f32 %v690, %v791
  %v823 = vadd.f32 %v692, %v795
  %v824 = vadd.f32 %v731, %v799
  %v825 = vadd.f32 %v733, %v803
  %v826 = vadd.f32 %v772, %v807
  %v827 = vadd.f32 %v774, %v811
  %v828 = vld [vmem:[%s5] sm:$0xff]
  %v829 = vld [vmem:[%s6] sm:$0xff]
  %v830 = vadd.f32 %v820, %v821
  %v831 = vadd.f32 %v830, %v822
  %v832 = vadd.f32 %v831, %v823
  %v833 = vadd.f32 %v832, %v824
  %v834 = vadd.f32 %v833, %v825
  %v835 = vadd.f32 %v834, %v826
  %v836 = vadd.f32 %v835, %v827
  %837 = vadd.xlane.f32.xlu0 %v836
  %v838 = vpop.xlane.xlu0 %837
  %v839 = vrcp.pop 1024.0
  %v840 = vmul.f32 %v838, %v839
  %v841 = vsub.f32 %v820, %v840
  %v842 = vsub.f32 %v821, %v840
  %v843 = vsub.f32 %v822, %v840
  %v844 = vsub.f32 %v823, %v840
  %v845 = vsub.f32 %v824, %v840
  %v846 = vsub.f32 %v825, %v840
  %v847 = vsub.f32 %v826, %v840
  %v848 = vsub.f32 %v827, %v840
  %v849 = vmul.f32 %v841, %v841
  %v850 = vmul.f32 %v842, %v842
  %v851 = vmul.f32 %v843, %v843
  %v852 = vmul.f32 %v844, %v844
  %v853 = vmul.f32 %v845, %v845
  %v854 = vmul.f32 %v846, %v846
  %v855 = vmul.f32 %v847, %v847
  %v856 = vmul.f32 %v848, %v848
  %v857 = vadd.f32 %v849, %v850
  %v858 = vadd.f32 %v857, %v851
  %v859 = vadd.f32 %v858, %v852
  %v860 = vadd.f32 %v859, %v853
  %v861 = vadd.f32 %v860, %v854
  %v862 = vadd.f32 %v861, %v855
  %v863 = vadd.f32 %v862, %v856
  %864 = vadd.xlane.f32.xlu0 %v863
  %v865 = vpop.xlane.xlu0 %864
  %v866 = vmul.f32 %v865, %v839
  %v867 = vadd.f32 %v866, 1e-05
  %v868 = vrsqrt.pop %v867
  %v869 = vmul.f32 %v841, %v868
  %v870 = vmul.f32 %v842, %v868
  %v871 = vmul.f32 %v843, %v868
  %v872 = vmul.f32 %v844, %v868
  %v873 = vmul.f32 %v845, %v868
  %v874 = vmul.f32 %v846, %v868
  %v875 = vmul.f32 %v847, %v868
  %v876 = vmul.f32 %v848, %v868
  %v878 = vlaneseq
  %v879 = vshrl.u32 %v878, 7
  %v880 = vsub.s32 0, %v879
  %v881 = vrot.slane %v828, %v880
  %v882 = vlaneseq
  %v883 = vshrl.u32 %v882, 7
  %v884 = vsub.s32 1, %v883
  %v885 = vrot.slane %v828, %v884
  %v886 = vlaneseq
  %v887 = vshrl.u32 %v886, 7
  %v888 = vsub.s32 2, %v887
  %v889 = vrot.slane %v828, %v888
  %v890 = vlaneseq
  %v891 = vshrl.u32 %v890, 7
  %v892 = vsub.s32 3, %v891
  %v893 = vrot.slane %v828, %v892
  %v894 = vlaneseq
  %v895 = vshrl.u32 %v894, 7
  %v896 = vsub.s32 4, %v895
  %v897 = vrot.slane %v828, %v896
  %v898 = vlaneseq
  %v899 = vshrl.u32 %v898, 7
  %v900 = vsub.s32 5, %v899
  %v901 = vrot.slane %v828, %v900
  %v902 = vlaneseq
  %v903 = vshrl.u32 %v902, 7
  %v904 = vsub.s32 6, %v903
  %v905 = vrot.slane %v828, %v904
  %v906 = vlaneseq
  %v907 = vshrl.u32 %v906, 7
  %v908 = vsub.s32 7, %v907
  %v909 = vrot.slane %v828, %v908
  %v918 = vmul.f32 %v869, %v881
  %v919 = vmul.f32 %v870, %v885
  %v920 = vmul.f32 %v871, %v889
  %v921 = vmul.f32 %v872, %v893
  %v922 = vmul.f32 %v873, %v897
  %v923 = vmul.f32 %v874, %v901
  %v924 = vmul.f32 %v875, %v905
  %v925 = vmul.f32 %v876, %v909
  %v927 = vlaneseq
  %v928 = vshrl.u32 %v927, 7
  %v929 = vsub.s32 0, %v928
  %v930 = vrot.slane %v829, %v929
  %v931 = vlaneseq
  %v932 = vshrl.u32 %v931, 7
  %v933 = vsub.s32 1, %v932
  %v934 = vrot.slane %v829, %v933
  %v935 = vlaneseq
  %v936 = vshrl.u32 %v935, 7
  %v937 = vsub.s32 2, %v936
  %v938 = vrot.slane %v829, %v937
  %v939 = vlaneseq
  %v940 = vshrl.u32 %v939, 7
  %v941 = vsub.s32 3, %v940
  %v942 = vrot.slane %v829, %v941
  %v943 = vlaneseq
  %v944 = vshrl.u32 %v943, 7
  %v945 = vsub.s32 4, %v944
  %v946 = vrot.slane %v829, %v945
  %v947 = vlaneseq
  %v948 = vshrl.u32 %v947, 7
  %v949 = vsub.s32 5, %v948
  %v950 = vrot.slane %v829, %v949
  %v951 = vlaneseq
  %v952 = vshrl.u32 %v951, 7
  %v953 = vsub.s32 6, %v952
  %v954 = vrot.slane %v829, %v953
  %v955 = vlaneseq
  %v956 = vshrl.u32 %v955, 7
  %v957 = vsub.s32 7, %v956
  %v958 = vrot.slane %v829, %v957
  %v967 = vadd.f32 %v918, %v930
  %v968 = vadd.f32 %v919, %v934
  %v969 = vadd.f32 %v920, %v938
  %v970 = vadd.f32 %v921, %v942
  %v971 = vadd.f32 %v922, %v946
  %v972 = vadd.f32 %v923, %v950
  %v973 = vadd.f32 %v924, %v954
  %v974 = vadd.f32 %v925, %v958
  %v975 = vmax.f32 %v967, 0.0
  %v976 = vmax.f32 %v968, 0.0
  %v977 = vmax.f32 %v969, 0.0
  %v978 = vmax.f32 %v970, 0.0
  %v979 = vmax.f32 %v971, 0.0
  %v980 = vmax.f32 %v972, 0.0
  %v981 = vmax.f32 %v973, 0.0
  %v982 = vmax.f32 %v974, 0.0
  %v983 = vpack.c.bf16 %v975, %v975
  %v984 = vpack.c.bf16 %v976, %v976
  %v985 = vpack.c.bf16 %v977, %v977
  %v986 = vpack.c.bf16 %v978, %v978
  %v987 = vpack.c.bf16 %v979, %v979
  %v988 = vpack.c.bf16 %v980, %v980
  %v989 = vpack.c.bf16 %v981, %v981
  %v990 = vpack.c.bf16 %v982, %v982
  %v991 = vld [vmem:[%s7] sm:$0xff]
  %v992 = vld [vmem:[%s7 + $0x8] sm:$0xff]
  %v993 = vld [vmem:[%s7 + $0x10] sm:$0xff]
  %v994 = vld [vmem:[%s7 + $0x18] sm:$0xff]
  %v995 = vld [vmem:[%s7 + $0x20] sm:$0xff]
  %v996 = vld [vmem:[%s7 + $0x28] sm:$0xff]
  %v997 = vld [vmem:[%s7 + $0x30] sm:$0xff]
  %v998 = vld [vmem:[%s7 + $0x38] sm:$0xff]
  %v999 = vld [vmem:[%s7 + $0x40] sm:$0xff]
  %v1000 = vld [vmem:[%s7 + $0x48] sm:$0xff]
  %v1001 = vld [vmem:[%s7 + $0x50] sm:$0xff]
  %v1002 = vld [vmem:[%s7 + $0x58] sm:$0xff]
  %v1003 = vld [vmem:[%s7 + $0x60] sm:$0xff]
  %v1004 = vld [vmem:[%s7 + $0x68] sm:$0xff]
  %v1005 = vld [vmem:[%s7 + $0x70] sm:$0xff]
  %v1006 = vld [vmem:[%s7 + $0x78] sm:$0xff]
  %v1007 = vld [vmem:[%s7 + $0x80] sm:$0xff]
  %v1008 = vld [vmem:[%s7 + $0x88] sm:$0xff]
  %v1009 = vld [vmem:[%s7 + $0x90] sm:$0xff]
  %v1010 = vld [vmem:[%s7 + $0x98] sm:$0xff]
  %v1011 = vld [vmem:[%s7 + $0xa0] sm:$0xff]
  %v1012 = vld [vmem:[%s7 + $0xa8] sm:$0xff]
  %v1013 = vld [vmem:[%s7 + $0xb0] sm:$0xff]
  %v1014 = vld [vmem:[%s7 + $0xb8] sm:$0xff]
  %v1015 = vld [vmem:[%s7 + $0xc0] sm:$0xff]
  %v1016 = vld [vmem:[%s7 + $0xc8] sm:$0xff]
  %v1017 = vld [vmem:[%s7 + $0xd0] sm:$0xff]
  %v1018 = vld [vmem:[%s7 + $0xd8] sm:$0xff]
  %v1019 = vld [vmem:[%s7 + $0xe0] sm:$0xff]
  %v1020 = vld [vmem:[%s7 + $0xe8] sm:$0xff]
  %v1021 = vld [vmem:[%s7 + $0xf0] sm:$0xff]
  %v1022 = vld [vmem:[%s7 + $0xf8] sm:$0xff]
  %v1023 = vld [vmem:[%s7 + $0x100] sm:$0xff]
  %v1024 = vld [vmem:[%s7 + $0x108] sm:$0xff]
  %v1025 = vld [vmem:[%s7 + $0x110] sm:$0xff]
  %v1026 = vld [vmem:[%s7 + $0x118] sm:$0xff]
  %v1027 = vld [vmem:[%s7 + $0x120] sm:$0xff]
  %v1028 = vld [vmem:[%s7 + $0x128] sm:$0xff]
  %v1029 = vld [vmem:[%s7 + $0x130] sm:$0xff]
  %v1030 = vld [vmem:[%s7 + $0x138] sm:$0xff]
  %v1031 = vld [vmem:[%s7 + $0x140] sm:$0xff]
  %v1032 = vld [vmem:[%s7 + $0x148] sm:$0xff]
  %v1033 = vld [vmem:[%s7 + $0x150] sm:$0xff]
  %v1034 = vld [vmem:[%s7 + $0x158] sm:$0xff]
  %v1035 = vld [vmem:[%s7 + $0x160] sm:$0xff]
  %v1036 = vld [vmem:[%s7 + $0x168] sm:$0xff]
  %v1037 = vld [vmem:[%s7 + $0x170] sm:$0xff]
  %v1038 = vld [vmem:[%s7 + $0x178] sm:$0xff]
  %v1039 = vld [vmem:[%s7 + $0x180] sm:$0xff]
  %v1040 = vld [vmem:[%s7 + $0x188] sm:$0xff]
  %v1041 = vld [vmem:[%s7 + $0x190] sm:$0xff]
  %v1042 = vld [vmem:[%s7 + $0x198] sm:$0xff]
  %v1043 = vld [vmem:[%s7 + $0x1a0] sm:$0xff]
  %v1044 = vld [vmem:[%s7 + $0x1a8] sm:$0xff]
  %v1045 = vld [vmem:[%s7 + $0x1b0] sm:$0xff]
  %v1046 = vld [vmem:[%s7 + $0x1b8] sm:$0xff]
  %v1047 = vld [vmem:[%s7 + $0x1c0] sm:$0xff]
  %v1048 = vld [vmem:[%s7 + $0x1c8] sm:$0xff]
  %v1049 = vld [vmem:[%s7 + $0x1d0] sm:$0xff]
  %v1050 = vld [vmem:[%s7 + $0x1d8] sm:$0xff]
  %v1051 = vld [vmem:[%s7 + $0x1e0] sm:$0xff]
  %v1052 = vld [vmem:[%s7 + $0x1e8] sm:$0xff]
  %v1053 = vld [vmem:[%s7 + $0x1f0] sm:$0xff]
  %v1054 = vld [vmem:[%s7 + $0x1f8] sm:$0xff]
  %v1055 = vld [vmem:[%s7 + $0x200] sm:$0xff]
  %v1056 = vld [vmem:[%s7 + $0x208] sm:$0xff]
  %v1057 = vld [vmem:[%s7 + $0x210] sm:$0xff]
  %v1058 = vld [vmem:[%s7 + $0x218] sm:$0xff]
  %v1059 = vld [vmem:[%s7 + $0x220] sm:$0xff]
  %v1060 = vld [vmem:[%s7 + $0x228] sm:$0xff]
  %v1061 = vld [vmem:[%s7 + $0x230] sm:$0xff]
  %v1062 = vld [vmem:[%s7 + $0x238] sm:$0xff]
  %v1063 = vld [vmem:[%s7 + $0x240] sm:$0xff]
  %v1064 = vld [vmem:[%s7 + $0x248] sm:$0xff]
  %v1065 = vld [vmem:[%s7 + $0x250] sm:$0xff]
  %v1066 = vld [vmem:[%s7 + $0x258] sm:$0xff]
  %v1067 = vld [vmem:[%s7 + $0x260] sm:$0xff]
  %v1068 = vld [vmem:[%s7 + $0x268] sm:$0xff]
  %v1069 = vld [vmem:[%s7 + $0x270] sm:$0xff]
  %v1070 = vld [vmem:[%s7 + $0x278] sm:$0xff]
  %v1071 = vld [vmem:[%s7 + $0x280] sm:$0xff]
  %v1072 = vld [vmem:[%s7 + $0x288] sm:$0xff]
  %v1073 = vld [vmem:[%s7 + $0x290] sm:$0xff]
  %v1074 = vld [vmem:[%s7 + $0x298] sm:$0xff]
  %v1075 = vld [vmem:[%s7 + $0x2a0] sm:$0xff]
  %v1076 = vld [vmem:[%s7 + $0x2a8] sm:$0xff]
  %v1077 = vld [vmem:[%s7 + $0x2b0] sm:$0xff]
  %v1078 = vld [vmem:[%s7 + $0x2b8] sm:$0xff]
  %v1079 = vld [vmem:[%s7 + $0x2c0] sm:$0xff]
  %v1080 = vld [vmem:[%s7 + $0x2c8] sm:$0xff]
  %v1081 = vld [vmem:[%s7 + $0x2d0] sm:$0xff]
  %v1082 = vld [vmem:[%s7 + $0x2d8] sm:$0xff]
  %v1083 = vld [vmem:[%s7 + $0x2e0] sm:$0xff]
  %v1084 = vld [vmem:[%s7 + $0x2e8] sm:$0xff]
  %v1085 = vld [vmem:[%s7 + $0x2f0] sm:$0xff]
  %v1086 = vld [vmem:[%s7 + $0x2f8] sm:$0xff]
  %v1087 = vld [vmem:[%s7 + $0x300] sm:$0xff]
  %v1088 = vld [vmem:[%s7 + $0x308] sm:$0xff]
  %v1089 = vld [vmem:[%s7 + $0x310] sm:$0xff]
  %v1090 = vld [vmem:[%s7 + $0x318] sm:$0xff]
  %v1091 = vld [vmem:[%s7 + $0x320] sm:$0xff]
  %v1092 = vld [vmem:[%s7 + $0x328] sm:$0xff]
  %v1093 = vld [vmem:[%s7 + $0x330] sm:$0xff]
  %v1094 = vld [vmem:[%s7 + $0x338] sm:$0xff]
  %v1095 = vld [vmem:[%s7 + $0x340] sm:$0xff]
  %v1096 = vld [vmem:[%s7 + $0x348] sm:$0xff]
  %v1097 = vld [vmem:[%s7 + $0x350] sm:$0xff]
  %v1098 = vld [vmem:[%s7 + $0x358] sm:$0xff]
  %v1099 = vld [vmem:[%s7 + $0x360] sm:$0xff]
  %v1100 = vld [vmem:[%s7 + $0x368] sm:$0xff]
  %v1101 = vld [vmem:[%s7 + $0x370] sm:$0xff]
  %v1102 = vld [vmem:[%s7 + $0x378] sm:$0xff]
  %v1103 = vld [vmem:[%s7 + $0x380] sm:$0xff]
  %v1104 = vld [vmem:[%s7 + $0x388] sm:$0xff]
  %v1105 = vld [vmem:[%s7 + $0x390] sm:$0xff]
  %v1106 = vld [vmem:[%s7 + $0x398] sm:$0xff]
  %v1107 = vld [vmem:[%s7 + $0x3a0] sm:$0xff]
  %v1108 = vld [vmem:[%s7 + $0x3a8] sm:$0xff]
  %v1109 = vld [vmem:[%s7 + $0x3b0] sm:$0xff]
  %v1110 = vld [vmem:[%s7 + $0x3b8] sm:$0xff]
  %v1111 = vld [vmem:[%s7 + $0x3c0] sm:$0xff]
  %v1112 = vld [vmem:[%s7 + $0x3c8] sm:$0xff]
  %v1113 = vld [vmem:[%s7 + $0x3d0] sm:$0xff]
  %v1114 = vld [vmem:[%s7 + $0x3d8] sm:$0xff]
  %v1115 = vld [vmem:[%s7 + $0x3e0] sm:$0xff]
  %v1116 = vld [vmem:[%s7 + $0x3e8] sm:$0xff]
  %v1117 = vld [vmem:[%s7 + $0x3f0] sm:$0xff]
  %v1118 = vld [vmem:[%s7 + $0x3f8] sm:$0xff]
  %v1119 = vld [vmem:[%s7 + $0x400] sm:$0xff]
  %v1120 = vld [vmem:[%s7 + $0x408] sm:$0xff]
  %v1121 = vld [vmem:[%s7 + $0x410] sm:$0xff]
  %v1122 = vld [vmem:[%s7 + $0x418] sm:$0xff]
  %v1123 = vld [vmem:[%s7 + $0x420] sm:$0xff]
  %v1124 = vld [vmem:[%s7 + $0x428] sm:$0xff]
  %v1125 = vld [vmem:[%s7 + $0x430] sm:$0xff]
  %v1126 = vld [vmem:[%s7 + $0x438] sm:$0xff]
  %v1127 = vld [vmem:[%s7 + $0x440] sm:$0xff]
  %v1128 = vld [vmem:[%s7 + $0x448] sm:$0xff]
  %v1129 = vld [vmem:[%s7 + $0x450] sm:$0xff]
  %v1130 = vld [vmem:[%s7 + $0x458] sm:$0xff]
  %v1131 = vld [vmem:[%s7 + $0x460] sm:$0xff]
  %v1132 = vld [vmem:[%s7 + $0x468] sm:$0xff]
  %v1133 = vld [vmem:[%s7 + $0x470] sm:$0xff]
  %v1134 = vld [vmem:[%s7 + $0x478] sm:$0xff]
  %v1135 = vld [vmem:[%s7 + $0x480] sm:$0xff]
  %v1136 = vld [vmem:[%s7 + $0x488] sm:$0xff]
  %v1137 = vld [vmem:[%s7 + $0x490] sm:$0xff]
  %v1138 = vld [vmem:[%s7 + $0x498] sm:$0xff]
  %v1139 = vld [vmem:[%s7 + $0x4a0] sm:$0xff]
  %v1140 = vld [vmem:[%s7 + $0x4a8] sm:$0xff]
  %v1141 = vld [vmem:[%s7 + $0x4b0] sm:$0xff]
  %v1142 = vld [vmem:[%s7 + $0x4b8] sm:$0xff]
  %v1143 = vld [vmem:[%s7 + $0x4c0] sm:$0xff]
  %v1144 = vld [vmem:[%s7 + $0x4c8] sm:$0xff]
  %v1145 = vld [vmem:[%s7 + $0x4d0] sm:$0xff]
  %v1146 = vld [vmem:[%s7 + $0x4d8] sm:$0xff]
  %v1147 = vld [vmem:[%s7 + $0x4e0] sm:$0xff]
  %v1148 = vld [vmem:[%s7 + $0x4e8] sm:$0xff]
  %v1149 = vld [vmem:[%s7 + $0x4f0] sm:$0xff]
  %v1150 = vld [vmem:[%s7 + $0x4f8] sm:$0xff]
  %v1151 = vld [vmem:[%s7 + $0x500] sm:$0xff]
  %v1152 = vld [vmem:[%s7 + $0x508] sm:$0xff]
  %v1153 = vld [vmem:[%s7 + $0x510] sm:$0xff]
  %v1154 = vld [vmem:[%s7 + $0x518] sm:$0xff]
  %v1155 = vld [vmem:[%s7 + $0x520] sm:$0xff]
  %v1156 = vld [vmem:[%s7 + $0x528] sm:$0xff]
  %v1157 = vld [vmem:[%s7 + $0x530] sm:$0xff]
  %v1158 = vld [vmem:[%s7 + $0x538] sm:$0xff]
  %v1159 = vld [vmem:[%s7 + $0x540] sm:$0xff]
  %v1160 = vld [vmem:[%s7 + $0x548] sm:$0xff]
  %v1161 = vld [vmem:[%s7 + $0x550] sm:$0xff]
  %v1162 = vld [vmem:[%s7 + $0x558] sm:$0xff]
  %v1163 = vld [vmem:[%s7 + $0x560] sm:$0xff]
  %v1164 = vld [vmem:[%s7 + $0x568] sm:$0xff]
  %v1165 = vld [vmem:[%s7 + $0x570] sm:$0xff]
  %v1166 = vld [vmem:[%s7 + $0x578] sm:$0xff]
  %v1167 = vld [vmem:[%s7 + $0x580] sm:$0xff]
  %v1168 = vld [vmem:[%s7 + $0x588] sm:$0xff]
  %v1169 = vld [vmem:[%s7 + $0x590] sm:$0xff]
  %v1170 = vld [vmem:[%s7 + $0x598] sm:$0xff]
  %v1171 = vld [vmem:[%s7 + $0x5a0] sm:$0xff]
  %v1172 = vld [vmem:[%s7 + $0x5a8] sm:$0xff]
  %v1173 = vld [vmem:[%s7 + $0x5b0] sm:$0xff]
  %v1174 = vld [vmem:[%s7 + $0x5b8] sm:$0xff]
  %v1175 = vld [vmem:[%s7 + $0x5c0] sm:$0xff]
  %v1176 = vld [vmem:[%s7 + $0x5c8] sm:$0xff]
  %v1177 = vld [vmem:[%s7 + $0x5d0] sm:$0xff]
  %v1178 = vld [vmem:[%s7 + $0x5d8] sm:$0xff]
  %v1179 = vld [vmem:[%s7 + $0x5e0] sm:$0xff]
  %v1180 = vld [vmem:[%s7 + $0x5e8] sm:$0xff]
  %v1181 = vld [vmem:[%s7 + $0x5f0] sm:$0xff]
  %v1182 = vld [vmem:[%s7 + $0x5f8] sm:$0xff]
  %v1183 = vld [vmem:[%s7 + $0x600] sm:$0xff]
  %v1184 = vld [vmem:[%s7 + $0x608] sm:$0xff]
  %v1185 = vld [vmem:[%s7 + $0x610] sm:$0xff]
  %v1186 = vld [vmem:[%s7 + $0x618] sm:$0xff]
  %v1187 = vld [vmem:[%s7 + $0x620] sm:$0xff]
  %v1188 = vld [vmem:[%s7 + $0x628] sm:$0xff]
  %v1189 = vld [vmem:[%s7 + $0x630] sm:$0xff]
  %v1190 = vld [vmem:[%s7 + $0x638] sm:$0xff]
  %v1191 = vld [vmem:[%s7 + $0x640] sm:$0xff]
  %v1192 = vld [vmem:[%s7 + $0x648] sm:$0xff]
  %v1193 = vld [vmem:[%s7 + $0x650] sm:$0xff]
  %v1194 = vld [vmem:[%s7 + $0x658] sm:$0xff]
  %v1195 = vld [vmem:[%s7 + $0x660] sm:$0xff]
  %v1196 = vld [vmem:[%s7 + $0x668] sm:$0xff]
  %v1197 = vld [vmem:[%s7 + $0x670] sm:$0xff]
  %v1198 = vld [vmem:[%s7 + $0x678] sm:$0xff]
  %v1199 = vld [vmem:[%s7 + $0x680] sm:$0xff]
  %v1200 = vld [vmem:[%s7 + $0x688] sm:$0xff]
  %v1201 = vld [vmem:[%s7 + $0x690] sm:$0xff]
  %v1202 = vld [vmem:[%s7 + $0x698] sm:$0xff]
  %v1203 = vld [vmem:[%s7 + $0x6a0] sm:$0xff]
  %v1204 = vld [vmem:[%s7 + $0x6a8] sm:$0xff]
  %v1205 = vld [vmem:[%s7 + $0x6b0] sm:$0xff]
  %v1206 = vld [vmem:[%s7 + $0x6b8] sm:$0xff]
  %v1207 = vld [vmem:[%s7 + $0x6c0] sm:$0xff]
  %v1208 = vld [vmem:[%s7 + $0x6c8] sm:$0xff]
  %v1209 = vld [vmem:[%s7 + $0x6d0] sm:$0xff]
  %v1210 = vld [vmem:[%s7 + $0x6d8] sm:$0xff]
  %v1211 = vld [vmem:[%s7 + $0x6e0] sm:$0xff]
  %v1212 = vld [vmem:[%s7 + $0x6e8] sm:$0xff]
  %v1213 = vld [vmem:[%s7 + $0x6f0] sm:$0xff]
  %v1214 = vld [vmem:[%s7 + $0x6f8] sm:$0xff]
  %v1215 = vld [vmem:[%s7 + $0x700] sm:$0xff]
  %v1216 = vld [vmem:[%s7 + $0x708] sm:$0xff]
  %v1217 = vld [vmem:[%s7 + $0x710] sm:$0xff]
  %v1218 = vld [vmem:[%s7 + $0x718] sm:$0xff]
  %v1219 = vld [vmem:[%s7 + $0x720] sm:$0xff]
  %v1220 = vld [vmem:[%s7 + $0x728] sm:$0xff]
  %v1221 = vld [vmem:[%s7 + $0x730] sm:$0xff]
  %v1222 = vld [vmem:[%s7 + $0x738] sm:$0xff]
  %v1223 = vld [vmem:[%s7 + $0x740] sm:$0xff]
  %v1224 = vld [vmem:[%s7 + $0x748] sm:$0xff]
  %v1225 = vld [vmem:[%s7 + $0x750] sm:$0xff]
  %v1226 = vld [vmem:[%s7 + $0x758] sm:$0xff]
  %v1227 = vld [vmem:[%s7 + $0x760] sm:$0xff]
  %v1228 = vld [vmem:[%s7 + $0x768] sm:$0xff]
  %v1229 = vld [vmem:[%s7 + $0x770] sm:$0xff]
  %v1230 = vld [vmem:[%s7 + $0x778] sm:$0xff]
  %v1231 = vld [vmem:[%s7 + $0x780] sm:$0xff]
  %v1232 = vld [vmem:[%s7 + $0x788] sm:$0xff]
  %v1233 = vld [vmem:[%s7 + $0x790] sm:$0xff]
  %v1234 = vld [vmem:[%s7 + $0x798] sm:$0xff]
  %v1235 = vld [vmem:[%s7 + $0x7a0] sm:$0xff]
  %v1236 = vld [vmem:[%s7 + $0x7a8] sm:$0xff]
  %v1237 = vld [vmem:[%s7 + $0x7b0] sm:$0xff]
  %v1238 = vld [vmem:[%s7 + $0x7b8] sm:$0xff]
  %v1239 = vld [vmem:[%s7 + $0x7c0] sm:$0xff]
  %v1240 = vld [vmem:[%s7 + $0x7c8] sm:$0xff]
  %v1241 = vld [vmem:[%s7 + $0x7d0] sm:$0xff]
  %v1242 = vld [vmem:[%s7 + $0x7d8] sm:$0xff]
  %v1243 = vld [vmem:[%s7 + $0x7e0] sm:$0xff]
  %v1244 = vld [vmem:[%s7 + $0x7e8] sm:$0xff]
  %v1245 = vld [vmem:[%s7 + $0x7f0] sm:$0xff]
  %v1246 = vld [vmem:[%s7 + $0x7f8] sm:$0xff]
  %v1247 = vld [vmem:[%s7 + $0x800] sm:$0xff]
  %v1248 = vld [vmem:[%s7 + $0x808] sm:$0xff]
  %v1249 = vld [vmem:[%s7 + $0x810] sm:$0xff]
  %v1250 = vld [vmem:[%s7 + $0x818] sm:$0xff]
  %v1251 = vld [vmem:[%s7 + $0x820] sm:$0xff]
  %v1252 = vld [vmem:[%s7 + $0x828] sm:$0xff]
  %v1253 = vld [vmem:[%s7 + $0x830] sm:$0xff]
  %v1254 = vld [vmem:[%s7 + $0x838] sm:$0xff]
  %v1255 = vld [vmem:[%s7 + $0x840] sm:$0xff]
  %v1256 = vld [vmem:[%s7 + $0x848] sm:$0xff]
  %v1257 = vld [vmem:[%s7 + $0x850] sm:$0xff]
  %v1258 = vld [vmem:[%s7 + $0x858] sm:$0xff]
  %v1259 = vld [vmem:[%s7 + $0x860] sm:$0xff]
  %v1260 = vld [vmem:[%s7 + $0x868] sm:$0xff]
  %v1261 = vld [vmem:[%s7 + $0x870] sm:$0xff]
  %v1262 = vld [vmem:[%s7 + $0x878] sm:$0xff]
  %v1263 = vld [vmem:[%s7 + $0x880] sm:$0xff]
  %v1264 = vld [vmem:[%s7 + $0x888] sm:$0xff]
  %v1265 = vld [vmem:[%s7 + $0x890] sm:$0xff]
  %v1266 = vld [vmem:[%s7 + $0x898] sm:$0xff]
  %v1267 = vld [vmem:[%s7 + $0x8a0] sm:$0xff]
  %v1268 = vld [vmem:[%s7 + $0x8a8] sm:$0xff]
  %v1269 = vld [vmem:[%s7 + $0x8b0] sm:$0xff]
  %v1270 = vld [vmem:[%s7 + $0x8b8] sm:$0xff]
  %v1271 = vld [vmem:[%s7 + $0x8c0] sm:$0xff]
  %v1272 = vld [vmem:[%s7 + $0x8c8] sm:$0xff]
  %v1273 = vld [vmem:[%s7 + $0x8d0] sm:$0xff]
  %v1274 = vld [vmem:[%s7 + $0x8d8] sm:$0xff]
  %v1275 = vld [vmem:[%s7 + $0x8e0] sm:$0xff]
  %v1276 = vld [vmem:[%s7 + $0x8e8] sm:$0xff]
  %v1277 = vld [vmem:[%s7 + $0x8f0] sm:$0xff]
  %v1278 = vld [vmem:[%s7 + $0x8f8] sm:$0xff]
  %v1279 = vld [vmem:[%s7 + $0x900] sm:$0xff]
  %v1280 = vld [vmem:[%s7 + $0x908] sm:$0xff]
  %v1281 = vld [vmem:[%s7 + $0x910] sm:$0xff]
  %v1282 = vld [vmem:[%s7 + $0x918] sm:$0xff]
  %v1283 = vld [vmem:[%s7 + $0x920] sm:$0xff]
  %v1284 = vld [vmem:[%s7 + $0x928] sm:$0xff]
  %v1285 = vld [vmem:[%s7 + $0x930] sm:$0xff]
  %v1286 = vld [vmem:[%s7 + $0x938] sm:$0xff]
  %v1287 = vld [vmem:[%s7 + $0x940] sm:$0xff]
  %v1288 = vld [vmem:[%s7 + $0x948] sm:$0xff]
  %v1289 = vld [vmem:[%s7 + $0x950] sm:$0xff]
  %v1290 = vld [vmem:[%s7 + $0x958] sm:$0xff]
  %v1291 = vld [vmem:[%s7 + $0x960] sm:$0xff]
  %v1292 = vld [vmem:[%s7 + $0x968] sm:$0xff]
  %v1293 = vld [vmem:[%s7 + $0x970] sm:$0xff]
  %v1294 = vld [vmem:[%s7 + $0x978] sm:$0xff]
  %v1295 = vld [vmem:[%s7 + $0x980] sm:$0xff]
  %v1296 = vld [vmem:[%s7 + $0x988] sm:$0xff]
  %v1297 = vld [vmem:[%s7 + $0x990] sm:$0xff]
  %v1298 = vld [vmem:[%s7 + $0x998] sm:$0xff]
  %v1299 = vld [vmem:[%s7 + $0x9a0] sm:$0xff]
  %v1300 = vld [vmem:[%s7 + $0x9a8] sm:$0xff]
  %v1301 = vld [vmem:[%s7 + $0x9b0] sm:$0xff]
  %v1302 = vld [vmem:[%s7 + $0x9b8] sm:$0xff]
  %v1303 = vld [vmem:[%s7 + $0x9c0] sm:$0xff]
  %v1304 = vld [vmem:[%s7 + $0x9c8] sm:$0xff]
  %v1305 = vld [vmem:[%s7 + $0x9d0] sm:$0xff]
  %v1306 = vld [vmem:[%s7 + $0x9d8] sm:$0xff]
  %v1307 = vld [vmem:[%s7 + $0x9e0] sm:$0xff]
  %v1308 = vld [vmem:[%s7 + $0x9e8] sm:$0xff]
  %v1309 = vld [vmem:[%s7 + $0x9f0] sm:$0xff]
  %v1310 = vld [vmem:[%s7 + $0x9f8] sm:$0xff]
  %v1311 = vld [vmem:[%s7 + $0xa00] sm:$0xff]
  %v1312 = vld [vmem:[%s7 + $0xa08] sm:$0xff]
  %v1313 = vld [vmem:[%s7 + $0xa10] sm:$0xff]
  %v1314 = vld [vmem:[%s7 + $0xa18] sm:$0xff]
  %v1315 = vld [vmem:[%s7 + $0xa20] sm:$0xff]
  %v1316 = vld [vmem:[%s7 + $0xa28] sm:$0xff]
  %v1317 = vld [vmem:[%s7 + $0xa30] sm:$0xff]
  %v1318 = vld [vmem:[%s7 + $0xa38] sm:$0xff]
  %v1319 = vld [vmem:[%s7 + $0xa40] sm:$0xff]
  %v1320 = vld [vmem:[%s7 + $0xa48] sm:$0xff]
  %v1321 = vld [vmem:[%s7 + $0xa50] sm:$0xff]
  %v1322 = vld [vmem:[%s7 + $0xa58] sm:$0xff]
  %v1323 = vld [vmem:[%s7 + $0xa60] sm:$0xff]
  %v1324 = vld [vmem:[%s7 + $0xa68] sm:$0xff]
  %v1325 = vld [vmem:[%s7 + $0xa70] sm:$0xff]
  %v1326 = vld [vmem:[%s7 + $0xa78] sm:$0xff]
  %v1327 = vld [vmem:[%s7 + $0xa80] sm:$0xff]
  %v1328 = vld [vmem:[%s7 + $0xa88] sm:$0xff]
  %v1329 = vld [vmem:[%s7 + $0xa90] sm:$0xff]
  %v1330 = vld [vmem:[%s7 + $0xa98] sm:$0xff]
  %v1331 = vld [vmem:[%s7 + $0xaa0] sm:$0xff]
  %v1332 = vld [vmem:[%s7 + $0xaa8] sm:$0xff]
  %v1333 = vld [vmem:[%s7 + $0xab0] sm:$0xff]
  %v1334 = vld [vmem:[%s7 + $0xab8] sm:$0xff]
  %v1335 = vld [vmem:[%s7 + $0xac0] sm:$0xff]
  %v1336 = vld [vmem:[%s7 + $0xac8] sm:$0xff]
  %v1337 = vld [vmem:[%s7 + $0xad0] sm:$0xff]
  %v1338 = vld [vmem:[%s7 + $0xad8] sm:$0xff]
  %v1339 = vld [vmem:[%s7 + $0xae0] sm:$0xff]
  %v1340 = vld [vmem:[%s7 + $0xae8] sm:$0xff]
  %v1341 = vld [vmem:[%s7 + $0xaf0] sm:$0xff]
  %v1342 = vld [vmem:[%s7 + $0xaf8] sm:$0xff]
  %v1343 = vld [vmem:[%s7 + $0xb00] sm:$0xff]
  %v1344 = vld [vmem:[%s7 + $0xb08] sm:$0xff]
  %v1345 = vld [vmem:[%s7 + $0xb10] sm:$0xff]
  %v1346 = vld [vmem:[%s7 + $0xb18] sm:$0xff]
  %v1347 = vld [vmem:[%s7 + $0xb20] sm:$0xff]
  %v1348 = vld [vmem:[%s7 + $0xb28] sm:$0xff]
  %v1349 = vld [vmem:[%s7 + $0xb30] sm:$0xff]
  %v1350 = vld [vmem:[%s7 + $0xb38] sm:$0xff]
  %v1351 = vld [vmem:[%s7 + $0xb40] sm:$0xff]
  %v1352 = vld [vmem:[%s7 + $0xb48] sm:$0xff]
  %v1353 = vld [vmem:[%s7 + $0xb50] sm:$0xff]
  %v1354 = vld [vmem:[%s7 + $0xb58] sm:$0xff]
  %v1355 = vld [vmem:[%s7 + $0xb60] sm:$0xff]
  %v1356 = vld [vmem:[%s7 + $0xb68] sm:$0xff]
  %v1357 = vld [vmem:[%s7 + $0xb70] sm:$0xff]
  %v1358 = vld [vmem:[%s7 + $0xb78] sm:$0xff]
  %v1359 = vld [vmem:[%s7 + $0xb80] sm:$0xff]
  %v1360 = vld [vmem:[%s7 + $0xb88] sm:$0xff]
  %v1361 = vld [vmem:[%s7 + $0xb90] sm:$0xff]
  %v1362 = vld [vmem:[%s7 + $0xb98] sm:$0xff]
  %v1363 = vld [vmem:[%s7 + $0xba0] sm:$0xff]
  %v1364 = vld [vmem:[%s7 + $0xba8] sm:$0xff]
  %v1365 = vld [vmem:[%s7 + $0xbb0] sm:$0xff]
  %v1366 = vld [vmem:[%s7 + $0xbb8] sm:$0xff]
  %v1367 = vld [vmem:[%s7 + $0xbc0] sm:$0xff]
  %v1368 = vld [vmem:[%s7 + $0xbc8] sm:$0xff]
  %v1369 = vld [vmem:[%s7 + $0xbd0] sm:$0xff]
  %v1370 = vld [vmem:[%s7 + $0xbd8] sm:$0xff]
  %v1371 = vld [vmem:[%s7 + $0xbe0] sm:$0xff]
  %v1372 = vld [vmem:[%s7 + $0xbe8] sm:$0xff]
  %v1373 = vld [vmem:[%s7 + $0xbf0] sm:$0xff]
  %v1374 = vld [vmem:[%s7 + $0xbf8] sm:$0xff]
  %v1375 = vld [vmem:[%s8] sm:$0x3f]
  %v1377 = vlaneseq
  %v1378 = vshrl.u32 %v1377, 7
  %v1379 = vsub.s32 0, %v1378
  %v1380 = vrot.slane %v1375, %v1379
  %v1381 = vlaneseq
  %v1382 = vshrl.u32 %v1381, 7
  %v1383 = vsub.s32 1, %v1382
  %v1384 = vrot.slane %v1375, %v1383
  %v1385 = vlaneseq
  %v1386 = vshrl.u32 %v1385, 7
  %v1387 = vsub.s32 2, %v1386
  %v1388 = vrot.slane %v1375, %v1387
  %v1389 = vlaneseq
  %v1390 = vshrl.u32 %v1389, 7
  %v1391 = vsub.s32 3, %v1390
  %v1392 = vrot.slane %v1375, %v1391
  %v1393 = vlaneseq
  %v1394 = vshrl.u32 %v1393, 7
  %v1395 = vsub.s32 4, %v1394
  %v1396 = vrot.slane %v1375, %v1395
  %v1397 = vlaneseq
  %v1398 = vshrl.u32 %v1397, 7
  %v1399 = vsub.s32 5, %v1398
  %v1400 = vrot.slane %v1375, %v1399
  %v1791 = vunpack.c.l.b16 %v991
  %v1792 = vunpack.c.h.b16 %v991
  %v1793 = vunpack.c.l.b16 %v992
  %v1794 = vunpack.c.h.b16 %v992
  %v1795 = vunpack.c.l.b16 %v993
  %v1796 = vunpack.c.h.b16 %v993
  %v1797 = vunpack.c.l.b16 %v994
  %v1798 = vunpack.c.h.b16 %v994
  %v1799 = vunpack.c.l.b16 %v995
  %v1800 = vunpack.c.h.b16 %v995
  %v1801 = vunpack.c.l.b16 %v996
  %v1802 = vunpack.c.h.b16 %v996
  %v1803 = vunpack.c.l.b16 %v997
  %v1804 = vunpack.c.h.b16 %v997
  %v1805 = vunpack.c.l.b16 %v998
  %v1806 = vunpack.c.h.b16 %v998
  %v1807 = vunpack.c.l.b16 %v999
  %v1808 = vunpack.c.h.b16 %v999
  %v1809 = vunpack.c.l.b16 %v1000
  %v1810 = vunpack.c.h.b16 %v1000
  %v1811 = vunpack.c.l.b16 %v1001
  %v1812 = vunpack.c.h.b16 %v1001
  %v1813 = vunpack.c.l.b16 %v1002
  %v1814 = vunpack.c.h.b16 %v1002
  %v1815 = vunpack.c.l.b16 %v1003
  %v1816 = vunpack.c.h.b16 %v1003
  %v1817 = vunpack.c.l.b16 %v1004
  %v1818 = vunpack.c.h.b16 %v1004
  %v1819 = vunpack.c.l.b16 %v1005
  %v1820 = vunpack.c.h.b16 %v1005
  %v1821 = vunpack.c.l.b16 %v1006
  %v1822 = vunpack.c.h.b16 %v1006
  %v1823 = vunpack.c.l.b16 %v1007
  %v1824 = vunpack.c.h.b16 %v1007
  %v1825 = vunpack.c.l.b16 %v1008
  %v1826 = vunpack.c.h.b16 %v1008
  %v1827 = vunpack.c.l.b16 %v1009
  %v1828 = vunpack.c.h.b16 %v1009
  %v1829 = vunpack.c.l.b16 %v1010
  %v1830 = vunpack.c.h.b16 %v1010
  %v1831 = vunpack.c.l.b16 %v1011
  %v1832 = vunpack.c.h.b16 %v1011
  %v1833 = vunpack.c.l.b16 %v1012
  %v1834 = vunpack.c.h.b16 %v1012
  %v1835 = vunpack.c.l.b16 %v1013
  %v1836 = vunpack.c.h.b16 %v1013
  %v1837 = vunpack.c.l.b16 %v1014
  %v1838 = vunpack.c.h.b16 %v1014
  %v1839 = vunpack.c.l.b16 %v1015
  %v1840 = vunpack.c.h.b16 %v1015
  %v1841 = vunpack.c.l.b16 %v1016
  %v1842 = vunpack.c.h.b16 %v1016
  %v1843 = vunpack.c.l.b16 %v1017
  %v1844 = vunpack.c.h.b16 %v1017
  %v1845 = vunpack.c.l.b16 %v1018
  %v1846 = vunpack.c.h.b16 %v1018
  %v1847 = vunpack.c.l.b16 %v1019
  %v1848 = vunpack.c.h.b16 %v1019
  %v1849 = vunpack.c.l.b16 %v1020
  %v1850 = vunpack.c.h.b16 %v1020
  %v1851 = vunpack.c.l.b16 %v1021
  %v1852 = vunpack.c.h.b16 %v1021
  %v1853 = vunpack.c.l.b16 %v1022
  %v1854 = vunpack.c.h.b16 %v1022
  %v1855 = vunpack.c.l.b16 %v1023
  %v1856 = vunpack.c.h.b16 %v1023
  %v1857 = vunpack.c.l.b16 %v1024
  %v1858 = vunpack.c.h.b16 %v1024
  %v1859 = vunpack.c.l.b16 %v1025
  %v1860 = vunpack.c.h.b16 %v1025
  %v1861 = vunpack.c.l.b16 %v1026
  %v1862 = vunpack.c.h.b16 %v1026
  %v1863 = vunpack.c.l.b16 %v1027
  %v1864 = vunpack.c.h.b16 %v1027
  %v1865 = vunpack.c.l.b16 %v1028
  %v1866 = vunpack.c.h.b16 %v1028
  %v1867 = vunpack.c.l.b16 %v1029
  %v1868 = vunpack.c.h.b16 %v1029
  %v1869 = vunpack.c.l.b16 %v1030
  %v1870 = vunpack.c.h.b16 %v1030
  %v1871 = vunpack.c.l.b16 %v1031
  %v1872 = vunpack.c.h.b16 %v1031
  %v1873 = vunpack.c.l.b16 %v1032
  %v1874 = vunpack.c.h.b16 %v1032
  %v1875 = vunpack.c.l.b16 %v1033
  %v1876 = vunpack.c.h.b16 %v1033
  %v1877 = vunpack.c.l.b16 %v1034
  %v1878 = vunpack.c.h.b16 %v1034
  %v1879 = vunpack.c.l.b16 %v1035
  %v1880 = vunpack.c.h.b16 %v1035
  %v1881 = vunpack.c.l.b16 %v1036
  %v1882 = vunpack.c.h.b16 %v1036
  %v1883 = vunpack.c.l.b16 %v1037
  %v1884 = vunpack.c.h.b16 %v1037
  %v1885 = vunpack.c.l.b16 %v1038
  %v1886 = vunpack.c.h.b16 %v1038
  %v1887 = vunpack.c.l.b16 %v1039
  %v1888 = vunpack.c.h.b16 %v1039
  %v1889 = vunpack.c.l.b16 %v1040
  %v1890 = vunpack.c.h.b16 %v1040
  %v1891 = vunpack.c.l.b16 %v1041
  %v1892 = vunpack.c.h.b16 %v1041
  %v1893 = vunpack.c.l.b16 %v1042
  %v1894 = vunpack.c.h.b16 %v1042
  %v1895 = vunpack.c.l.b16 %v1043
  %v1896 = vunpack.c.h.b16 %v1043
  %v1897 = vunpack.c.l.b16 %v1044
  %v1898 = vunpack.c.h.b16 %v1044
  %v1899 = vunpack.c.l.b16 %v1045
  %v1900 = vunpack.c.h.b16 %v1045
  %v1901 = vunpack.c.l.b16 %v1046
  %v1902 = vunpack.c.h.b16 %v1046
  %v1903 = vunpack.c.l.b16 %v1047
  %v1904 = vunpack.c.h.b16 %v1047
  %v1905 = vunpack.c.l.b16 %v1048
  %v1906 = vunpack.c.h.b16 %v1048
  %v1907 = vunpack.c.l.b16 %v1049
  %v1908 = vunpack.c.h.b16 %v1049
  %v1909 = vunpack.c.l.b16 %v1050
  %v1910 = vunpack.c.h.b16 %v1050
  %v1911 = vunpack.c.l.b16 %v1051
  %v1912 = vunpack.c.h.b16 %v1051
  %v1913 = vunpack.c.l.b16 %v1052
  %v1914 = vunpack.c.h.b16 %v1052
  %v1915 = vunpack.c.l.b16 %v1053
  %v1916 = vunpack.c.h.b16 %v1053
  %v1917 = vunpack.c.l.b16 %v1054
  %v1918 = vunpack.c.h.b16 %v1054
  %v1919 = vunpack.c.l.b16 %v1055
  %v1920 = vunpack.c.h.b16 %v1055
  %v1921 = vunpack.c.l.b16 %v1056
  %v1922 = vunpack.c.h.b16 %v1056
  %v1923 = vunpack.c.l.b16 %v1057
  %v1924 = vunpack.c.h.b16 %v1057
  %v1925 = vunpack.c.l.b16 %v1058
  %v1926 = vunpack.c.h.b16 %v1058
  %v1927 = vunpack.c.l.b16 %v1059
  %v1928 = vunpack.c.h.b16 %v1059
  %v1929 = vunpack.c.l.b16 %v1060
  %v1930 = vunpack.c.h.b16 %v1060
  %v1931 = vunpack.c.l.b16 %v1061
  %v1932 = vunpack.c.h.b16 %v1061
  %v1933 = vunpack.c.l.b16 %v1062
  %v1934 = vunpack.c.h.b16 %v1062
  %v1935 = vunpack.c.l.b16 %v1063
  %v1936 = vunpack.c.h.b16 %v1063
  %v1937 = vunpack.c.l.b16 %v1064
  %v1938 = vunpack.c.h.b16 %v1064
  %v1939 = vunpack.c.l.b16 %v1065
  %v1940 = vunpack.c.h.b16 %v1065
  %v1941 = vunpack.c.l.b16 %v1066
  %v1942 = vunpack.c.h.b16 %v1066
  %v1943 = vunpack.c.l.b16 %v1067
  %v1944 = vunpack.c.h.b16 %v1067
  %v1945 = vunpack.c.l.b16 %v1068
  %v1946 = vunpack.c.h.b16 %v1068
  %v1947 = vunpack.c.l.b16 %v1069
  %v1948 = vunpack.c.h.b16 %v1069
  %v1949 = vunpack.c.l.b16 %v1070
  %v1950 = vunpack.c.h.b16 %v1070
  %v1951 = vunpack.c.l.b16 %v1071
  %v1952 = vunpack.c.h.b16 %v1071
  %v1953 = vunpack.c.l.b16 %v1072
  %v1954 = vunpack.c.h.b16 %v1072
  %v1955 = vunpack.c.l.b16 %v1073
  %v1956 = vunpack.c.h.b16 %v1073
  %v1957 = vunpack.c.l.b16 %v1074
  %v1958 = vunpack.c.h.b16 %v1074
  %v1959 = vunpack.c.l.b16 %v1075
  %v1960 = vunpack.c.h.b16 %v1075
  %v1961 = vunpack.c.l.b16 %v1076
  %v1962 = vunpack.c.h.b16 %v1076
  %v1963 = vunpack.c.l.b16 %v1077
  %v1964 = vunpack.c.h.b16 %v1077
  %v1965 = vunpack.c.l.b16 %v1078
  %v1966 = vunpack.c.h.b16 %v1078
  %v1967 = vunpack.c.l.b16 %v1079
  %v1968 = vunpack.c.h.b16 %v1079
  %v1969 = vunpack.c.l.b16 %v1080
  %v1970 = vunpack.c.h.b16 %v1080
  %v1971 = vunpack.c.l.b16 %v1081
  %v1972 = vunpack.c.h.b16 %v1081
  %v1973 = vunpack.c.l.b16 %v1082
  %v1974 = vunpack.c.h.b16 %v1082
  %v1975 = vunpack.c.l.b16 %v1083
  %v1976 = vunpack.c.h.b16 %v1083
  %v1977 = vunpack.c.l.b16 %v1084
  %v1978 = vunpack.c.h.b16 %v1084
  %v1979 = vunpack.c.l.b16 %v1085
  %v1980 = vunpack.c.h.b16 %v1085
  %v1981 = vunpack.c.l.b16 %v1086
  %v1982 = vunpack.c.h.b16 %v1086
  %v1983 = vunpack.c.l.b16 %v1087
  %v1984 = vunpack.c.h.b16 %v1087
  %v1985 = vunpack.c.l.b16 %v1088
  %v1986 = vunpack.c.h.b16 %v1088
  %v1987 = vunpack.c.l.b16 %v1089
  %v1988 = vunpack.c.h.b16 %v1089
  %v1989 = vunpack.c.l.b16 %v1090
  %v1990 = vunpack.c.h.b16 %v1090
  %v1991 = vunpack.c.l.b16 %v1091
  %v1992 = vunpack.c.h.b16 %v1091
  %v1993 = vunpack.c.l.b16 %v1092
  %v1994 = vunpack.c.h.b16 %v1092
  %v1995 = vunpack.c.l.b16 %v1093
  %v1996 = vunpack.c.h.b16 %v1093
  %v1997 = vunpack.c.l.b16 %v1094
  %v1998 = vunpack.c.h.b16 %v1094
  %v1999 = vunpack.c.l.b16 %v1095
  %v2000 = vunpack.c.h.b16 %v1095
  %v2001 = vunpack.c.l.b16 %v1096
  %v2002 = vunpack.c.h.b16 %v1096
  %v2003 = vunpack.c.l.b16 %v1097
  %v2004 = vunpack.c.h.b16 %v1097
  %v2005 = vunpack.c.l.b16 %v1098
  %v2006 = vunpack.c.h.b16 %v1098
  %v2007 = vunpack.c.l.b16 %v1099
  %v2008 = vunpack.c.h.b16 %v1099
  %v2009 = vunpack.c.l.b16 %v1100
  %v2010 = vunpack.c.h.b16 %v1100
  %v2011 = vunpack.c.l.b16 %v1101
  %v2012 = vunpack.c.h.b16 %v1101
  %v2013 = vunpack.c.l.b16 %v1102
  %v2014 = vunpack.c.h.b16 %v1102
  %v2015 = vunpack.c.l.b16 %v1103
  %v2016 = vunpack.c.h.b16 %v1103
  %v2017 = vunpack.c.l.b16 %v1104
  %v2018 = vunpack.c.h.b16 %v1104
  %v2019 = vunpack.c.l.b16 %v1105
  %v2020 = vunpack.c.h.b16 %v1105
  %v2021 = vunpack.c.l.b16 %v1106
  %v2022 = vunpack.c.h.b16 %v1106
  %v2023 = vunpack.c.l.b16 %v1107
  %v2024 = vunpack.c.h.b16 %v1107
  %v2025 = vunpack.c.l.b16 %v1108
  %v2026 = vunpack.c.h.b16 %v1108
  %v2027 = vunpack.c.l.b16 %v1109
  %v2028 = vunpack.c.h.b16 %v1109
  %v2029 = vunpack.c.l.b16 %v1110
  %v2030 = vunpack.c.h.b16 %v1110
  %v2031 = vunpack.c.l.b16 %v1111
  %v2032 = vunpack.c.h.b16 %v1111
  %v2033 = vunpack.c.l.b16 %v1112
  %v2034 = vunpack.c.h.b16 %v1112
  %v2035 = vunpack.c.l.b16 %v1113
  %v2036 = vunpack.c.h.b16 %v1113
  %v2037 = vunpack.c.l.b16 %v1114
  %v2038 = vunpack.c.h.b16 %v1114
  %v2039 = vunpack.c.l.b16 %v1115
  %v2040 = vunpack.c.h.b16 %v1115
  %v2041 = vunpack.c.l.b16 %v1116
  %v2042 = vunpack.c.h.b16 %v1116
  %v2043 = vunpack.c.l.b16 %v1117
  %v2044 = vunpack.c.h.b16 %v1117
  %v2045 = vunpack.c.l.b16 %v1118
  %v2046 = vunpack.c.h.b16 %v1118
  %v2047 = vunpack.c.l.b16 %v1119
  %v2048 = vunpack.c.h.b16 %v1119
  %v2049 = vunpack.c.l.b16 %v1120
  %v2050 = vunpack.c.h.b16 %v1120
  %v2051 = vunpack.c.l.b16 %v1121
  %v2052 = vunpack.c.h.b16 %v1121
  %v2053 = vunpack.c.l.b16 %v1122
  %v2054 = vunpack.c.h.b16 %v1122
  %v2055 = vunpack.c.l.b16 %v1123
  %v2056 = vunpack.c.h.b16 %v1123
  %v2057 = vunpack.c.l.b16 %v1124
  %v2058 = vunpack.c.h.b16 %v1124
  %v2059 = vunpack.c.l.b16 %v1125
  %v2060 = vunpack.c.h.b16 %v1125
  %v2061 = vunpack.c.l.b16 %v1126
  %v2062 = vunpack.c.h.b16 %v1126
  %v2063 = vunpack.c.l.b16 %v1127
  %v2064 = vunpack.c.h.b16 %v1127
  %v2065 = vunpack.c.l.b16 %v1128
  %v2066 = vunpack.c.h.b16 %v1128
  %v2067 = vunpack.c.l.b16 %v1129
  %v2068 = vunpack.c.h.b16 %v1129
  %v2069 = vunpack.c.l.b16 %v1130
  %v2070 = vunpack.c.h.b16 %v1130
  %v2071 = vunpack.c.l.b16 %v1131
  %v2072 = vunpack.c.h.b16 %v1131
  %v2073 = vunpack.c.l.b16 %v1132
  %v2074 = vunpack.c.h.b16 %v1132
  %v2075 = vunpack.c.l.b16 %v1133
  %v2076 = vunpack.c.h.b16 %v1133
  %v2077 = vunpack.c.l.b16 %v1134
  %v2078 = vunpack.c.h.b16 %v1134
  %v2079 = vunpack.c.l.b16 %v1135
  %v2080 = vunpack.c.h.b16 %v1135
  %v2081 = vunpack.c.l.b16 %v1136
  %v2082 = vunpack.c.h.b16 %v1136
  %v2083 = vunpack.c.l.b16 %v1137
  %v2084 = vunpack.c.h.b16 %v1137
  %v2085 = vunpack.c.l.b16 %v1138
  %v2086 = vunpack.c.h.b16 %v1138
  %v2087 = vunpack.c.l.b16 %v1139
  %v2088 = vunpack.c.h.b16 %v1139
  %v2089 = vunpack.c.l.b16 %v1140
  %v2090 = vunpack.c.h.b16 %v1140
  %v2091 = vunpack.c.l.b16 %v1141
  %v2092 = vunpack.c.h.b16 %v1141
  %v2093 = vunpack.c.l.b16 %v1142
  %v2094 = vunpack.c.h.b16 %v1142
  %v2095 = vunpack.c.l.b16 %v1143
  %v2096 = vunpack.c.h.b16 %v1143
  %v2097 = vunpack.c.l.b16 %v1144
  %v2098 = vunpack.c.h.b16 %v1144
  %v2099 = vunpack.c.l.b16 %v1145
  %v2100 = vunpack.c.h.b16 %v1145
  %v2101 = vunpack.c.l.b16 %v1146
  %v2102 = vunpack.c.h.b16 %v1146
  %v2103 = vunpack.c.l.b16 %v1147
  %v2104 = vunpack.c.h.b16 %v1147
  %v2105 = vunpack.c.l.b16 %v1148
  %v2106 = vunpack.c.h.b16 %v1148
  %v2107 = vunpack.c.l.b16 %v1149
  %v2108 = vunpack.c.h.b16 %v1149
  %v2109 = vunpack.c.l.b16 %v1150
  %v2110 = vunpack.c.h.b16 %v1150
  %v2111 = vunpack.c.l.b16 %v1151
  %v2112 = vunpack.c.h.b16 %v1151
  %v2113 = vunpack.c.l.b16 %v1152
  %v2114 = vunpack.c.h.b16 %v1152
  %v2115 = vunpack.c.l.b16 %v1153
  %v2116 = vunpack.c.h.b16 %v1153
  %v2117 = vunpack.c.l.b16 %v1154
  %v2118 = vunpack.c.h.b16 %v1154
  %v2119 = vunpack.c.l.b16 %v1155
  %v2120 = vunpack.c.h.b16 %v1155
  %v2121 = vunpack.c.l.b16 %v1156
  %v2122 = vunpack.c.h.b16 %v1156
  %v2123 = vunpack.c.l.b16 %v1157
  %v2124 = vunpack.c.h.b16 %v1157
  %v2125 = vunpack.c.l.b16 %v1158
  %v2126 = vunpack.c.h.b16 %v1158
  %v2127 = vunpack.c.l.b16 %v1159
  %v2128 = vunpack.c.h.b16 %v1159
  %v2129 = vunpack.c.l.b16 %v1160
  %v2130 = vunpack.c.h.b16 %v1160
  %v2131 = vunpack.c.l.b16 %v1161
  %v2132 = vunpack.c.h.b16 %v1161
  %v2133 = vunpack.c.l.b16 %v1162
  %v2134 = vunpack.c.h.b16 %v1162
  %v2135 = vunpack.c.l.b16 %v1163
  %v2136 = vunpack.c.h.b16 %v1163
  %v2137 = vunpack.c.l.b16 %v1164
  %v2138 = vunpack.c.h.b16 %v1164
  %v2139 = vunpack.c.l.b16 %v1165
  %v2140 = vunpack.c.h.b16 %v1165
  %v2141 = vunpack.c.l.b16 %v1166
  %v2142 = vunpack.c.h.b16 %v1166
  %v2143 = vunpack.c.l.b16 %v1167
  %v2144 = vunpack.c.h.b16 %v1167
  %v2145 = vunpack.c.l.b16 %v1168
  %v2146 = vunpack.c.h.b16 %v1168
  %v2147 = vunpack.c.l.b16 %v1169
  %v2148 = vunpack.c.h.b16 %v1169
  %v2149 = vunpack.c.l.b16 %v1170
  %v2150 = vunpack.c.h.b16 %v1170
  %v2151 = vunpack.c.l.b16 %v1171
  %v2152 = vunpack.c.h.b16 %v1171
  %v2153 = vunpack.c.l.b16 %v1172
  %v2154 = vunpack.c.h.b16 %v1172
  %v2155 = vunpack.c.l.b16 %v1173
  %v2156 = vunpack.c.h.b16 %v1173
  %v2157 = vunpack.c.l.b16 %v1174
  %v2158 = vunpack.c.h.b16 %v1174
  %v2159 = vunpack.c.l.b16 %v1175
  %v2160 = vunpack.c.h.b16 %v1175
  %v2161 = vunpack.c.l.b16 %v1176
  %v2162 = vunpack.c.h.b16 %v1176
  %v2163 = vunpack.c.l.b16 %v1177
  %v2164 = vunpack.c.h.b16 %v1177
  %v2165 = vunpack.c.l.b16 %v1178
  %v2166 = vunpack.c.h.b16 %v1178
  %v2167 = vunpack.c.l.b16 %v1179
  %v2168 = vunpack.c.h.b16 %v1179
  %v2169 = vunpack.c.l.b16 %v1180
  %v2170 = vunpack.c.h.b16 %v1180
  %v2171 = vunpack.c.l.b16 %v1181
  %v2172 = vunpack.c.h.b16 %v1181
  %v2173 = vunpack.c.l.b16 %v1182
  %v2174 = vunpack.c.h.b16 %v1182
  %v2175 = vunpack.c.l.b16 %v1183
  %v2176 = vunpack.c.h.b16 %v1183
  %v2177 = vunpack.c.l.b16 %v1184
  %v2178 = vunpack.c.h.b16 %v1184
  %v2179 = vunpack.c.l.b16 %v1185
  %v2180 = vunpack.c.h.b16 %v1185
  %v2181 = vunpack.c.l.b16 %v1186
  %v2182 = vunpack.c.h.b16 %v1186
  %v2183 = vunpack.c.l.b16 %v1187
  %v2184 = vunpack.c.h.b16 %v1187
  %v2185 = vunpack.c.l.b16 %v1188
  %v2186 = vunpack.c.h.b16 %v1188
  %v2187 = vunpack.c.l.b16 %v1189
  %v2188 = vunpack.c.h.b16 %v1189
  %v2189 = vunpack.c.l.b16 %v1190
  %v2190 = vunpack.c.h.b16 %v1190
  %v2191 = vunpack.c.l.b16 %v1191
  %v2192 = vunpack.c.h.b16 %v1191
  %v2193 = vunpack.c.l.b16 %v1192
  %v2194 = vunpack.c.h.b16 %v1192
  %v2195 = vunpack.c.l.b16 %v1193
  %v2196 = vunpack.c.h.b16 %v1193
  %v2197 = vunpack.c.l.b16 %v1194
  %v2198 = vunpack.c.h.b16 %v1194
  %v2199 = vunpack.c.l.b16 %v1195
  %v2200 = vunpack.c.h.b16 %v1195
  %v2201 = vunpack.c.l.b16 %v1196
  %v2202 = vunpack.c.h.b16 %v1196
  %v2203 = vunpack.c.l.b16 %v1197
  %v2204 = vunpack.c.h.b16 %v1197
  %v2205 = vunpack.c.l.b16 %v1198
  %v2206 = vunpack.c.h.b16 %v1198
  %v2207 = vunpack.c.l.b16 %v1199
  %v2208 = vunpack.c.h.b16 %v1199
  %v2209 = vunpack.c.l.b16 %v1200
  %v2210 = vunpack.c.h.b16 %v1200
  %v2211 = vunpack.c.l.b16 %v1201
  %v2212 = vunpack.c.h.b16 %v1201
  %v2213 = vunpack.c.l.b16 %v1202
  %v2214 = vunpack.c.h.b16 %v1202
  %v2215 = vunpack.c.l.b16 %v1203
  %v2216 = vunpack.c.h.b16 %v1203
  %v2217 = vunpack.c.l.b16 %v1204
  %v2218 = vunpack.c.h.b16 %v1204
  %v2219 = vunpack.c.l.b16 %v1205
  %v2220 = vunpack.c.h.b16 %v1205
  %v2221 = vunpack.c.l.b16 %v1206
  %v2222 = vunpack.c.h.b16 %v1206
  %v2223 = vunpack.c.l.b16 %v1207
  %v2224 = vunpack.c.h.b16 %v1207
  %v2225 = vunpack.c.l.b16 %v1208
  %v2226 = vunpack.c.h.b16 %v1208
  %v2227 = vunpack.c.l.b16 %v1209
  %v2228 = vunpack.c.h.b16 %v1209
  %v2229 = vunpack.c.l.b16 %v1210
  %v2230 = vunpack.c.h.b16 %v1210
  %v2231 = vunpack.c.l.b16 %v1211
  %v2232 = vunpack.c.h.b16 %v1211
  %v2233 = vunpack.c.l.b16 %v1212
  %v2234 = vunpack.c.h.b16 %v1212
  %v2235 = vunpack.c.l.b16 %v1213
  %v2236 = vunpack.c.h.b16 %v1213
  %v2237 = vunpack.c.l.b16 %v1214
  %v2238 = vunpack.c.h.b16 %v1214
  %v2239 = vunpack.c.l.b16 %v1215
  %v2240 = vunpack.c.h.b16 %v1215
  %v2241 = vunpack.c.l.b16 %v1216
  %v2242 = vunpack.c.h.b16 %v1216
  %v2243 = vunpack.c.l.b16 %v1217
  %v2244 = vunpack.c.h.b16 %v1217
  %v2245 = vunpack.c.l.b16 %v1218
  %v2246 = vunpack.c.h.b16 %v1218
  %v2247 = vunpack.c.l.b16 %v1219
  %v2248 = vunpack.c.h.b16 %v1219
  %v2249 = vunpack.c.l.b16 %v1220
  %v2250 = vunpack.c.h.b16 %v1220
  %v2251 = vunpack.c.l.b16 %v1221
  %v2252 = vunpack.c.h.b16 %v1221
  %v2253 = vunpack.c.l.b16 %v1222
  %v2254 = vunpack.c.h.b16 %v1222
  %v2255 = vunpack.c.l.b16 %v1223
  %v2256 = vunpack.c.h.b16 %v1223
  %v2257 = vunpack.c.l.b16 %v1224
  %v2258 = vunpack.c.h.b16 %v1224
  %v2259 = vunpack.c.l.b16 %v1225
  %v2260 = vunpack.c.h.b16 %v1225
  %v2261 = vunpack.c.l.b16 %v1226
  %v2262 = vunpack.c.h.b16 %v1226
  %v2263 = vunpack.c.l.b16 %v1227
  %v2264 = vunpack.c.h.b16 %v1227
  %v2265 = vunpack.c.l.b16 %v1228
  %v2266 = vunpack.c.h.b16 %v1228
  %v2267 = vunpack.c.l.b16 %v1229
  %v2268 = vunpack.c.h.b16 %v1229
  %v2269 = vunpack.c.l.b16 %v1230
  %v2270 = vunpack.c.h.b16 %v1230
  %v2271 = vunpack.c.l.b16 %v1231
  %v2272 = vunpack.c.h.b16 %v1231
  %v2273 = vunpack.c.l.b16 %v1232
  %v2274 = vunpack.c.h.b16 %v1232
  %v2275 = vunpack.c.l.b16 %v1233
  %v2276 = vunpack.c.h.b16 %v1233
  %v2277 = vunpack.c.l.b16 %v1234
  %v2278 = vunpack.c.h.b16 %v1234
  %v2279 = vunpack.c.l.b16 %v1235
  %v2280 = vunpack.c.h.b16 %v1235
  %v2281 = vunpack.c.l.b16 %v1236
  %v2282 = vunpack.c.h.b16 %v1236
  %v2283 = vunpack.c.l.b16 %v1237
  %v2284 = vunpack.c.h.b16 %v1237
  %v2285 = vunpack.c.l.b16 %v1238
  %v2286 = vunpack.c.h.b16 %v1238
  %v2287 = vunpack.c.l.b16 %v1239
  %v2288 = vunpack.c.h.b16 %v1239
  %v2289 = vunpack.c.l.b16 %v1240
  %v2290 = vunpack.c.h.b16 %v1240
  %v2291 = vunpack.c.l.b16 %v1241
  %v2292 = vunpack.c.h.b16 %v1241
  %v2293 = vunpack.c.l.b16 %v1242
  %v2294 = vunpack.c.h.b16 %v1242
  %v2295 = vunpack.c.l.b16 %v1243
  %v2296 = vunpack.c.h.b16 %v1243
  %v2297 = vunpack.c.l.b16 %v1244
  %v2298 = vunpack.c.h.b16 %v1244
  %v2299 = vunpack.c.l.b16 %v1245
  %v2300 = vunpack.c.h.b16 %v1245
  %v2301 = vunpack.c.l.b16 %v1246
  %v2302 = vunpack.c.h.b16 %v1246
  %v2303 = vunpack.c.l.b16 %v1247
  %v2304 = vunpack.c.h.b16 %v1247
  %v2305 = vunpack.c.l.b16 %v1248
  %v2306 = vunpack.c.h.b16 %v1248
  %v2307 = vunpack.c.l.b16 %v1249
  %v2308 = vunpack.c.h.b16 %v1249
  %v2309 = vunpack.c.l.b16 %v1250
  %v2310 = vunpack.c.h.b16 %v1250
  %v2311 = vunpack.c.l.b16 %v1251
  %v2312 = vunpack.c.h.b16 %v1251
  %v2313 = vunpack.c.l.b16 %v1252
  %v2314 = vunpack.c.h.b16 %v1252
  %v2315 = vunpack.c.l.b16 %v1253
  %v2316 = vunpack.c.h.b16 %v1253
  %v2317 = vunpack.c.l.b16 %v1254
  %v2318 = vunpack.c.h.b16 %v1254
  %v2319 = vunpack.c.l.b16 %v1255
  %v2320 = vunpack.c.h.b16 %v1255
  %v2321 = vunpack.c.l.b16 %v1256
  %v2322 = vunpack.c.h.b16 %v1256
  %v2323 = vunpack.c.l.b16 %v1257
  %v2324 = vunpack.c.h.b16 %v1257
  %v2325 = vunpack.c.l.b16 %v1258
  %v2326 = vunpack.c.h.b16 %v1258
  %v2327 = vunpack.c.l.b16 %v1259
  %v2328 = vunpack.c.h.b16 %v1259
  %v2329 = vunpack.c.l.b16 %v1260
  %v2330 = vunpack.c.h.b16 %v1260
  %v2331 = vunpack.c.l.b16 %v1261
  %v2332 = vunpack.c.h.b16 %v1261
  %v2333 = vunpack.c.l.b16 %v1262
  %v2334 = vunpack.c.h.b16 %v1262
  %v2335 = vunpack.c.l.b16 %v1263
  %v2336 = vunpack.c.h.b16 %v1263
  %v2337 = vunpack.c.l.b16 %v1264
  %v2338 = vunpack.c.h.b16 %v1264
  %v2339 = vunpack.c.l.b16 %v1265
  %v2340 = vunpack.c.h.b16 %v1265
  %v2341 = vunpack.c.l.b16 %v1266
  %v2342 = vunpack.c.h.b16 %v1266
  %v2343 = vunpack.c.l.b16 %v1267
  %v2344 = vunpack.c.h.b16 %v1267
  %v2345 = vunpack.c.l.b16 %v1268
  %v2346 = vunpack.c.h.b16 %v1268
  %v2347 = vunpack.c.l.b16 %v1269
  %v2348 = vunpack.c.h.b16 %v1269
  %v2349 = vunpack.c.l.b16 %v1270
  %v2350 = vunpack.c.h.b16 %v1270
  %v2351 = vunpack.c.l.b16 %v1271
  %v2352 = vunpack.c.h.b16 %v1271
  %v2353 = vunpack.c.l.b16 %v1272
  %v2354 = vunpack.c.h.b16 %v1272
  %v2355 = vunpack.c.l.b16 %v1273
  %v2356 = vunpack.c.h.b16 %v1273
  %v2357 = vunpack.c.l.b16 %v1274
  %v2358 = vunpack.c.h.b16 %v1274
  %v2359 = vunpack.c.l.b16 %v1275
  %v2360 = vunpack.c.h.b16 %v1275
  %v2361 = vunpack.c.l.b16 %v1276
  %v2362 = vunpack.c.h.b16 %v1276
  %v2363 = vunpack.c.l.b16 %v1277
  %v2364 = vunpack.c.h.b16 %v1277
  %v2365 = vunpack.c.l.b16 %v1278
  %v2366 = vunpack.c.h.b16 %v1278
  %v2367 = vunpack.c.l.b16 %v1279
  %v2368 = vunpack.c.h.b16 %v1279
  %v2369 = vunpack.c.l.b16 %v1280
  %v2370 = vunpack.c.h.b16 %v1280
  %v2371 = vunpack.c.l.b16 %v1281
  %v2372 = vunpack.c.h.b16 %v1281
  %v2373 = vunpack.c.l.b16 %v1282
  %v2374 = vunpack.c.h.b16 %v1282
  %v2375 = vunpack.c.l.b16 %v1283
  %v2376 = vunpack.c.h.b16 %v1283
  %v2377 = vunpack.c.l.b16 %v1284
  %v2378 = vunpack.c.h.b16 %v1284
  %v2379 = vunpack.c.l.b16 %v1285
  %v2380 = vunpack.c.h.b16 %v1285
  %v2381 = vunpack.c.l.b16 %v1286
  %v2382 = vunpack.c.h.b16 %v1286
  %v2383 = vunpack.c.l.b16 %v1287
  %v2384 = vunpack.c.h.b16 %v1287
  %v2385 = vunpack.c.l.b16 %v1288
  %v2386 = vunpack.c.h.b16 %v1288
  %v2387 = vunpack.c.l.b16 %v1289
  %v2388 = vunpack.c.h.b16 %v1289
  %v2389 = vunpack.c.l.b16 %v1290
  %v2390 = vunpack.c.h.b16 %v1290
  %v2391 = vunpack.c.l.b16 %v1291
  %v2392 = vunpack.c.h.b16 %v1291
  %v2393 = vunpack.c.l.b16 %v1292
  %v2394 = vunpack.c.h.b16 %v1292
  %v2395 = vunpack.c.l.b16 %v1293
  %v2396 = vunpack.c.h.b16 %v1293
  %v2397 = vunpack.c.l.b16 %v1294
  %v2398 = vunpack.c.h.b16 %v1294
  %v2399 = vunpack.c.l.b16 %v1295
  %v2400 = vunpack.c.h.b16 %v1295
  %v2401 = vunpack.c.l.b16 %v1296
  %v2402 = vunpack.c.h.b16 %v1296
  %v2403 = vunpack.c.l.b16 %v1297
  %v2404 = vunpack.c.h.b16 %v1297
  %v2405 = vunpack.c.l.b16 %v1298
  %v2406 = vunpack.c.h.b16 %v1298
  %v2407 = vunpack.c.l.b16 %v1299
  %v2408 = vunpack.c.h.b16 %v1299
  %v2409 = vunpack.c.l.b16 %v1300
  %v2410 = vunpack.c.h.b16 %v1300
  %v2411 = vunpack.c.l.b16 %v1301
  %v2412 = vunpack.c.h.b16 %v1301
  %v2413 = vunpack.c.l.b16 %v1302
  %v2414 = vunpack.c.h.b16 %v1302
  %v2415 = vunpack.c.l.b16 %v1303
  %v2416 = vunpack.c.h.b16 %v1303
  %v2417 = vunpack.c.l.b16 %v1304
  %v2418 = vunpack.c.h.b16 %v1304
  %v2419 = vunpack.c.l.b16 %v1305
  %v2420 = vunpack.c.h.b16 %v1305
  %v2421 = vunpack.c.l.b16 %v1306
  %v2422 = vunpack.c.h.b16 %v1306
  %v2423 = vunpack.c.l.b16 %v1307
  %v2424 = vunpack.c.h.b16 %v1307
  %v2425 = vunpack.c.l.b16 %v1308
  %v2426 = vunpack.c.h.b16 %v1308
  %v2427 = vunpack.c.l.b16 %v1309
  %v2428 = vunpack.c.h.b16 %v1309
  %v2429 = vunpack.c.l.b16 %v1310
  %v2430 = vunpack.c.h.b16 %v1310
  %v2431 = vunpack.c.l.b16 %v1311
  %v2432 = vunpack.c.h.b16 %v1311
  %v2433 = vunpack.c.l.b16 %v1312
  %v2434 = vunpack.c.h.b16 %v1312
  %v2435 = vunpack.c.l.b16 %v1313
  %v2436 = vunpack.c.h.b16 %v1313
  %v2437 = vunpack.c.l.b16 %v1314
  %v2438 = vunpack.c.h.b16 %v1314
  %v2439 = vunpack.c.l.b16 %v1315
  %v2440 = vunpack.c.h.b16 %v1315
  %v2441 = vunpack.c.l.b16 %v1316
  %v2442 = vunpack.c.h.b16 %v1316
  %v2443 = vunpack.c.l.b16 %v1317
  %v2444 = vunpack.c.h.b16 %v1317
  %v2445 = vunpack.c.l.b16 %v1318
  %v2446 = vunpack.c.h.b16 %v1318
  %v2447 = vunpack.c.l.b16 %v1319
  %v2448 = vunpack.c.h.b16 %v1319
  %v2449 = vunpack.c.l.b16 %v1320
  %v2450 = vunpack.c.h.b16 %v1320
  %v2451 = vunpack.c.l.b16 %v1321
  %v2452 = vunpack.c.h.b16 %v1321
  %v2453 = vunpack.c.l.b16 %v1322
  %v2454 = vunpack.c.h.b16 %v1322
  %v2455 = vunpack.c.l.b16 %v1323
  %v2456 = vunpack.c.h.b16 %v1323
  %v2457 = vunpack.c.l.b16 %v1324
  %v2458 = vunpack.c.h.b16 %v1324
  %v2459 = vunpack.c.l.b16 %v1325
  %v2460 = vunpack.c.h.b16 %v1325
  %v2461 = vunpack.c.l.b16 %v1326
  %v2462 = vunpack.c.h.b16 %v1326
  %v2463 = vunpack.c.l.b16 %v1327
  %v2464 = vunpack.c.h.b16 %v1327
  %v2465 = vunpack.c.l.b16 %v1328
  %v2466 = vunpack.c.h.b16 %v1328
  %v2467 = vunpack.c.l.b16 %v1329
  %v2468 = vunpack.c.h.b16 %v1329
  %v2469 = vunpack.c.l.b16 %v1330
  %v2470 = vunpack.c.h.b16 %v1330
  %v2471 = vunpack.c.l.b16 %v1331
  %v2472 = vunpack.c.h.b16 %v1331
  %v2473 = vunpack.c.l.b16 %v1332
  %v2474 = vunpack.c.h.b16 %v1332
  %v2475 = vunpack.c.l.b16 %v1333
  %v2476 = vunpack.c.h.b16 %v1333
  %v2477 = vunpack.c.l.b16 %v1334
  %v2478 = vunpack.c.h.b16 %v1334
  %v2479 = vunpack.c.l.b16 %v1335
  %v2480 = vunpack.c.h.b16 %v1335
  %v2481 = vunpack.c.l.b16 %v1336
  %v2482 = vunpack.c.h.b16 %v1336
  %v2483 = vunpack.c.l.b16 %v1337
  %v2484 = vunpack.c.h.b16 %v1337
  %v2485 = vunpack.c.l.b16 %v1338
  %v2486 = vunpack.c.h.b16 %v1338
  %v2487 = vunpack.c.l.b16 %v1339
  %v2488 = vunpack.c.h.b16 %v1339
  %v2489 = vunpack.c.l.b16 %v1340
  %v2490 = vunpack.c.h.b16 %v1340
  %v2491 = vunpack.c.l.b16 %v1341
  %v2492 = vunpack.c.h.b16 %v1341
  %v2493 = vunpack.c.l.b16 %v1342
  %v2494 = vunpack.c.h.b16 %v1342
  %v2495 = vunpack.c.l.b16 %v1343
  %v2496 = vunpack.c.h.b16 %v1343
  %v2497 = vunpack.c.l.b16 %v1344
  %v2498 = vunpack.c.h.b16 %v1344
  %v2499 = vunpack.c.l.b16 %v1345
  %v2500 = vunpack.c.h.b16 %v1345
  %v2501 = vunpack.c.l.b16 %v1346
  %v2502 = vunpack.c.h.b16 %v1346
  %v2503 = vunpack.c.l.b16 %v1347
  %v2504 = vunpack.c.h.b16 %v1347
  %v2505 = vunpack.c.l.b16 %v1348
  %v2506 = vunpack.c.h.b16 %v1348
  %v2507 = vunpack.c.l.b16 %v1349
  %v2508 = vunpack.c.h.b16 %v1349
  %v2509 = vunpack.c.l.b16 %v1350
  %v2510 = vunpack.c.h.b16 %v1350
  %v2511 = vunpack.c.l.b16 %v1351
  %v2512 = vunpack.c.h.b16 %v1351
  %v2513 = vunpack.c.l.b16 %v1352
  %v2514 = vunpack.c.h.b16 %v1352
  %v2515 = vunpack.c.l.b16 %v1353
  %v2516 = vunpack.c.h.b16 %v1353
  %v2517 = vunpack.c.l.b16 %v1354
  %v2518 = vunpack.c.h.b16 %v1354
  %v2519 = vunpack.c.l.b16 %v1355
  %v2520 = vunpack.c.h.b16 %v1355
  %v2521 = vunpack.c.l.b16 %v1356
  %v2522 = vunpack.c.h.b16 %v1356
  %v2523 = vunpack.c.l.b16 %v1357
  %v2524 = vunpack.c.h.b16 %v1357
  %v2525 = vunpack.c.l.b16 %v1358
  %v2526 = vunpack.c.h.b16 %v1358
  %v2527 = vunpack.c.l.b16 %v1359
  %v2528 = vunpack.c.h.b16 %v1359
  %v2529 = vunpack.c.l.b16 %v1360
  %v2530 = vunpack.c.h.b16 %v1360
  %v2531 = vunpack.c.l.b16 %v1361
  %v2532 = vunpack.c.h.b16 %v1361
  %v2533 = vunpack.c.l.b16 %v1362
  %v2534 = vunpack.c.h.b16 %v1362
  %v2535 = vunpack.c.l.b16 %v1363
  %v2536 = vunpack.c.h.b16 %v1363
  %v2537 = vunpack.c.l.b16 %v1364
  %v2538 = vunpack.c.h.b16 %v1364
  %v2539 = vunpack.c.l.b16 %v1365
  %v2540 = vunpack.c.h.b16 %v1365
  %v2541 = vunpack.c.l.b16 %v1366
  %v2542 = vunpack.c.h.b16 %v1366
  %v2543 = vunpack.c.l.b16 %v1367
  %v2544 = vunpack.c.h.b16 %v1367
  %v2545 = vunpack.c.l.b16 %v1368
  %v2546 = vunpack.c.h.b16 %v1368
  %v2547 = vunpack.c.l.b16 %v1369
  %v2548 = vunpack.c.h.b16 %v1369
  %v2549 = vunpack.c.l.b16 %v1370
  %v2550 = vunpack.c.h.b16 %v1370
  %v2551 = vunpack.c.l.b16 %v1371
  %v2552 = vunpack.c.h.b16 %v1371
  %v2553 = vunpack.c.l.b16 %v1372
  %v2554 = vunpack.c.h.b16 %v1372
  %v2555 = vunpack.c.l.b16 %v1373
  %v2556 = vunpack.c.h.b16 %v1373
  %v2557 = vunpack.c.l.b16 %v1374
  %v2558 = vunpack.c.h.b16 %v1374
  %v2559 = vpack.c.b16 %v1797, %v1791
  %v2560 = vpack.c.b16 %v1798, %v1792
  %v2561 = vpack.c.b16 %v1799, %v1793
  %v2562 = vpack.c.b16 %v1800, %v1794
  %v2563 = vpack.c.b16 %v1801, %v1795
  %v2564 = vpack.c.b16 %v1802, %v1796
  %v2565 = vpack.c.b16 %v1809, %v1803
  %v2566 = vpack.c.b16 %v1810, %v1804
  %v2567 = vpack.c.b16 %v1811, %v1805
  %v2568 = vpack.c.b16 %v1812, %v1806
  %v2569 = vpack.c.b16 %v1813, %v1807
  %v2570 = vpack.c.b16 %v1814, %v1808
  %v2571 = vpack.c.b16 %v1821, %v1815
  %v2572 = vpack.c.b16 %v1822, %v1816
  %v2573 = vpack.c.b16 %v1823, %v1817
  %v2574 = vpack.c.b16 %v1824, %v1818
  %v2575 = vpack.c.b16 %v1825, %v1819
  %v2576 = vpack.c.b16 %v1826, %v1820
  %v2577 = vpack.c.b16 %v1833, %v1827
  %v2578 = vpack.c.b16 %v1834, %v1828
  %v2579 = vpack.c.b16 %v1835, %v1829
  %v2580 = vpack.c.b16 %v1836, %v1830
  %v2581 = vpack.c.b16 %v1837, %v1831
  %v2582 = vpack.c.b16 %v1838, %v1832
  %v2583 = vpack.c.b16 %v1845, %v1839
  %v2584 = vpack.c.b16 %v1846, %v1840
  %v2585 = vpack.c.b16 %v1847, %v1841
  %v2586 = vpack.c.b16 %v1848, %v1842
  %v2587 = vpack.c.b16 %v1849, %v1843
  %v2588 = vpack.c.b16 %v1850, %v1844
  %v2589 = vpack.c.b16 %v1857, %v1851
  %v2590 = vpack.c.b16 %v1858, %v1852
  %v2591 = vpack.c.b16 %v1859, %v1853
  %v2592 = vpack.c.b16 %v1860, %v1854
  %v2593 = vpack.c.b16 %v1861, %v1855
  %v2594 = vpack.c.b16 %v1862, %v1856
  %v2595 = vpack.c.b16 %v1869, %v1863
  %v2596 = vpack.c.b16 %v1870, %v1864
  %v2597 = vpack.c.b16 %v1871, %v1865
  %v2598 = vpack.c.b16 %v1872, %v1866
  %v2599 = vpack.c.b16 %v1873, %v1867
  %v2600 = vpack.c.b16 %v1874, %v1868
  %v2601 = vpack.c.b16 %v1881, %v1875
  %v2602 = vpack.c.b16 %v1882, %v1876
  %v2603 = vpack.c.b16 %v1883, %v1877
  %v2604 = vpack.c.b16 %v1884, %v1878
  %v2605 = vpack.c.b16 %v1885, %v1879
  %v2606 = vpack.c.b16 %v1886, %v1880
  %v2607 = vpack.c.b16 %v1893, %v1887
  %v2608 = vpack.c.b16 %v1894, %v1888
  %v2609 = vpack.c.b16 %v1895, %v1889
  %v2610 = vpack.c.b16 %v1896, %v1890
  %v2611 = vpack.c.b16 %v1897, %v1891
  %v2612 = vpack.c.b16 %v1898, %v1892
  %v2613 = vpack.c.b16 %v1905, %v1899
  %v2614 = vpack.c.b16 %v1906, %v1900
  %v2615 = vpack.c.b16 %v1907, %v1901
  %v2616 = vpack.c.b16 %v1908, %v1902
  %v2617 = vpack.c.b16 %v1909, %v1903
  %v2618 = vpack.c.b16 %v1910, %v1904
  %v2619 = vpack.c.b16 %v1917, %v1911
  %v2620 = vpack.c.b16 %v1918, %v1912
  %v2621 = vpack.c.b16 %v1919, %v1913
  %v2622 = vpack.c.b16 %v1920, %v1914
  %v2623 = vpack.c.b16 %v1921, %v1915
  %v2624 = vpack.c.b16 %v1922, %v1916
  %v2625 = vpack.c.b16 %v1929, %v1923
  %v2626 = vpack.c.b16 %v1930, %v1924
  %v2627 = vpack.c.b16 %v1931, %v1925
  %v2628 = vpack.c.b16 %v1932, %v1926
  %v2629 = vpack.c.b16 %v1933, %v1927
  %v2630 = vpack.c.b16 %v1934, %v1928
  %v2631 = vpack.c.b16 %v1941, %v1935
  %v2632 = vpack.c.b16 %v1942, %v1936
  %v2633 = vpack.c.b16 %v1943, %v1937
  %v2634 = vpack.c.b16 %v1944, %v1938
  %v2635 = vpack.c.b16 %v1945, %v1939
  %v2636 = vpack.c.b16 %v1946, %v1940
  %v2637 = vpack.c.b16 %v1953, %v1947
  %v2638 = vpack.c.b16 %v1954, %v1948
  %v2639 = vpack.c.b16 %v1955, %v1949
  %v2640 = vpack.c.b16 %v1956, %v1950
  %v2641 = vpack.c.b16 %v1957, %v1951
  %v2642 = vpack.c.b16 %v1958, %v1952
  %v2643 = vpack.c.b16 %v1965, %v1959
  %v2644 = vpack.c.b16 %v1966, %v1960
  %v2645 = vpack.c.b16 %v1967, %v1961
  %v2646 = vpack.c.b16 %v1968, %v1962
  %v2647 = vpack.c.b16 %v1969, %v1963
  %v2648 = vpack.c.b16 %v1970, %v1964
  %v2649 = vpack.c.b16 %v1977, %v1971
  %v2650 = vpack.c.b16 %v1978, %v1972
  %v2651 = vpack.c.b16 %v1979, %v1973
  %v2652 = vpack.c.b16 %v1980, %v1974
  %v2653 = vpack.c.b16 %v1981, %v1975
  %v2654 = vpack.c.b16 %v1982, %v1976
  %v2655 = vpack.c.b16 %v1989, %v1983
  %v2656 = vpack.c.b16 %v1990, %v1984
  %v2657 = vpack.c.b16 %v1991, %v1985
  %v2658 = vpack.c.b16 %v1992, %v1986
  %v2659 = vpack.c.b16 %v1993, %v1987
  %v2660 = vpack.c.b16 %v1994, %v1988
  %v2661 = vpack.c.b16 %v2001, %v1995
  %v2662 = vpack.c.b16 %v2002, %v1996
  %v2663 = vpack.c.b16 %v2003, %v1997
  %v2664 = vpack.c.b16 %v2004, %v1998
  %v2665 = vpack.c.b16 %v2005, %v1999
  %v2666 = vpack.c.b16 %v2006, %v2000
  %v2667 = vpack.c.b16 %v2013, %v2007
  %v2668 = vpack.c.b16 %v2014, %v2008
  %v2669 = vpack.c.b16 %v2015, %v2009
  %v2670 = vpack.c.b16 %v2016, %v2010
  %v2671 = vpack.c.b16 %v2017, %v2011
  %v2672 = vpack.c.b16 %v2018, %v2012
  %v2673 = vpack.c.b16 %v2025, %v2019
  %v2674 = vpack.c.b16 %v2026, %v2020
  %v2675 = vpack.c.b16 %v2027, %v2021
  %v2676 = vpack.c.b16 %v2028, %v2022
  %v2677 = vpack.c.b16 %v2029, %v2023
  %v2678 = vpack.c.b16 %v2030, %v2024
  %v2679 = vpack.c.b16 %v2037, %v2031
  %v2680 = vpack.c.b16 %v2038, %v2032
  %v2681 = vpack.c.b16 %v2039, %v2033
  %v2682 = vpack.c.b16 %v2040, %v2034
  %v2683 = vpack.c.b16 %v2041, %v2035
  %v2684 = vpack.c.b16 %v2042, %v2036
  %v2685 = vpack.c.b16 %v2049, %v2043
  %v2686 = vpack.c.b16 %v2050, %v2044
  %v2687 = vpack.c.b16 %v2051, %v2045
  %v2688 = vpack.c.b16 %v2052, %v2046
  %v2689 = vpack.c.b16 %v2053, %v2047
  %v2690 = vpack.c.b16 %v2054, %v2048
  %v2691 = vpack.c.b16 %v2061, %v2055
  %v2692 = vpack.c.b16 %v2062, %v2056
  %v2693 = vpack.c.b16 %v2063, %v2057
  %v2694 = vpack.c.b16 %v2064, %v2058
  %v2695 = vpack.c.b16 %v2065, %v2059
  %v2696 = vpack.c.b16 %v2066, %v2060
  %v2697 = vpack.c.b16 %v2073, %v2067
  %v2698 = vpack.c.b16 %v2074, %v2068
  %v2699 = vpack.c.b16 %v2075, %v2069
  %v2700 = vpack.c.b16 %v2076, %v2070
  %v2701 = vpack.c.b16 %v2077, %v2071
  %v2702 = vpack.c.b16 %v2078, %v2072
  %v2703 = vpack.c.b16 %v2085, %v2079
  %v2704 = vpack.c.b16 %v2086, %v2080
  %v2705 = vpack.c.b16 %v2087, %v2081
  %v2706 = vpack.c.b16 %v2088, %v2082
  %v2707 = vpack.c.b16 %v2089, %v2083
  %v2708 = vpack.c.b16 %v2090, %v2084
  %v2709 = vpack.c.b16 %v2097, %v2091
  %v2710 = vpack.c.b16 %v2098, %v2092
  %v2711 = vpack.c.b16 %v2099, %v2093
  %v2712 = vpack.c.b16 %v2100, %v2094
  %v2713 = vpack.c.b16 %v2101, %v2095
  %v2714 = vpack.c.b16 %v2102, %v2096
  %v2715 = vpack.c.b16 %v2109, %v2103
  %v2716 = vpack.c.b16 %v2110, %v2104
  %v2717 = vpack.c.b16 %v2111, %v2105
  %v2718 = vpack.c.b16 %v2112, %v2106
  %v2719 = vpack.c.b16 %v2113, %v2107
  %v2720 = vpack.c.b16 %v2114, %v2108
  %v2721 = vpack.c.b16 %v2121, %v2115
  %v2722 = vpack.c.b16 %v2122, %v2116
  %v2723 = vpack.c.b16 %v2123, %v2117
  %v2724 = vpack.c.b16 %v2124, %v2118
  %v2725 = vpack.c.b16 %v2125, %v2119
  %v2726 = vpack.c.b16 %v2126, %v2120
  %v2727 = vpack.c.b16 %v2133, %v2127
  %v2728 = vpack.c.b16 %v2134, %v2128
  %v2729 = vpack.c.b16 %v2135, %v2129
  %v2730 = vpack.c.b16 %v2136, %v2130
  %v2731 = vpack.c.b16 %v2137, %v2131
  %v2732 = vpack.c.b16 %v2138, %v2132
  %v2733 = vpack.c.b16 %v2145, %v2139
  %v2734 = vpack.c.b16 %v2146, %v2140
  %v2735 = vpack.c.b16 %v2147, %v2141
  %v2736 = vpack.c.b16 %v2148, %v2142
  %v2737 = vpack.c.b16 %v2149, %v2143
  %v2738 = vpack.c.b16 %v2150, %v2144
  %v2739 = vpack.c.b16 %v2157, %v2151
  %v2740 = vpack.c.b16 %v2158, %v2152
  %v2741 = vpack.c.b16 %v2159, %v2153
  %v2742 = vpack.c.b16 %v2160, %v2154
  %v2743 = vpack.c.b16 %v2161, %v2155
  %v2744 = vpack.c.b16 %v2162, %v2156
  %v2745 = vpack.c.b16 %v2169, %v2163
  %v2746 = vpack.c.b16 %v2170, %v2164
  %v2747 = vpack.c.b16 %v2171, %v2165
  %v2748 = vpack.c.b16 %v2172, %v2166
  %v2749 = vpack.c.b16 %v2173, %v2167
  %v2750 = vpack.c.b16 %v2174, %v2168
  %v2751 = vpack.c.b16 %v2181, %v2175
  %v2752 = vpack.c.b16 %v2182, %v2176
  %v2753 = vpack.c.b16 %v2183, %v2177
  %v2754 = vpack.c.b16 %v2184, %v2178
  %v2755 = vpack.c.b16 %v2185, %v2179
  %v2756 = vpack.c.b16 %v2186, %v2180
  %v2757 = vpack.c.b16 %v2193, %v2187
  %v2758 = vpack.c.b16 %v2194, %v2188
  %v2759 = vpack.c.b16 %v2195, %v2189
  %v2760 = vpack.c.b16 %v2196, %v2190
  %v2761 = vpack.c.b16 %v2197, %v2191
  %v2762 = vpack.c.b16 %v2198, %v2192
  %v2763 = vpack.c.b16 %v2205, %v2199
  %v2764 = vpack.c.b16 %v2206, %v2200
  %v2765 = vpack.c.b16 %v2207, %v2201
  %v2766 = vpack.c.b16 %v2208, %v2202
  %v2767 = vpack.c.b16 %v2209, %v2203
  %v2768 = vpack.c.b16 %v2210, %v2204
  %v2769 = vpack.c.b16 %v2217, %v2211
  %v2770 = vpack.c.b16 %v2218, %v2212
  %v2771 = vpack.c.b16 %v2219, %v2213
  %v2772 = vpack.c.b16 %v2220, %v2214
  %v2773 = vpack.c.b16 %v2221, %v2215
  %v2774 = vpack.c.b16 %v2222, %v2216
  %v2775 = vpack.c.b16 %v2229, %v2223
  %v2776 = vpack.c.b16 %v2230, %v2224
  %v2777 = vpack.c.b16 %v2231, %v2225
  %v2778 = vpack.c.b16 %v2232, %v2226
  %v2779 = vpack.c.b16 %v2233, %v2227
  %v2780 = vpack.c.b16 %v2234, %v2228
  %v2781 = vpack.c.b16 %v2241, %v2235
  %v2782 = vpack.c.b16 %v2242, %v2236
  %v2783 = vpack.c.b16 %v2243, %v2237
  %v2784 = vpack.c.b16 %v2244, %v2238
  %v2785 = vpack.c.b16 %v2245, %v2239
  %v2786 = vpack.c.b16 %v2246, %v2240
  %v2787 = vpack.c.b16 %v2253, %v2247
  %v2788 = vpack.c.b16 %v2254, %v2248
  %v2789 = vpack.c.b16 %v2255, %v2249
  %v2790 = vpack.c.b16 %v2256, %v2250
  %v2791 = vpack.c.b16 %v2257, %v2251
  %v2792 = vpack.c.b16 %v2258, %v2252
  %v2793 = vpack.c.b16 %v2265, %v2259
  %v2794 = vpack.c.b16 %v2266, %v2260
  %v2795 = vpack.c.b16 %v2267, %v2261
  %v2796 = vpack.c.b16 %v2268, %v2262
  %v2797 = vpack.c.b16 %v2269, %v2263
  %v2798 = vpack.c.b16 %v2270, %v2264
  %v2799 = vpack.c.b16 %v2277, %v2271
  %v2800 = vpack.c.b16 %v2278, %v2272
  %v2801 = vpack.c.b16 %v2279, %v2273
  %v2802 = vpack.c.b16 %v2280, %v2274
  %v2803 = vpack.c.b16 %v2281, %v2275
  %v2804 = vpack.c.b16 %v2282, %v2276
  %v2805 = vpack.c.b16 %v2289, %v2283
  %v2806 = vpack.c.b16 %v2290, %v2284
  %v2807 = vpack.c.b16 %v2291, %v2285
  %v2808 = vpack.c.b16 %v2292, %v2286
  %v2809 = vpack.c.b16 %v2293, %v2287
  %v2810 = vpack.c.b16 %v2294, %v2288
  %v2811 = vpack.c.b16 %v2301, %v2295
  %v2812 = vpack.c.b16 %v2302, %v2296
  %v2813 = vpack.c.b16 %v2303, %v2297
  %v2814 = vpack.c.b16 %v2304, %v2298
  %v2815 = vpack.c.b16 %v2305, %v2299
  %v2816 = vpack.c.b16 %v2306, %v2300
  %v2817 = vpack.c.b16 %v2313, %v2307
  %v2818 = vpack.c.b16 %v2314, %v2308
  %v2819 = vpack.c.b16 %v2315, %v2309
  %v2820 = vpack.c.b16 %v2316, %v2310
  %v2821 = vpack.c.b16 %v2317, %v2311
  %v2822 = vpack.c.b16 %v2318, %v2312
  %v2823 = vpack.c.b16 %v2325, %v2319
  %v2824 = vpack.c.b16 %v2326, %v2320
  %v2825 = vpack.c.b16 %v2327, %v2321
  %v2826 = vpack.c.b16 %v2328, %v2322
  %v2827 = vpack.c.b16 %v2329, %v2323
  %v2828 = vpack.c.b16 %v2330, %v2324
  %v2829 = vpack.c.b16 %v2337, %v2331
  %v2830 = vpack.c.b16 %v2338, %v2332
  %v2831 = vpack.c.b16 %v2339, %v2333
  %v2832 = vpack.c.b16 %v2340, %v2334
  %v2833 = vpack.c.b16 %v2341, %v2335
  %v2834 = vpack.c.b16 %v2342, %v2336
  %v2835 = vpack.c.b16 %v2349, %v2343
  %v2836 = vpack.c.b16 %v2350, %v2344
  %v2837 = vpack.c.b16 %v2351, %v2345
  %v2838 = vpack.c.b16 %v2352, %v2346
  %v2839 = vpack.c.b16 %v2353, %v2347
  %v2840 = vpack.c.b16 %v2354, %v2348
  %v2841 = vpack.c.b16 %v2361, %v2355
  %v2842 = vpack.c.b16 %v2362, %v2356
  %v2843 = vpack.c.b16 %v2363, %v2357
  %v2844 = vpack.c.b16 %v2364, %v2358
  %v2845 = vpack.c.b16 %v2365, %v2359
  %v2846 = vpack.c.b16 %v2366, %v2360
  %v2847 = vpack.c.b16 %v2373, %v2367
  %v2848 = vpack.c.b16 %v2374, %v2368
  %v2849 = vpack.c.b16 %v2375, %v2369
  %v2850 = vpack.c.b16 %v2376, %v2370
  %v2851 = vpack.c.b16 %v2377, %v2371
  %v2852 = vpack.c.b16 %v2378, %v2372
  %v2853 = vpack.c.b16 %v2385, %v2379
  %v2854 = vpack.c.b16 %v2386, %v2380
  %v2855 = vpack.c.b16 %v2387, %v2381
  %v2856 = vpack.c.b16 %v2388, %v2382
  %v2857 = vpack.c.b16 %v2389, %v2383
  %v2858 = vpack.c.b16 %v2390, %v2384
  %v2859 = vpack.c.b16 %v2397, %v2391
  %v2860 = vpack.c.b16 %v2398, %v2392
  %v2861 = vpack.c.b16 %v2399, %v2393
  %v2862 = vpack.c.b16 %v2400, %v2394
  %v2863 = vpack.c.b16 %v2401, %v2395
  %v2864 = vpack.c.b16 %v2402, %v2396
  %v2865 = vpack.c.b16 %v2409, %v2403
  %v2866 = vpack.c.b16 %v2410, %v2404
  %v2867 = vpack.c.b16 %v2411, %v2405
  %v2868 = vpack.c.b16 %v2412, %v2406
  %v2869 = vpack.c.b16 %v2413, %v2407
  %v2870 = vpack.c.b16 %v2414, %v2408
  %v2871 = vpack.c.b16 %v2421, %v2415
  %v2872 = vpack.c.b16 %v2422, %v2416
  %v2873 = vpack.c.b16 %v2423, %v2417
  %v2874 = vpack.c.b16 %v2424, %v2418
  %v2875 = vpack.c.b16 %v2425, %v2419
  %v2876 = vpack.c.b16 %v2426, %v2420
  %v2877 = vpack.c.b16 %v2433, %v2427
  %v2878 = vpack.c.b16 %v2434, %v2428
  %v2879 = vpack.c.b16 %v2435, %v2429
  %v2880 = vpack.c.b16 %v2436, %v2430
  %v2881 = vpack.c.b16 %v2437, %v2431
  %v2882 = vpack.c.b16 %v2438, %v2432
  %v2883 = vpack.c.b16 %v2445, %v2439
  %v2884 = vpack.c.b16 %v2446, %v2440
  %v2885 = vpack.c.b16 %v2447, %v2441
  %v2886 = vpack.c.b16 %v2448, %v2442
  %v2887 = vpack.c.b16 %v2449, %v2443
  %v2888 = vpack.c.b16 %v2450, %v2444
  %v2889 = vpack.c.b16 %v2457, %v2451
  %v2890 = vpack.c.b16 %v2458, %v2452
  %v2891 = vpack.c.b16 %v2459, %v2453
  %v2892 = vpack.c.b16 %v2460, %v2454
  %v2893 = vpack.c.b16 %v2461, %v2455
  %v2894 = vpack.c.b16 %v2462, %v2456
  %v2895 = vpack.c.b16 %v2469, %v2463
  %v2896 = vpack.c.b16 %v2470, %v2464
  %v2897 = vpack.c.b16 %v2471, %v2465
  %v2898 = vpack.c.b16 %v2472, %v2466
  %v2899 = vpack.c.b16 %v2473, %v2467
  %v2900 = vpack.c.b16 %v2474, %v2468
  %v2901 = vpack.c.b16 %v2481, %v2475
  %v2902 = vpack.c.b16 %v2482, %v2476
  %v2903 = vpack.c.b16 %v2483, %v2477
  %v2904 = vpack.c.b16 %v2484, %v2478
  %v2905 = vpack.c.b16 %v2485, %v2479
  %v2906 = vpack.c.b16 %v2486, %v2480
  %v2907 = vpack.c.b16 %v2493, %v2487
  %v2908 = vpack.c.b16 %v2494, %v2488
  %v2909 = vpack.c.b16 %v2495, %v2489
  %v2910 = vpack.c.b16 %v2496, %v2490
  %v2911 = vpack.c.b16 %v2497, %v2491
  %v2912 = vpack.c.b16 %v2498, %v2492
  %v2913 = vpack.c.b16 %v2505, %v2499
  %v2914 = vpack.c.b16 %v2506, %v2500
  %v2915 = vpack.c.b16 %v2507, %v2501
  %v2916 = vpack.c.b16 %v2508, %v2502
  %v2917 = vpack.c.b16 %v2509, %v2503
  %v2918 = vpack.c.b16 %v2510, %v2504
  %v2919 = vpack.c.b16 %v2517, %v2511
  %v2920 = vpack.c.b16 %v2518, %v2512
  %v2921 = vpack.c.b16 %v2519, %v2513
  %v2922 = vpack.c.b16 %v2520, %v2514
  %v2923 = vpack.c.b16 %v2521, %v2515
  %v2924 = vpack.c.b16 %v2522, %v2516
  %v2925 = vpack.c.b16 %v2529, %v2523
  %v2926 = vpack.c.b16 %v2530, %v2524
  %v2927 = vpack.c.b16 %v2531, %v2525
  %v2928 = vpack.c.b16 %v2532, %v2526
  %v2929 = vpack.c.b16 %v2533, %v2527
  %v2930 = vpack.c.b16 %v2534, %v2528
  %v2931 = vpack.c.b16 %v2541, %v2535
  %v2932 = vpack.c.b16 %v2542, %v2536
  %v2933 = vpack.c.b16 %v2543, %v2537
  %v2934 = vpack.c.b16 %v2544, %v2538
  %v2935 = vpack.c.b16 %v2545, %v2539
  %v2936 = vpack.c.b16 %v2546, %v2540
  %v2937 = vpack.c.b16 %v2553, %v2547
  %v2938 = vpack.c.b16 %v2554, %v2548
  %v2939 = vpack.c.b16 %v2555, %v2549
  %v2940 = vpack.c.b16 %v2556, %v2550
  %v2941 = vpack.c.b16 %v2557, %v2551
  %v2942 = vpack.c.b16 %v2558, %v2552
  %3327 = vmatprep.subr.bf16.mxu0 %v2560
  %3328 = vmatpush1.bf16.msra.mxu0 %v2559
  %3329 = vmatprep.subr.bf16.mxu0 %v2566
  %3330 = vmatpush1.bf16.msra.mxu0 %v2565
  %3331 = vmatprep.subr.bf16.mxu0 %v2572
  %3332 = vmatpush1.bf16.msra.mxu0 %v2571
  %3333 = vmatprep.subr.bf16.mxu0 %v2578
  %3334 = vmatpush1.bf16.msra.mxu0 %v2577
  %3335 = vmatprep.subr.bf16.mxu0 %v2584
  %3336 = vmatpush1.bf16.msra.mxu0 %v2583
  %3337 = vmatprep.subr.bf16.mxu0 %v2590
  %3338 = vmatpush1.bf16.msra.mxu0 %v2589
  %3339 = vmatprep.subr.bf16.mxu0 %v2596
  %3340 = vmatpush1.bf16.msra.mxu0 %v2595
  %3341 = vmatprep.subr.bf16.mxu0 %v2602
  %3342 = vmatpush1.bf16.msra.mxu0 %v2601
  %3343 = vmatprep.subr.bf16.mxu0 %v2608
  %3344 = vmatpush1.bf16.msra.mxu0 %v2607
  %3345 = vmatprep.subr.bf16.mxu0 %v2614
  %3346 = vmatpush1.bf16.msra.mxu0 %v2613
  %3347 = vmatprep.subr.bf16.mxu0 %v2620
  %3348 = vmatpush1.bf16.msra.mxu0 %v2619
  %3349 = vmatprep.subr.bf16.mxu0 %v2626
  %3350 = vmatpush1.bf16.msra.mxu0 %v2625
  %3351 = vmatprep.subr.bf16.mxu0 %v2632
  %3352 = vmatpush1.bf16.msra.mxu0 %v2631
  %3353 = vmatprep.subr.bf16.mxu0 %v2638
  %3354 = vmatpush1.bf16.msra.mxu0 %v2637
  %3355 = vmatprep.subr.bf16.mxu0 %v2644
  %3356 = vmatpush1.bf16.msra.mxu0 %v2643
  %3357 = vmatprep.subr.bf16.mxu0 %v2650
  %3358 = vmatpush1.bf16.msra.mxu0 %v2649
  %3359 = vmatprep.mubr.bf16.mxu0 %v984
  %3360 = vmatmul.mubr.bf16.gmra.mrb[0].mxu0 %v983
  %v3361 = vpop.f32.mrb[0].mxu0
  %v3362 = vadd.f32 %v1380, %v3361
  %v3363 = vpop.f32.mrb[0].mxu0
  %v3364 = vadd.f32 %v1384, %v3363
  %v3365 = vpop.f32.mrb[0].mxu0
  %v3366 = vpop.f32.mrb[0].mxu0
  %3367 = vdwg.mxu0
  %3368 = vmatprep.subr.bf16.mxu0 %v2656
  %3369 = vmatpush1.bf16.msra.mxu0 %v2655
  %3370 = vmatprep.subr.bf16.mxu0 %v2662
  %3371 = vmatpush1.bf16.msra.mxu0 %v2661
  %3372 = vmatprep.subr.bf16.mxu0 %v2668
  %3373 = vmatpush1.bf16.msra.mxu0 %v2667
  %3374 = vmatprep.subr.bf16.mxu0 %v2674
  %3375 = vmatpush1.bf16.msra.mxu0 %v2673
  %3376 = vmatprep.subr.bf16.mxu0 %v2680
  %3377 = vmatpush1.bf16.msra.mxu0 %v2679
  %3378 = vmatprep.subr.bf16.mxu0 %v2686
  %3379 = vmatpush1.bf16.msra.mxu0 %v2685
  %3380 = vmatprep.subr.bf16.mxu0 %v2692
  %3381 = vmatpush1.bf16.msra.mxu0 %v2691
  %3382 = vmatprep.subr.bf16.mxu0 %v2698
  %3383 = vmatpush1.bf16.msra.mxu0 %v2697
  %3384 = vmatprep.subr.bf16.mxu0 %v2704
  %3385 = vmatpush1.bf16.msra.mxu0 %v2703
  %3386 = vmatprep.subr.bf16.mxu0 %v2710
  %3387 = vmatpush1.bf16.msra.mxu0 %v2709
  %3388 = vmatprep.subr.bf16.mxu0 %v2716
  %3389 = vmatpush1.bf16.msra.mxu0 %v2715
  %3390 = vmatprep.subr.bf16.mxu0 %v2722
  %3391 = vmatpush1.bf16.msra.mxu0 %v2721
  %3392 = vmatprep.subr.bf16.mxu0 %v2728
  %3393 = vmatpush1.bf16.msra.mxu0 %v2727
  %3394 = vmatprep.subr.bf16.mxu0 %v2734
  %3395 = vmatpush1.bf16.msra.mxu0 %v2733
  %3396 = vmatprep.subr.bf16.mxu0 %v2740
  %3397 = vmatpush1.bf16.msra.mxu0 %v2739
  %3398 = vmatprep.subr.bf16.mxu0 %v2746
  %3399 = vmatpush1.bf16.msra.mxu0 %v2745
  %3400 = vmatprep.mubr.bf16.mxu0 %v986
  %3401 = vmatmul.mubr.bf16.gmra.mrb[0].mxu0 %v985
  %v3402 = vpop.f32.mrb[0].mxu0
  %v3403 = vadd.f32 %v3362, %v3402
  %v3404 = vpop.f32.mrb[0].mxu0
  %v3405 = vadd.f32 %v3364, %v3404
  %v3406 = vpop.f32.mrb[0].mxu0
  %v3407 = vpop.f32.mrb[0].mxu0
  %3408 = vdwg.mxu0
  %3409 = vmatprep.subr.bf16.mxu0 %v2752
  %3410 = vmatpush1.bf16.msra.mxu0 %v2751
  %3411 = vmatprep.subr.bf16.mxu0 %v2758
  %3412 = vmatpush1.bf16.msra.mxu0 %v2757
  %3413 = vmatprep.subr.bf16.mxu0 %v2764
  %3414 = vmatpush1.bf16.msra.mxu0 %v2763
  %3415 = vmatprep.subr.bf16.mxu0 %v2770
  %3416 = vmatpush1.bf16.msra.mxu0 %v2769
  %3417 = vmatprep.subr.bf16.mxu0 %v2776
  %3418 = vmatpush1.bf16.msra.mxu0 %v2775
  %3419 = vmatprep.subr.bf16.mxu0 %v2782
  %3420 = vmatpush1.bf16.msra.mxu0 %v2781
  %3421 = vmatprep.subr.bf16.mxu0 %v2788
  %3422 = vmatpush1.bf16.msra.mxu0 %v2787
  %3423 = vmatprep.subr.bf16.mxu0 %v2794
  %3424 = vmatpush1.bf16.msra.mxu0 %v2793
  %3425 = vmatprep.subr.bf16.mxu0 %v2800
  %3426 = vmatpush1.bf16.msra.mxu0 %v2799
  %3427 = vmatprep.subr.bf16.mxu0 %v2806
  %3428 = vmatpush1.bf16.msra.mxu0 %v2805
  %3429 = vmatprep.subr.bf16.mxu0 %v2812
  %3430 = vmatpush1.bf16.msra.mxu0 %v2811
  %3431 = vmatprep.subr.bf16.mxu0 %v2818
  %3432 = vmatpush1.bf16.msra.mxu0 %v2817
  %3433 = vmatprep.subr.bf16.mxu0 %v2824
  %3434 = vmatpush1.bf16.msra.mxu0 %v2823
  %3435 = vmatprep.subr.bf16.mxu0 %v2830
  %3436 = vmatpush1.bf16.msra.mxu0 %v2829
  %3437 = vmatprep.subr.bf16.mxu0 %v2836
  %3438 = vmatpush1.bf16.msra.mxu0 %v2835
  %3439 = vmatprep.subr.bf16.mxu0 %v2842
  %3440 = vmatpush1.bf16.msra.mxu0 %v2841
  %3441 = vmatprep.mubr.bf16.mxu0 %v988
  %3442 = vmatmul.mubr.bf16.gmra.mrb[0].mxu0 %v987
  %v3443 = vpop.f32.mrb[0].mxu0
  %v3444 = vadd.f32 %v3403, %v3443
  %v3445 = vpop.f32.mrb[0].mxu0
  %v3446 = vadd.f32 %v3405, %v3445
  %v3447 = vpop.f32.mrb[0].mxu0
  %v3448 = vpop.f32.mrb[0].mxu0
  %3449 = vdwg.mxu0
  %3450 = vmatprep.subr.bf16.mxu0 %v2848
  %3451 = vmatpush1.bf16.msra.mxu0 %v2847
  %3452 = vmatprep.subr.bf16.mxu0 %v2854
  %3453 = vmatpush1.bf16.msra.mxu0 %v2853
  %3454 = vmatprep.subr.bf16.mxu0 %v2860
  %3455 = vmatpush1.bf16.msra.mxu0 %v2859
  %3456 = vmatprep.subr.bf16.mxu0 %v2866
  %3457 = vmatpush1.bf16.msra.mxu0 %v2865
  %3458 = vmatprep.subr.bf16.mxu0 %v2872
  %3459 = vmatpush1.bf16.msra.mxu0 %v2871
  %3460 = vmatprep.subr.bf16.mxu0 %v2878
  %3461 = vmatpush1.bf16.msra.mxu0 %v2877
  %3462 = vmatprep.subr.bf16.mxu0 %v2884
  %3463 = vmatpush1.bf16.msra.mxu0 %v2883
  %3464 = vmatprep.subr.bf16.mxu0 %v2890
  %3465 = vmatpush1.bf16.msra.mxu0 %v2889
  %3466 = vmatprep.subr.bf16.mxu0 %v2896
  %3467 = vmatpush1.bf16.msra.mxu0 %v2895
  %3468 = vmatprep.subr.bf16.mxu0 %v2902
  %3469 = vmatpush1.bf16.msra.mxu0 %v2901
  %3470 = vmatprep.subr.bf16.mxu0 %v2908
  %3471 = vmatpush1.bf16.msra.mxu0 %v2907
  %3472 = vmatprep.subr.bf16.mxu0 %v2914
  %3473 = vmatpush1.bf16.msra.mxu0 %v2913
  %3474 = vmatprep.subr.bf16.mxu0 %v2920
  %3475 = vmatpush1.bf16.msra.mxu0 %v2919
  %3476 = vmatprep.subr.bf16.mxu0 %v2926
  %3477 = vmatpush1.bf16.msra.mxu0 %v2925
  %3478 = vmatprep.subr.bf16.mxu0 %v2932
  %3479 = vmatpush1.bf16.msra.mxu0 %v2931
  %3480 = vmatprep.subr.bf16.mxu0 %v2938
  %3481 = vmatpush1.bf16.msra.mxu0 %v2937
  %3482 = vmatprep.mubr.bf16.mxu0 %v990
  %3483 = vmatmul.mubr.bf16.gmra.mrb[0].mxu0 %v989
  %v3484 = vpop.f32.mrb[0].mxu0
  %v3485 = vadd.f32 %v3444, %v3484
  %v3486 = vpop.f32.mrb[0].mxu0
  %v3487 = vadd.f32 %v3446, %v3486
  %v3488 = vpop.f32.mrb[0].mxu0
  %v3489 = vpop.f32.mrb[0].mxu0
  %3490 = vdwg.mxu0
  %3491 = vmatprep.subr.bf16.mxu0 %v2562
  %3492 = vmatpush1.bf16.msra.mxu0 %v2561
  %3493 = vmatprep.subr.bf16.mxu0 %v2568
  %3494 = vmatpush1.bf16.msra.mxu0 %v2567
  %3495 = vmatprep.subr.bf16.mxu0 %v2574
  %3496 = vmatpush1.bf16.msra.mxu0 %v2573
  %3497 = vmatprep.subr.bf16.mxu0 %v2580
  %3498 = vmatpush1.bf16.msra.mxu0 %v2579
  %3499 = vmatprep.subr.bf16.mxu0 %v2586
  %3500 = vmatpush1.bf16.msra.mxu0 %v2585
  %3501 = vmatprep.subr.bf16.mxu0 %v2592
  %3502 = vmatpush1.bf16.msra.mxu0 %v2591
  %3503 = vmatprep.subr.bf16.mxu0 %v2598
  %3504 = vmatpush1.bf16.msra.mxu0 %v2597
  %3505 = vmatprep.subr.bf16.mxu0 %v2604
  %3506 = vmatpush1.bf16.msra.mxu0 %v2603
  %3507 = vmatprep.subr.bf16.mxu0 %v2610
  %3508 = vmatpush1.bf16.msra.mxu0 %v2609
  %3509 = vmatprep.subr.bf16.mxu0 %v2616
  %3510 = vmatpush1.bf16.msra.mxu0 %v2615
  %3511 = vmatprep.subr.bf16.mxu0 %v2622
  %3512 = vmatpush1.bf16.msra.mxu0 %v2621
  %3513 = vmatprep.subr.bf16.mxu0 %v2628
  %3514 = vmatpush1.bf16.msra.mxu0 %v2627
  %3515 = vmatprep.subr.bf16.mxu0 %v2634
  %3516 = vmatpush1.bf16.msra.mxu0 %v2633
  %3517 = vmatprep.subr.bf16.mxu0 %v2640
  %3518 = vmatpush1.bf16.msra.mxu0 %v2639
  %3519 = vmatprep.subr.bf16.mxu0 %v2646
  %3520 = vmatpush1.bf16.msra.mxu0 %v2645
  %3521 = vmatprep.subr.bf16.mxu0 %v2652
  %3522 = vmatpush1.bf16.msra.mxu0 %v2651
  %3523 = vmatprep.mubr.bf16.mxu0 %v984
  %3524 = vmatmul.mubr.bf16.gmra.mrb[0].mxu0 %v983
  %v3525 = vpop.f32.mrb[0].mxu0
  %v3526 = vadd.f32 %v1388, %v3525
  %v3527 = vpop.f32.mrb[0].mxu0
  %v3528 = vadd.f32 %v1392, %v3527
  %v3529 = vpop.f32.mrb[0].mxu0
  %v3530 = vpop.f32.mrb[0].mxu0
  %3531 = vdwg.mxu0
  %3532 = vmatprep.subr.bf16.mxu0 %v2658
  %3533 = vmatpush1.bf16.msra.mxu0 %v2657
  %3534 = vmatprep.subr.bf16.mxu0 %v2664
  %3535 = vmatpush1.bf16.msra.mxu0 %v2663
  %3536 = vmatprep.subr.bf16.mxu0 %v2670
  %3537 = vmatpush1.bf16.msra.mxu0 %v2669
  %3538 = vmatprep.subr.bf16.mxu0 %v2676
  %3539 = vmatpush1.bf16.msra.mxu0 %v2675
  %3540 = vmatprep.subr.bf16.mxu0 %v2682
  %3541 = vmatpush1.bf16.msra.mxu0 %v2681
  %3542 = vmatprep.subr.bf16.mxu0 %v2688
  %3543 = vmatpush1.bf16.msra.mxu0 %v2687
  %3544 = vmatprep.subr.bf16.mxu0 %v2694
  %3545 = vmatpush1.bf16.msra.mxu0 %v2693
  %3546 = vmatprep.subr.bf16.mxu0 %v2700
  %3547 = vmatpush1.bf16.msra.mxu0 %v2699
  %3548 = vmatprep.subr.bf16.mxu0 %v2706
  %3549 = vmatpush1.bf16.msra.mxu0 %v2705
  %3550 = vmatprep.subr.bf16.mxu0 %v2712
  %3551 = vmatpush1.bf16.msra.mxu0 %v2711
  %3552 = vmatprep.subr.bf16.mxu0 %v2718
  %3553 = vmatpush1.bf16.msra.mxu0 %v2717
  %3554 = vmatprep.subr.bf16.mxu0 %v2724
  %3555 = vmatpush1.bf16.msra.mxu0 %v2723
  %3556 = vmatprep.subr.bf16.mxu0 %v2730
  %3557 = vmatpush1.bf16.msra.mxu0 %v2729
  %3558 = vmatprep.subr.bf16.mxu0 %v2736
  %3559 = vmatpush1.bf16.msra.mxu0 %v2735
  %3560 = vmatprep.subr.bf16.mxu0 %v2742
  %3561 = vmatpush1.bf16.msra.mxu0 %v2741
  %3562 = vmatprep.subr.bf16.mxu0 %v2748
  %3563 = vmatpush1.bf16.msra.mxu0 %v2747
  %3564 = vmatprep.mubr.bf16.mxu0 %v986
  %3565 = vmatmul.mubr.bf16.gmra.mrb[0].mxu0 %v985
  %v3566 = vpop.f32.mrb[0].mxu0
  %v3567 = vadd.f32 %v3526, %v3566
  %v3568 = vpop.f32.mrb[0].mxu0
  %v3569 = vadd.f32 %v3528, %v3568
  %v3570 = vpop.f32.mrb[0].mxu0
  %v3571 = vpop.f32.mrb[0].mxu0
  %3572 = vdwg.mxu0
  %3573 = vmatprep.subr.bf16.mxu0 %v2754
  %3574 = vmatpush1.bf16.msra.mxu0 %v2753
  %3575 = vmatprep.subr.bf16.mxu0 %v2760
  %3576 = vmatpush1.bf16.msra.mxu0 %v2759
  %3577 = vmatprep.subr.bf16.mxu0 %v2766
  %3578 = vmatpush1.bf16.msra.mxu0 %v2765
  %3579 = vmatprep.subr.bf16.mxu0 %v2772
  %3580 = vmatpush1.bf16.msra.mxu0 %v2771
  %3581 = vmatprep.subr.bf16.mxu0 %v2778
  %3582 = vmatpush1.bf16.msra.mxu0 %v2777
  %3583 = vmatprep.subr.bf16.mxu0 %v2784
  %3584 = vmatpush1.bf16.msra.mxu0 %v2783
  %3585 = vmatprep.subr.bf16.mxu0 %v2790
  %3586 = vmatpush1.bf16.msra.mxu0 %v2789
  %3587 = vmatprep.subr.bf16.mxu0 %v2796
  %3588 = vmatpush1.bf16.msra.mxu0 %v2795
  %3589 = vmatprep.subr.bf16.mxu0 %v2802
  %3590 = vmatpush1.bf16.msra.mxu0 %v2801
  %3591 = vmatprep.subr.bf16.mxu0 %v2808
  %3592 = vmatpush1.bf16.msra.mxu0 %v2807
  %3593 = vmatprep.subr.bf16.mxu0 %v2814
  %3594 = vmatpush1.bf16.msra.mxu0 %v2813
  %3595 = vmatprep.subr.bf16.mxu0 %v2820
  %3596 = vmatpush1.bf16.msra.mxu0 %v2819
  %3597 = vmatprep.subr.bf16.mxu0 %v2826
  %3598 = vmatpush1.bf16.msra.mxu0 %v2825
  %3599 = vmatprep.subr.bf16.mxu0 %v2832
  %3600 = vmatpush1.bf16.msra.mxu0 %v2831
  %3601 = vmatprep.subr.bf16.mxu0 %v2838
  %3602 = vmatpush1.bf16.msra.mxu0 %v2837
  %3603 = vmatprep.subr.bf16.mxu0 %v2844
  %3604 = vmatpush1.bf16.msra.mxu0 %v2843
  %3605 = vmatprep.mubr.bf16.mxu0 %v988
  %3606 = vmatmul.mubr.bf16.gmra.mrb[0].mxu0 %v987
  %v3607 = vpop.f32.mrb[0].mxu0
  %v3608 = vadd.f32 %v3567, %v3607
  %v3609 = vpop.f32.mrb[0].mxu0
  %v3610 = vadd.f32 %v3569, %v3609
  %v3611 = vpop.f32.mrb[0].mxu0
  %v3612 = vpop.f32.mrb[0].mxu0
  %3613 = vdwg.mxu0
  %3614 = vmatprep.subr.bf16.mxu0 %v2850
  %3615 = vmatpush1.bf16.msra.mxu0 %v2849
  %3616 = vmatprep.subr.bf16.mxu0 %v2856
  %3617 = vmatpush1.bf16.msra.mxu0 %v2855
  %3618 = vmatprep.subr.bf16.mxu0 %v2862
  %3619 = vmatpush1.bf16.msra.mxu0 %v2861
  %3620 = vmatprep.subr.bf16.mxu0 %v2868
  %3621 = vmatpush1.bf16.msra.mxu0 %v2867
  %3622 = vmatprep.subr.bf16.mxu0 %v2874
  %3623 = vmatpush1.bf16.msra.mxu0 %v2873
  %3624 = vmatprep.subr.bf16.mxu0 %v2880
  %3625 = vmatpush1.bf16.msra.mxu0 %v2879
  %3626 = vmatprep.subr.bf16.mxu0 %v2886
  %3627 = vmatpush1.bf16.msra.mxu0 %v2885
  %3628 = vmatprep.subr.bf16.mxu0 %v2892
  %3629 = vmatpush1.bf16.msra.mxu0 %v2891
  %3630 = vmatprep.subr.bf16.mxu0 %v2898
  %3631 = vmatpush1.bf16.msra.mxu0 %v2897
  %3632 = vmatprep.subr.bf16.mxu0 %v2904
  %3633 = vmatpush1.bf16.msra.mxu0 %v2903
  %3634 = vmatprep.subr.bf16.mxu0 %v2910
  %3635 = vmatpush1.bf16.msra.mxu0 %v2909
  %3636 = vmatprep.subr.bf16.mxu0 %v2916
  %3637 = vmatpush1.bf16.msra.mxu0 %v2915
  %3638 = vmatprep.subr.bf16.mxu0 %v2922
  %3639 = vmatpush1.bf16.msra.mxu0 %v2921
  %3640 = vmatprep.subr.bf16.mxu0 %v2928
  %3641 = vmatpush1.bf16.msra.mxu0 %v2927
  %3642 = vmatprep.subr.bf16.mxu0 %v2934
  %3643 = vmatpush1.bf16.msra.mxu0 %v2933
  %3644 = vmatprep.subr.bf16.mxu0 %v2940
  %3645 = vmatpush1.bf16.msra.mxu0 %v2939
  %3646 = vmatprep.mubr.bf16.mxu0 %v990
  %3647 = vmatmul.mubr.bf16.gmra.mrb[0].mxu0 %v989
  %v3648 = vpop.f32.mrb[0].mxu0
  %v3649 = vadd.f32 %v3608, %v3648
  %v3650 = vpop.f32.mrb[0].mxu0
  %v3651 = vadd.f32 %v3610, %v3650
  %v3652 = vpop.f32.mrb[0].mxu0
  %v3653 = vpop.f32.mrb[0].mxu0
  %3654 = vdwg.mxu0
  %3655 = vmatprep.subr.bf16.mxu0 %v2564
  %3656 = vmatpush1.bf16.msra.mxu0 %v2563
  %3657 = vmatprep.subr.bf16.mxu0 %v2570
  %3658 = vmatpush1.bf16.msra.mxu0 %v2569
  %3659 = vmatprep.subr.bf16.mxu0 %v2576
  %3660 = vmatpush1.bf16.msra.mxu0 %v2575
  %3661 = vmatprep.subr.bf16.mxu0 %v2582
  %3662 = vmatpush1.bf16.msra.mxu0 %v2581
  %3663 = vmatprep.subr.bf16.mxu0 %v2588
  %3664 = vmatpush1.bf16.msra.mxu0 %v2587
  %3665 = vmatprep.subr.bf16.mxu0 %v2594
  %3666 = vmatpush1.bf16.msra.mxu0 %v2593
  %3667 = vmatprep.subr.bf16.mxu0 %v2600
  %3668 = vmatpush1.bf16.msra.mxu0 %v2599
  %3669 = vmatprep.subr.bf16.mxu0 %v2606
  %3670 = vmatpush1.bf16.msra.mxu0 %v2605
  %3671 = vmatprep.subr.bf16.mxu0 %v2612
  %3672 = vmatpush1.bf16.msra.mxu0 %v2611
  %3673 = vmatprep.subr.bf16.mxu0 %v2618
  %3674 = vmatpush1.bf16.msra.mxu0 %v2617
  %3675 = vmatprep.subr.bf16.mxu0 %v2624
  %3676 = vmatpush1.bf16.msra.mxu0 %v2623
  %3677 = vmatprep.subr.bf16.mxu0 %v2630
  %3678 = vmatpush1.bf16.msra.mxu0 %v2629
  %3679 = vmatprep.subr.bf16.mxu0 %v2636
  %3680 = vmatpush1.bf16.msra.mxu0 %v2635
  %3681 = vmatprep.subr.bf16.mxu0 %v2642
  %3682 = vmatpush1.bf16.msra.mxu0 %v2641
  %3683 = vmatprep.subr.bf16.mxu0 %v2648
  %3684 = vmatpush1.bf16.msra.mxu0 %v2647
  %3685 = vmatprep.subr.bf16.mxu0 %v2654
  %3686 = vmatpush1.bf16.msra.mxu0 %v2653
  %3687 = vmatprep.mubr.bf16.mxu0 %v984
  %3688 = vmatmul.mubr.bf16.gmra.mrb[0].mxu0 %v983
  %v3689 = vpop.f32.mrb[0].mxu0
  %v3690 = vadd.f32 %v1396, %v3689
  %v3691 = vpop.f32.mrb[0].mxu0
  %v3692 = vadd.f32 %v1400, %v3691
  %v3693 = vpop.f32.mrb[0].mxu0
  %v3694 = vpop.f32.mrb[0].mxu0
  %3695 = vdwg.mxu0
  %3696 = vmatprep.subr.bf16.mxu0 %v2660
  %3697 = vmatpush1.bf16.msra.mxu0 %v2659
  %3698 = vmatprep.subr.bf16.mxu0 %v2666
  %3699 = vmatpush1.bf16.msra.mxu0 %v2665
  %3700 = vmatprep.subr.bf16.mxu0 %v2672
  %3701 = vmatpush1.bf16.msra.mxu0 %v2671
  %3702 = vmatprep.subr.bf16.mxu0 %v2678
  %3703 = vmatpush1.bf16.msra.mxu0 %v2677
  %3704 = vmatprep.subr.bf16.mxu0 %v2684
  %3705 = vmatpush1.bf16.msra.mxu0 %v2683
  %3706 = vmatprep.subr.bf16.mxu0 %v2690
  %3707 = vmatpush1.bf16.msra.mxu0 %v2689
  %3708 = vmatprep.subr.bf16.mxu0 %v2696
  %3709 = vmatpush1.bf16.msra.mxu0 %v2695
  %3710 = vmatprep.subr.bf16.mxu0 %v2702
  %3711 = vmatpush1.bf16.msra.mxu0 %v2701
  %3712 = vmatprep.subr.bf16.mxu0 %v2708
  %3713 = vmatpush1.bf16.msra.mxu0 %v2707
  %3714 = vmatprep.subr.bf16.mxu0 %v2714
  %3715 = vmatpush1.bf16.msra.mxu0 %v2713
  %3716 = vmatprep.subr.bf16.mxu0 %v2720
  %3717 = vmatpush1.bf16.msra.mxu0 %v2719
  %3718 = vmatprep.subr.bf16.mxu0 %v2726
  %3719 = vmatpush1.bf16.msra.mxu0 %v2725
  %3720 = vmatprep.subr.bf16.mxu0 %v2732
  %3721 = vmatpush1.bf16.msra.mxu0 %v2731
  %3722 = vmatprep.subr.bf16.mxu0 %v2738
  %3723 = vmatpush1.bf16.msra.mxu0 %v2737
  %3724 = vmatprep.subr.bf16.mxu0 %v2744
  %3725 = vmatpush1.bf16.msra.mxu0 %v2743
  %3726 = vmatprep.subr.bf16.mxu0 %v2750
  %3727 = vmatpush1.bf16.msra.mxu0 %v2749
  %3728 = vmatprep.mubr.bf16.mxu0 %v986
  %3729 = vmatmul.mubr.bf16.gmra.mrb[0].mxu0 %v985
  %v3730 = vpop.f32.mrb[0].mxu0
  %v3731 = vadd.f32 %v3690, %v3730
  %v3732 = vpop.f32.mrb[0].mxu0
  %v3733 = vadd.f32 %v3692, %v3732
  %v3734 = vpop.f32.mrb[0].mxu0
  %v3735 = vpop.f32.mrb[0].mxu0
  %3736 = vdwg.mxu0
  %3737 = vmatprep.subr.bf16.mxu0 %v2756
  %3738 = vmatpush1.bf16.msra.mxu0 %v2755
  %3739 = vmatprep.subr.bf16.mxu0 %v2762
  %3740 = vmatpush1.bf16.msra.mxu0 %v2761
  %3741 = vmatprep.subr.bf16.mxu0 %v2768
  %3742 = vmatpush1.bf16.msra.mxu0 %v2767
  %3743 = vmatprep.subr.bf16.mxu0 %v2774
  %3744 = vmatpush1.bf16.msra.mxu0 %v2773
  %3745 = vmatprep.subr.bf16.mxu0 %v2780
  %3746 = vmatpush1.bf16.msra.mxu0 %v2779
  %3747 = vmatprep.subr.bf16.mxu0 %v2786
  %3748 = vmatpush1.bf16.msra.mxu0 %v2785
  %3749 = vmatprep.subr.bf16.mxu0 %v2792
  %3750 = vmatpush1.bf16.msra.mxu0 %v2791
  %3751 = vmatprep.subr.bf16.mxu0 %v2798
  %3752 = vmatpush1.bf16.msra.mxu0 %v2797
  %3753 = vmatprep.subr.bf16.mxu0 %v2804
  %3754 = vmatpush1.bf16.msra.mxu0 %v2803
  %3755 = vmatprep.subr.bf16.mxu0 %v2810
  %3756 = vmatpush1.bf16.msra.mxu0 %v2809
  %3757 = vmatprep.subr.bf16.mxu0 %v2816
  %3758 = vmatpush1.bf16.msra.mxu0 %v2815
  %3759 = vmatprep.subr.bf16.mxu0 %v2822
  %3760 = vmatpush1.bf16.msra.mxu0 %v2821
  %3761 = vmatprep.subr.bf16.mxu0 %v2828
  %3762 = vmatpush1.bf16.msra.mxu0 %v2827
  %3763 = vmatprep.subr.bf16.mxu0 %v2834
  %3764 = vmatpush1.bf16.msra.mxu0 %v2833
  %3765 = vmatprep.subr.bf16.mxu0 %v2840
  %3766 = vmatpush1.bf16.msra.mxu0 %v2839
  %3767 = vmatprep.subr.bf16.mxu0 %v2846
  %3768 = vmatpush1.bf16.msra.mxu0 %v2845
  %3769 = vmatprep.mubr.bf16.mxu0 %v988
  %3770 = vmatmul.mubr.bf16.gmra.mrb[0].mxu0 %v987
  %v3771 = vpop.f32.mrb[0].mxu0
  %v3772 = vadd.f32 %v3731, %v3771
  %v3773 = vpop.f32.mrb[0].mxu0
  %v3774 = vadd.f32 %v3733, %v3773
  %v3775 = vpop.f32.mrb[0].mxu0
  %v3776 = vpop.f32.mrb[0].mxu0
  %3777 = vdwg.mxu0
  %3778 = vmatprep.subr.bf16.mxu0 %v2852
  %3779 = vmatpush1.bf16.msra.mxu0 %v2851
  %3780 = vmatprep.subr.bf16.mxu0 %v2858
  %3781 = vmatpush1.bf16.msra.mxu0 %v2857
  %3782 = vmatprep.subr.bf16.mxu0 %v2864
  %3783 = vmatpush1.bf16.msra.mxu0 %v2863
  %3784 = vmatprep.subr.bf16.mxu0 %v2870
  %3785 = vmatpush1.bf16.msra.mxu0 %v2869
  %3786 = vmatprep.subr.bf16.mxu0 %v2876
  %3787 = vmatpush1.bf16.msra.mxu0 %v2875
  %3788 = vmatprep.subr.bf16.mxu0 %v2882
  %3789 = vmatpush1.bf16.msra.mxu0 %v2881
  %3790 = vmatprep.subr.bf16.mxu0 %v2888
  %3791 = vmatpush1.bf16.msra.mxu0 %v2887
  %3792 = vmatprep.subr.bf16.mxu0 %v2894
  %3793 = vmatpush1.bf16.msra.mxu0 %v2893
  %3794 = vmatprep.subr.bf16.mxu0 %v2900
  %3795 = vmatpush1.bf16.msra.mxu0 %v2899
  %3796 = vmatprep.subr.bf16.mxu0 %v2906
  %3797 = vmatpush1.bf16.msra.mxu0 %v2905
  %3798 = vmatprep.subr.bf16.mxu0 %v2912
  %3799 = vmatpush1.bf16.msra.mxu0 %v2911
  %3800 = vmatprep.subr.bf16.mxu0 %v2918
  %3801 = vmatpush1.bf16.msra.mxu0 %v2917
  %3802 = vmatprep.subr.bf16.mxu0 %v2924
  %3803 = vmatpush1.bf16.msra.mxu0 %v2923
  %3804 = vmatprep.subr.bf16.mxu0 %v2930
  %3805 = vmatpush1.bf16.msra.mxu0 %v2929
  %3806 = vmatprep.subr.bf16.mxu0 %v2936
  %3807 = vmatpush1.bf16.msra.mxu0 %v2935
  %3808 = vmatprep.subr.bf16.mxu0 %v2942
  %3809 = vmatpush1.bf16.msra.mxu0 %v2941
  %3810 = vmatprep.mubr.bf16.mxu0 %v990
  %3811 = vmatmul.mubr.bf16.gmra.mrb[0].mxu0 %v989
  %v3812 = vpop.f32.mrb[0].mxu0
  %v3813 = vadd.f32 %v3772, %v3812
  %v3814 = vpop.f32.mrb[0].mxu0
  %v3815 = vadd.f32 %v3774, %v3814
  %v3816 = vpop.f32.mrb[0].mxu0
  %v3817 = vpop.f32.mrb[0].mxu0
  %3818 = vdwg.mxu0
  %v3819 = vld [vmem:[%s9] sm:$0x3f]
  %v3820 = vld [vmem:[%s10] sm:$0x3f]
  %v3821 = vadd.f32 %v3485, %v3487
  %v3822 = vadd.f32 %v3821, %v3649
  %v3823 = vadd.f32 %v3822, %v3651
  %v3824 = vadd.f32 %v3823, %v3813
  %v3825 = vadd.f32 %v3824, %v3815
  %3826 = vadd.xlane.f32.xlu0 %v3825
  %v3827 = vpop.xlane.xlu0 %3826
  %v3828 = vrcp.pop 768.0
  %v3829 = vmul.f32 %v3827, %v3828
  %v3830 = vsub.f32 %v3485, %v3829
  %v3831 = vsub.f32 %v3487, %v3829
  %v3832 = vsub.f32 %v3649, %v3829
  %v3833 = vsub.f32 %v3651, %v3829
  %v3834 = vsub.f32 %v3813, %v3829
  %v3835 = vsub.f32 %v3815, %v3829
  %v3836 = vmul.f32 %v3830, %v3830
  %v3837 = vmul.f32 %v3831, %v3831
  %v3838 = vmul.f32 %v3832, %v3832
  %v3839 = vmul.f32 %v3833, %v3833
  %v3840 = vmul.f32 %v3834, %v3834
  %v3841 = vmul.f32 %v3835, %v3835
  %v3842 = vadd.f32 %v3836, %v3837
  %v3843 = vadd.f32 %v3842, %v3838
  %v3844 = vadd.f32 %v3843, %v3839
  %v3845 = vadd.f32 %v3844, %v3840
  %v3846 = vadd.f32 %v3845, %v3841
  %3847 = vadd.xlane.f32.xlu0 %v3846
  %v3848 = vpop.xlane.xlu0 %3847
  %v3849 = vmul.f32 %v3848, %v3828
  %v3850 = vadd.f32 %v3849, 1e-05
  %v3851 = vrsqrt.pop %v3850
  %v3852 = vmul.f32 %v3830, %v3851
  %v3853 = vmul.f32 %v3831, %v3851
  %v3854 = vmul.f32 %v3832, %v3851
  %v3855 = vmul.f32 %v3833, %v3851
  %v3856 = vmul.f32 %v3834, %v3851
  %v3857 = vmul.f32 %v3835, %v3851
  %v3859 = vlaneseq
  %v3860 = vshrl.u32 %v3859, 7
  %v3861 = vsub.s32 0, %v3860
  %v3862 = vrot.slane %v3819, %v3861
  %v3863 = vlaneseq
  %v3864 = vshrl.u32 %v3863, 7
  %v3865 = vsub.s32 1, %v3864
  %v3866 = vrot.slane %v3819, %v3865
  %v3867 = vlaneseq
  %v3868 = vshrl.u32 %v3867, 7
  %v3869 = vsub.s32 2, %v3868
  %v3870 = vrot.slane %v3819, %v3869
  %v3871 = vlaneseq
  %v3872 = vshrl.u32 %v3871, 7
  %v3873 = vsub.s32 3, %v3872
  %v3874 = vrot.slane %v3819, %v3873
  %v3875 = vlaneseq
  %v3876 = vshrl.u32 %v3875, 7
  %v3877 = vsub.s32 4, %v3876
  %v3878 = vrot.slane %v3819, %v3877
  %v3879 = vlaneseq
  %v3880 = vshrl.u32 %v3879, 7
  %v3881 = vsub.s32 5, %v3880
  %v3882 = vrot.slane %v3819, %v3881
  %v3889 = vmul.f32 %v3852, %v3862
  %v3890 = vmul.f32 %v3853, %v3866
  %v3891 = vmul.f32 %v3854, %v3870
  %v3892 = vmul.f32 %v3855, %v3874
  %v3893 = vmul.f32 %v3856, %v3878
  %v3894 = vmul.f32 %v3857, %v3882
  %v3896 = vlaneseq
  %v3897 = vshrl.u32 %v3896, 7
  %v3898 = vsub.s32 0, %v3897
  %v3899 = vrot.slane %v3820, %v3898
  %v3900 = vlaneseq
  %v3901 = vshrl.u32 %v3900, 7
  %v3902 = vsub.s32 1, %v3901
  %v3903 = vrot.slane %v3820, %v3902
  %v3904 = vlaneseq
  %v3905 = vshrl.u32 %v3904, 7
  %v3906 = vsub.s32 2, %v3905
  %v3907 = vrot.slane %v3820, %v3906
  %v3908 = vlaneseq
  %v3909 = vshrl.u32 %v3908, 7
  %v3910 = vsub.s32 3, %v3909
  %v3911 = vrot.slane %v3820, %v3910
  %v3912 = vlaneseq
  %v3913 = vshrl.u32 %v3912, 7
  %v3914 = vsub.s32 4, %v3913
  %v3915 = vrot.slane %v3820, %v3914
  %v3916 = vlaneseq
  %v3917 = vshrl.u32 %v3916, 7
  %v3918 = vsub.s32 5, %v3917
  %v3919 = vrot.slane %v3820, %v3918
  %v3926 = vadd.f32 %v3889, %v3899
  %v3927 = vadd.f32 %v3890, %v3903
  %v3928 = vadd.f32 %v3891, %v3907
  %v3929 = vadd.f32 %v3892, %v3911
  %v3930 = vadd.f32 %v3893, %v3915
  %v3931 = vadd.f32 %v3894, %v3919
  %v3932 = vmax.f32 %v3926, 0.0
  %v3933 = vmax.f32 %v3927, 0.0
  %v3934 = vmax.f32 %v3928, 0.0
  %v3935 = vmax.f32 %v3929, 0.0
  %v3936 = vmax.f32 %v3930, 0.0
  %v3937 = vmax.f32 %v3931, 0.0
  %v3938 = vpack.c.bf16 %v3932, %v3932
  %v3939 = vpack.c.bf16 %v3933, %v3933
  %v3940 = vpack.c.bf16 %v3934, %v3934
  %v3941 = vpack.c.bf16 %v3935, %v3935
  %v3942 = vpack.c.bf16 %v3936, %v3936
  %v3943 = vpack.c.bf16 %v3937, %v3937
  %v3944 = vld [vmem:[%s11] sm:$0xff]
  %v3945 = vld [vmem:[%s11 + $0x8] sm:$0xff]
  %v3946 = vld [vmem:[%s11 + $0x10] sm:$0xff]
  %v3947 = vld [vmem:[%s11 + $0x18] sm:$0xff]
  %v3948 = vld [vmem:[%s11 + $0x20] sm:$0xff]
  %v3949 = vld [vmem:[%s11 + $0x28] sm:$0xff]
  %v3950 = vld [vmem:[%s11 + $0x30] sm:$0xff]
  %v3951 = vld [vmem:[%s11 + $0x38] sm:$0xff]
  %v3952 = vld [vmem:[%s11 + $0x40] sm:$0xff]
  %v3953 = vld [vmem:[%s11 + $0x48] sm:$0xff]
  %v3954 = vld [vmem:[%s11 + $0x50] sm:$0xff]
  %v3955 = vld [vmem:[%s11 + $0x58] sm:$0xff]
  %v3956 = vld [vmem:[%s11 + $0x60] sm:$0xff]
  %v3957 = vld [vmem:[%s11 + $0x68] sm:$0xff]
  %v3958 = vld [vmem:[%s11 + $0x70] sm:$0xff]
  %v3959 = vld [vmem:[%s11 + $0x78] sm:$0xff]
  %v3960 = vld [vmem:[%s11 + $0x80] sm:$0xff]
  %v3961 = vld [vmem:[%s11 + $0x88] sm:$0xff]
  %v3962 = vld [vmem:[%s11 + $0x90] sm:$0xff]
  %v3963 = vld [vmem:[%s11 + $0x98] sm:$0xff]
  %v3964 = vld [vmem:[%s11 + $0xa0] sm:$0xff]
  %v3965 = vld [vmem:[%s11 + $0xa8] sm:$0xff]
  %v3966 = vld [vmem:[%s11 + $0xb0] sm:$0xff]
  %v3967 = vld [vmem:[%s11 + $0xb8] sm:$0xff]
  %v3968 = vld [vmem:[%s11 + $0xc0] sm:$0xff]
  %v3969 = vld [vmem:[%s11 + $0xc8] sm:$0xff]
  %v3970 = vld [vmem:[%s11 + $0xd0] sm:$0xff]
  %v3971 = vld [vmem:[%s11 + $0xd8] sm:$0xff]
  %v3972 = vld [vmem:[%s11 + $0xe0] sm:$0xff]
  %v3973 = vld [vmem:[%s11 + $0xe8] sm:$0xff]
  %v3974 = vld [vmem:[%s11 + $0xf0] sm:$0xff]
  %v3975 = vld [vmem:[%s11 + $0xf8] sm:$0xff]
  %v3976 = vld [vmem:[%s11 + $0x100] sm:$0xff]
  %v3977 = vld [vmem:[%s11 + $0x108] sm:$0xff]
  %v3978 = vld [vmem:[%s11 + $0x110] sm:$0xff]
  %v3979 = vld [vmem:[%s11 + $0x118] sm:$0xff]
  %v3980 = vld [vmem:[%s11 + $0x120] sm:$0xff]
  %v3981 = vld [vmem:[%s11 + $0x128] sm:$0xff]
  %v3982 = vld [vmem:[%s11 + $0x130] sm:$0xff]
  %v3983 = vld [vmem:[%s11 + $0x138] sm:$0xff]
  %v3984 = vld [vmem:[%s11 + $0x140] sm:$0xff]
  %v3985 = vld [vmem:[%s11 + $0x148] sm:$0xff]
  %v3986 = vld [vmem:[%s11 + $0x150] sm:$0xff]
  %v3987 = vld [vmem:[%s11 + $0x158] sm:$0xff]
  %v3988 = vld [vmem:[%s11 + $0x160] sm:$0xff]
  %v3989 = vld [vmem:[%s11 + $0x168] sm:$0xff]
  %v3990 = vld [vmem:[%s11 + $0x170] sm:$0xff]
  %v3991 = vld [vmem:[%s11 + $0x178] sm:$0xff]
  %v3992 = vld [vmem:[%s11 + $0x180] sm:$0xff]
  %v3993 = vld [vmem:[%s11 + $0x188] sm:$0xff]
  %v3994 = vld [vmem:[%s11 + $0x190] sm:$0xff]
  %v3995 = vld [vmem:[%s11 + $0x198] sm:$0xff]
  %v3996 = vld [vmem:[%s11 + $0x1a0] sm:$0xff]
  %v3997 = vld [vmem:[%s11 + $0x1a8] sm:$0xff]
  %v3998 = vld [vmem:[%s11 + $0x1b0] sm:$0xff]
  %v3999 = vld [vmem:[%s11 + $0x1b8] sm:$0xff]
  %v4000 = vld [vmem:[%s11 + $0x1c0] sm:$0xff]
  %v4001 = vld [vmem:[%s11 + $0x1c8] sm:$0xff]
  %v4002 = vld [vmem:[%s11 + $0x1d0] sm:$0xff]
  %v4003 = vld [vmem:[%s11 + $0x1d8] sm:$0xff]
  %v4004 = vld [vmem:[%s11 + $0x1e0] sm:$0xff]
  %v4005 = vld [vmem:[%s11 + $0x1e8] sm:$0xff]
  %v4006 = vld [vmem:[%s11 + $0x1f0] sm:$0xff]
  %v4007 = vld [vmem:[%s11 + $0x1f8] sm:$0xff]
  %v4008 = vld [vmem:[%s11 + $0x200] sm:$0xff]
  %v4009 = vld [vmem:[%s11 + $0x208] sm:$0xff]
  %v4010 = vld [vmem:[%s11 + $0x210] sm:$0xff]
  %v4011 = vld [vmem:[%s11 + $0x218] sm:$0xff]
  %v4012 = vld [vmem:[%s11 + $0x220] sm:$0xff]
  %v4013 = vld [vmem:[%s11 + $0x228] sm:$0xff]
  %v4014 = vld [vmem:[%s11 + $0x230] sm:$0xff]
  %v4015 = vld [vmem:[%s11 + $0x238] sm:$0xff]
  %v4016 = vld [vmem:[%s11 + $0x240] sm:$0xff]
  %v4017 = vld [vmem:[%s11 + $0x248] sm:$0xff]
  %v4018 = vld [vmem:[%s11 + $0x250] sm:$0xff]
  %v4019 = vld [vmem:[%s11 + $0x258] sm:$0xff]
  %v4020 = vld [vmem:[%s11 + $0x260] sm:$0xff]
  %v4021 = vld [vmem:[%s11 + $0x268] sm:$0xff]
  %v4022 = vld [vmem:[%s11 + $0x270] sm:$0xff]
  %v4023 = vld [vmem:[%s11 + $0x278] sm:$0xff]
  %v4024 = vld [vmem:[%s11 + $0x280] sm:$0xff]
  %v4025 = vld [vmem:[%s11 + $0x288] sm:$0xff]
  %v4026 = vld [vmem:[%s11 + $0x290] sm:$0xff]
  %v4027 = vld [vmem:[%s11 + $0x298] sm:$0xff]
  %v4028 = vld [vmem:[%s11 + $0x2a0] sm:$0xff]
  %v4029 = vld [vmem:[%s11 + $0x2a8] sm:$0xff]
  %v4030 = vld [vmem:[%s11 + $0x2b0] sm:$0xff]
  %v4031 = vld [vmem:[%s11 + $0x2b8] sm:$0xff]
  %v4032 = vld [vmem:[%s11 + $0x2c0] sm:$0xff]
  %v4033 = vld [vmem:[%s11 + $0x2c8] sm:$0xff]
  %v4034 = vld [vmem:[%s11 + $0x2d0] sm:$0xff]
  %v4035 = vld [vmem:[%s11 + $0x2d8] sm:$0xff]
  %v4036 = vld [vmem:[%s11 + $0x2e0] sm:$0xff]
  %v4037 = vld [vmem:[%s11 + $0x2e8] sm:$0xff]
  %v4038 = vld [vmem:[%s11 + $0x2f0] sm:$0xff]
  %v4039 = vld [vmem:[%s11 + $0x2f8] sm:$0xff]
  %v4040 = vld [vmem:[%s11 + $0x300] sm:$0xff]
  %v4041 = vld [vmem:[%s11 + $0x308] sm:$0xff]
  %v4042 = vld [vmem:[%s11 + $0x310] sm:$0xff]
  %v4043 = vld [vmem:[%s11 + $0x318] sm:$0xff]
  %v4044 = vld [vmem:[%s11 + $0x320] sm:$0xff]
  %v4045 = vld [vmem:[%s11 + $0x328] sm:$0xff]
  %v4046 = vld [vmem:[%s11 + $0x330] sm:$0xff]
  %v4047 = vld [vmem:[%s11 + $0x338] sm:$0xff]
  %v4048 = vld [vmem:[%s11 + $0x340] sm:$0xff]
  %v4049 = vld [vmem:[%s11 + $0x348] sm:$0xff]
  %v4050 = vld [vmem:[%s11 + $0x350] sm:$0xff]
  %v4051 = vld [vmem:[%s11 + $0x358] sm:$0xff]
  %v4052 = vld [vmem:[%s11 + $0x360] sm:$0xff]
  %v4053 = vld [vmem:[%s11 + $0x368] sm:$0xff]
  %v4054 = vld [vmem:[%s11 + $0x370] sm:$0xff]
  %v4055 = vld [vmem:[%s11 + $0x378] sm:$0xff]
  %v4056 = vld [vmem:[%s11 + $0x380] sm:$0xff]
  %v4057 = vld [vmem:[%s11 + $0x388] sm:$0xff]
  %v4058 = vld [vmem:[%s11 + $0x390] sm:$0xff]
  %v4059 = vld [vmem:[%s11 + $0x398] sm:$0xff]
  %v4060 = vld [vmem:[%s11 + $0x3a0] sm:$0xff]
  %v4061 = vld [vmem:[%s11 + $0x3a8] sm:$0xff]
  %v4062 = vld [vmem:[%s11 + $0x3b0] sm:$0xff]
  %v4063 = vld [vmem:[%s11 + $0x3b8] sm:$0xff]
  %v4064 = vld [vmem:[%s11 + $0x3c0] sm:$0xff]
  %v4065 = vld [vmem:[%s11 + $0x3c8] sm:$0xff]
  %v4066 = vld [vmem:[%s11 + $0x3d0] sm:$0xff]
  %v4067 = vld [vmem:[%s11 + $0x3d8] sm:$0xff]
  %v4068 = vld [vmem:[%s11 + $0x3e0] sm:$0xff]
  %v4069 = vld [vmem:[%s11 + $0x3e8] sm:$0xff]
  %v4070 = vld [vmem:[%s11 + $0x3f0] sm:$0xff]
  %v4071 = vld [vmem:[%s11 + $0x3f8] sm:$0xff]
  %v4072 = vld [vmem:[%s11 + $0x400] sm:$0xff]
  %v4073 = vld [vmem:[%s11 + $0x408] sm:$0xff]
  %v4074 = vld [vmem:[%s11 + $0x410] sm:$0xff]
  %v4075 = vld [vmem:[%s11 + $0x418] sm:$0xff]
  %v4076 = vld [vmem:[%s11 + $0x420] sm:$0xff]
  %v4077 = vld [vmem:[%s11 + $0x428] sm:$0xff]
  %v4078 = vld [vmem:[%s11 + $0x430] sm:$0xff]
  %v4079 = vld [vmem:[%s11 + $0x438] sm:$0xff]
  %v4080 = vld [vmem:[%s11 + $0x440] sm:$0xff]
  %v4081 = vld [vmem:[%s11 + $0x448] sm:$0xff]
  %v4082 = vld [vmem:[%s11 + $0x450] sm:$0xff]
  %v4083 = vld [vmem:[%s11 + $0x458] sm:$0xff]
  %v4084 = vld [vmem:[%s11 + $0x460] sm:$0xff]
  %v4085 = vld [vmem:[%s11 + $0x468] sm:$0xff]
  %v4086 = vld [vmem:[%s11 + $0x470] sm:$0xff]
  %v4087 = vld [vmem:[%s11 + $0x478] sm:$0xff]
  %v4088 = vld [vmem:[%s11 + $0x480] sm:$0xff]
  %v4089 = vld [vmem:[%s11 + $0x488] sm:$0xff]
  %v4090 = vld [vmem:[%s11 + $0x490] sm:$0xff]
  %v4091 = vld [vmem:[%s11 + $0x498] sm:$0xff]
  %v4092 = vld [vmem:[%s11 + $0x4a0] sm:$0xff]
  %v4093 = vld [vmem:[%s11 + $0x4a8] sm:$0xff]
  %v4094 = vld [vmem:[%s11 + $0x4b0] sm:$0xff]
  %v4095 = vld [vmem:[%s11 + $0x4b8] sm:$0xff]
  %v4096 = vld [vmem:[%s11 + $0x4c0] sm:$0xff]
  %v4097 = vld [vmem:[%s11 + $0x4c8] sm:$0xff]
  %v4098 = vld [vmem:[%s11 + $0x4d0] sm:$0xff]
  %v4099 = vld [vmem:[%s11 + $0x4d8] sm:$0xff]
  %v4100 = vld [vmem:[%s11 + $0x4e0] sm:$0xff]
  %v4101 = vld [vmem:[%s11 + $0x4e8] sm:$0xff]
  %v4102 = vld [vmem:[%s11 + $0x4f0] sm:$0xff]
  %v4103 = vld [vmem:[%s11 + $0x4f8] sm:$0xff]
  %v4104 = vld [vmem:[%s11 + $0x500] sm:$0xff]
  %v4105 = vld [vmem:[%s11 + $0x508] sm:$0xff]
  %v4106 = vld [vmem:[%s11 + $0x510] sm:$0xff]
  %v4107 = vld [vmem:[%s11 + $0x518] sm:$0xff]
  %v4108 = vld [vmem:[%s11 + $0x520] sm:$0xff]
  %v4109 = vld [vmem:[%s11 + $0x528] sm:$0xff]
  %v4110 = vld [vmem:[%s11 + $0x530] sm:$0xff]
  %v4111 = vld [vmem:[%s11 + $0x538] sm:$0xff]
  %v4112 = vld [vmem:[%s11 + $0x540] sm:$0xff]
  %v4113 = vld [vmem:[%s11 + $0x548] sm:$0xff]
  %v4114 = vld [vmem:[%s11 + $0x550] sm:$0xff]
  %v4115 = vld [vmem:[%s11 + $0x558] sm:$0xff]
  %v4116 = vld [vmem:[%s11 + $0x560] sm:$0xff]
  %v4117 = vld [vmem:[%s11 + $0x568] sm:$0xff]
  %v4118 = vld [vmem:[%s11 + $0x570] sm:$0xff]
  %v4119 = vld [vmem:[%s11 + $0x578] sm:$0xff]
  %v4120 = vld [vmem:[%s11 + $0x580] sm:$0xff]
  %v4121 = vld [vmem:[%s11 + $0x588] sm:$0xff]
  %v4122 = vld [vmem:[%s11 + $0x590] sm:$0xff]
  %v4123 = vld [vmem:[%s11 + $0x598] sm:$0xff]
  %v4124 = vld [vmem:[%s11 + $0x5a0] sm:$0xff]
  %v4125 = vld [vmem:[%s11 + $0x5a8] sm:$0xff]
  %v4126 = vld [vmem:[%s11 + $0x5b0] sm:$0xff]
  %v4127 = vld [vmem:[%s11 + $0x5b8] sm:$0xff]
  %v4128 = vld [vmem:[%s11 + $0x5c0] sm:$0xff]
  %v4129 = vld [vmem:[%s11 + $0x5c8] sm:$0xff]
  %v4130 = vld [vmem:[%s11 + $0x5d0] sm:$0xff]
  %v4131 = vld [vmem:[%s11 + $0x5d8] sm:$0xff]
  %v4132 = vld [vmem:[%s11 + $0x5e0] sm:$0xff]
  %v4133 = vld [vmem:[%s11 + $0x5e8] sm:$0xff]
  %v4134 = vld [vmem:[%s11 + $0x5f0] sm:$0xff]
  %v4135 = vld [vmem:[%s11 + $0x5f8] sm:$0xff]
  %v4136 = vld [vmem:[%s12] sm:$0xf]
  %v4138 = vlaneseq
  %v4139 = vshrl.u32 %v4138, 7
  %v4140 = vsub.s32 0, %v4139
  %v4141 = vrot.slane %v4136, %v4140
  %v4142 = vlaneseq
  %v4143 = vshrl.u32 %v4142, 7
  %v4144 = vsub.s32 1, %v4143
  %v4145 = vrot.slane %v4136, %v4144
  %v4146 = vlaneseq
  %v4147 = vshrl.u32 %v4146, 7
  %v4148 = vsub.s32 2, %v4147
  %v4149 = vrot.slane %v4136, %v4148
  %v4150 = vlaneseq
  %v4151 = vshrl.u32 %v4150, 7
  %v4152 = vsub.s32 3, %v4151
  %v4153 = vrot.slane %v4136, %v4152
  %v4350 = vunpack.c.l.b16 %v3944
  %v4351 = vunpack.c.h.b16 %v3944
  %v4352 = vunpack.c.l.b16 %v3945
  %v4353 = vunpack.c.h.b16 %v3945
  %v4354 = vunpack.c.l.b16 %v3946
  %v4355 = vunpack.c.h.b16 %v3946
  %v4356 = vunpack.c.l.b16 %v3947
  %v4357 = vunpack.c.h.b16 %v3947
  %v4358 = vunpack.c.l.b16 %v3948
  %v4359 = vunpack.c.h.b16 %v3948
  %v4360 = vunpack.c.l.b16 %v3949
  %v4361 = vunpack.c.h.b16 %v3949
  %v4362 = vunpack.c.l.b16 %v3950
  %v4363 = vunpack.c.h.b16 %v3950
  %v4364 = vunpack.c.l.b16 %v3951
  %v4365 = vunpack.c.h.b16 %v3951
  %v4366 = vunpack.c.l.b16 %v3952
  %v4367 = vunpack.c.h.b16 %v3952
  %v4368 = vunpack.c.l.b16 %v3953
  %v4369 = vunpack.c.h.b16 %v3953
  %v4370 = vunpack.c.l.b16 %v3954
  %v4371 = vunpack.c.h.b16 %v3954
  %v4372 = vunpack.c.l.b16 %v3955
  %v4373 = vunpack.c.h.b16 %v3955
  %v4374 = vunpack.c.l.b16 %v3956
  %v4375 = vunpack.c.h.b16 %v3956
  %v4376 = vunpack.c.l.b16 %v3957
  %v4377 = vunpack.c.h.b16 %v3957
  %v4378 = vunpack.c.l.b16 %v3958
  %v4379 = vunpack.c.h.b16 %v3958
  %v4380 = vunpack.c.l.b16 %v3959
  %v4381 = vunpack.c.h.b16 %v3959
  %v4382 = vunpack.c.l.b16 %v3960
  %v4383 = vunpack.c.h.b16 %v3960
  %v4384 = vunpack.c.l.b16 %v3961
  %v4385 = vunpack.c.h.b16 %v3961
  %v4386 = vunpack.c.l.b16 %v3962
  %v4387 = vunpack.c.h.b16 %v3962
  %v4388 = vunpack.c.l.b16 %v3963
  %v4389 = vunpack.c.h.b16 %v3963
  %v4390 = vunpack.c.l.b16 %v3964
  %v4391 = vunpack.c.h.b16 %v3964
  %v4392 = vunpack.c.l.b16 %v3965
  %v4393 = vunpack.c.h.b16 %v3965
  %v4394 = vunpack.c.l.b16 %v3966
  %v4395 = vunpack.c.h.b16 %v3966
  %v4396 = vunpack.c.l.b16 %v3967
  %v4397 = vunpack.c.h.b16 %v3967
  %v4398 = vunpack.c.l.b16 %v3968
  %v4399 = vunpack.c.h.b16 %v3968
  %v4400 = vunpack.c.l.b16 %v3969
  %v4401 = vunpack.c.h.b16 %v3969
  %v4402 = vunpack.c.l.b16 %v3970
  %v4403 = vunpack.c.h.b16 %v3970
  %v4404 = vunpack.c.l.b16 %v3971
  %v4405 = vunpack.c.h.b16 %v3971
  %v4406 = vunpack.c.l.b16 %v3972
  %v4407 = vunpack.c.h.b16 %v3972
  %v4408 = vunpack.c.l.b16 %v3973
  %v4409 = vunpack.c.h.b16 %v3973
  %v4410 = vunpack.c.l.b16 %v3974
  %v4411 = vunpack.c.h.b16 %v3974
  %v4412 = vunpack.c.l.b16 %v3975
  %v4413 = vunpack.c.h.b16 %v3975
  %v4414 = vunpack.c.l.b16 %v3976
  %v4415 = vunpack.c.h.b16 %v3976
  %v4416 = vunpack.c.l.b16 %v3977
  %v4417 = vunpack.c.h.b16 %v3977
  %v4418 = vunpack.c.l.b16 %v3978
  %v4419 = vunpack.c.h.b16 %v3978
  %v4420 = vunpack.c.l.b16 %v3979
  %v4421 = vunpack.c.h.b16 %v3979
  %v4422 = vunpack.c.l.b16 %v3980
  %v4423 = vunpack.c.h.b16 %v3980
  %v4424 = vunpack.c.l.b16 %v3981
  %v4425 = vunpack.c.h.b16 %v3981
  %v4426 = vunpack.c.l.b16 %v3982
  %v4427 = vunpack.c.h.b16 %v3982
  %v4428 = vunpack.c.l.b16 %v3983
  %v4429 = vunpack.c.h.b16 %v3983
  %v4430 = vunpack.c.l.b16 %v3984
  %v4431 = vunpack.c.h.b16 %v3984
  %v4432 = vunpack.c.l.b16 %v3985
  %v4433 = vunpack.c.h.b16 %v3985
  %v4434 = vunpack.c.l.b16 %v3986
  %v4435 = vunpack.c.h.b16 %v3986
  %v4436 = vunpack.c.l.b16 %v3987
  %v4437 = vunpack.c.h.b16 %v3987
  %v4438 = vunpack.c.l.b16 %v3988
  %v4439 = vunpack.c.h.b16 %v3988
  %v4440 = vunpack.c.l.b16 %v3989
  %v4441 = vunpack.c.h.b16 %v3989
  %v4442 = vunpack.c.l.b16 %v3990
  %v4443 = vunpack.c.h.b16 %v3990
  %v4444 = vunpack.c.l.b16 %v3991
  %v4445 = vunpack.c.h.b16 %v3991
  %v4446 = vunpack.c.l.b16 %v3992
  %v4447 = vunpack.c.h.b16 %v3992
  %v4448 = vunpack.c.l.b16 %v3993
  %v4449 = vunpack.c.h.b16 %v3993
  %v4450 = vunpack.c.l.b16 %v3994
  %v4451 = vunpack.c.h.b16 %v3994
  %v4452 = vunpack.c.l.b16 %v3995
  %v4453 = vunpack.c.h.b16 %v3995
  %v4454 = vunpack.c.l.b16 %v3996
  %v4455 = vunpack.c.h.b16 %v3996
  %v4456 = vunpack.c.l.b16 %v3997
  %v4457 = vunpack.c.h.b16 %v3997
  %v4458 = vunpack.c.l.b16 %v3998
  %v4459 = vunpack.c.h.b16 %v3998
  %v4460 = vunpack.c.l.b16 %v3999
  %v4461 = vunpack.c.h.b16 %v3999
  %v4462 = vunpack.c.l.b16 %v4000
  %v4463 = vunpack.c.h.b16 %v4000
  %v4464 = vunpack.c.l.b16 %v4001
  %v4465 = vunpack.c.h.b16 %v4001
  %v4466 = vunpack.c.l.b16 %v4002
  %v4467 = vunpack.c.h.b16 %v4002
  %v4468 = vunpack.c.l.b16 %v4003
  %v4469 = vunpack.c.h.b16 %v4003
  %v4470 = vunpack.c.l.b16 %v4004
  %v4471 = vunpack.c.h.b16 %v4004
  %v4472 = vunpack.c.l.b16 %v4005
  %v4473 = vunpack.c.h.b16 %v4005
  %v4474 = vunpack.c.l.b16 %v4006
  %v4475 = vunpack.c.h.b16 %v4006
  %v4476 = vunpack.c.l.b16 %v4007
  %v4477 = vunpack.c.h.b16 %v4007
  %v4478 = vunpack.c.l.b16 %v4008
  %v4479 = vunpack.c.h.b16 %v4008
  %v4480 = vunpack.c.l.b16 %v4009
  %v4481 = vunpack.c.h.b16 %v4009
  %v4482 = vunpack.c.l.b16 %v4010
  %v4483 = vunpack.c.h.b16 %v4010
  %v4484 = vunpack.c.l.b16 %v4011
  %v4485 = vunpack.c.h.b16 %v4011
  %v4486 = vunpack.c.l.b16 %v4012
  %v4487 = vunpack.c.h.b16 %v4012
  %v4488 = vunpack.c.l.b16 %v4013
  %v4489 = vunpack.c.h.b16 %v4013
  %v4490 = vunpack.c.l.b16 %v4014
  %v4491 = vunpack.c.h.b16 %v4014
  %v4492 = vunpack.c.l.b16 %v4015
  %v4493 = vunpack.c.h.b16 %v4015
  %v4494 = vunpack.c.l.b16 %v4016
  %v4495 = vunpack.c.h.b16 %v4016
  %v4496 = vunpack.c.l.b16 %v4017
  %v4497 = vunpack.c.h.b16 %v4017
  %v4498 = vunpack.c.l.b16 %v4018
  %v4499 = vunpack.c.h.b16 %v4018
  %v4500 = vunpack.c.l.b16 %v4019
  %v4501 = vunpack.c.h.b16 %v4019
  %v4502 = vunpack.c.l.b16 %v4020
  %v4503 = vunpack.c.h.b16 %v4020
  %v4504 = vunpack.c.l.b16 %v4021
  %v4505 = vunpack.c.h.b16 %v4021
  %v4506 = vunpack.c.l.b16 %v4022
  %v4507 = vunpack.c.h.b16 %v4022
  %v4508 = vunpack.c.l.b16 %v4023
  %v4509 = vunpack.c.h.b16 %v4023
  %v4510 = vunpack.c.l.b16 %v4024
  %v4511 = vunpack.c.h.b16 %v4024
  %v4512 = vunpack.c.l.b16 %v4025
  %v4513 = vunpack.c.h.b16 %v4025
  %v4514 = vunpack.c.l.b16 %v4026
  %v4515 = vunpack.c.h.b16 %v4026
  %v4516 = vunpack.c.l.b16 %v4027
  %v4517 = vunpack.c.h.b16 %v4027
  %v4518 = vunpack.c.l.b16 %v4028
  %v4519 = vunpack.c.h.b16 %v4028
  %v4520 = vunpack.c.l.b16 %v4029
  %v4521 = vunpack.c.h.b16 %v4029
  %v4522 = vunpack.c.l.b16 %v4030
  %v4523 = vunpack.c.h.b16 %v4030
  %v4524 = vunpack.c.l.b16 %v4031
  %v4525 = vunpack.c.h.b16 %v4031
  %v4526 = vunpack.c.l.b16 %v4032
  %v4527 = vunpack.c.h.b16 %v4032
  %v4528 = vunpack.c.l.b16 %v4033
  %v4529 = vunpack.c.h.b16 %v4033
  %v4530 = vunpack.c.l.b16 %v4034
  %v4531 = vunpack.c.h.b16 %v4034
  %v4532 = vunpack.c.l.b16 %v4035
  %v4533 = vunpack.c.h.b16 %v4035
  %v4534 = vunpack.c.l.b16 %v4036
  %v4535 = vunpack.c.h.b16 %v4036
  %v4536 = vunpack.c.l.b16 %v4037
  %v4537 = vunpack.c.h.b16 %v4037
  %v4538 = vunpack.c.l.b16 %v4038
  %v4539 = vunpack.c.h.b16 %v4038
  %v4540 = vunpack.c.l.b16 %v4039
  %v4541 = vunpack.c.h.b16 %v4039
  %v4542 = vunpack.c.l.b16 %v4040
  %v4543 = vunpack.c.h.b16 %v4040
  %v4544 = vunpack.c.l.b16 %v4041
  %v4545 = vunpack.c.h.b16 %v4041
  %v4546 = vunpack.c.l.b16 %v4042
  %v4547 = vunpack.c.h.b16 %v4042
  %v4548 = vunpack.c.l.b16 %v4043
  %v4549 = vunpack.c.h.b16 %v4043
  %v4550 = vunpack.c.l.b16 %v4044
  %v4551 = vunpack.c.h.b16 %v4044
  %v4552 = vunpack.c.l.b16 %v4045
  %v4553 = vunpack.c.h.b16 %v4045
  %v4554 = vunpack.c.l.b16 %v4046
  %v4555 = vunpack.c.h.b16 %v4046
  %v4556 = vunpack.c.l.b16 %v4047
  %v4557 = vunpack.c.h.b16 %v4047
  %v4558 = vunpack.c.l.b16 %v4048
  %v4559 = vunpack.c.h.b16 %v4048
  %v4560 = vunpack.c.l.b16 %v4049
  %v4561 = vunpack.c.h.b16 %v4049
  %v4562 = vunpack.c.l.b16 %v4050
  %v4563 = vunpack.c.h.b16 %v4050
  %v4564 = vunpack.c.l.b16 %v4051
  %v4565 = vunpack.c.h.b16 %v4051
  %v4566 = vunpack.c.l.b16 %v4052
  %v4567 = vunpack.c.h.b16 %v4052
  %v4568 = vunpack.c.l.b16 %v4053
  %v4569 = vunpack.c.h.b16 %v4053
  %v4570 = vunpack.c.l.b16 %v4054
  %v4571 = vunpack.c.h.b16 %v4054
  %v4572 = vunpack.c.l.b16 %v4055
  %v4573 = vunpack.c.h.b16 %v4055
  %v4574 = vunpack.c.l.b16 %v4056
  %v4575 = vunpack.c.h.b16 %v4056
  %v4576 = vunpack.c.l.b16 %v4057
  %v4577 = vunpack.c.h.b16 %v4057
  %v4578 = vunpack.c.l.b16 %v4058
  %v4579 = vunpack.c.h.b16 %v4058
  %v4580 = vunpack.c.l.b16 %v4059
  %v4581 = vunpack.c.h.b16 %v4059
  %v4582 = vunpack.c.l.b16 %v4060
  %v4583 = vunpack.c.h.b16 %v4060
  %v4584 = vunpack.c.l.b16 %v4061
  %v4585 = vunpack.c.h.b16 %v4061
  %v4586 = vunpack.c.l.b16 %v4062
  %v4587 = vunpack.c.h.b16 %v4062
  %v4588 = vunpack.c.l.b16 %v4063
  %v4589 = vunpack.c.h.b16 %v4063
  %v4590 = vunpack.c.l.b16 %v4064
  %v4591 = vunpack.c.h.b16 %v4064
  %v4592 = vunpack.c.l.b16 %v4065
  %v4593 = vunpack.c.h.b16 %v4065
  %v4594 = vunpack.c.l.b16 %v4066
  %v4595 = vunpack.c.h.b16 %v4066
  %v4596 = vunpack.c.l.b16 %v4067
  %v4597 = vunpack.c.h.b16 %v4067
  %v4598 = vunpack.c.l.b16 %v4068
  %v4599 = vunpack.c.h.b16 %v4068
  %v4600 = vunpack.c.l.b16 %v4069
  %v4601 = vunpack.c.h.b16 %v4069
  %v4602 = vunpack.c.l.b16 %v4070
  %v4603 = vunpack.c.h.b16 %v4070
  %v4604 = vunpack.c.l.b16 %v4071
  %v4605 = vunpack.c.h.b16 %v4071
  %v4606 = vunpack.c.l.b16 %v4072
  %v4607 = vunpack.c.h.b16 %v4072
  %v4608 = vunpack.c.l.b16 %v4073
  %v4609 = vunpack.c.h.b16 %v4073
  %v4610 = vunpack.c.l.b16 %v4074
  %v4611 = vunpack.c.h.b16 %v4074
  %v4612 = vunpack.c.l.b16 %v4075
  %v4613 = vunpack.c.h.b16 %v4075
  %v4614 = vunpack.c.l.b16 %v4076
  %v4615 = vunpack.c.h.b16 %v4076
  %v4616 = vunpack.c.l.b16 %v4077
  %v4617 = vunpack.c.h.b16 %v4077
  %v4618 = vunpack.c.l.b16 %v4078
  %v4619 = vunpack.c.h.b16 %v4078
  %v4620 = vunpack.c.l.b16 %v4079
  %v4621 = vunpack.c.h.b16 %v4079
  %v4622 = vunpack.c.l.b16 %v4080
  %v4623 = vunpack.c.h.b16 %v4080
  %v4624 = vunpack.c.l.b16 %v4081
  %v4625 = vunpack.c.h.b16 %v4081
  %v4626 = vunpack.c.l.b16 %v4082
  %v4627 = vunpack.c.h.b16 %v4082
  %v4628 = vunpack.c.l.b16 %v4083
  %v4629 = vunpack.c.h.b16 %v4083
  %v4630 = vunpack.c.l.b16 %v4084
  %v4631 = vunpack.c.h.b16 %v4084
  %v4632 = vunpack.c.l.b16 %v4085
  %v4633 = vunpack.c.h.b16 %v4085
  %v4634 = vunpack.c.l.b16 %v4086
  %v4635 = vunpack.c.h.b16 %v4086
  %v4636 = vunpack.c.l.b16 %v4087
  %v4637 = vunpack.c.h.b16 %v4087
  %v4638 = vunpack.c.l.b16 %v4088
  %v4639 = vunpack.c.h.b16 %v4088
  %v4640 = vunpack.c.l.b16 %v4089
  %v4641 = vunpack.c.h.b16 %v4089
  %v4642 = vunpack.c.l.b16 %v4090
  %v4643 = vunpack.c.h.b16 %v4090
  %v4644 = vunpack.c.l.b16 %v4091
  %v4645 = vunpack.c.h.b16 %v4091
  %v4646 = vunpack.c.l.b16 %v4092
  %v4647 = vunpack.c.h.b16 %v4092
  %v4648 = vunpack.c.l.b16 %v4093
  %v4649 = vunpack.c.h.b16 %v4093
  %v4650 = vunpack.c.l.b16 %v4094
  %v4651 = vunpack.c.h.b16 %v4094
  %v4652 = vunpack.c.l.b16 %v4095
  %v4653 = vunpack.c.h.b16 %v4095
  %v4654 = vunpack.c.l.b16 %v4096
  %v4655 = vunpack.c.h.b16 %v4096
  %v4656 = vunpack.c.l.b16 %v4097
  %v4657 = vunpack.c.h.b16 %v4097
  %v4658 = vunpack.c.l.b16 %v4098
  %v4659 = vunpack.c.h.b16 %v4098
  %v4660 = vunpack.c.l.b16 %v4099
  %v4661 = vunpack.c.h.b16 %v4099
  %v4662 = vunpack.c.l.b16 %v4100
  %v4663 = vunpack.c.h.b16 %v4100
  %v4664 = vunpack.c.l.b16 %v4101
  %v4665 = vunpack.c.h.b16 %v4101
  %v4666 = vunpack.c.l.b16 %v4102
  %v4667 = vunpack.c.h.b16 %v4102
  %v4668 = vunpack.c.l.b16 %v4103
  %v4669 = vunpack.c.h.b16 %v4103
  %v4670 = vunpack.c.l.b16 %v4104
  %v4671 = vunpack.c.h.b16 %v4104
  %v4672 = vunpack.c.l.b16 %v4105
  %v4673 = vunpack.c.h.b16 %v4105
  %v4674 = vunpack.c.l.b16 %v4106
  %v4675 = vunpack.c.h.b16 %v4106
  %v4676 = vunpack.c.l.b16 %v4107
  %v4677 = vunpack.c.h.b16 %v4107
  %v4678 = vunpack.c.l.b16 %v4108
  %v4679 = vunpack.c.h.b16 %v4108
  %v4680 = vunpack.c.l.b16 %v4109
  %v4681 = vunpack.c.h.b16 %v4109
  %v4682 = vunpack.c.l.b16 %v4110
  %v4683 = vunpack.c.h.b16 %v4110
  %v4684 = vunpack.c.l.b16 %v4111
  %v4685 = vunpack.c.h.b16 %v4111
  %v4686 = vunpack.c.l.b16 %v4112
  %v4687 = vunpack.c.h.b16 %v4112
  %v4688 = vunpack.c.l.b16 %v4113
  %v4689 = vunpack.c.h.b16 %v4113
  %v4690 = vunpack.c.l.b16 %v4114
  %v4691 = vunpack.c.h.b16 %v4114
  %v4692 = vunpack.c.l.b16 %v4115
  %v4693 = vunpack.c.h.b16 %v4115
  %v4694 = vunpack.c.l.b16 %v4116
  %v4695 = vunpack.c.h.b16 %v4116
  %v4696 = vunpack.c.l.b16 %v4117
  %v4697 = vunpack.c.h.b16 %v4117
  %v4698 = vunpack.c.l.b16 %v4118
  %v4699 = vunpack.c.h.b16 %v4118
  %v4700 = vunpack.c.l.b16 %v4119
  %v4701 = vunpack.c.h.b16 %v4119
  %v4702 = vunpack.c.l.b16 %v4120
  %v4703 = vunpack.c.h.b16 %v4120
  %v4704 = vunpack.c.l.b16 %v4121
  %v4705 = vunpack.c.h.b16 %v4121
  %v4706 = vunpack.c.l.b16 %v4122
  %v4707 = vunpack.c.h.b16 %v4122
  %v4708 = vunpack.c.l.b16 %v4123
  %v4709 = vunpack.c.h.b16 %v4123
  %v4710 = vunpack.c.l.b16 %v4124
  %v4711 = vunpack.c.h.b16 %v4124
  %v4712 = vunpack.c.l.b16 %v4125
  %v4713 = vunpack.c.h.b16 %v4125
  %v4714 = vunpack.c.l.b16 %v4126
  %v4715 = vunpack.c.h.b16 %v4126
  %v4716 = vunpack.c.l.b16 %v4127
  %v4717 = vunpack.c.h.b16 %v4127
  %v4718 = vunpack.c.l.b16 %v4128
  %v4719 = vunpack.c.h.b16 %v4128
  %v4720 = vunpack.c.l.b16 %v4129
  %v4721 = vunpack.c.h.b16 %v4129
  %v4722 = vunpack.c.l.b16 %v4130
  %v4723 = vunpack.c.h.b16 %v4130
  %v4724 = vunpack.c.l.b16 %v4131
  %v4725 = vunpack.c.h.b16 %v4131
  %v4726 = vunpack.c.l.b16 %v4132
  %v4727 = vunpack.c.h.b16 %v4132
  %v4728 = vunpack.c.l.b16 %v4133
  %v4729 = vunpack.c.h.b16 %v4133
  %v4730 = vunpack.c.l.b16 %v4134
  %v4731 = vunpack.c.h.b16 %v4134
  %v4732 = vunpack.c.l.b16 %v4135
  %v4733 = vunpack.c.h.b16 %v4135
  %v4734 = vpack.c.b16 %v4354, %v4350
  %v4735 = vpack.c.b16 %v4355, %v4351
  %v4736 = vpack.c.b16 %v4356, %v4352
  %v4737 = vpack.c.b16 %v4357, %v4353
  %v4738 = vpack.c.b16 %v4362, %v4358
  %v4739 = vpack.c.b16 %v4363, %v4359
  %v4740 = vpack.c.b16 %v4364, %v4360
  %v4741 = vpack.c.b16 %v4365, %v4361
  %v4742 = vpack.c.b16 %v4370, %v4366
  %v4743 = vpack.c.b16 %v4371, %v4367
  %v4744 = vpack.c.b16 %v4372, %v4368
  %v4745 = vpack.c.b16 %v4373, %v4369
  %v4746 = vpack.c.b16 %v4378, %v4374
  %v4747 = vpack.c.b16 %v4379, %v4375
  %v4748 = vpack.c.b16 %v4380, %v4376
  %v4749 = vpack.c.b16 %v4381, %v4377
  %v4750 = vpack.c.b16 %v4386, %v4382
  %v4751 = vpack.c.b16 %v4387, %v4383
  %v4752 = vpack.c.b16 %v4388, %v4384
  %v4753 = vpack.c.b16 %v4389, %v4385
  %v4754 = vpack.c.b16 %v4394, %v4390
  %v4755 = vpack.c.b16 %v4395, %v4391
  %v4756 = vpack.c.b16 %v4396, %v4392
  %v4757 = vpack.c.b16 %v4397, %v4393
  %v4758 = vpack.c.b16 %v4402, %v4398
  %v4759 = vpack.c.b16 %v4403, %v4399
  %v4760 = vpack.c.b16 %v4404, %v4400
  %v4761 = vpack.c.b16 %v4405, %v4401
  %v4762 = vpack.c.b16 %v4410, %v4406
  %v4763 = vpack.c.b16 %v4411, %v4407
  %v4764 = vpack.c.b16 %v4412, %v4408
  %v4765 = vpack.c.b16 %v4413, %v4409
  %v4766 = vpack.c.b16 %v4418, %v4414
  %v4767 = vpack.c.b16 %v4419, %v4415
  %v4768 = vpack.c.b16 %v4420, %v4416
  %v4769 = vpack.c.b16 %v4421, %v4417
  %v4770 = vpack.c.b16 %v4426, %v4422
  %v4771 = vpack.c.b16 %v4427, %v4423
  %v4772 = vpack.c.b16 %v4428, %v4424
  %v4773 = vpack.c.b16 %v4429, %v4425
  %v4774 = vpack.c.b16 %v4434, %v4430
  %v4775 = vpack.c.b16 %v4435, %v4431
  %v4776 = vpack.c.b16 %v4436, %v4432
  %v4777 = vpack.c.b16 %v4437, %v4433
  %v4778 = vpack.c.b16 %v4442, %v4438
  %v4779 = vpack.c.b16 %v4443, %v4439
  %v4780 = vpack.c.b16 %v4444, %v4440
  %v4781 = vpack.c.b16 %v4445, %v4441
  %v4782 = vpack.c.b16 %v4450, %v4446
  %v4783 = vpack.c.b16 %v4451, %v4447
  %v4784 = vpack.c.b16 %v4452, %v4448
  %v4785 = vpack.c.b16 %v4453, %v4449
  %v4786 = vpack.c.b16 %v4458, %v4454
  %v4787 = vpack.c.b16 %v4459, %v4455
  %v4788 = vpack.c.b16 %v4460, %v4456
  %v4789 = vpack.c.b16 %v4461, %v4457
  %v4790 = vpack.c.b16 %v4466, %v4462
  %v4791 = vpack.c.b16 %v4467, %v4463
  %v4792 = vpack.c.b16 %v4468, %v4464
  %v4793 = vpack.c.b16 %v4469, %v4465
  %v4794 = vpack.c.b16 %v4474, %v4470
  %v4795 = vpack.c.b16 %v4475, %v4471
  %v4796 = vpack.c.b16 %v4476, %v4472
  %v4797 = vpack.c.b16 %v4477, %v4473
  %v4798 = vpack.c.b16 %v4482, %v4478
  %v4799 = vpack.c.b16 %v4483, %v4479
  %v4800 = vpack.c.b16 %v4484, %v4480
  %v4801 = vpack.c.b16 %v4485, %v4481
  %v4802 = vpack.c.b16 %v4490, %v4486
  %v4803 = vpack.c.b16 %v4491, %v4487
  %v4804 = vpack.c.b16 %v4492, %v4488
  %v4805 = vpack.c.b16 %v4493, %v4489
  %v4806 = vpack.c.b16 %v4498, %v4494
  %v4807 = vpack.c.b16 %v4499, %v4495
  %v4808 = vpack.c.b16 %v4500, %v4496
  %v4809 = vpack.c.b16 %v4501, %v4497
  %v4810 = vpack.c.b16 %v4506, %v4502
  %v4811 = vpack.c.b16 %v4507, %v4503
  %v4812 = vpack.c.b16 %v4508, %v4504
  %v4813 = vpack.c.b16 %v4509, %v4505
  %v4814 = vpack.c.b16 %v4514, %v4510
  %v4815 = vpack.c.b16 %v4515, %v4511
  %v4816 = vpack.c.b16 %v4516, %v4512
  %v4817 = vpack.c.b16 %v4517, %v4513
  %v4818 = vpack.c.b16 %v4522, %v4518
  %v4819 = vpack.c.b16 %v4523, %v4519
  %v4820 = vpack.c.b16 %v4524, %v4520
  %v4821 = vpack.c.b16 %v4525, %v4521
  %v4822 = vpack.c.b16 %v4530, %v4526
  %v4823 = vpack.c.b16 %v4531, %v4527
  %v4824 = vpack.c.b16 %v4532, %v4528
  %v4825 = vpack.c.b16 %v4533, %v4529
  %v4826 = vpack.c.b16 %v4538, %v4534
  %v4827 = vpack.c.b16 %v4539, %v4535
  %v4828 = vpack.c.b16 %v4540, %v4536
  %v4829 = vpack.c.b16 %v4541, %v4537
  %v4830 = vpack.c.b16 %v4546, %v4542
  %v4831 = vpack.c.b16 %v4547, %v4543
  %v4832 = vpack.c.b16 %v4548, %v4544
  %v4833 = vpack.c.b16 %v4549, %v4545
  %v4834 = vpack.c.b16 %v4554, %v4550
  %v4835 = vpack.c.b16 %v4555, %v4551
  %v4836 = vpack.c.b16 %v4556, %v4552
  %v4837 = vpack.c.b16 %v4557, %v4553
  %v4838 = vpack.c.b16 %v4562, %v4558
  %v4839 = vpack.c.b16 %v4563, %v4559
  %v4840 = vpack.c.b16 %v4564, %v4560
  %v4841 = vpack.c.b16 %v4565, %v4561
  %v4842 = vpack.c.b16 %v4570, %v4566
  %v4843 = vpack.c.b16 %v4571, %v4567
  %v4844 = vpack.c.b16 %v4572, %v4568
  %v4845 = vpack.c.b16 %v4573, %v4569
  %v4846 = vpack.c.b16 %v4578, %v4574
  %v4847 = vpack.c.b16 %v4579, %v4575
  %v4848 = vpack.c.b16 %v4580, %v4576
  %v4849 = vpack.c.b16 %v4581, %v4577
  %v4850 = vpack.c.b16 %v4586, %v4582
  %v4851 = vpack.c.b16 %v4587, %v4583
  %v4852 = vpack.c.b16 %v4588, %v4584
  %v4853 = vpack.c.b16 %v4589, %v4585
  %v4854 = vpack.c.b16 %v4594, %v4590
  %v4855 = vpack.c.b16 %v4595, %v4591
  %v4856 = vpack.c.b16 %v4596, %v4592
  %v4857 = vpack.c.b16 %v4597, %v4593
  %v4858 = vpack.c.b16 %v4602, %v4598
  %v4859 = vpack.c.b16 %v4603, %v4599
  %v4860 = vpack.c.b16 %v4604, %v4600
  %v4861 = vpack.c.b16 %v4605, %v4601
  %v4862 = vpack.c.b16 %v4610, %v4606
  %v4863 = vpack.c.b16 %v4611, %v4607
  %v4864 = vpack.c.b16 %v4612, %v4608
  %v4865 = vpack.c.b16 %v4613, %v4609
  %v4866 = vpack.c.b16 %v4618, %v4614
  %v4867 = vpack.c.b16 %v4619, %v4615
  %v4868 = vpack.c.b16 %v4620, %v4616
  %v4869 = vpack.c.b16 %v4621, %v4617
  %v4870 = vpack.c.b16 %v4626, %v4622
  %v4871 = vpack.c.b16 %v4627, %v4623
  %v4872 = vpack.c.b16 %v4628, %v4624
  %v4873 = vpack.c.b16 %v4629, %v4625
  %v4874 = vpack.c.b16 %v4634, %v4630
  %v4875 = vpack.c.b16 %v4635, %v4631
  %v4876 = vpack.c.b16 %v4636, %v4632
  %v4877 = vpack.c.b16 %v4637, %v4633
  %v4878 = vpack.c.b16 %v4642, %v4638
  %v4879 = vpack.c.b16 %v4643, %v4639
  %v4880 = vpack.c.b16 %v4644, %v4640
  %v4881 = vpack.c.b16 %v4645, %v4641
  %v4882 = vpack.c.b16 %v4650, %v4646
  %v4883 = vpack.c.b16 %v4651, %v4647
  %v4884 = vpack.c.b16 %v4652, %v4648
  %v4885 = vpack.c.b16 %v4653, %v4649
  %v4886 = vpack.c.b16 %v4658, %v4654
  %v4887 = vpack.c.b16 %v4659, %v4655
  %v4888 = vpack.c.b16 %v4660, %v4656
  %v4889 = vpack.c.b16 %v4661, %v4657
  %v4890 = vpack.c.b16 %v4666, %v4662
  %v4891 = vpack.c.b16 %v4667, %v4663
  %v4892 = vpack.c.b16 %v4668, %v4664
  %v4893 = vpack.c.b16 %v4669, %v4665
  %v4894 = vpack.c.b16 %v4674, %v4670
  %v4895 = vpack.c.b16 %v4675, %v4671
  %v4896 = vpack.c.b16 %v4676, %v4672
  %v4897 = vpack.c.b16 %v4677, %v4673
  %v4898 = vpack.c.b16 %v4682, %v4678
  %v4899 = vpack.c.b16 %v4683, %v4679
  %v4900 = vpack.c.b16 %v4684, %v4680
  %v4901 = vpack.c.b16 %v4685, %v4681
  %v4902 = vpack.c.b16 %v4690, %v4686
  %v4903 = vpack.c.b16 %v4691, %v4687
  %v4904 = vpack.c.b16 %v4692, %v4688
  %v4905 = vpack.c.b16 %v4693, %v4689
  %v4906 = vpack.c.b16 %v4698, %v4694
  %v4907 = vpack.c.b16 %v4699, %v4695
  %v4908 = vpack.c.b16 %v4700, %v4696
  %v4909 = vpack.c.b16 %v4701, %v4697
  %v4910 = vpack.c.b16 %v4706, %v4702
  %v4911 = vpack.c.b16 %v4707, %v4703
  %v4912 = vpack.c.b16 %v4708, %v4704
  %v4913 = vpack.c.b16 %v4709, %v4705
  %v4914 = vpack.c.b16 %v4714, %v4710
  %v4915 = vpack.c.b16 %v4715, %v4711
  %v4916 = vpack.c.b16 %v4716, %v4712
  %v4917 = vpack.c.b16 %v4717, %v4713
  %v4918 = vpack.c.b16 %v4722, %v4718
  %v4919 = vpack.c.b16 %v4723, %v4719
  %v4920 = vpack.c.b16 %v4724, %v4720
  %v4921 = vpack.c.b16 %v4725, %v4721
  %v4922 = vpack.c.b16 %v4730, %v4726
  %v4923 = vpack.c.b16 %v4731, %v4727
  %v4924 = vpack.c.b16 %v4732, %v4728
  %v4925 = vpack.c.b16 %v4733, %v4729
  %5118 = vmatprep.subr.bf16.mxu0 %v4735
  %5119 = vmatpush1.bf16.msra.mxu0 %v4734
  %5120 = vmatprep.subr.bf16.mxu0 %v4739
  %5121 = vmatpush1.bf16.msra.mxu0 %v4738
  %5122 = vmatprep.subr.bf16.mxu0 %v4743
  %5123 = vmatpush1.bf16.msra.mxu0 %v4742
  %5124 = vmatprep.subr.bf16.mxu0 %v4747
  %5125 = vmatpush1.bf16.msra.mxu0 %v4746
  %5126 = vmatprep.subr.bf16.mxu0 %v4751
  %5127 = vmatpush1.bf16.msra.mxu0 %v4750
  %5128 = vmatprep.subr.bf16.mxu0 %v4755
  %5129 = vmatpush1.bf16.msra.mxu0 %v4754
  %5130 = vmatprep.subr.bf16.mxu0 %v4759
  %5131 = vmatpush1.bf16.msra.mxu0 %v4758
  %5132 = vmatprep.subr.bf16.mxu0 %v4763
  %5133 = vmatpush1.bf16.msra.mxu0 %v4762
  %5134 = vmatprep.subr.bf16.mxu0 %v4767
  %5135 = vmatpush1.bf16.msra.mxu0 %v4766
  %5136 = vmatprep.subr.bf16.mxu0 %v4771
  %5137 = vmatpush1.bf16.msra.mxu0 %v4770
  %5138 = vmatprep.subr.bf16.mxu0 %v4775
  %5139 = vmatpush1.bf16.msra.mxu0 %v4774
  %5140 = vmatprep.subr.bf16.mxu0 %v4779
  %5141 = vmatpush1.bf16.msra.mxu0 %v4778
  %5142 = vmatprep.subr.bf16.mxu0 %v4783
  %5143 = vmatpush1.bf16.msra.mxu0 %v4782
  %5144 = vmatprep.subr.bf16.mxu0 %v4787
  %5145 = vmatpush1.bf16.msra.mxu0 %v4786
  %5146 = vmatprep.subr.bf16.mxu0 %v4791
  %5147 = vmatpush1.bf16.msra.mxu0 %v4790
  %5148 = vmatprep.subr.bf16.mxu0 %v4795
  %5149 = vmatpush1.bf16.msra.mxu0 %v4794
  %5150 = vmatprep.mubr.bf16.mxu0 %v3939
  %5151 = vmatmul.mubr.bf16.gmra.mrb[0].mxu0 %v3938
  %v5152 = vpop.f32.mrb[0].mxu0
  %v5153 = vadd.f32 %v4141, %v5152
  %v5154 = vpop.f32.mrb[0].mxu0
  %v5155 = vadd.f32 %v4145, %v5154
  %v5156 = vpop.f32.mrb[0].mxu0
  %v5157 = vpop.f32.mrb[0].mxu0
  %5158 = vdwg.mxu0
  %5159 = vmatprep.subr.bf16.mxu0 %v4799
  %5160 = vmatpush1.bf16.msra.mxu0 %v4798
  %5161 = vmatprep.subr.bf16.mxu0 %v4803
  %5162 = vmatpush1.bf16.msra.mxu0 %v4802
  %5163 = vmatprep.subr.bf16.mxu0 %v4807
  %5164 = vmatpush1.bf16.msra.mxu0 %v4806
  %5165 = vmatprep.subr.bf16.mxu0 %v4811
  %5166 = vmatpush1.bf16.msra.mxu0 %v4810
  %5167 = vmatprep.subr.bf16.mxu0 %v4815
  %5168 = vmatpush1.bf16.msra.mxu0 %v4814
  %5169 = vmatprep.subr.bf16.mxu0 %v4819
  %5170 = vmatpush1.bf16.msra.mxu0 %v4818
  %5171 = vmatprep.subr.bf16.mxu0 %v4823
  %5172 = vmatpush1.bf16.msra.mxu0 %v4822
  %5173 = vmatprep.subr.bf16.mxu0 %v4827
  %5174 = vmatpush1.bf16.msra.mxu0 %v4826
  %5175 = vmatprep.subr.bf16.mxu0 %v4831
  %5176 = vmatpush1.bf16.msra.mxu0 %v4830
  %5177 = vmatprep.subr.bf16.mxu0 %v4835
  %5178 = vmatpush1.bf16.msra.mxu0 %v4834
  %5179 = vmatprep.subr.bf16.mxu0 %v4839
  %5180 = vmatpush1.bf16.msra.mxu0 %v4838
  %5181 = vmatprep.subr.bf16.mxu0 %v4843
  %5182 = vmatpush1.bf16.msra.mxu0 %v4842
  %5183 = vmatprep.subr.bf16.mxu0 %v4847
  %5184 = vmatpush1.bf16.msra.mxu0 %v4846
  %5185 = vmatprep.subr.bf16.mxu0 %v4851
  %5186 = vmatpush1.bf16.msra.mxu0 %v4850
  %5187 = vmatprep.subr.bf16.mxu0 %v4855
  %5188 = vmatpush1.bf16.msra.mxu0 %v4854
  %5189 = vmatprep.subr.bf16.mxu0 %v4859
  %5190 = vmatpush1.bf16.msra.mxu0 %v4858
  %5191 = vmatprep.mubr.bf16.mxu0 %v3941
  %5192 = vmatmul.mubr.bf16.gmra.mrb[0].mxu0 %v3940
  %v5193 = vpop.f32.mrb[0].mxu0
  %v5194 = vadd.f32 %v5153, %v5193
  %v5195 = vpop.f32.mrb[0].mxu0
  %v5196 = vadd.f32 %v5155, %v5195
  %v5197 = vpop.f32.mrb[0].mxu0
  %v5198 = vpop.f32.mrb[0].mxu0
  %5199 = vdwg.mxu0
  %5200 = vmatprep.subr.bf16.mxu0 %v4863
  %5201 = vmatpush1.bf16.msra.mxu0 %v4862
  %5202 = vmatprep.subr.bf16.mxu0 %v4867
  %5203 = vmatpush1.bf16.msra.mxu0 %v4866
  %5204 = vmatprep.subr.bf16.mxu0 %v4871
  %5205 = vmatpush1.bf16.msra.mxu0 %v4870
  %5206 = vmatprep.subr.bf16.mxu0 %v4875
  %5207 = vmatpush1.bf16.msra.mxu0 %v4874
  %5208 = vmatprep.subr.bf16.mxu0 %v4879
  %5209 = vmatpush1.bf16.msra.mxu0 %v4878
  %5210 = vmatprep.subr.bf16.mxu0 %v4883
  %5211 = vmatpush1.bf16.msra.mxu0 %v4882
  %5212 = vmatprep.subr.bf16.mxu0 %v4887
  %5213 = vmatpush1.bf16.msra.mxu0 %v4886
  %5214 = vmatprep.subr.bf16.mxu0 %v4891
  %5215 = vmatpush1.bf16.msra.mxu0 %v4890
  %5216 = vmatprep.subr.bf16.mxu0 %v4895
  %5217 = vmatpush1.bf16.msra.mxu0 %v4894
  %5218 = vmatprep.subr.bf16.mxu0 %v4899
  %5219 = vmatpush1.bf16.msra.mxu0 %v4898
  %5220 = vmatprep.subr.bf16.mxu0 %v4903
  %5221 = vmatpush1.bf16.msra.mxu0 %v4902
  %5222 = vmatprep.subr.bf16.mxu0 %v4907
  %5223 = vmatpush1.bf16.msra.mxu0 %v4906
  %5224 = vmatprep.subr.bf16.mxu0 %v4911
  %5225 = vmatpush1.bf16.msra.mxu0 %v4910
  %5226 = vmatprep.subr.bf16.mxu0 %v4915
  %5227 = vmatpush1.bf16.msra.mxu0 %v4914
  %5228 = vmatprep.subr.bf16.mxu0 %v4919
  %5229 = vmatpush1.bf16.msra.mxu0 %v4918
  %5230 = vmatprep.subr.bf16.mxu0 %v4923
  %5231 = vmatpush1.bf16.msra.mxu0 %v4922
  %5232 = vmatprep.mubr.bf16.mxu0 %v3943
  %5233 = vmatmul.mubr.bf16.gmra.mrb[0].mxu0 %v3942
  %v5234 = vpop.f32.mrb[0].mxu0
  %v5235 = vadd.f32 %v5194, %v5234
  %v5236 = vpop.f32.mrb[0].mxu0
  %v5237 = vadd.f32 %v5196, %v5236
  %v5238 = vpop.f32.mrb[0].mxu0
  %v5239 = vpop.f32.mrb[0].mxu0
  %5240 = vdwg.mxu0
  %5241 = vmatprep.subr.bf16.mxu0 %v4737
  %5242 = vmatpush1.bf16.msra.mxu0 %v4736
  %5243 = vmatprep.subr.bf16.mxu0 %v4741
  %5244 = vmatpush1.bf16.msra.mxu0 %v4740
  %5245 = vmatprep.subr.bf16.mxu0 %v4745
  %5246 = vmatpush1.bf16.msra.mxu0 %v4744
  %5247 = vmatprep.subr.bf16.mxu0 %v4749
  %5248 = vmatpush1.bf16.msra.mxu0 %v4748
  %5249 = vmatprep.subr.bf16.mxu0 %v4753
  %5250 = vmatpush1.bf16.msra.mxu0 %v4752
  %5251 = vmatprep.subr.bf16.mxu0 %v4757
  %5252 = vmatpush1.bf16.msra.mxu0 %v4756
  %5253 = vmatprep.subr.bf16.mxu0 %v4761
  %5254 = vmatpush1.bf16.msra.mxu0 %v4760
  %5255 = vmatprep.subr.bf16.mxu0 %v4765
  %5256 = vmatpush1.bf16.msra.mxu0 %v4764
  %5257 = vmatprep.subr.bf16.mxu0 %v4769
  %5258 = vmatpush1.bf16.msra.mxu0 %v4768
  %5259 = vmatprep.subr.bf16.mxu0 %v4773
  %5260 = vmatpush1.bf16.msra.mxu0 %v4772
  %5261 = vmatprep.subr.bf16.mxu0 %v4777
  %5262 = vmatpush1.bf16.msra.mxu0 %v4776
  %5263 = vmatprep.subr.bf16.mxu0 %v4781
  %5264 = vmatpush1.bf16.msra.mxu0 %v4780
  %5265 = vmatprep.subr.bf16.mxu0 %v4785
  %5266 = vmatpush1.bf16.msra.mxu0 %v4784
  %5267 = vmatprep.subr.bf16.mxu0 %v4789
  %5268 = vmatpush1.bf16.msra.mxu0 %v4788
  %5269 = vmatprep.subr.bf16.mxu0 %v4793
  %5270 = vmatpush1.bf16.msra.mxu0 %v4792
  %5271 = vmatprep.subr.bf16.mxu0 %v4797
  %5272 = vmatpush1.bf16.msra.mxu0 %v4796
  %5273 = vmatprep.mubr.bf16.mxu0 %v3939
  %5274 = vmatmul.mubr.bf16.gmra.mrb[0].mxu0 %v3938
  %v5275 = vpop.f32.mrb[0].mxu0
  %v5276 = vadd.f32 %v4149, %v5275
  %v5277 = vpop.f32.mrb[0].mxu0
  %v5278 = vadd.f32 %v4153, %v5277
  %v5279 = vpop.f32.mrb[0].mxu0
  %v5280 = vpop.f32.mrb[0].mxu0
  %5281 = vdwg.mxu0
  %5282 = vmatprep.subr.bf16.mxu0 %v4801
  %5283 = vmatpush1.bf16.msra.mxu0 %v4800
  %5284 = vmatprep.subr.bf16.mxu0 %v4805
  %5285 = vmatpush1.bf16.msra.mxu0 %v4804
  %5286 = vmatprep.subr.bf16.mxu0 %v4809
  %5287 = vmatpush1.bf16.msra.mxu0 %v4808
  %5288 = vmatprep.subr.bf16.mxu0 %v4813
  %5289 = vmatpush1.bf16.msra.mxu0 %v4812
  %5290 = vmatprep.subr.bf16.mxu0 %v4817
  %5291 = vmatpush1.bf16.msra.mxu0 %v4816
  %5292 = vmatprep.subr.bf16.mxu0 %v4821
  %5293 = vmatpush1.bf16.msra.mxu0 %v4820
  %5294 = vmatprep.subr.bf16.mxu0 %v4825
  %5295 = vmatpush1.bf16.msra.mxu0 %v4824
  %5296 = vmatprep.subr.bf16.mxu0 %v4829
  %5297 = vmatpush1.bf16.msra.mxu0 %v4828
  %5298 = vmatprep.subr.bf16.mxu0 %v4833
  %5299 = vmatpush1.bf16.msra.mxu0 %v4832
  %5300 = vmatprep.subr.bf16.mxu0 %v4837
  %5301 = vmatpush1.bf16.msra.mxu0 %v4836
  %5302 = vmatprep.subr.bf16.mxu0 %v4841
  %5303 = vmatpush1.bf16.msra.mxu0 %v4840
  %5304 = vmatprep.subr.bf16.mxu0 %v4845
  %5305 = vmatpush1.bf16.msra.mxu0 %v4844
  %5306 = vmatprep.subr.bf16.mxu0 %v4849
  %5307 = vmatpush1.bf16.msra.mxu0 %v4848
  %5308 = vmatprep.subr.bf16.mxu0 %v4853
  %5309 = vmatpush1.bf16.msra.mxu0 %v4852
  %5310 = vmatprep.subr.bf16.mxu0 %v4857
  %5311 = vmatpush1.bf16.msra.mxu0 %v4856
  %5312 = vmatprep.subr.bf16.mxu0 %v4861
  %5313 = vmatpush1.bf16.msra.mxu0 %v4860
  %5314 = vmatprep.mubr.bf16.mxu0 %v3941
  %5315 = vmatmul.mubr.bf16.gmra.mrb[0].mxu0 %v3940
  %v5316 = vpop.f32.mrb[0].mxu0
  %v5317 = vadd.f32 %v5276, %v5316
  %v5318 = vpop.f32.mrb[0].mxu0
  %v5319 = vadd.f32 %v5278, %v5318
  %v5320 = vpop.f32.mrb[0].mxu0
  %v5321 = vpop.f32.mrb[0].mxu0
  %5322 = vdwg.mxu0
  %5323 = vmatprep.subr.bf16.mxu0 %v4865
  %5324 = vmatpush1.bf16.msra.mxu0 %v4864
  %5325 = vmatprep.subr.bf16.mxu0 %v4869
  %5326 = vmatpush1.bf16.msra.mxu0 %v4868
  %5327 = vmatprep.subr.bf16.mxu0 %v4873
  %5328 = vmatpush1.bf16.msra.mxu0 %v4872
  %5329 = vmatprep.subr.bf16.mxu0 %v4877
  %5330 = vmatpush1.bf16.msra.mxu0 %v4876
  %5331 = vmatprep.subr.bf16.mxu0 %v4881
  %5332 = vmatpush1.bf16.msra.mxu0 %v4880
  %5333 = vmatprep.subr.bf16.mxu0 %v4885
  %5334 = vmatpush1.bf16.msra.mxu0 %v4884
  %5335 = vmatprep.subr.bf16.mxu0 %v4889
  %5336 = vmatpush1.bf16.msra.mxu0 %v4888
  %5337 = vmatprep.subr.bf16.mxu0 %v4893
  %5338 = vmatpush1.bf16.msra.mxu0 %v4892
  %5339 = vmatprep.subr.bf16.mxu0 %v4897
  %5340 = vmatpush1.bf16.msra.mxu0 %v4896
  %5341 = vmatprep.subr.bf16.mxu0 %v4901
  %5342 = vmatpush1.bf16.msra.mxu0 %v4900
  %5343 = vmatprep.subr.bf16.mxu0 %v4905
  %5344 = vmatpush1.bf16.msra.mxu0 %v4904
  %5345 = vmatprep.subr.bf16.mxu0 %v4909
  %5346 = vmatpush1.bf16.msra.mxu0 %v4908
  %5347 = vmatprep.subr.bf16.mxu0 %v4913
  %5348 = vmatpush1.bf16.msra.mxu0 %v4912
  %5349 = vmatprep.subr.bf16.mxu0 %v4917
  %5350 = vmatpush1.bf16.msra.mxu0 %v4916
  %5351 = vmatprep.subr.bf16.mxu0 %v4921
  %5352 = vmatpush1.bf16.msra.mxu0 %v4920
  %5353 = vmatprep.subr.bf16.mxu0 %v4925
  %5354 = vmatpush1.bf16.msra.mxu0 %v4924
  %5355 = vmatprep.mubr.bf16.mxu0 %v3943
  %5356 = vmatmul.mubr.bf16.gmra.mrb[0].mxu0 %v3942
  %v5357 = vpop.f32.mrb[0].mxu0
  %v5358 = vadd.f32 %v5317, %v5357
  %v5359 = vpop.f32.mrb[0].mxu0
  %v5360 = vadd.f32 %v5319, %v5359
  %v5361 = vpop.f32.mrb[0].mxu0
  %v5362 = vpop.f32.mrb[0].mxu0
  %5363 = vdwg.mxu0
  %v5364 = vld [vmem:[%s13] sm:$0xf]
  %v5365 = vld [vmem:[%s14] sm:$0xf]
  %v5366 = vadd.f32 %v5235, %v5237
  %v5367 = vadd.f32 %v5366, %v5358
  %v5368 = vadd.f32 %v5367, %v5360
  %5369 = vadd.xlane.f32.xlu0 %v5368
  %v5370 = vpop.xlane.xlu0 %5369
  %v5371 = vrcp.pop 512.0
  %v5372 = vmul.f32 %v5370, %v5371
  %v5373 = vsub.f32 %v5235, %v5372
  %v5374 = vsub.f32 %v5237, %v5372
  %v5375 = vsub.f32 %v5358, %v5372
  %v5376 = vsub.f32 %v5360, %v5372
  %v5377 = vmul.f32 %v5373, %v5373
  %v5378 = vmul.f32 %v5374, %v5374
  %v5379 = vmul.f32 %v5375, %v5375
  %v5380 = vmul.f32 %v5376, %v5376
  %v5381 = vadd.f32 %v5377, %v5378
  %v5382 = vadd.f32 %v5381, %v5379
  %v5383 = vadd.f32 %v5382, %v5380
  %5384 = vadd.xlane.f32.xlu0 %v5383
  %v5385 = vpop.xlane.xlu0 %5384
  %v5386 = vmul.f32 %v5385, %v5371
  %v5387 = vadd.f32 %v5386, 1e-05
  %v5388 = vrsqrt.pop %v5387
  %v5389 = vmul.f32 %v5373, %v5388
  %v5390 = vmul.f32 %v5374, %v5388
  %v5391 = vmul.f32 %v5375, %v5388
  %v5392 = vmul.f32 %v5376, %v5388
  %v5394 = vlaneseq
  %v5395 = vshrl.u32 %v5394, 7
  %v5396 = vsub.s32 0, %v5395
  %v5397 = vrot.slane %v5364, %v5396
  %v5398 = vlaneseq
  %v5399 = vshrl.u32 %v5398, 7
  %v5400 = vsub.s32 1, %v5399
  %v5401 = vrot.slane %v5364, %v5400
  %v5402 = vlaneseq
  %v5403 = vshrl.u32 %v5402, 7
  %v5404 = vsub.s32 2, %v5403
  %v5405 = vrot.slane %v5364, %v5404
  %v5406 = vlaneseq
  %v5407 = vshrl.u32 %v5406, 7
  %v5408 = vsub.s32 3, %v5407
  %v5409 = vrot.slane %v5364, %v5408
  %v5414 = vmul.f32 %v5389, %v5397
  %v5415 = vmul.f32 %v5390, %v5401
  %v5416 = vmul.f32 %v5391, %v5405
  %v5417 = vmul.f32 %v5392, %v5409
  %v5419 = vlaneseq
  %v5420 = vshrl.u32 %v5419, 7
  %v5421 = vsub.s32 0, %v5420
  %v5422 = vrot.slane %v5365, %v5421
  %v5423 = vlaneseq
  %v5424 = vshrl.u32 %v5423, 7
  %v5425 = vsub.s32 1, %v5424
  %v5426 = vrot.slane %v5365, %v5425
  %v5427 = vlaneseq
  %v5428 = vshrl.u32 %v5427, 7
  %v5429 = vsub.s32 2, %v5428
  %v5430 = vrot.slane %v5365, %v5429
  %v5431 = vlaneseq
  %v5432 = vshrl.u32 %v5431, 7
  %v5433 = vsub.s32 3, %v5432
  %v5434 = vrot.slane %v5365, %v5433
  %v5439 = vadd.f32 %v5414, %v5422
  %v5440 = vadd.f32 %v5415, %v5426
  %v5441 = vadd.f32 %v5416, %v5430
  %v5442 = vadd.f32 %v5417, %v5434
  %v5443 = vmax.f32 %v5439, 0.0
  %v5444 = vmax.f32 %v5440, 0.0
  %v5445 = vmax.f32 %v5441, 0.0
  %v5446 = vmax.f32 %v5442, 0.0
  %v5447 = vpack.c.bf16 %v5443, %v5443
  %v5448 = vpack.c.bf16 %v5444, %v5444
  %v5449 = vpack.c.bf16 %v5445, %v5445
  %v5450 = vpack.c.bf16 %v5446, %v5446
  %v5451 = vld [vmem:[%s15] sm:$0xf]
  %v5452 = vld [vmem:[%s15 + $0x4] sm:$0xf]
  %v5453 = vld [vmem:[%s15 + $0x8] sm:$0xf]
  %v5454 = vld [vmem:[%s15 + $0xc] sm:$0xf]
  %v5455 = vld [vmem:[%s15 + $0x10] sm:$0xf]
  %v5456 = vld [vmem:[%s15 + $0x14] sm:$0xf]
  %v5457 = vld [vmem:[%s15 + $0x18] sm:$0xf]
  %v5458 = vld [vmem:[%s15 + $0x1c] sm:$0xf]
  %v5459 = vld [vmem:[%s15 + $0x20] sm:$0xf]
  %v5460 = vld [vmem:[%s15 + $0x24] sm:$0xf]
  %v5461 = vld [vmem:[%s15 + $0x28] sm:$0xf]
  %v5462 = vld [vmem:[%s15 + $0x2c] sm:$0xf]
  %v5463 = vld [vmem:[%s15 + $0x30] sm:$0xf]
  %v5464 = vld [vmem:[%s15 + $0x34] sm:$0xf]
  %v5465 = vld [vmem:[%s15 + $0x38] sm:$0xf]
  %v5466 = vld [vmem:[%s15 + $0x3c] sm:$0xf]
  %v5467 = vld [vmem:[%s15 + $0x40] sm:$0xf]
  %v5468 = vld [vmem:[%s15 + $0x44] sm:$0xf]
  %v5469 = vld [vmem:[%s15 + $0x48] sm:$0xf]
  %v5470 = vld [vmem:[%s15 + $0x4c] sm:$0xf]
  %v5471 = vld [vmem:[%s15 + $0x50] sm:$0xf]
  %v5472 = vld [vmem:[%s15 + $0x54] sm:$0xf]
  %v5473 = vld [vmem:[%s15 + $0x58] sm:$0xf]
  %v5474 = vld [vmem:[%s15 + $0x5c] sm:$0xf]
  %v5475 = vld [vmem:[%s15 + $0x60] sm:$0xf]
  %v5476 = vld [vmem:[%s15 + $0x64] sm:$0xf]
  %v5477 = vld [vmem:[%s15 + $0x68] sm:$0xf]
  %v5478 = vld [vmem:[%s15 + $0x6c] sm:$0xf]
  %v5479 = vld [vmem:[%s15 + $0x70] sm:$0xf]
  %v5480 = vld [vmem:[%s15 + $0x74] sm:$0xf]
  %v5481 = vld [vmem:[%s15 + $0x78] sm:$0xf]
  %v5482 = vld [vmem:[%s15 + $0x7c] sm:$0xf]
  %v5483 = vld [vmem:[%s15 + $0x80] sm:$0xf]
  %v5484 = vld [vmem:[%s15 + $0x84] sm:$0xf]
  %v5485 = vld [vmem:[%s15 + $0x88] sm:$0xf]
  %v5486 = vld [vmem:[%s15 + $0x8c] sm:$0xf]
  %v5487 = vld [vmem:[%s15 + $0x90] sm:$0xf]
  %v5488 = vld [vmem:[%s15 + $0x94] sm:$0xf]
  %v5489 = vld [vmem:[%s15 + $0x98] sm:$0xf]
  %v5490 = vld [vmem:[%s15 + $0x9c] sm:$0xf]
  %v5491 = vld [vmem:[%s15 + $0xa0] sm:$0xf]
  %v5492 = vld [vmem:[%s15 + $0xa4] sm:$0xf]
  %v5493 = vld [vmem:[%s15 + $0xa8] sm:$0xf]
  %v5494 = vld [vmem:[%s15 + $0xac] sm:$0xf]
  %v5495 = vld [vmem:[%s15 + $0xb0] sm:$0xf]
  %v5496 = vld [vmem:[%s15 + $0xb4] sm:$0xf]
  %v5497 = vld [vmem:[%s15 + $0xb8] sm:$0xf]
  %v5498 = vld [vmem:[%s15 + $0xbc] sm:$0xf]
  %v5499 = vld [vmem:[%s15 + $0xc0] sm:$0xf]
  %v5500 = vld [vmem:[%s15 + $0xc4] sm:$0xf]
  %v5501 = vld [vmem:[%s15 + $0xc8] sm:$0xf]
  %v5502 = vld [vmem:[%s15 + $0xcc] sm:$0xf]
  %v5503 = vld [vmem:[%s15 + $0xd0] sm:$0xf]
  %v5504 = vld [vmem:[%s15 + $0xd4] sm:$0xf]
  %v5505 = vld [vmem:[%s15 + $0xd8] sm:$0xf]
  %v5506 = vld [vmem:[%s15 + $0xdc] sm:$0xf]
  %v5507 = vld [vmem:[%s15 + $0xe0] sm:$0xf]
  %v5508 = vld [vmem:[%s15 + $0xe4] sm:$0xf]
  %v5509 = vld [vmem:[%s15 + $0xe8] sm:$0xf]
  %v5510 = vld [vmem:[%s15 + $0xec] sm:$0xf]
  %v5511 = vld [vmem:[%s15 + $0xf0] sm:$0xf]
  %v5512 = vld [vmem:[%s15 + $0xf4] sm:$0xf]
  %v5513 = vld [vmem:[%s15 + $0xf8] sm:$0xf]
  %v5514 = vld [vmem:[%s15 + $0xfc] sm:$0xf]
  %v5515 = vld [vmem:[%s16] sm:$0x1]
  %v5517 = vlaneseq
  %v5518 = vshrl.u32 %v5517, 7
  %v5519 = vsub.s32 0, %v5518
  %v5520 = vrot.slane %v5515, %v5519
  %v5586 = vunpack.c.l.b16 %v5451
  %v5587 = vunpack.c.l.b16 %v5452
  %v5588 = vunpack.c.l.b16 %v5453
  %v5589 = vunpack.c.l.b16 %v5454
  %v5590 = vunpack.c.l.b16 %v5455
  %v5591 = vunpack.c.l.b16 %v5456
  %v5592 = vunpack.c.l.b16 %v5457
  %v5593 = vunpack.c.l.b16 %v5458
  %v5594 = vunpack.c.l.b16 %v5459
  %v5595 = vunpack.c.l.b16 %v5460
  %v5596 = vunpack.c.l.b16 %v5461
  %v5597 = vunpack.c.l.b16 %v5462
  %v5598 = vunpack.c.l.b16 %v5463
  %v5599 = vunpack.c.l.b16 %v5464
  %v5600 = vunpack.c.l.b16 %v5465
  %v5601 = vunpack.c.l.b16 %v5466
  %v5602 = vunpack.c.l.b16 %v5467
  %v5603 = vunpack.c.l.b16 %v5468
  %v5604 = vunpack.c.l.b16 %v5469
  %v5605 = vunpack.c.l.b16 %v5470
  %v5606 = vunpack.c.l.b16 %v5471
  %v5607 = vunpack.c.l.b16 %v5472
  %v5608 = vunpack.c.l.b16 %v5473
  %v5609 = vunpack.c.l.b16 %v5474
  %v5610 = vunpack.c.l.b16 %v5475
  %v5611 = vunpack.c.l.b16 %v5476
  %v5612 = vunpack.c.l.b16 %v5477
  %v5613 = vunpack.c.l.b16 %v5478
  %v5614 = vunpack.c.l.b16 %v5479
  %v5615 = vunpack.c.l.b16 %v5480
  %v5616 = vunpack.c.l.b16 %v5481
  %v5617 = vunpack.c.l.b16 %v5482
  %v5618 = vunpack.c.l.b16 %v5483
  %v5619 = vunpack.c.l.b16 %v5484
  %v5620 = vunpack.c.l.b16 %v5485
  %v5621 = vunpack.c.l.b16 %v5486
  %v5622 = vunpack.c.l.b16 %v5487
  %v5623 = vunpack.c.l.b16 %v5488
  %v5624 = vunpack.c.l.b16 %v5489
  %v5625 = vunpack.c.l.b16 %v5490
  %v5626 = vunpack.c.l.b16 %v5491
  %v5627 = vunpack.c.l.b16 %v5492
  %v5628 = vunpack.c.l.b16 %v5493
  %v5629 = vunpack.c.l.b16 %v5494
  %v5630 = vunpack.c.l.b16 %v5495
  %v5631 = vunpack.c.l.b16 %v5496
  %v5632 = vunpack.c.l.b16 %v5497
  %v5633 = vunpack.c.l.b16 %v5498
  %v5634 = vunpack.c.l.b16 %v5499
  %v5635 = vunpack.c.l.b16 %v5500
  %v5636 = vunpack.c.l.b16 %v5501
  %v5637 = vunpack.c.l.b16 %v5502
  %v5638 = vunpack.c.l.b16 %v5503
  %v5639 = vunpack.c.l.b16 %v5504
  %v5640 = vunpack.c.l.b16 %v5505
  %v5641 = vunpack.c.l.b16 %v5506
  %v5642 = vunpack.c.l.b16 %v5507
  %v5643 = vunpack.c.l.b16 %v5508
  %v5644 = vunpack.c.l.b16 %v5509
  %v5645 = vunpack.c.l.b16 %v5510
  %v5646 = vunpack.c.l.b16 %v5511
  %v5647 = vunpack.c.l.b16 %v5512
  %v5648 = vunpack.c.l.b16 %v5513
  %v5649 = vunpack.c.l.b16 %v5514
  %v5650 = vpack.c.b16 %v5587, %v5586
  %v5651 = vpack.c.b16 %v5589, %v5588
  %v5652 = vpack.c.b16 %v5591, %v5590
  %v5653 = vpack.c.b16 %v5593, %v5592
  %v5654 = vpack.c.b16 %v5595, %v5594
  %v5655 = vpack.c.b16 %v5597, %v5596
  %v5656 = vpack.c.b16 %v5599, %v5598
  %v5657 = vpack.c.b16 %v5601, %v5600
  %v5658 = vpack.c.b16 %v5603, %v5602
  %v5659 = vpack.c.b16 %v5605, %v5604
  %v5660 = vpack.c.b16 %v5607, %v5606
  %v5661 = vpack.c.b16 %v5609, %v5608
  %v5662 = vpack.c.b16 %v5611, %v5610
  %v5663 = vpack.c.b16 %v5613, %v5612
  %v5664 = vpack.c.b16 %v5615, %v5614
  %v5665 = vpack.c.b16 %v5617, %v5616
  %v5666 = vpack.c.b16 %v5619, %v5618
  %v5667 = vpack.c.b16 %v5621, %v5620
  %v5668 = vpack.c.b16 %v5623, %v5622
  %v5669 = vpack.c.b16 %v5625, %v5624
  %v5670 = vpack.c.b16 %v5627, %v5626
  %v5671 = vpack.c.b16 %v5629, %v5628
  %v5672 = vpack.c.b16 %v5631, %v5630
  %v5673 = vpack.c.b16 %v5633, %v5632
  %v5674 = vpack.c.b16 %v5635, %v5634
  %v5675 = vpack.c.b16 %v5637, %v5636
  %v5676 = vpack.c.b16 %v5639, %v5638
  %v5677 = vpack.c.b16 %v5641, %v5640
  %v5678 = vpack.c.b16 %v5643, %v5642
  %v5679 = vpack.c.b16 %v5645, %v5644
  %v5680 = vpack.c.b16 %v5647, %v5646
  %v5681 = vpack.c.b16 %v5649, %v5648
  %5714 = vmatprep.subr.bf16.mxu0 0
  %5715 = vmatpush1.bf16.msra.mxu0 %v5650
  %5716 = vmatprep.subr.bf16.mxu0 0
  %5717 = vmatpush1.bf16.msra.mxu0 %v5651
  %5718 = vmatprep.subr.bf16.mxu0 0
  %5719 = vmatpush1.bf16.msra.mxu0 %v5652
  %5720 = vmatprep.subr.bf16.mxu0 0
  %5721 = vmatpush1.bf16.msra.mxu0 %v5653
  %5722 = vmatprep.subr.bf16.mxu0 0
  %5723 = vmatpush1.bf16.msra.mxu0 %v5654
  %5724 = vmatprep.subr.bf16.mxu0 0
  %5725 = vmatpush1.bf16.msra.mxu0 %v5655
  %5726 = vmatprep.subr.bf16.mxu0 0
  %5727 = vmatpush1.bf16.msra.mxu0 %v5656
  %5728 = vmatprep.subr.bf16.mxu0 0
  %5729 = vmatpush1.bf16.msra.mxu0 %v5657
  %5730 = vmatprep.subr.bf16.mxu0 0
  %5731 = vmatpush1.bf16.msra.mxu0 %v5658
  %5732 = vmatprep.subr.bf16.mxu0 0
  %5733 = vmatpush1.bf16.msra.mxu0 %v5659
  %5734 = vmatprep.subr.bf16.mxu0 0
  %5735 = vmatpush1.bf16.msra.mxu0 %v5660
  %5736 = vmatprep.subr.bf16.mxu0 0
  %5737 = vmatpush1.bf16.msra.mxu0 %v5661
  %5738 = vmatprep.subr.bf16.mxu0 0
  %5739 = vmatpush1.bf16.msra.mxu0 %v5662
  %5740 = vmatprep.subr.bf16.mxu0 0
  %5741 = vmatpush1.bf16.msra.mxu0 %v5663
  %5742 = vmatprep.subr.bf16.mxu0 0
  %5743 = vmatpush1.bf16.msra.mxu0 %v5664
  %5744 = vmatprep.subr.bf16.mxu0 0
  %5745 = vmatpush1.bf16.msra.mxu0 %v5665
  %5746 = vmatprep.mubr.bf16.mxu0 %v5448
  %5747 = vmatmul.mubr.bf16.gmra.mrb[0].mxu0 %v5447
  %v5748 = vpop.f32.mrb[0].mxu0
  %v5749 = vadd.f32 %v5520, %v5748
  %v5750 = vpop.f32.mrb[0].mxu0
  %v5751 = vpop.f32.mrb[0].mxu0
  %v5752 = vpop.f32.mrb[0].mxu0
  %5753 = vdwg.mxu0
  %5754 = vmatprep.subr.bf16.mxu0 0
  %5755 = vmatpush1.bf16.msra.mxu0 %v5666
  %5756 = vmatprep.subr.bf16.mxu0 0
  %5757 = vmatpush1.bf16.msra.mxu0 %v5667
  %5758 = vmatprep.subr.bf16.mxu0 0
  %5759 = vmatpush1.bf16.msra.mxu0 %v5668
  %5760 = vmatprep.subr.bf16.mxu0 0
  %5761 = vmatpush1.bf16.msra.mxu0 %v5669
  %5762 = vmatprep.subr.bf16.mxu0 0
  %5763 = vmatpush1.bf16.msra.mxu0 %v5670
  %5764 = vmatprep.subr.bf16.mxu0 0
  %5765 = vmatpush1.bf16.msra.mxu0 %v5671
  %5766 = vmatprep.subr.bf16.mxu0 0
  %5767 = vmatpush1.bf16.msra.mxu0 %v5672
  %5768 = vmatprep.subr.bf16.mxu0 0
  %5769 = vmatpush1.bf16.msra.mxu0 %v5673
  %5770 = vmatprep.subr.bf16.mxu0 0
  %5771 = vmatpush1.bf16.msra.mxu0 %v5674
  %5772 = vmatprep.subr.bf16.mxu0 0
  %5773 = vmatpush1.bf16.msra.mxu0 %v5675
  %5774 = vmatprep.subr.bf16.mxu0 0
  %5775 = vmatpush1.bf16.msra.mxu0 %v5676
  %5776 = vmatprep.subr.bf16.mxu0 0
  %5777 = vmatpush1.bf16.msra.mxu0 %v5677
  %5778 = vmatprep.subr.bf16.mxu0 0
  %5779 = vmatpush1.bf16.msra.mxu0 %v5678
  %5780 = vmatprep.subr.bf16.mxu0 0
  %5781 = vmatpush1.bf16.msra.mxu0 %v5679
  %5782 = vmatprep.subr.bf16.mxu0 0
  %5783 = vmatpush1.bf16.msra.mxu0 %v5680
  %5784 = vmatprep.subr.bf16.mxu0 0
  %5785 = vmatpush1.bf16.msra.mxu0 %v5681
  %5786 = vmatprep.mubr.bf16.mxu0 %v5450
  %5787 = vmatmul.mubr.bf16.gmra.mrb[0].mxu0 %v5449
  %v5788 = vpop.f32.mrb[0].mxu0
  %v5789 = vadd.f32 %v5749, %v5788
  %v5790 = vpop.f32.mrb[0].mxu0
  %v5791 = vpop.f32.mrb[0].mxu0
  %v5792 = vpop.f32.mrb[0].mxu0
  %5793 = vdwg.mxu0
  %v5794 = vlaneseq
  %v5795 = vand.u32 %v5794, 127
  %vm5796 = vcmp.lt.s32.totalorder %v5795, 3
  %v5797 = vsel %vm5796, %v5789, 0.0
  %vm5798 = vcmask 31744
  %v5799 = vsel %vm5798, %v5797, 0.0
  %5800 = vadd.xlane.f32.xlu0 %v5799
  %v5801 = vpop.xlane.xlu0 %5800
  %vm5802 = vcmp.eq.s32.totalorder %v5795, 3
  %v5803 = vmax.f32 %v5801, 0.0
  %v5804 = vmin.f32 %v5803, 1.0
  %v5805 = vsub.f32 1.0, %v5804
  %v5806 = vsel %vm5802, %v5805, %v5789
  %5807 = vst.msk [vmem:[%s17] sm:$0xff] %vm5798, %v5806
  // Predicated region
  $region70: #{sarcasm_forward.1} parent=0 // pred_check
    _
  $region71: #{sarcasm_forward.1} parent=0 // pred_check_branch
    %5809 = sbr.rel (0) target = $region73
  $region72: #{sarcasm_forward.1} parent=0 // pred_region
    _
  $region73: #{sarcasm_forward.1} parent=0 // pred_fallthru
    _
  // Predicated region
  $region74: #{sarcasm_forward.1} parent=0 // pred_check
    _
  $region75: #{sarcasm_forward.1} parent=0 // pred_check_branch
    %5811 = sbr.rel (0) target = $region77
  $region76: #{sarcasm_forward.1} parent=0 // pred_region
    _
  $region77: #{sarcasm_forward.1} parent=0 // pred_fallthru
    _

// kernel: sarcasm_forward.1
$region0: #{sarcasm_forward.1}
  #allocation0 [shape = 'u32[]', space=smem, size = 0x4, offset = 0x4, fixed_abs, tag = 'smem constant byte address 0x4 - core index']
  #allocation1 [shape = 'u32[144,128]{1,0:T(1,128)}', space=vmem, size = 0x12000, scoped, tag = 'internal scratch']
  %s0 = inlined_call_operand.vmem [shape: bf16[8,64], index: 0, kind: input, shape index: {}]
  %s1 = inlined_call_operand.vmem [shape: bf16[8,64], index: 1, kind: input, shape index: {}]
  %s2 = inlined_call_operand.vmem [shape: bf16[64,1024], index: 2, kind: input, shape index: {}]
  %s3 = inlined_call_operand.vmem [shape: bf16[64,1024], index: 3, kind: input, shape index: {}]
  %s4 = inlined_call_operand.vmem [shape: f32[1,1024], index: 4, kind: input, shape index: {}]
  %s5 = inlined_call_operand.vmem [shape: f32[1,1024], index: 5, kind: input, shape index: {}]
  %s6 = inlined_call_operand.vmem [shape: f32[1,1024], index: 6, kind: input, shape index: {}]
  %s7 = inlined_call_operand.vmem [shape: bf16[1024,768], index: 7, kind: input, shape index: {}]
  %s8 = inlined_call_operand.vmem [shape: f32[1,768], index: 8, kind: input, shape index: {}]
  %s9 = inlined_call_operand.vmem [shape: f32[1,768], index: 9, kind: input, shape index: {}]
  %s10 = inlined_call_operand.vmem [shape: f32[1,768], index: 10, kind: input, shape index: {}]
  %s11 = inlined_call_operand.vmem [shape: bf16[768,512], index: 11, kind: input, shape index: {}]
  %s12 = inlined_call_operand.vmem [shape: f32[1,512], index: 12, kind: input, shape index: {}]
  %s13 = inlined_call_operand.vmem [shape: f32[1,512], index: 13, kind: input, shape index: {}]
  %s14 = inlined_call_operand.vmem [shape: f32[1,512], index: 14, kind: input, shape index: {}]
  %s15 = inlined_call_operand.vmem [shape: bf16[512,4], index: 15, kind: input, shape index: {}]
  %s16 = inlined_call_operand.vmem [shape: f32[1,4], index: 16, kind: input, shape index: {}]
  %s17 = inlined_call_operand.vmem [shape: f32[8,4], index: 17, kind: output, shape index: {}]
  %s18 = sld [smem:[#allocation0]]
  $region78: #{sarcasm_forward.1} parent=0
    _
  %s20 = ssub.s32 1, %s18
  %s21 = scalar_select 0, %s20, %s18
  // Predicated region
  $region2: #{sarcasm_forward.1} parent=0 // pred_check
    _
  $region3: #{sarcasm_forward.1} parent=0 // pred_check_branch
    %23 = sbr.rel (0) target = $region5
  $region4: #{sarcasm_forward.1} parent=0 // pred_region
    _
  $region5: #{sarcasm_forward.1} parent=0 // pred_fallthru
    _
  // Predicated region
  $region6: #{sarcasm_forward.1} parent=0 // pred_check
    _
  $region7: #{sarcasm_forward.1} parent=0 // pred_check_branch
    %25 = sbr.rel (0) target = $region9
  $region8: #{sarcasm_forward.1} parent=0 // pred_region
    _
  $region9: #{sarcasm_forward.1} parent=0 // pred_fallthru
    _
  // Predicated region
  $region10: #{sarcasm_forward.1} parent=0 // pred_check
    _
  $region11: #{sarcasm_forward.1} parent=0 // pred_check_branch
    %27 = sbr.rel (0) target = $region13
  $region12: #{sarcasm_forward.1} parent=0 // pred_region
    _
  $region13: #{sarcasm_forward.1} parent=0 // pred_fallthru
    _
  // Predicated region
  $region14: #{sarcasm_forward.1} parent=0 // pred_check
    _
  $region15: #{sarcasm_forward.1} parent=0 // pred_check_branch
    %29 = sbr.rel (0) target = $region17
  $region16: #{sarcasm_forward.1} parent=0 // pred_region
    _
  $region17: #{sarcasm_forward.1} parent=0 // pred_fallthru
    _
  // Predicated region
  $region18: #{sarcasm_forward.1} parent=0 // pred_check
    _
  $region19: #{sarcasm_forward.1} parent=0 // pred_check_branch
    %31 = sbr.rel (0) target = $region21
  $region20: #{sarcasm_forward.1} parent=0 // pred_region
    _
  $region21: #{sarcasm_forward.1} parent=0 // pred_fallthru
    _
  // Predicated region
  $region22: #{sarcasm_forward.1} parent=0 // pred_check
    _
  $region23: #{sarcasm_forward.1} parent=0 // pred_check_branch
    %33 = sbr.rel (0) target = $region25
  $region24: #{sarcasm_forward.1} parent=0 // pred_region
    _
  $region25: #{sarcasm_forward.1} parent=0 // pred_fallthru
    _
  // Predicated region
  $region26: #{sarcasm_forward.1} parent=0 // pred_check
    _
  $region27: #{sarcasm_forward.1} parent=0 // pred_check_branch
    %35 = sbr.rel (0) target = $region29
  $region28: #{sarcasm_forward.1} parent=0 // pred_region
    _
  $region29: #{sarcasm_forward.1} parent=0 // pred_fallthru
    _
  // Predicated region
  $region30: #{sarcasm_forward.1} parent=0 // pred_check
    _
  $region31: #{sarcasm_forward.1} parent=0 // pred_check_branch
    %37 = sbr.rel (0) target = $region33
  $region32: #{sarcasm_forward.1} parent=0 // pred_region
    _
  $region33: #{sarcasm_forward.1} parent=0 // pred_fallthru
    _
  // Predicated region
  $region34: #{sarcasm_forward.1} parent=0 // pred_check
    _
  $region35: #{sarcasm_forward.1} parent=0 // pred_check_branch
    %39 = sbr.rel (0) target = $region37
  $region36: #{sarcasm_forward.1} parent=0 // pred_region
    _
  $region37: #{sarcasm_forward.1} parent=0 // pred_fallthru
    _
  // Predicated region
  $region38: #{sarcasm_forward.1} parent=0 // pred_check
    _
  $region39: #{sarcasm_forward.1} parent=0 // pred_check_branch
    %41 = sbr.rel (0) target = $region41
  $region40: #{sarcasm_forward.1} parent=0 // pred_region
    _
  $region41: #{sarcasm_forward.1} parent=0 // pred_fallthru
    _
  // Predicated region
  $region42: #{sarcasm_forward.1} parent=0 // pred_check
    _
  $region43: #{sarcasm_forward.1} parent=0 // pred_check_branch
    %43 = sbr.rel (0) target = $region45
  $region44: #{sarcasm_forward.1} parent=0 // pred_region
    _
  $region45: #{sarcasm_forward.1} parent=0 // pred_fallthru
    _
  // Predicated region
  $region46: #{sarcasm_forward.1} parent=0 // pred_check
    _
  $region47: #{sarcasm_forward.1} parent=0 // pred_check_branch
    %45 = sbr.rel (0) target = $region49
  $region48: #{sarcasm_forward.1} parent=0 // pred_region
    _
  $region49: #{sarcasm_forward.1} parent=0 // pred_fallthru
    _
  // Predicated region
  $region50: #{sarcasm_forward.1} parent=0 // pred_check
    _
  $region51: #{sarcasm_forward.1} parent=0 // pred_check_branch
    %47 = sbr.rel (0) target = $region53
  $region52: #{sarcasm_forward.1} parent=0 // pred_region
    _
  $region53: #{sarcasm_forward.1} parent=0 // pred_fallthru
    _
  // Predicated region
  $region54: #{sarcasm_forward.1} parent=0 // pred_check
    _
  $region55: #{sarcasm_forward.1} parent=0 // pred_check_branch
    %49 = sbr.rel (0) target = $region57
  $region56: #{sarcasm_forward.1} parent=0 // pred_region
    _
  $region57: #{sarcasm_forward.1} parent=0 // pred_fallthru
    _
  // Predicated region
  $region58: #{sarcasm_forward.1} parent=0 // pred_check
    _
  $region59: #{sarcasm_forward.1} parent=0 // pred_check_branch
    %51 = sbr.rel (0) target = $region61
  $region60: #{sarcasm_forward.1} parent=0 // pred_region
    _
  $region61: #{sarcasm_forward.1} parent=0 // pred_fallthru
    _
  // Predicated region
  $region62: #{sarcasm_forward.1} parent=0 // pred_check
    _
  $region63: #{sarcasm_forward.1} parent=0 // pred_check_branch
    %53 = sbr.rel (0) target = $region65
  $region64: #{sarcasm_forward.1} parent=0 // pred_region
    _
  $region65: #{sarcasm_forward.1} parent=0 // pred_fallthru
    _
  // Predicated region
  $region66: #{sarcasm_forward.1} parent=0 // pred_check
    _
  $region67: #{sarcasm_forward.1} parent=0 // pred_check_branch
    %55 = sbr.rel (0) target = $region69
  $region68: #{sarcasm_forward.1} parent=0 // pred_region
    _
  $region69: #{sarcasm_forward.1} parent=0 // pred_fallthru
    _
  %v57 = vld [vmem:[%s0] sm:$0xf]
  %v58 = vld [vmem:[%s2] sm:$0xff]
  %v59 = vld [vmem:[%s2 + $0x8] sm:$0xff]
  %v60 = vld [vmem:[%s2 + $0x10] sm:$0xff]
  %v61 = vld [vmem:[%s2 + $0x18] sm:$0xff]
  %v62 = vld [vmem:[%s2 + $0x20] sm:$0xff]
  %v63 = vld [vmem:[%s2 + $0x28] sm:$0xff]
  %v64 = vld [vmem:[%s2 + $0x30] sm:$0xff]
  %v65 = vld [vmem:[%s2 + $0x38] sm:$0xff]
  %v66 = vld [vmem:[%s2 + $0x40] sm:$0xff]
  %v67 = vld [vmem:[%s2 + $0x48] sm:$0xff]
  %v68 = vld [vmem:[%s2 + $0x50] sm:$0xff]
  %v69 = vld [vmem:[%s2 + $0x58] sm:$0xff]
  %v70 = vld [vmem:[%s2 + $0x60] sm:$0xff]
  %v71 = vld [vmem:[%s2 + $0x68] sm:$0xff]
  %v72 = vld [vmem:[%s2 + $0x70] sm:$0xff]
  %v73 = vld [vmem:[%s2 + $0x78] sm:$0xff]
  %v74 = vld [vmem:[%s2 + $0x80] sm:$0xff]
  %v75 = vld [vmem:[%s2 + $0x88] sm:$0xff]
  %v76 = vld [vmem:[%s2 + $0x90] sm:$0xff]
  %v77 = vld [vmem:[%s2 + $0x98] sm:$0xff]
  %v78 = vld [vmem:[%s2 + $0xa0] sm:$0xff]
  %v79 = vld [vmem:[%s2 + $0xa8] sm:$0xff]
  %v80 = vld [vmem:[%s2 + $0xb0] sm:$0xff]
  %v81 = vld [vmem:[%s2 + $0xb8] sm:$0xff]
  %v82 = vld [vmem:[%s2 + $0xc0] sm:$0xff]
  %v83 = vld [vmem:[%s2 + $0xc8] sm:$0xff]
  %v84 = vld [vmem:[%s2 + $0xd0] sm:$0xff]
  %v85 = vld [vmem:[%s2 + $0xd8] sm:$0xff]
  %v86 = vld [vmem:[%s2 + $0xe0] sm:$0xff]
  %v87 = vld [vmem:[%s2 + $0xe8] sm:$0xff]
  %v88 = vld [vmem:[%s2 + $0xf0] sm:$0xff]
  %v89 = vld [vmem:[%s2 + $0xf8] sm:$0xff]
  %v90 = vld [vmem:[%s1] sm:$0xf]
  %v91 = vld [vmem:[%s3] sm:$0xff]
  %v92 = vld [vmem:[%s3 + $0x8] sm:$0xff]
  %v93 = vld [vmem:[%s3 + $0x10] sm:$0xff]
  %v94 = vld [vmem:[%s3 + $0x18] sm:$0xff]
  %v95 = vld [vmem:[%s3 + $0x20] sm:$0xff]
  %v96 = vld [vmem:[%s3 + $0x28] sm:$0xff]
  %v97 = vld [vmem:[%s3 + $0x30] sm:$0xff]
  %v98 = vld [vmem:[%s3 + $0x38] sm:$0xff]
  %v99 = vld [vmem:[%s3 + $0x40] sm:$0xff]
  %v100 = vld [vmem:[%s3 + $0x48] sm:$0xff]
  %v101 = vld [vmem:[%s3 + $0x50] sm:$0xff]
  %v102 = vld [vmem:[%s3 + $0x58] sm:$0xff]
  %v103 = vld [vmem:[%s3 + $0x60] sm:$0xff]
  %v104 = vld [vmem:[%s3 + $0x68] sm:$0xff]
  %v105 = vld [vmem:[%s3 + $0x70] sm:$0xff]
  %v106 = vld [vmem:[%s3 + $0x78] sm:$0xff]
  %v107 = vld [vmem:[%s3 + $0x80] sm:$0xff]
  %v108 = vld [vmem:[%s3 + $0x88] sm:$0xff]
  %v109 = vld [vmem:[%s3 + $0x90] sm:$0xff]
  %v110 = vld [vmem:[%s3 + $0x98] sm:$0xff]
  %v111 = vld [vmem:[%s3 + $0xa0] sm:$0xff]
  %v112 = vld [vmem:[%s3 + $0xa8] sm:$0xff]
  %v113 = vld [vmem:[%s3 + $0xb0] sm:$0xff]
  %v114 = vld [vmem:[%s3 + $0xb8] sm:$0xff]
  %v115 = vld [vmem:[%s3 + $0xc0] sm:$0xff]
  %v116 = vld [vmem:[%s3 + $0xc8] sm:$0xff]
  %v117 = vld [vmem:[%s3 + $0xd0] sm:$0xff]
  %v118 = vld [vmem:[%s3 + $0xd8] sm:$0xff]
  %v119 = vld [vmem:[%s3 + $0xe0] sm:$0xff]
  %v120 = vld [vmem:[%s3 + $0xe8] sm:$0xff]
  %v121 = vld [vmem:[%s3 + $0xf0] sm:$0xff]
  %v122 = vld [vmem:[%s3 + $0xf8] sm:$0xff]
  %v155 = vunpack.c.l.b16 %v91
  %v156 = vunpack.c.h.b16 %v91
  %v157 = vunpack.c.l.b16 %v92
  %v158 = vunpack.c.h.b16 %v92
  %v159 = vunpack.c.l.b16 %v93
  %v160 = vunpack.c.h.b16 %v93
  %v161 = vunpack.c.l.b16 %v94
  %v162 = vunpack.c.h.b16 %v94
  %v163 = vunpack.c.l.b16 %v95
  %v164 = vunpack.c.h.b16 %v95
  %v165 = vunpack.c.l.b16 %v96
  %v166 = vunpack.c.h.b16 %v96
  %v167 = vunpack.c.l.b16 %v97
  %v168 = vunpack.c.h.b16 %v97
  %v169 = vunpack.c.l.b16 %v98
  %v170 = vunpack.c.h.b16 %v98
  %v171 = vunpack.c.l.b16 %v99
  %v172 = vunpack.c.h.b16 %v99
  %v173 = vunpack.c.l.b16 %v100
  %v174 = vunpack.c.h.b16 %v100
  %v175 = vunpack.c.l.b16 %v101
  %v176 = vunpack.c.h.b16 %v101
  %v177 = vunpack.c.l.b16 %v102
  %v178 = vunpack.c.h.b16 %v102
  %v179 = vunpack.c.l.b16 %v103
  %v180 = vunpack.c.h.b16 %v103
  %v181 = vunpack.c.l.b16 %v104
  %v182 = vunpack.c.h.b16 %v104
  %v183 = vunpack.c.l.b16 %v105
  %v184 = vunpack.c.h.b16 %v105
  %v185 = vunpack.c.l.b16 %v106
  %v186 = vunpack.c.h.b16 %v106
  %v187 = vunpack.c.l.b16 %v107
  %v188 = vunpack.c.h.b16 %v107
  %v189 = vunpack.c.l.b16 %v108
  %v190 = vunpack.c.h.b16 %v108
  %v191 = vunpack.c.l.b16 %v109
  %v192 = vunpack.c.h.b16 %v109
  %v193 = vunpack.c.l.b16 %v110
  %v194 = vunpack.c.h.b16 %v110
  %v195 = vunpack.c.l.b16 %v111
  %v196 = vunpack.c.h.b16 %v111
  %v197 = vunpack.c.l.b16 %v112
  %v198 = vunpack.c.h.b16 %v112
  %v199 = vunpack.c.l.b16 %v113
  %v200 = vunpack.c.h.b16 %v113
  %v201 = vunpack.c.l.b16 %v114
  %v202 = vunpack.c.h.b16 %v114
  %v203 = vunpack.c.l.b16 %v115
  %v204 = vunpack.c.h.b16 %v115
  %v205 = vunpack.c.l.b16 %v116
  %v206 = vunpack.c.h.b16 %v116
  %v207 = vunpack.c.l.b16 %v117
  %v208 = vunpack.c.h.b16 %v117
  %v209 = vunpack.c.l.b16 %v118
  %v210 = vunpack.c.h.b16 %v118
  %v211 = vunpack.c.l.b16 %v119
  %v212 = vunpack.c.h.b16 %v119
  %v213 = vunpack.c.l.b16 %v120
  %v214 = vunpack.c.h.b16 %v120
  %v215 = vunpack.c.l.b16 %v121
  %v216 = vunpack.c.h.b16 %v121
  %v217 = vunpack.c.l.b16 %v122
  %v218 = vunpack.c.h.b16 %v122
  %v219 = vpack.c.b16 %v163, %v155
  %v220 = vpack.c.b16 %v164, %v156
  %v221 = vpack.c.b16 %v165, %v157
  %v222 = vpack.c.b16 %v166, %v158
  %v223 = vpack.c.b16 %v167, %v159
  %v224 = vpack.c.b16 %v168, %v160
  %v225 = vpack.c.b16 %v169, %v161
  %v226 = vpack.c.b16 %v170, %v162
  %v227 = vpack.c.b16 %v179, %v171
  %v228 = vpack.c.b16 %v180, %v172
  %v229 = vpack.c.b16 %v181, %v173
  %v230 = vpack.c.b16 %v182, %v174
  %v231 = vpack.c.b16 %v183, %v175
  %v232 = vpack.c.b16 %v184, %v176
  %v233 = vpack.c.b16 %v185, %v177
  %v234 = vpack.c.b16 %v186, %v178
  %v235 = vpack.c.b16 %v195, %v187
  %v236 = vpack.c.b16 %v196, %v188
  %v237 = vpack.c.b16 %v197, %v189
  %v238 = vpack.c.b16 %v198, %v190
  %v239 = vpack.c.b16 %v199, %v191
  %v240 = vpack.c.b16 %v200, %v192
  %v241 = vpack.c.b16 %v201, %v193
  %v242 = vpack.c.b16 %v202, %v194
  %v243 = vpack.c.b16 %v211, %v203
  %v244 = vpack.c.b16 %v212, %v204
  %v245 = vpack.c.b16 %v213, %v205
  %v246 = vpack.c.b16 %v214, %v206
  %v247 = vpack.c.b16 %v215, %v207
  %v248 = vpack.c.b16 %v216, %v208
  %v249 = vpack.c.b16 %v217, %v209
  %v250 = vpack.c.b16 %v218, %v210
  %vm283 = vcmask 523264
  %v285 = vsel %vm283, %v90, 0
  %287 = vmatprep.subr.bf16.mxu0 %v220
  %288 = vmatpush1.bf16.msra.mxu0 %v219
  %289 = vmatprep.subr.bf16.mxu0 %v228
  %290 = vmatpush1.bf16.msra.mxu0 %v227
  %291 = vmatprep.subr.bf16.mxu0 %v236
  %292 = vmatpush1.bf16.msra.mxu0 %v235
  %293 = vmatprep.subr.bf16.mxu0 %v244
  %294 = vmatpush1.bf16.msra.mxu0 %v243
  %295 = vmatprep.subr.bf16.mxu0 0
  %296 = vmatpush1.bf16.msra.mxu0 0
  %297 = vmatprep.subr.bf16.mxu0 0
  %298 = vmatpush1.bf16.msra.mxu0 0
  %299 = vmatprep.subr.bf16.mxu0 0
  %300 = vmatpush1.bf16.msra.mxu0 0
  %301 = vmatprep.subr.bf16.mxu0 0
  %302 = vmatpush1.bf16.msra.mxu0 0
  %303 = vmatprep.subr.bf16.mxu0 0
  %304 = vmatpush1.bf16.msra.mxu0 0
  %305 = vmatprep.subr.bf16.mxu0 0
  %306 = vmatpush1.bf16.msra.mxu0 0
  %307 = vmatprep.subr.bf16.mxu0 0
  %308 = vmatpush1.bf16.msra.mxu0 0
  %309 = vmatprep.subr.bf16.mxu0 0
  %310 = vmatpush1.bf16.msra.mxu0 0
  %311 = vmatprep.subr.bf16.mxu0 0
  %312 = vmatpush1.bf16.msra.mxu0 0
  %313 = vmatprep.subr.bf16.mxu0 0
  %314 = vmatpush1.bf16.msra.mxu0 0
  %315 = vmatprep.subr.bf16.mxu0 0
  %316 = vmatpush1.bf16.msra.mxu0 0
  %317 = vmatprep.subr.bf16.mxu0 0
  %318 = vmatpush1.bf16.msra.mxu0 0
  %319 = vmatprep.mubr.bf16.mxu0 0
  %320 = vmatmul.mubr.bf16.gmra.mrb[0].mxu0 %v285
  %v321 = vpop.f32.mrb[0].mxu0
  %v322 = vadd.f32 0.0, %v321
  %v323 = vpop.f32.mrb[0].mxu0
  %v324 = vadd.f32 0.0, %v323
  %v325 = vpop.f32.mrb[0].mxu0
  %v326 = vpop.f32.mrb[0].mxu0
  %327 = vdwg.mxu0
  %328 = vmatprep.subr.bf16.mxu0 %v222
  %329 = vmatpush1.bf16.msra.mxu0 %v221
  %330 = vmatprep.subr.bf16.mxu0 %v230
  %331 = vmatpush1.bf16.msra.mxu0 %v229
  %332 = vmatprep.subr.bf16.mxu0 %v238
  %333 = vmatpush1.bf16.msra.mxu0 %v237
  %334 = vmatprep.subr.bf16.mxu0 %v246
  %335 = vmatpush1.bf16.msra.mxu0 %v245
  %336 = vmatprep.subr.bf16.mxu0 0
  %337 = vmatpush1.bf16.msra.mxu0 0
  %338 = vmatprep.subr.bf16.mxu0 0
  %339 = vmatpush1.bf16.msra.mxu0 0
  %340 = vmatprep.subr.bf16.mxu0 0
  %341 = vmatpush1.bf16.msra.mxu0 0
  %342 = vmatprep.subr.bf16.mxu0 0
  %343 = vmatpush1.bf16.msra.mxu0 0
  %344 = vmatprep.subr.bf16.mxu0 0
  %345 = vmatpush1.bf16.msra.mxu0 0
  %346 = vmatprep.subr.bf16.mxu0 0
  %347 = vmatpush1.bf16.msra.mxu0 0
  %348 = vmatprep.subr.bf16.mxu0 0
  %349 = vmatpush1.bf16.msra.mxu0 0
  %350 = vmatprep.subr.bf16.mxu0 0
  %351 = vmatpush1.bf16.msra.mxu0 0
  %352 = vmatprep.subr.bf16.mxu0 0
  %353 = vmatpush1.bf16.msra.mxu0 0
  %354 = vmatprep.subr.bf16.mxu0 0
  %355 = vmatpush1.bf16.msra.mxu0 0
  %356 = vmatprep.subr.bf16.mxu0 0
  %357 = vmatpush1.bf16.msra.mxu0 0
  %358 = vmatprep.subr.bf16.mxu0 0
  %359 = vmatpush1.bf16.msra.mxu0 0
  %360 = vmatprep.mubr.bf16.mxu0 0
  %361 = vmatmul.mubr.bf16.gmra.mrb[0].mxu0 %v285
  %v362 = vpop.f32.mrb[0].mxu0
  %v363 = vadd.f32 0.0, %v362
  %v364 = vpop.f32.mrb[0].mxu0
  %v365 = vadd.f32 0.0, %v364
  %v366 = vpop.f32.mrb[0].mxu0
  %v367 = vpop.f32.mrb[0].mxu0
  %368 = vdwg.mxu0
  %369 = vmatprep.subr.bf16.mxu0 %v224
  %370 = vmatpush1.bf16.msra.mxu0 %v223
  %371 = vmatprep.subr.bf16.mxu0 %v232
  %372 = vmatpush1.bf16.msra.mxu0 %v231
  %373 = vmatprep.subr.bf16.mxu0 %v240
  %374 = vmatpush1.bf16.msra.mxu0 %v239
  %375 = vmatprep.subr.bf16.mxu0 %v248
  %376 = vmatpush1.bf16.msra.mxu0 %v247
  %377 = vmatprep.subr.bf16.mxu0 0
  %378 = vmatpush1.bf16.msra.mxu0 0
  %379 = vmatprep.subr.bf16.mxu0 0
  %380 = vmatpush1.bf16.msra.mxu0 0
  %381 = vmatprep.subr.bf16.mxu0 0
  %382 = vmatpush1.bf16.msra.mxu0 0
  %383 = vmatprep.subr.bf16.mxu0 0
  %384 = vmatpush1.bf16.msra.mxu0 0
  %385 = vmatprep.subr.bf16.mxu0 0
  %386 = vmatpush1.bf16.msra.mxu0 0
  %387 = vmatprep.subr.bf16.mxu0 0
  %388 = vmatpush1.bf16.msra.mxu0 0
  %389 = vmatprep.subr.bf16.mxu0 0
  %390 = vmatpush1.bf16.msra.mxu0 0
  %391 = vmatprep.subr.bf16.mxu0 0
  %392 = vmatpush1.bf16.msra.mxu0 0
  %393 = vmatprep.subr.bf16.mxu0 0
  %394 = vmatpush1.bf16.msra.mxu0 0
  %395 = vmatprep.subr.bf16.mxu0 0
  %396 = vmatpush1.bf16.msra.mxu0 0
  %397 = vmatprep.subr.bf16.mxu0 0
  %398 = vmatpush1.bf16.msra.mxu0 0
  %399 = vmatprep.subr.bf16.mxu0 0
  %400 = vmatpush1.bf16.msra.mxu0 0
  %401 = vmatprep.mubr.bf16.mxu0 0
  %402 = vmatmul.mubr.bf16.gmra.mrb[0].mxu0 %v285
  %v403 = vpop.f32.mrb[0].mxu0
  %v404 = vadd.f32 0.0, %v403
  %v405 = vpop.f32.mrb[0].mxu0
  %v406 = vadd.f32 0.0, %v405
  %v407 = vpop.f32.mrb[0].mxu0
  %v408 = vpop.f32.mrb[0].mxu0
  %409 = vdwg.mxu0
  %410 = vmatprep.subr.bf16.mxu0 %v226
  %411 = vmatpush1.bf16.msra.mxu0 %v225
  %412 = vmatprep.subr.bf16.mxu0 %v234
  %413 = vmatpush1.bf16.msra.mxu0 %v233
  %414 = vmatprep.subr.bf16.mxu0 %v242
  %415 = vmatpush1.bf16.msra.mxu0 %v241
  %416 = vmatprep.subr.bf16.mxu0 %v250
  %417 = vmatpush1.bf16.msra.mxu0 %v249
  %418 = vmatprep.subr.bf16.mxu0 0
  %419 = vmatpush1.bf16.msra.mxu0 0
  %420 = vmatprep.subr.bf16.mxu0 0
  %421 = vmatpush1.bf16.msra.mxu0 0
  %422 = vmatprep.subr.bf16.mxu0 0
  %423 = vmatpush1.bf16.msra.mxu0 0
  %424 = vmatprep.subr.bf16.mxu0 0
  %425 = vmatpush1.bf16.msra.mxu0 0
  %426 = vmatprep.subr.bf16.mxu0 0
  %427 = vmatpush1.bf16.msra.mxu0 0
  %428 = vmatprep.subr.bf16.mxu0 0
  %429 = vmatpush1.bf16.msra.mxu0 0
  %430 = vmatprep.subr.bf16.mxu0 0
  %431 = vmatpush1.bf16.msra.mxu0 0
  %432 = vmatprep.subr.bf16.mxu0 0
  %433 = vmatpush1.bf16.msra.mxu0 0
  %434 = vmatprep.subr.bf16.mxu0 0
  %435 = vmatpush1.bf16.msra.mxu0 0
  %436 = vmatprep.subr.bf16.mxu0 0
  %437 = vmatpush1.bf16.msra.mxu0 0
  %438 = vmatprep.subr.bf16.mxu0 0
  %439 = vmatpush1.bf16.msra.mxu0 0
  %440 = vmatprep.subr.bf16.mxu0 0
  %441 = vmatpush1.bf16.msra.mxu0 0
  %442 = vmatprep.mubr.bf16.mxu0 0
  %443 = vmatmul.mubr.bf16.gmra.mrb[0].mxu0 %v285
  %v444 = vpop.f32.mrb[0].mxu0
  %v445 = vadd.f32 0.0, %v444
  %v446 = vpop.f32.mrb[0].mxu0
  %v447 = vadd.f32 0.0, %v446
  %v448 = vpop.f32.mrb[0].mxu0
  %v449 = vpop.f32.mrb[0].mxu0
  %450 = vdwg.mxu0
  %v483 = vunpack.c.l.b16 %v58
  %v484 = vunpack.c.h.b16 %v58
  %v485 = vunpack.c.l.b16 %v59
  %v486 = vunpack.c.h.b16 %v59
  %v487 = vunpack.c.l.b16 %v60
  %v488 = vunpack.c.h.b16 %v60
  %v489 = vunpack.c.l.b16 %v61
  %v490 = vunpack.c.h.b16 %v61
  %v491 = vunpack.c.l.b16 %v62
  %v492 = vunpack.c.h.b16 %v62
  %v493 = vunpack.c.l.b16 %v63
  %v494 = vunpack.c.h.b16 %v63
  %v495 = vunpack.c.l.b16 %v64
  %v496 = vunpack.c.h.b16 %v64
  %v497 = vunpack.c.l.b16 %v65
  %v498 = vunpack.c.h.b16 %v65
  %v499 = vunpack.c.l.b16 %v66
  %v500 = vunpack.c.h.b16 %v66
  %v501 = vunpack.c.l.b16 %v67
  %v502 = vunpack.c.h.b16 %v67
  %v503 = vunpack.c.l.b16 %v68
  %v504 = vunpack.c.h.b16 %v68
  %v505 = vunpack.c.l.b16 %v69
  %v506 = vunpack.c.h.b16 %v69
  %v507 = vunpack.c.l.b16 %v70
  %v508 = vunpack.c.h.b16 %v70
  %v509 = vunpack.c.l.b16 %v71
  %v510 = vunpack.c.h.b16 %v71
  %v511 = vunpack.c.l.b16 %v72
  %v512 = vunpack.c.h.b16 %v72
  %v513 = vunpack.c.l.b16 %v73
  %v514 = vunpack.c.h.b16 %v73
  %v515 = vunpack.c.l.b16 %v74
  %v516 = vunpack.c.h.b16 %v74
  %v517 = vunpack.c.l.b16 %v75
  %v518 = vunpack.c.h.b16 %v75
  %v519 = vunpack.c.l.b16 %v76
  %v520 = vunpack.c.h.b16 %v76
  %v521 = vunpack.c.l.b16 %v77
  %v522 = vunpack.c.h.b16 %v77
  %v523 = vunpack.c.l.b16 %v78
  %v524 = vunpack.c.h.b16 %v78
  %v525 = vunpack.c.l.b16 %v79
  %v526 = vunpack.c.h.b16 %v79
  %v527 = vunpack.c.l.b16 %v80
  %v528 = vunpack.c.h.b16 %v80
  %v529 = vunpack.c.l.b16 %v81
  %v530 = vunpack.c.h.b16 %v81
  %v531 = vunpack.c.l.b16 %v82
  %v532 = vunpack.c.h.b16 %v82
  %v533 = vunpack.c.l.b16 %v83
  %v534 = vunpack.c.h.b16 %v83
  %v535 = vunpack.c.l.b16 %v84
  %v536 = vunpack.c.h.b16 %v84
  %v537 = vunpack.c.l.b16 %v85
  %v538 = vunpack.c.h.b16 %v85
  %v539 = vunpack.c.l.b16 %v86
  %v540 = vunpack.c.h.b16 %v86
  %v541 = vunpack.c.l.b16 %v87
  %v542 = vunpack.c.h.b16 %v87
  %v543 = vunpack.c.l.b16 %v88
  %v544 = vunpack.c.h.b16 %v88
  %v545 = vunpack.c.l.b16 %v89
  %v546 = vunpack.c.h.b16 %v89
  %v547 = vpack.c.b16 %v491, %v483
  %v548 = vpack.c.b16 %v492, %v484
  %v549 = vpack.c.b16 %v493, %v485
  %v550 = vpack.c.b16 %v494, %v486
  %v551 = vpack.c.b16 %v495, %v487
  %v552 = vpack.c.b16 %v496, %v488
  %v553 = vpack.c.b16 %v497, %v489
  %v554 = vpack.c.b16 %v498, %v490
  %v555 = vpack.c.b16 %v507, %v499
  %v556 = vpack.c.b16 %v508, %v500
  %v557 = vpack.c.b16 %v509, %v501
  %v558 = vpack.c.b16 %v510, %v502
  %v559 = vpack.c.b16 %v511, %v503
  %v560 = vpack.c.b16 %v512, %v504
  %v561 = vpack.c.b16 %v513, %v505
  %v562 = vpack.c.b16 %v514, %v506
  %v563 = vpack.c.b16 %v523, %v515
  %v564 = vpack.c.b16 %v524, %v516
  %v565 = vpack.c.b16 %v525, %v517
  %v566 = vpack.c.b16 %v526, %v518
  %v567 = vpack.c.b16 %v527, %v519
  %v568 = vpack.c.b16 %v528, %v520
  %v569 = vpack.c.b16 %v529, %v521
  %v570 = vpack.c.b16 %v530, %v522
  %v571 = vpack.c.b16 %v539, %v531
  %v572 = vpack.c.b16 %v540, %v532
  %v573 = vpack.c.b16 %v541, %v533
  %v574 = vpack.c.b16 %v542, %v534
  %v575 = vpack.c.b16 %v543, %v535
  %v576 = vpack.c.b16 %v544, %v536
  %v577 = vpack.c.b16 %v545, %v537
  %v578 = vpack.c.b16 %v546, %v538
  %v612 = vsel %vm283, %v57, 0
  %614 = vmatprep.subr.bf16.mxu0 %v548
  %615 = vmatpush1.bf16.msra.mxu0 %v547
  %616 = vmatprep.subr.bf16.mxu0 %v556
  %617 = vmatpush1.bf16.msra.mxu0 %v555
  %618 = vmatprep.subr.bf16.mxu0 %v564
  %619 = vmatpush1.bf16.msra.mxu0 %v563
  %620 = vmatprep.subr.bf16.mxu0 %v572
  %621 = vmatpush1.bf16.msra.mxu0 %v571
  %622 = vmatprep.subr.bf16.mxu0 0
  %623 = vmatpush1.bf16.msra.mxu0 0
  %624 = vmatprep.subr.bf16.mxu0 0
  %625 = vmatpush1.bf16.msra.mxu0 0
  %626 = vmatprep.subr.bf16.mxu0 0
  %627 = vmatpush1.bf16.msra.mxu0 0
  %628 = vmatprep.subr.bf16.mxu0 0
  %629 = vmatpush1.bf16.msra.mxu0 0
  %630 = vmatprep.subr.bf16.mxu0 0
  %631 = vmatpush1.bf16.msra.mxu0 0
  %632 = vmatprep.subr.bf16.mxu0 0
  %633 = vmatpush1.bf16.msra.mxu0 0
  %634 = vmatprep.subr.bf16.mxu0 0
  %635 = vmatpush1.bf16.msra.mxu0 0
  %636 = vmatprep.subr.bf16.mxu0 0
  %637 = vmatpush1.bf16.msra.mxu0 0
  %638 = vmatprep.subr.bf16.mxu0 0
  %639 = vmatpush1.bf16.msra.mxu0 0
  %640 = vmatprep.subr.bf16.mxu0 0
  %641 = vmatpush1.bf16.msra.mxu0 0
  %642 = vmatprep.subr.bf16.mxu0 0
  %643 = vmatpush1.bf16.msra.mxu0 0
  %644 = vmatprep.subr.bf16.mxu0 0
  %645 = vmatpush1.bf16.msra.mxu0 0
  %646 = vmatprep.mubr.bf16.mxu0 0
  %647 = vmatmul.mubr.bf16.gmra.mrb[0].mxu0 %v612
  %v648 = vpop.f32.mrb[0].mxu0
  %v649 = vadd.f32 %v322, %v648
  %v650 = vpop.f32.mrb[0].mxu0
  %v651 = vadd.f32 %v324, %v650
  %v652 = vpop.f32.mrb[0].mxu0
  %v653 = vpop.f32.mrb[0].mxu0
  %654 = vdwg.mxu0
  %655 = vmatprep.subr.bf16.mxu0 %v550
  %656 = vmatpush1.bf16.msra.mxu0 %v549
  %657 = vmatprep.subr.bf16.mxu0 %v558
  %658 = vmatpush1.bf16.msra.mxu0 %v557
  %659 = vmatprep.subr.bf16.mxu0 %v566
  %660 = vmatpush1.bf16.msra.mxu0 %v565
  %661 = vmatprep.subr.bf16.mxu0 %v574
  %662 = vmatpush1.bf16.msra.mxu0 %v573
  %663 = vmatprep.subr.bf16.mxu0 0
  %664 = vmatpush1.bf16.msra.mxu0 0
  %665 = vmatprep.subr.bf16.mxu0 0
  %666 = vmatpush1.bf16.msra.mxu0 0
  %667 = vmatprep.subr.bf16.mxu0 0
  %668 = vmatpush1.bf16.msra.mxu0 0
  %669 = vmatprep.subr.bf16.mxu0 0
  %670 = vmatpush1.bf16.msra.mxu0 0
  %671 = vmatprep.subr.bf16.mxu0 0
  %672 = vmatpush1.bf16.msra.mxu0 0
  %673 = vmatprep.subr.bf16.mxu0 0
  %674 = vmatpush1.bf16.msra.mxu0 0
  %675 = vmatprep.subr.bf16.mxu0 0
  %676 = vmatpush1.bf16.msra.mxu0 0
  %677 = vmatprep.subr.bf16.mxu0 0
  %678 = vmatpush1.bf16.msra.mxu0 0
  %679 = vmatprep.subr.bf16.mxu0 0
  %680 = vmatpush1.bf16.msra.mxu0 0
  %681 = vmatprep.subr.bf16.mxu0 0
  %682 = vmatpush1.bf16.msra.mxu0 0
  %683 = vmatprep.subr.bf16.mxu0 0
  %684 = vmatpush1.bf16.msra.mxu0 0
  %685 = vmatprep.subr.bf16.mxu0 0
  %686 = vmatpush1.bf16.msra.mxu0 0
  %687 = vmatprep.mubr.bf16.mxu0 0
  %688 = vmatmul.mubr.bf16.gmra.mrb[0].mxu0 %v612
  %v689 = vpop.f32.mrb[0].mxu0
  %v690 = vadd.f32 %v363, %v689
  %v691 = vpop.f32.mrb[0].mxu0
  %v692 = vadd.f32 %v365, %v691
  %v693 = vpop.f32.mrb[0].mxu0
  %v694 = vpop.f32.mrb[0].mxu0
  %695 = vdwg.mxu0
  %696 = vmatprep.subr.bf16.mxu0 %v552
  %697 = vmatpush1.bf16.msra.mxu0 %v551
  %698 = vmatprep.subr.bf16.mxu0 %v560
  %699 = vmatpush1.bf16.msra.mxu0 %v559
  %700 = vmatprep.subr.bf16.mxu0 %v568
  %701 = vmatpush1.bf16.msra.mxu0 %v567
  %702 = vmatprep.subr.bf16.mxu0 %v576
  %703 = vmatpush1.bf16.msra.mxu0 %v575
  %704 = vmatprep.subr.bf16.mxu0 0
  %705 = vmatpush1.bf16.msra.mxu0 0
  %706 = vmatprep.subr.bf16.mxu0 0
  %707 = vmatpush1.bf16.msra.mxu0 0
  %708 = vmatprep.subr.bf16.mxu0 0
  %709 = vmatpush1.bf16.msra.mxu0 0
  %710 = vmatprep.subr.bf16.mxu0 0
  %711 = vmatpush1.bf16.msra.mxu0 0
  %712 = vmatprep.subr.bf16.mxu0 0
  %713 = vmatpush1.bf16.msra.mxu0 0
  %714 = vmatprep.subr.bf16.mxu0 0
  %715 = vmatpush1.bf16.msra.mxu0 0
  %716 = vmatprep.subr.bf16.mxu0 0
  %717 = vmatpush1.bf16.msra.mxu0 0
  %718 = vmatprep.subr.bf16.mxu0 0
  %719 = vmatpush1.bf16.msra.mxu0 0
  %720 = vmatprep.subr.bf16.mxu0 0
  %721 = vmatpush1.bf16.msra.mxu0 0
  %722 = vmatprep.subr.bf16.mxu0 0
  %723 = vmatpush1.bf16.msra.mxu0 0
  %724 = vmatprep.subr.bf16.mxu0 0
  %725 = vmatpush1.bf16.msra.mxu0 0
  %726 = vmatprep.subr.bf16.mxu0 0
  %727 = vmatpush1.bf16.msra.mxu0 0
  %728 = vmatprep.mubr.bf16.mxu0 0
  %729 = vmatmul.mubr.bf16.gmra.mrb[0].mxu0 %v612
  %v730 = vpop.f32.mrb[0].mxu0
  %v731 = vadd.f32 %v404, %v730
  %v732 = vpop.f32.mrb[0].mxu0
  %v733 = vadd.f32 %v406, %v732
  %v734 = vpop.f32.mrb[0].mxu0
  %v735 = vpop.f32.mrb[0].mxu0
  %736 = vdwg.mxu0
  %737 = vmatprep.subr.bf16.mxu0 %v554
  %738 = vmatpush1.bf16.msra.mxu0 %v553
  %739 = vmatprep.subr.bf16.mxu0 %v562
  %740 = vmatpush1.bf16.msra.mxu0 %v561
  %741 = vmatprep.subr.bf16.mxu0 %v570
  %742 = vmatpush1.bf16.msra.mxu0 %v569
  %743 = vmatprep.subr.bf16.mxu0 %v578
  %744 = vmatpush1.bf16.msra.mxu0 %v577
  %745 = vmatprep.subr.bf16.mxu0 0
  %746 = vmatpush1.bf16.msra.mxu0 0
  %747 = vmatprep.subr.bf16.mxu0 0
  %748 = vmatpush1.bf16.msra.mxu0 0
  %749 = vmatprep.subr.bf16.mxu0 0
  %750 = vmatpush1.bf16.msra.mxu0 0
  %751 = vmatprep.subr.bf16.mxu0 0
  %752 = vmatpush1.bf16.msra.mxu0 0
  %753 = vmatprep.subr.bf16.mxu0 0
  %754 = vmatpush1.bf16.msra.mxu0 0
  %755 = vmatprep.subr.bf16.mxu0 0
  %756 = vmatpush1.bf16.msra.mxu0 0
  %757 = vmatprep.subr.bf16.mxu0 0
  %758 = vmatpush1.bf16.msra.mxu0 0
  %759 = vmatprep.subr.bf16.mxu0 0
  %760 = vmatpush1.bf16.msra.mxu0 0
  %761 = vmatprep.subr.bf16.mxu0 0
  %762 = vmatpush1.bf16.msra.mxu0 0
  %763 = vmatprep.subr.bf16.mxu0 0
  %764 = vmatpush1.bf16.msra.mxu0 0
  %765 = vmatprep.subr.bf16.mxu0 0
  %766 = vmatpush1.bf16.msra.mxu0 0
  %767 = vmatprep.subr.bf16.mxu0 0
  %768 = vmatpush1.bf16.msra.mxu0 0
  %769 = vmatprep.mubr.bf16.mxu0 0
  %770 = vmatmul.mubr.bf16.gmra.mrb[0].mxu0 %v612
  %v771 = vpop.f32.mrb[0].mxu0
  %v772 = vadd.f32 %v445, %v771
  %v773 = vpop.f32.mrb[0].mxu0
  %v774 = vadd.f32 %v447, %v773
  %v775 = vpop.f32.mrb[0].mxu0
  %v776 = vpop.f32.mrb[0].mxu0
  %777 = vdwg.mxu0
  %v778 = vld [vmem:[%s4] sm:$0xff]
  %v780 = vlaneseq
  %v781 = vshrl.u32 %v780, 7
  %v782 = vsub.s32 0, %v781
  %v783 = vrot.slane %v778, %v782
  %v784 = vlaneseq
  %v785 = vshrl.u32 %v784, 7
  %v786 = vsub.s32 1, %v785
  %v787 = vrot.slane %v778, %v786
  %v788 = vlaneseq
  %v789 = vshrl.u32 %v788, 7
  %v790 = vsub.s32 2, %v789
  %v791 = vrot.slane %v778, %v790
  %v792 = vlaneseq
  %v793 = vshrl.u32 %v792, 7
  %v794 = vsub.s32 3, %v793
  %v795 = vrot.slane %v778, %v794
  %v796 = vlaneseq
  %v797 = vshrl.u32 %v796, 7
  %v798 = vsub.s32 4, %v797
  %v799 = vrot.slane %v778, %v798
  %v800 = vlaneseq
  %v801 = vshrl.u32 %v800, 7
  %v802 = vsub.s32 5, %v801
  %v803 = vrot.slane %v778, %v802
  %v804 = vlaneseq
  %v805 = vshrl.u32 %v804, 7
  %v806 = vsub.s32 6, %v805
  %v807 = vrot.slane %v778, %v806
  %v808 = vlaneseq
  %v809 = vshrl.u32 %v808, 7
  %v810 = vsub.s32 7, %v809
  %v811 = vrot.slane %v778, %v810
  %v820 = vadd.f32 %v649, %v783
  %v821 = vadd.f32 %v651, %v787
  %v822 = vadd.f32 %v690, %v791
  %v823 = vadd.f32 %v692, %v795
  %v824 = vadd.f32 %v731, %v799
  %v825 = vadd.f32 %v733, %v803
  %v826 = vadd.f32 %v772, %v807
  %v827 = vadd.f32 %v774, %v811
  %v828 = vld [vmem:[%s5] sm:$0xff]
  %v829 = vld [vmem:[%s6] sm:$0xff]
  %v830 = vadd.f32 %v820, %v821
  %v831 = vadd.f32 %v830, %v822
  %v832 = vadd.f32 %v831, %v823
  %v833 = vadd.f32 %v832, %v824
  %v834 = vadd.f32 %v833, %v825
  %v835 = vadd.f32 %v834, %v826
  %v836 = vadd.f32 %v835, %v827
  %837 = vadd.xlane.f32.xlu0 %v836
  %v838 = vpop.xlane.xlu0 %837
  %v839 = vrcp.pop 1024.0
  %v840 = vmul.f32 %v838, %v839
  %v841 = vsub.f32 %v820, %v840
  %v842 = vsub.f32 %v821, %v840
  %v843 = vsub.f32 %v822, %v840
  %v844 = vsub.f32 %v823, %v840
  %v845 = vsub.f32 %v824, %v840
  %v846 = vsub.f32 %v825, %v840
  %v847 = vsub.f32 %v826, %v840
  %v848 = vsub.f32 %v827, %v840
  %v849 = vmul.f32 %v841, %v841
  %v850 = vmul.f32 %v842, %v842
  %v851 = vmul.f32 %v843, %v843
  %v852 = vmul.f32 %v844, %v844
  %v853 = vmul.f32 %v845, %v845
  %v854 = vmul.f32 %v846, %v846
  %v855 = vmul.f32 %v847, %v847
  %v856 = vmul.f32 %v848, %v848
  %v857 = vadd.f32 %v849, %v850
  %v858 = vadd.f32 %v857, %v851
  %v859 = vadd.f32 %v858, %v852
  %v860 = vadd.f32 %v859, %v853
  %v861 = vadd.f32 %v860, %v854
  %v862 = vadd.f32 %v861, %v855
  %v863 = vadd.f32 %v862, %v856
  %864 = vadd.xlane.f32.xlu0 %v863
  %v865 = vpop.xlane.xlu0 %864
  %v866 = vmul.f32 %v865, %v839
  %v867 = vadd.f32 %v866, 1e-05
  %v868 = vrsqrt.pop %v867
  %v869 = vmul.f32 %v841, %v868
  %v870 = vmul.f32 %v842, %v868
  %v871 = vmul.f32 %v843, %v868
  %v872 = vmul.f32 %v844, %v868
  %v873 = vmul.f32 %v845, %v868
  %v874 = vmul.f32 %v846, %v868
  %v875 = vmul.f32 %v847, %v868
  %v876 = vmul.f32 %v848, %v868
  %v878 = vlaneseq
  %v879 = vshrl.u32 %v878, 7
  %v880 = vsub.s32 0, %v879
  %v881 = vrot.slane %v828, %v880
  %v882 = vlaneseq
  %v883 = vshrl.u32 %v882, 7
  %v884 = vsub.s32 1, %v883
  %v885 = vrot.slane %v828, %v884
  %v886 = vlaneseq
  %v887 = vshrl.u32 %v886, 7
  %v888 = vsub.s32 2, %v887
  %v889 = vrot.slane %v828, %v888
  %v890 = vlaneseq
  %v891 = vshrl.u32 %v890, 7
  %v892 = vsub.s32 3, %v891
  %v893 = vrot.slane %v828, %v892
  %v894 = vlaneseq
  %v895 = vshrl.u32 %v894, 7
  %v896 = vsub.s32 4, %v895
  %v897 = vrot.slane %v828, %v896
  %v898 = vlaneseq
  %v899 = vshrl.u32 %v898, 7
  %v900 = vsub.s32 5, %v899
  %v901 = vrot.slane %v828, %v900
  %v902 = vlaneseq
  %v903 = vshrl.u32 %v902, 7
  %v904 = vsub.s32 6, %v903
  %v905 = vrot.slane %v828, %v904
  %v906 = vlaneseq
  %v907 = vshrl.u32 %v906, 7
  %v908 = vsub.s32 7, %v907
  %v909 = vrot.slane %v828, %v908
  %v918 = vmul.f32 %v869, %v881
  %v919 = vmul.f32 %v870, %v885
  %v920 = vmul.f32 %v871, %v889
  %v921 = vmul.f32 %v872, %v893
  %v922 = vmul.f32 %v873, %v897
  %v923 = vmul.f32 %v874, %v901
  %v924 = vmul.f32 %v875, %v905
  %v925 = vmul.f32 %v876, %v909
  %v927 = vlaneseq
  %v928 = vshrl.u32 %v927, 7
  %v929 = vsub.s32 0, %v928
  %v930 = vrot.slane %v829, %v929
  %v931 = vlaneseq
  %v932 = vshrl.u32 %v931, 7
  %v933 = vsub.s32 1, %v932
  %v934 = vrot.slane %v829, %v933
  %v935 = vlaneseq
  %v936 = vshrl.u32 %v935, 7
  %v937 = vsub.s32 2, %v936
  %v938 = vrot.slane %v829, %v937
  %v939 = vlaneseq
  %v940 = vshrl.u32 %v939, 7
  %v941 = vsub.s32 3, %v940
  %v942 = vrot.slane %v829, %v941
  %v943 = vlaneseq
  %v944 = vshrl.u32 %v943, 7
  %v945 = vsub.s32 4, %v944
  %v946 = vrot.slane %v829, %v945
  %v947 = vlaneseq
  %v948 = vshrl.u32 %v947, 7
  %v949 = vsub.s32 5, %v948
  %v950 = vrot.slane %v829, %v949
  %v951 = vlaneseq
  %v952 = vshrl.u32 %v951, 7
  %v953 = vsub.s32 6, %v952
  %v954 = vrot.slane %v829, %v953
  %v955 = vlaneseq
  %v956 = vshrl.u32 %v955, 7
  %v957 = vsub.s32 7, %v956
  %v958 = vrot.slane %v829, %v957
  %v967 = vadd.f32 %v918, %v930
  %v968 = vadd.f32 %v919, %v934
  %v969 = vadd.f32 %v920, %v938
  %v970 = vadd.f32 %v921, %v942
  %v971 = vadd.f32 %v922, %v946
  %v972 = vadd.f32 %v923, %v950
  %v973 = vadd.f32 %v924, %v954
  %v974 = vadd.f32 %v925, %v958
  %v975 = vmax.f32 %v967, 0.0
  %v976 = vmax.f32 %v968, 0.0
  %v977 = vmax.f32 %v969, 0.0
  %v978 = vmax.f32 %v970, 0.0
  %v979 = vmax.f32 %v971, 0.0
  %v980 = vmax.f32 %v972, 0.0
  %v981 = vmax.f32 %v973, 0.0
  %v982 = vmax.f32 %v974, 0.0
  %v983 = vpack.c.bf16 %v975, %v975
  %v984 = vpack.c.bf16 %v976, %v976
  %v985 = vpack.c.bf16 %v977, %v977
  %v986 = vpack.c.bf16 %v978, %v978
  %v987 = vpack.c.bf16 %v979, %v979
  %v988 = vpack.c.bf16 %v980, %v980
  %v989 = vpack.c.bf16 %v981, %v981
  %v990 = vpack.c.bf16 %v982, %v982
  %v991 = vld [vmem:[%s7] sm:$0xff]
  %v992 = vld [vmem:[%s7 + $0x8] sm:$0xff]
  %v993 = vld [vmem:[%s7 + $0x10] sm:$0xff]
  %v994 = vld [vmem:[%s7 + $0x18] sm:$0xff]
  %v995 = vld [vmem:[%s7 + $0x20] sm:$0xff]
  %v996 = vld [vmem:[%s7 + $0x28] sm:$0xff]
  %v997 = vld [vmem:[%s7 + $0x30] sm:$0xff]
  %v998 = vld [vmem:[%s7 + $0x38] sm:$0xff]
  %v999 = vld [vmem:[%s7 + $0x40] sm:$0xff]
  %v1000 = vld [vmem:[%s7 + $0x48] sm:$0xff]
  %v1001 = vld [vmem:[%s7 + $0x50] sm:$0xff]
  %v1002 = vld [vmem:[%s7 + $0x58] sm:$0xff]
  %v1003 = vld [vmem:[%s7 + $0x60] sm:$0xff]
  %v1004 = vld [vmem:[%s7 + $0x68] sm:$0xff]
  %v1005 = vld [vmem:[%s7 + $0x70] sm:$0xff]
  %v1006 = vld [vmem:[%s7 + $0x78] sm:$0xff]
  %v1007 = vld [vmem:[%s7 + $0x80] sm:$0xff]
  %v1008 = vld [vmem:[%s7 + $0x88] sm:$0xff]
  %v1009 = vld [vmem:[%s7 + $0x90] sm:$0xff]
  %v1010 = vld [vmem:[%s7 + $0x98] sm:$0xff]
  %v1011 = vld [vmem:[%s7 + $0xa0] sm:$0xff]
  %v1012 = vld [vmem:[%s7 + $0xa8] sm:$0xff]
  %v1013 = vld [vmem:[%s7 + $0xb0] sm:$0xff]
  %v1014 = vld [vmem:[%s7 + $0xb8] sm:$0xff]
  %v1015 = vld [vmem:[%s7 + $0xc0] sm:$0xff]
  %v1016 = vld [vmem:[%s7 + $0xc8] sm:$0xff]
  %v1017 = vld [vmem:[%s7 + $0xd0] sm:$0xff]
  %v1018 = vld [vmem:[%s7 + $0xd8] sm:$0xff]
  %v1019 = vld [vmem:[%s7 + $0xe0] sm:$0xff]
  %v1020 = vld [vmem:[%s7 + $0xe8] sm:$0xff]
  %v1021 = vld [vmem:[%s7 + $0xf0] sm:$0xff]
  %v1022 = vld [vmem:[%s7 + $0xf8] sm:$0xff]
  %v1023 = vld [vmem:[%s7 + $0x100] sm:$0xff]
  %v1024 = vld [vmem:[%s7 + $0x108] sm:$0xff]
  %v1025 = vld [vmem:[%s7 + $0x110] sm:$0xff]
  %v1026 = vld [vmem:[%s7 + $0x118] sm:$0xff]
  %v1027 = vld [vmem:[%s7 + $0x120] sm:$0xff]
  %v1028 = vld [vmem:[%s7 + $0x128] sm:$0xff]
  %v1029 = vld [vmem:[%s7 + $0x130] sm:$0xff]
  %v1030 = vld [vmem:[%s7 + $0x138] sm:$0xff]
  %v1031 = vld [vmem:[%s7 + $0x140] sm:$0xff]
  %v1032 = vld [vmem:[%s7 + $0x148] sm:$0xff]
  %v1033 = vld [vmem:[%s7 + $0x150] sm:$0xff]
  %v1034 = vld [vmem:[%s7 + $0x158] sm:$0xff]
  %v1035 = vld [vmem:[%s7 + $0x160] sm:$0xff]
  %v1036 = vld [vmem:[%s7 + $0x168] sm:$0xff]
  %v1037 = vld [vmem:[%s7 + $0x170] sm:$0xff]
  %v1038 = vld [vmem:[%s7 + $0x178] sm:$0xff]
  %v1039 = vld [vmem:[%s7 + $0x180] sm:$0xff]
  %v1040 = vld [vmem:[%s7 + $0x188] sm:$0xff]
  %v1041 = vld [vmem:[%s7 + $0x190] sm:$0xff]
  %v1042 = vld [vmem:[%s7 + $0x198] sm:$0xff]
  %v1043 = vld [vmem:[%s7 + $0x1a0] sm:$0xff]
  %v1044 = vld [vmem:[%s7 + $0x1a8] sm:$0xff]
  %v1045 = vld [vmem:[%s7 + $0x1b0] sm:$0xff]
  %v1046 = vld [vmem:[%s7 + $0x1b8] sm:$0xff]
  %v1047 = vld [vmem:[%s7 + $0x1c0] sm:$0xff]
  %v1048 = vld [vmem:[%s7 + $0x1c8] sm:$0xff]
  %v1049 = vld [vmem:[%s7 + $0x1d0] sm:$0xff]
  %v1050 = vld [vmem:[%s7 + $0x1d8] sm:$0xff]
  %v1051 = vld [vmem:[%s7 + $0x1e0] sm:$0xff]
  %v1052 = vld [vmem:[%s7 + $0x1e8] sm:$0xff]
  %v1053 = vld [vmem:[%s7 + $0x1f0] sm:$0xff]
  %v1054 = vld [vmem:[%s7 + $0x1f8] sm:$0xff]
  %v1055 = vld [vmem:[%s7 + $0x200] sm:$0xff]
  %v1056 = vld [vmem:[%s7 + $0x208] sm:$0xff]
  %v1057 = vld [vmem:[%s7 + $0x210] sm:$0xff]
  %v1058 = vld [vmem:[%s7 + $0x218] sm:$0xff]
  %v1059 = vld [vmem:[%s7 + $0x220] sm:$0xff]
  %v1060 = vld [vmem:[%s7 + $0x228] sm:$0xff]
  %v1061 = vld [vmem:[%s7 + $0x230] sm:$0xff]
  %v1062 = vld [vmem:[%s7 + $0x238] sm:$0xff]
  %v1063 = vld [vmem:[%s7 + $0x240] sm:$0xff]
  %v1064 = vld [vmem:[%s7 + $0x248] sm:$0xff]
  %v1065 = vld [vmem:[%s7 + $0x250] sm:$0xff]
  %v1066 = vld [vmem:[%s7 + $0x258] sm:$0xff]
  %v1067 = vld [vmem:[%s7 + $0x260] sm:$0xff]
  %v1068 = vld [vmem:[%s7 + $0x268] sm:$0xff]
  %v1069 = vld [vmem:[%s7 + $0x270] sm:$0xff]
  %v1070 = vld [vmem:[%s7 + $0x278] sm:$0xff]
  %v1071 = vld [vmem:[%s7 + $0x280] sm:$0xff]
  %v1072 = vld [vmem:[%s7 + $0x288] sm:$0xff]
  %v1073 = vld [vmem:[%s7 + $0x290] sm:$0xff]
  %v1074 = vld [vmem:[%s7 + $0x298] sm:$0xff]
  %v1075 = vld [vmem:[%s7 + $0x2a0] sm:$0xff]
  %v1076 = vld [vmem:[%s7 + $0x2a8] sm:$0xff]
  %v1077 = vld [vmem:[%s7 + $0x2b0] sm:$0xff]
  %v1078 = vld [vmem:[%s7 + $0x2b8] sm:$0xff]
  %v1079 = vld [vmem:[%s7 + $0x2c0] sm:$0xff]
  %v1080 = vld [vmem:[%s7 + $0x2c8] sm:$0xff]
  %v1081 = vld [vmem:[%s7 + $0x2d0] sm:$0xff]
  %v1082 = vld [vmem:[%s7 + $0x2d8] sm:$0xff]
  %v1083 = vld [vmem:[%s7 + $0x2e0] sm:$0xff]
  %v1084 = vld [vmem:[%s7 + $0x2e8] sm:$0xff]
  %v1085 = vld [vmem:[%s7 + $0x2f0] sm:$0xff]
  %v1086 = vld [vmem:[%s7 + $0x2f8] sm:$0xff]
  %v1087 = vld [vmem:[%s7 + $0x300] sm:$0xff]
  %v1088 = vld [vmem:[%s7 + $0x308] sm:$0xff]
  %v1089 = vld [vmem:[%s7 + $0x310] sm:$0xff]
  %v1090 = vld [vmem:[%s7 + $0x318] sm:$0xff]
  %v1091 = vld [vmem:[%s7 + $0x320] sm:$0xff]
  %v1092 = vld [vmem:[%s7 + $0x328] sm:$0xff]
  %v1093 = vld [vmem:[%s7 + $0x330] sm:$0xff]
  %v1094 = vld [vmem:[%s7 + $0x338] sm:$0xff]
  %v1095 = vld [vmem:[%s7 + $0x340] sm:$0xff]
  %v1096 = vld [vmem:[%s7 + $0x348] sm:$0xff]
  %v1097 = vld [vmem:[%s7 + $0x350] sm:$0xff]
  %v1098 = vld [vmem:[%s7 + $0x358] sm:$0xff]
  %v1099 = vld [vmem:[%s7 + $0x360] sm:$0xff]
  %v1100 = vld [vmem:[%s7 + $0x368] sm:$0xff]
  %v1101 = vld [vmem:[%s7 + $0x370] sm:$0xff]
  %v1102 = vld [vmem:[%s7 + $0x378] sm:$0xff]
  %v1103 = vld [vmem:[%s7 + $0x380] sm:$0xff]
  %v1104 = vld [vmem:[%s7 + $0x388] sm:$0xff]
  %v1105 = vld [vmem:[%s7 + $0x390] sm:$0xff]
  %v1106 = vld [vmem:[%s7 + $0x398] sm:$0xff]
  %v1107 = vld [vmem:[%s7 + $0x3a0] sm:$0xff]
  %v1108 = vld [vmem:[%s7 + $0x3a8] sm:$0xff]
  %v1109 = vld [vmem:[%s7 + $0x3b0] sm:$0xff]
  %v1110 = vld [vmem:[%s7 + $0x3b8] sm:$0xff]
  %v1111 = vld [vmem:[%s7 + $0x3c0] sm:$0xff]
  %v1112 = vld [vmem:[%s7 + $0x3c8] sm:$0xff]
  %v1113 = vld [vmem:[%s7 + $0x3d0] sm:$0xff]
  %v1114 = vld [vmem:[%s7 + $0x3d8] sm:$0xff]
  %v1115 = vld [vmem:[%s7 + $0x3e0] sm:$0xff]
  %v1116 = vld [vmem:[%s7 + $0x3e8] sm:$0xff]
  %v1117 = vld [vmem:[%s7 + $0x3f0] sm:$0xff]
  %v1118 = vld [vmem:[%s7 + $0x3f8] sm:$0xff]
  %v1119 = vld [vmem:[%s7 + $0x400] sm:$0xff]
  %v1120 = vld [vmem:[%s7 + $0x408] sm:$0xff]
  %v1121 = vld [vmem:[%s7 + $0x410] sm:$0xff]
  %v1122 = vld [vmem:[%s7 + $0x418] sm:$0xff]
  %v1123 = vld [vmem:[%s7 + $0x420] sm:$0xff]
  %v1124 = vld [vmem:[%s7 + $0x428] sm:$0xff]
  %v1125 = vld [vmem:[%s7 + $0x430] sm:$0xff]
  %v1126 = vld [vmem:[%s7 + $0x438] sm:$0xff]
  %v1127 = vld [vmem:[%s7 + $0x440] sm:$0xff]
  %v1128 = vld [vmem:[%s7 + $0x448] sm:$0xff]
  %v1129 = vld [vmem:[%s7 + $0x450] sm:$0xff]
  %v1130 = vld [vmem:[%s7 + $0x458] sm:$0xff]
  %v1131 = vld [vmem:[%s7 + $0x460] sm:$0xff]
  %v1132 = vld [vmem:[%s7 + $0x468] sm:$0xff]
  %v1133 = vld [vmem:[%s7 + $0x470] sm:$0xff]
  %v1134 = vld [vmem:[%s7 + $0x478] sm:$0xff]
  %v1135 = vld [vmem:[%s7 + $0x480] sm:$0xff]
  %v1136 = vld [vmem:[%s7 + $0x488] sm:$0xff]
  %v1137 = vld [vmem:[%s7 + $0x490] sm:$0xff]
  %v1138 = vld [vmem:[%s7 + $0x498] sm:$0xff]
  %v1139 = vld [vmem:[%s7 + $0x4a0] sm:$0xff]
  %v1140 = vld [vmem:[%s7 + $0x4a8] sm:$0xff]
  %v1141 = vld [vmem:[%s7 + $0x4b0] sm:$0xff]
  %v1142 = vld [vmem:[%s7 + $0x4b8] sm:$0xff]
  %v1143 = vld [vmem:[%s7 + $0x4c0] sm:$0xff]
  %v1144 = vld [vmem:[%s7 + $0x4c8] sm:$0xff]
  %v1145 = vld [vmem:[%s7 + $0x4d0] sm:$0xff]
  %v1146 = vld [vmem:[%s7 + $0x4d8] sm:$0xff]
  %v1147 = vld [vmem:[%s7 + $0x4e0] sm:$0xff]
  %v1148 = vld [vmem:[%s7 + $0x4e8] sm:$0xff]
  %v1149 = vld [vmem:[%s7 + $0x4f0] sm:$0xff]
  %v1150 = vld [vmem:[%s7 + $0x4f8] sm:$0xff]
  %v1151 = vld [vmem:[%s7 + $0x500] sm:$0xff]
  %v1152 = vld [vmem:[%s7 + $0x508] sm:$0xff]
  %v1153 = vld [vmem:[%s7 + $0x510] sm:$0xff]
  %v1154 = vld [vmem:[%s7 + $0x518] sm:$0xff]
  %v1155 = vld [vmem:[%s7 + $0x520] sm:$0xff]
  %v1156 = vld [vmem:[%s7 + $0x528] sm:$0xff]
  %v1157 = vld [vmem:[%s7 + $0x530] sm:$0xff]
  %v1158 = vld [vmem:[%s7 + $0x538] sm:$0xff]
  %v1159 = vld [vmem:[%s7 + $0x540] sm:$0xff]
  %v1160 = vld [vmem:[%s7 + $0x548] sm:$0xff]
  %v1161 = vld [vmem:[%s7 + $0x550] sm:$0xff]
  %v1162 = vld [vmem:[%s7 + $0x558] sm:$0xff]
  %v1163 = vld [vmem:[%s7 + $0x560] sm:$0xff]
  %v1164 = vld [vmem:[%s7 + $0x568] sm:$0xff]
  %v1165 = vld [vmem:[%s7 + $0x570] sm:$0xff]
  %v1166 = vld [vmem:[%s7 + $0x578] sm:$0xff]
  %v1167 = vld [vmem:[%s7 + $0x580] sm:$0xff]
  %v1168 = vld [vmem:[%s7 + $0x588] sm:$0xff]
  %v1169 = vld [vmem:[%s7 + $0x590] sm:$0xff]
  %v1170 = vld [vmem:[%s7 + $0x598] sm:$0xff]
  %v1171 = vld [vmem:[%s7 + $0x5a0] sm:$0xff]
  %v1172 = vld [vmem:[%s7 + $0x5a8] sm:$0xff]
  %v1173 = vld [vmem:[%s7 + $0x5b0] sm:$0xff]
  %v1174 = vld [vmem:[%s7 + $0x5b8] sm:$0xff]
  %v1175 = vld [vmem:[%s7 + $0x5c0] sm:$0xff]
  %v1176 = vld [vmem:[%s7 + $0x5c8] sm:$0xff]
  %v1177 = vld [vmem:[%s7 + $0x5d0] sm:$0xff]
  %v1178 = vld [vmem:[%s7 + $0x5d8] sm:$0xff]
  %v1179 = vld [vmem:[%s7 + $0x5e0] sm:$0xff]
  %v1180 = vld [vmem:[%s7 + $0x5e8] sm:$0xff]
  %v1181 = vld [vmem:[%s7 + $0x5f0] sm:$0xff]
  %v1182 = vld [vmem:[%s7 + $0x5f8] sm:$0xff]
  %v1183 = vld [vmem:[%s7 + $0x600] sm:$0xff]
  %v1184 = vld [vmem:[%s7 + $0x608] sm:$0xff]
  %v1185 = vld [vmem:[%s7 + $0x610] sm:$0xff]
  %v1186 = vld [vmem:[%s7 + $0x618] sm:$0xff]
  %v1187 = vld [vmem:[%s7 + $0x620] sm:$0xff]
  %v1188 = vld [vmem:[%s7 + $0x628] sm:$0xff]
  %v1189 = vld [vmem:[%s7 + $0x630] sm:$0xff]
  %v1190 = vld [vmem:[%s7 + $0x638] sm:$0xff]
  %v1191 = vld [vmem:[%s7 + $0x640] sm:$0xff]
  %v1192 = vld [vmem:[%s7 + $0x648] sm:$0xff]
  %v1193 = vld [vmem:[%s7 + $0x650] sm:$0xff]
  %v1194 = vld [vmem:[%s7 + $0x658] sm:$0xff]
  %v1195 = vld [vmem:[%s7 + $0x660] sm:$0xff]
  %v1196 = vld [vmem:[%s7 + $0x668] sm:$0xff]
  %v1197 = vld [vmem:[%s7 + $0x670] sm:$0xff]
  %v1198 = vld [vmem:[%s7 + $0x678] sm:$0xff]
  %v1199 = vld [vmem:[%s7 + $0x680] sm:$0xff]
  %v1200 = vld [vmem:[%s7 + $0x688] sm:$0xff]
  %v1201 = vld [vmem:[%s7 + $0x690] sm:$0xff]
  %v1202 = vld [vmem:[%s7 + $0x698] sm:$0xff]
  %v1203 = vld [vmem:[%s7 + $0x6a0] sm:$0xff]
  %v1204 = vld [vmem:[%s7 + $0x6a8] sm:$0xff]
  %v1205 = vld [vmem:[%s7 + $0x6b0] sm:$0xff]
  %v1206 = vld [vmem:[%s7 + $0x6b8] sm:$0xff]
  %v1207 = vld [vmem:[%s7 + $0x6c0] sm:$0xff]
  %v1208 = vld [vmem:[%s7 + $0x6c8] sm:$0xff]
  %v1209 = vld [vmem:[%s7 + $0x6d0] sm:$0xff]
  %v1210 = vld [vmem:[%s7 + $0x6d8] sm:$0xff]
  %v1211 = vld [vmem:[%s7 + $0x6e0] sm:$0xff]
  %v1212 = vld [vmem:[%s7 + $0x6e8] sm:$0xff]
  %v1213 = vld [vmem:[%s7 + $0x6f0] sm:$0xff]
  %v1214 = vld [vmem:[%s7 + $0x6f8] sm:$0xff]
  %v1215 = vld [vmem:[%s7 + $0x700] sm:$0xff]
  %v1216 = vld [vmem:[%s7 + $0x708] sm:$0xff]
  %v1217 = vld [vmem:[%s7 + $0x710] sm:$0xff]
  %v1218 = vld [vmem:[%s7 + $0x718] sm:$0xff]
  %v1219 = vld [vmem:[%s7 + $0x720] sm:$0xff]
  %v1220 = vld [vmem:[%s7 + $0x728] sm:$0xff]
  %v1221 = vld [vmem:[%s7 + $0x730] sm:$0xff]
  %v1222 = vld [vmem:[%s7 + $0x738] sm:$0xff]
  %v1223 = vld [vmem:[%s7 + $0x740] sm:$0xff]
  %v1224 = vld [vmem:[%s7 + $0x748] sm:$0xff]
  %v1225 = vld [vmem:[%s7 + $0x750] sm:$0xff]
  %v1226 = vld [vmem:[%s7 + $0x758] sm:$0xff]
  %v1227 = vld [vmem:[%s7 + $0x760] sm:$0xff]
  %v1228 = vld [vmem:[%s7 + $0x768] sm:$0xff]
  %v1229 = vld [vmem:[%s7 + $0x770] sm:$0xff]
  %v1230 = vld [vmem:[%s7 + $0x778] sm:$0xff]
  %v1231 = vld [vmem:[%s7 + $0x780] sm:$0xff]
  %v1232 = vld [vmem:[%s7 + $0x788] sm:$0xff]
  %v1233 = vld [vmem:[%s7 + $0x790] sm:$0xff]
  %v1234 = vld [vmem:[%s7 + $0x798] sm:$0xff]
  %v1235 = vld [vmem:[%s7 + $0x7a0] sm:$0xff]
  %v1236 = vld [vmem:[%s7 + $0x7a8] sm:$0xff]
  %v1237 = vld [vmem:[%s7 + $0x7b0] sm:$0xff]
  %v1238 = vld [vmem:[%s7 + $0x7b8] sm:$0xff]
  %v1239 = vld [vmem:[%s7 + $0x7c0] sm:$0xff]
  %v1240 = vld [vmem:[%s7 + $0x7c8] sm:$0xff]
  %v1241 = vld [vmem:[%s7 + $0x7d0] sm:$0xff]
  %v1242 = vld [vmem:[%s7 + $0x7d8] sm:$0xff]
  %v1243 = vld [vmem:[%s7 + $0x7e0] sm:$0xff]
  %v1244 = vld [vmem:[%s7 + $0x7e8] sm:$0xff]
  %v1245 = vld [vmem:[%s7 + $0x7f0] sm:$0xff]
  %v1246 = vld [vmem:[%s7 + $0x7f8] sm:$0xff]
  %v1247 = vld [vmem:[%s7 + $0x800] sm:$0xff]
  %v1248 = vld [vmem:[%s7 + $0x808] sm:$0xff]
  %v1249 = vld [vmem:[%s7 + $0x810] sm:$0xff]
  %v1250 = vld [vmem:[%s7 + $0x818] sm:$0xff]
  %v1251 = vld [vmem:[%s7 + $0x820] sm:$0xff]
  %v1252 = vld [vmem:[%s7 + $0x828] sm:$0xff]
  %v1253 = vld [vmem:[%s7 + $0x830] sm:$0xff]
  %v1254 = vld [vmem:[%s7 + $0x838] sm:$0xff]
  %v1255 = vld [vmem:[%s7 + $0x840] sm:$0xff]
  %v1256 = vld [vmem:[%s7 + $0x848] sm:$0xff]
  %v1257 = vld [vmem:[%s7 + $0x850] sm:$0xff]
  %v1258 = vld [vmem:[%s7 + $0x858] sm:$0xff]
  %v1259 = vld [vmem:[%s7 + $0x860] sm:$0xff]
  %v1260 = vld [vmem:[%s7 + $0x868] sm:$0xff]
  %v1261 = vld [vmem:[%s7 + $0x870] sm:$0xff]
  %v1262 = vld [vmem:[%s7 + $0x878] sm:$0xff]
  %v1263 = vld [vmem:[%s7 + $0x880] sm:$0xff]
  %v1264 = vld [vmem:[%s7 + $0x888] sm:$0xff]
  %v1265 = vld [vmem:[%s7 + $0x890] sm:$0xff]
  %v1266 = vld [vmem:[%s7 + $0x898] sm:$0xff]
  %v1267 = vld [vmem:[%s7 + $0x8a0] sm:$0xff]
  %v1268 = vld [vmem:[%s7 + $0x8a8] sm:$0xff]
  %v1269 = vld [vmem:[%s7 + $0x8b0] sm:$0xff]
  %v1270 = vld [vmem:[%s7 + $0x8b8] sm:$0xff]
  %v1271 = vld [vmem:[%s7 + $0x8c0] sm:$0xff]
  %v1272 = vld [vmem:[%s7 + $0x8c8] sm:$0xff]
  %v1273 = vld [vmem:[%s7 + $0x8d0] sm:$0xff]
  %v1274 = vld [vmem:[%s7 + $0x8d8] sm:$0xff]
  %v1275 = vld [vmem:[%s7 + $0x8e0] sm:$0xff]
  %v1276 = vld [vmem:[%s7 + $0x8e8] sm:$0xff]
  %v1277 = vld [vmem:[%s7 + $0x8f0] sm:$0xff]
  %v1278 = vld [vmem:[%s7 + $0x8f8] sm:$0xff]
  %v1279 = vld [vmem:[%s7 + $0x900] sm:$0xff]
  %v1280 = vld [vmem:[%s7 + $0x908] sm:$0xff]
  %v1281 = vld [vmem:[%s7 + $0x910] sm:$0xff]
  %v1282 = vld [vmem:[%s7 + $0x918] sm:$0xff]
  %v1283 = vld [vmem:[%s7 + $0x920] sm:$0xff]
  %v1284 = vld [vmem:[%s7 + $0x928] sm:$0xff]
  %v1285 = vld [vmem:[%s7 + $0x930] sm:$0xff]
  %v1286 = vld [vmem:[%s7 + $0x938] sm:$0xff]
  %v1287 = vld [vmem:[%s7 + $0x940] sm:$0xff]
  %v1288 = vld [vmem:[%s7 + $0x948] sm:$0xff]
  %v1289 = vld [vmem:[%s7 + $0x950] sm:$0xff]
  %v1290 = vld [vmem:[%s7 + $0x958] sm:$0xff]
  %v1291 = vld [vmem:[%s7 + $0x960] sm:$0xff]
  %v1292 = vld [vmem:[%s7 + $0x968] sm:$0xff]
  %v1293 = vld [vmem:[%s7 + $0x970] sm:$0xff]
  %v1294 = vld [vmem:[%s7 + $0x978] sm:$0xff]
  %v1295 = vld [vmem:[%s7 + $0x980] sm:$0xff]
  %v1296 = vld [vmem:[%s7 + $0x988] sm:$0xff]
  %v1297 = vld [vmem:[%s7 + $0x990] sm:$0xff]
  %v1298 = vld [vmem:[%s7 + $0x998] sm:$0xff]
  %v1299 = vld [vmem:[%s7 + $0x9a0] sm:$0xff]
  %v1300 = vld [vmem:[%s7 + $0x9a8] sm:$0xff]
  %v1301 = vld [vmem:[%s7 + $0x9b0] sm:$0xff]
  %v1302 = vld [vmem:[%s7 + $0x9b8] sm:$0xff]
  %v1303 = vld [vmem:[%s7 + $0x9c0] sm:$0xff]
  %v1304 = vld [vmem:[%s7 + $0x9c8] sm:$0xff]
  %v1305 = vld [vmem:[%s7 + $0x9d0] sm:$0xff]
  %v1306 = vld [vmem:[%s7 + $0x9d8] sm:$0xff]
  %v1307 = vld [vmem:[%s7 + $0x9e0] sm:$0xff]
  %v1308 = vld [vmem:[%s7 + $0x9e8] sm:$0xff]
  %v1309 = vld [vmem:[%s7 + $0x9f0] sm:$0xff]
  %v1310 = vld [vmem:[%s7 + $0x9f8] sm:$0xff]
  %v1311 = vld [vmem:[%s7 + $0xa00] sm:$0xff]
  %v1312 = vld [vmem:[%s7 + $0xa08] sm:$0xff]
  %v1313 = vld [vmem:[%s7 + $0xa10] sm:$0xff]
  %v1314 = vld [vmem:[%s7 + $0xa18] sm:$0xff]
  %v1315 = vld [vmem:[%s7 + $0xa20] sm:$0xff]
  %v1316 = vld [vmem:[%s7 + $0xa28] sm:$0xff]
  %v1317 = vld [vmem:[%s7 + $0xa30] sm:$0xff]
  %v1318 = vld [vmem:[%s7 + $0xa38] sm:$0xff]
  %v1319 = vld [vmem:[%s7 + $0xa40] sm:$0xff]
  %v1320 = vld [vmem:[%s7 + $0xa48] sm:$0xff]
  %v1321 = vld [vmem:[%s7 + $0xa50] sm:$0xff]
  %v1322 = vld [vmem:[%s7 + $0xa58] sm:$0xff]
  %v1323 = vld [vmem:[%s7 + $0xa60] sm:$0xff]
  %v1324 = vld [vmem:[%s7 + $0xa68] sm:$0xff]
  %v1325 = vld [vmem:[%s7 + $0xa70] sm:$0xff]
  %v1326 = vld [vmem:[%s7 + $0xa78] sm:$0xff]
  %v1327 = vld [vmem:[%s7 + $0xa80] sm:$0xff]
  %v1328 = vld [vmem:[%s7 + $0xa88] sm:$0xff]
  %v1329 = vld [vmem:[%s7 + $0xa90] sm:$0xff]
  %v1330 = vld [vmem:[%s7 + $0xa98] sm:$0xff]
  %v1331 = vld [vmem:[%s7 + $0xaa0] sm:$0xff]
  %v1332 = vld [vmem:[%s7 + $0xaa8] sm:$0xff]
  %v1333 = vld [vmem:[%s7 + $0xab0] sm:$0xff]
  %v1334 = vld [vmem:[%s7 + $0xab8] sm:$0xff]
  %v1335 = vld [vmem:[%s7 + $0xac0] sm:$0xff]
  %v1336 = vld [vmem:[%s7 + $0xac8] sm:$0xff]
  %v1337 = vld [vmem:[%s7 + $0xad0] sm:$0xff]
  %v1338 = vld [vmem:[%s7 + $0xad8] sm:$0xff]
  %v1339 = vld [vmem:[%s7 + $0xae0] sm:$0xff]
  %v1340 = vld [vmem:[%s7 + $0xae8] sm:$0xff]
  %v1341 = vld [vmem:[%s7 + $0xaf0] sm:$0xff]
  %v1342 = vld [vmem:[%s7 + $0xaf8] sm:$0xff]
  %v1343 = vld [vmem:[%s7 + $0xb00] sm:$0xff]
  %v1344 = vld [vmem:[%s7 + $0xb08] sm:$0xff]
  %v1345 = vld [vmem:[%s7 + $0xb10] sm:$0xff]
  %v1346 = vld [vmem:[%s7 + $0xb18] sm:$0xff]
  %v1347 = vld [vmem:[%s7 + $0xb20] sm:$0xff]
  %v1348 = vld [vmem:[%s7 + $0xb28] sm:$0xff]
  %v1349 = vld [vmem:[%s7 + $0xb30] sm:$0xff]
  %v1350 = vld [vmem:[%s7 + $0xb38] sm:$0xff]
  %v1351 = vld [vmem:[%s7 + $0xb40] sm:$0xff]
  %v1352 = vld [vmem:[%s7 + $0xb48] sm:$0xff]
  %v1353 = vld [vmem:[%s7 + $0xb50] sm:$0xff]
  %v1354 = vld [vmem:[%s7 + $0xb58] sm:$0xff]
  %v1355 = vld [vmem:[%s7 + $0xb60] sm:$0xff]
  %v1356 = vld [vmem:[%s7 + $0xb68] sm:$0xff]
  %v1357 = vld [vmem:[%s7 + $0xb70] sm:$0xff]
  %v1358 = vld [vmem:[%s7 + $0xb78] sm:$0xff]
  %v1359 = vld [vmem:[%s7 + $0xb80] sm:$0xff]
  %v1360 = vld [vmem:[%s7 + $0xb88] sm:$0xff]
  %v1361 = vld [vmem:[%s7 + $0xb90] sm:$0xff]
  %v1362 = vld [vmem:[%s7 + $0xb98] sm:$0xff]
  %v1363 = vld [vmem:[%s7 + $0xba0] sm:$0xff]
  %v1364 = vld [vmem:[%s7 + $0xba8] sm:$0xff]
  %v1365 = vld [vmem:[%s7 + $0xbb0] sm:$0xff]
  %v1366 = vld [vmem:[%s7 + $0xbb8] sm:$0xff]
  %v1367 = vld [vmem:[%s7 + $0xbc0] sm:$0xff]
  %v1368 = vld [vmem:[%s7 + $0xbc8] sm:$0xff]
  %v1369 = vld [vmem:[%s7 + $0xbd0] sm:$0xff]
  %v1370 = vld [vmem:[%s7 + $0xbd8] sm:$0xff]
  %v1371 = vld [vmem:[%s7 + $0xbe0] sm:$0xff]
  %v1372 = vld [vmem:[%s7 + $0xbe8] sm:$0xff]
  %v1373 = vld [vmem:[%s7 + $0xbf0] sm:$0xff]
  %v1374 = vld [vmem:[%s7 + $0xbf8] sm:$0xff]
  %v1375 = vld [vmem:[%s8] sm:$0x3f]
  %v1377 = vlaneseq
  %v1378 = vshrl.u32 %v1377, 7
  %v1379 = vsub.s32 0, %v1378
  %v1380 = vrot.slane %v1375, %v1379
  %v1381 = vlaneseq
  %v1382 = vshrl.u32 %v1381, 7
  %v1383 = vsub.s32 1, %v1382
  %v1384 = vrot.slane %v1375, %v1383
  %v1385 = vlaneseq
  %v1386 = vshrl.u32 %v1385, 7
  %v1387 = vsub.s32 2, %v1386
  %v1388 = vrot.slane %v1375, %v1387
  %v1389 = vlaneseq
  %v1390 = vshrl.u32 %v1389, 7
  %v1391 = vsub.s32 3, %v1390
  %v1392 = vrot.slane %v1375, %v1391
  %v1393 = vlaneseq
  %v1394 = vshrl.u32 %v1393, 7
  %v1395 = vsub.s32 4, %v1394
  %v1396 = vrot.slane %v1375, %v1395
  %v1397 = vlaneseq
  %v1398 = vshrl.u32 %v1397, 7
  %v1399 = vsub.s32 5, %v1398
  %v1400 = vrot.slane %v1375, %v1399
  %v1791 = vunpack.c.l.b16 %v991
  %v1792 = vunpack.c.h.b16 %v991
  %v1793 = vunpack.c.l.b16 %v992
  %v1794 = vunpack.c.h.b16 %v992
  %v1795 = vunpack.c.l.b16 %v993
  %v1796 = vunpack.c.h.b16 %v993
  %v1797 = vunpack.c.l.b16 %v994
  %v1798 = vunpack.c.h.b16 %v994
  %v1799 = vunpack.c.l.b16 %v995
  %v1800 = vunpack.c.h.b16 %v995
  %v1801 = vunpack.c.l.b16 %v996
  %v1802 = vunpack.c.h.b16 %v996
  %v1803 = vunpack.c.l.b16 %v997
  %v1804 = vunpack.c.h.b16 %v997
  %v1805 = vunpack.c.l.b16 %v998
  %v1806 = vunpack.c.h.b16 %v998
  %v1807 = vunpack.c.l.b16 %v999
  %v1808 = vunpack.c.h.b16 %v999
  %v1809 = vunpack.c.l.b16 %v1000
  %v1810 = vunpack.c.h.b16 %v1000
  %v1811 = vunpack.c.l.b16 %v1001
  %v1812 = vunpack.c.h.b16 %v1001
  %v1813 = vunpack.c.l.b16 %v1002
  %v1814 = vunpack.c.h.b16 %v1002
  %v1815 = vunpack.c.l.b16 %v1003
  %v1816 = vunpack.c.h.b16 %v1003
  %v1817 = vunpack.c.l.b16 %v1004
  %v1818 = vunpack.c.h.b16 %v1004
  %v1819 = vunpack.c.l.b16 %v1005
  %v1820 = vunpack.c.h.b16 %v1005
  %v1821 = vunpack.c.l.b16 %v1006
  %v1822 = vunpack.c.h.b16 %v1006
  %v1823 = vunpack.c.l.b16 %v1007
  %v1824 = vunpack.c.h.b16 %v1007
  %v1825 = vunpack.c.l.b16 %v1008
  %v1826 = vunpack.c.h.b16 %v1008
  %v1827 = vunpack.c.l.b16 %v1009
  %v1828 = vunpack.c.h.b16 %v1009
  %v1829 = vunpack.c.l.b16 %v1010
  %v1830 = vunpack.c.h.b16 %v1010
  %v1831 = vunpack.c.l.b16 %v1011
  %v1832 = vunpack.c.h.b16 %v1011
  %v1833 = vunpack.c.l.b16 %v1012
  %v1834 = vunpack.c.h.b16 %v1012
  %v1835 = vunpack.c.l.b16 %v1013
  %v1836 = vunpack.c.h.b16 %v1013
  %v1837 = vunpack.c.l.b16 %v1014
  %v1838 = vunpack.c.h.b16 %v1014
  %v1839 = vunpack.c.l.b16 %v1015
  %v1840 = vunpack.c.h.b16 %v1015
  %v1841 = vunpack.c.l.b16 %v1016
  %v1842 = vunpack.c.h.b16 %v1016
  %v1843 = vunpack.c.l.b16 %v1017
  %v1844 = vunpack.c.h.b16 %v1017
  %v1845 = vunpack.c.l.b16 %v1018
  %v1846 = vunpack.c.h.b16 %v1018
  %v1847 = vunpack.c.l.b16 %v1019
  %v1848 = vunpack.c.h.b16 %v1019
  %v1849 = vunpack.c.l.b16 %v1020
  %v1850 = vunpack.c.h.b16 %v1020
  %v1851 = vunpack.c.l.b16 %v1021
  %v1852 = vunpack.c.h.b16 %v1021
  %v1853 = vunpack.c.l.b16 %v1022
  %v1854 = vunpack.c.h.b16 %v1022
  %v1855 = vunpack.c.l.b16 %v1023
  %v1856 = vunpack.c.h.b16 %v1023
  %v1857 = vunpack.c.l.b16 %v1024
  %v1858 = vunpack.c.h.b16 %v1024
  %v1859 = vunpack.c.l.b16 %v1025
  %v1860 = vunpack.c.h.b16 %v1025
  %v1861 = vunpack.c.l.b16 %v1026
  %v1862 = vunpack.c.h.b16 %v1026
  %v1863 = vunpack.c.l.b16 %v1027
  %v1864 = vunpack.c.h.b16 %v1027
  %v1865 = vunpack.c.l.b16 %v1028
  %v1866 = vunpack.c.h.b16 %v1028
  %v1867 = vunpack.c.l.b16 %v1029
  %v1868 = vunpack.c.h.b16 %v1029
  %v1869 = vunpack.c.l.b16 %v1030
  %v1870 = vunpack.c.h.b16 %v1030
  %v1871 = vunpack.c.l.b16 %v1031
  %v1872 = vunpack.c.h.b16 %v1031
  %v1873 = vunpack.c.l.b16 %v1032
  %v1874 = vunpack.c.h.b16 %v1032
  %v1875 = vunpack.c.l.b16 %v1033
  %v1876 = vunpack.c.h.b16 %v1033
  %v1877 = vunpack.c.l.b16 %v1034
  %v1878 = vunpack.c.h.b16 %v1034
  %v1879 = vunpack.c.l.b16 %v1035
  %v1880 = vunpack.c.h.b16 %v1035
  %v1881 = vunpack.c.l.b16 %v1036
  %v1882 = vunpack.c.h.b16 %v1036
  %v1883 = vunpack.c.l.b16 %v1037
  %v1884 = vunpack.c.h.b16 %v1037
  %v1885 = vunpack.c.l.b16 %v1038
  %v1886 = vunpack.c.h.b16 %v1038
  %v1887 = vunpack.c.l.b16 %v1039
  %v1888 = vunpack.c.h.b16 %v1039
  %v1889 = vunpack.c.l.b16 %v1040
  %v1890 = vunpack.c.h.b16 %v1040
  %v1891 = vunpack.c.l.b16 %v1041
  %v1892 = vunpack.c.h.b16 %v1041
  %v1893 = vunpack.c.l.b16 %v1042
  %v1894 = vunpack.c.h.b16 %v1042
  %v1895 = vunpack.c.l.b16 %v1043
  %v1896 = vunpack.c.h.b16 %v1043
  %v1897 = vunpack.c.l.b16 %v1044
  %v1898 = vunpack.c.h.b16 %v1044
  %v1899 = vunpack.c.l.b16 %v1045
  %v1900 = vunpack.c.h.b16 %v1045
  %v1901 = vunpack.c.l.b16 %v1046
  %v1902 = vunpack.c.h.b16 %v1046
  %v1903 = vunpack.c.l.b16 %v1047
  %v1904 = vunpack.c.h.b16 %v1047
  %v1905 = vunpack.c.l.b16 %v1048
  %v1906 = vunpack.c.h.b16 %v1048
  %v1907 = vunpack.c.l.b16 %v1049
  %v1908 = vunpack.c.h.b16 %v1049
  %v1909 = vunpack.c.l.b16 %v1050
  %v1910 = vunpack.c.h.b16 %v1050
  %v1911 = vunpack.c.l.b16 %v1051
  %v1912 = vunpack.c.h.b16 %v1051
  %v1913 = vunpack.c.l.b16 %v1052
  %v1914 = vunpack.c.h.b16 %v1052
  %v1915 = vunpack.c.l.b16 %v1053
  %v1916 = vunpack.c.h.b16 %v1053
  %v1917 = vunpack.c.l.b16 %v1054
  %v1918 = vunpack.c.h.b16 %v1054
  %v1919 = vunpack.c.l.b16 %v1055
  %v1920 = vunpack.c.h.b16 %v1055
  %v1921 = vunpack.c.l.b16 %v1056
  %v1922 = vunpack.c.h.b16 %v1056
  %v1923 = vunpack.c.l.b16 %v1057
  %v1924 = vunpack.c.h.b16 %v1057
  %v1925 = vunpack.c.l.b16 %v1058
  %v1926 = vunpack.c.h.b16 %v1058
  %v1927 = vunpack.c.l.b16 %v1059
  %v1928 = vunpack.c.h.b16 %v1059
  %v1929 = vunpack.c.l.b16 %v1060
  %v1930 = vunpack.c.h.b16 %v1060
  %v1931 = vunpack.c.l.b16 %v1061
  %v1932 = vunpack.c.h.b16 %v1061
  %v1933 = vunpack.c.l.b16 %v1062
  %v1934 = vunpack.c.h.b16 %v1062
  %v1935 = vunpack.c.l.b16 %v1063
  %v1936 = vunpack.c.h.b16 %v1063
  %v1937 = vunpack.c.l.b16 %v1064
  %v1938 = vunpack.c.h.b16 %v1064
  %v1939 = vunpack.c.l.b16 %v1065
  %v1940 = vunpack.c.h.b16 %v1065
  %v1941 = vunpack.c.l.b16 %v1066
  %v1942 = vunpack.c.h.b16 %v1066
  %v1943 = vunpack.c.l.b16 %v1067
  %v1944 = vunpack.c.h.b16 %v1067
  %v1945 = vunpack.c.l.b16 %v1068
  %v1946 = vunpack.c.h.b16 %v1068
  %v1947 = vunpack.c.l.b16 %v1069
  %v1948 = vunpack.c.h.b16 %v1069
  %v1949 = vunpack.c.l.b16 %v1070
  %v1950 = vunpack.c.h.b16 %v1070
  %v1951 = vunpack.c.l.b16 %v1071
  %v1952 = vunpack.c.h.b16 %v1071
  %v1953 = vunpack.c.l.b16 %v1072
  %v1954 = vunpack.c.h.b16 %v1072
  %v1955 = vunpack.c.l.b16 %v1073
  %v1956 = vunpack.c.h.b16 %v1073
  %v1957 = vunpack.c.l.b16 %v1074
  %v1958 = vunpack.c.h.b16 %v1074
  %v1959 = vunpack.c.l.b16 %v1075
  %v1960 = vunpack.c.h.b16 %v1075
  %v1961 = vunpack.c.l.b16 %v1076
  %v1962 = vunpack.c.h.b16 %v1076
  %v1963 = vunpack.c.l.b16 %v1077
  %v1964 = vunpack.c.h.b16 %v1077
  %v1965 = vunpack.c.l.b16 %v1078
  %v1966 = vunpack.c.h.b16 %v1078
  %v1967 = vunpack.c.l.b16 %v1079
  %v1968 = vunpack.c.h.b16 %v1079
  %v1969 = vunpack.c.l.b16 %v1080
  %v1970 = vunpack.c.h.b16 %v1080
  %v1971 = vunpack.c.l.b16 %v1081
  %v1972 = vunpack.c.h.b16 %v1081
  %v1973 = vunpack.c.l.b16 %v1082
  %v1974 = vunpack.c.h.b16 %v1082
  %v1975 = vunpack.c.l.b16 %v1083
  %v1976 = vunpack.c.h.b16 %v1083
  %v1977 = vunpack.c.l.b16 %v1084
  %v1978 = vunpack.c.h.b16 %v1084
  %v1979 = vunpack.c.l.b16 %v1085
  %v1980 = vunpack.c.h.b16 %v1085
  %v1981 = vunpack.c.l.b16 %v1086
  %v1982 = vunpack.c.h.b16 %v1086
  %v1983 = vunpack.c.l.b16 %v1087
  %v1984 = vunpack.c.h.b16 %v1087
  %v1985 = vunpack.c.l.b16 %v1088
  %v1986 = vunpack.c.h.b16 %v1088
  %v1987 = vunpack.c.l.b16 %v1089
  %v1988 = vunpack.c.h.b16 %v1089
  %v1989 = vunpack.c.l.b16 %v1090
  %v1990 = vunpack.c.h.b16 %v1090
  %v1991 = vunpack.c.l.b16 %v1091
  %v1992 = vunpack.c.h.b16 %v1091
  %v1993 = vunpack.c.l.b16 %v1092
  %v1994 = vunpack.c.h.b16 %v1092
  %v1995 = vunpack.c.l.b16 %v1093
  %v1996 = vunpack.c.h.b16 %v1093
  %v1997 = vunpack.c.l.b16 %v1094
  %v1998 = vunpack.c.h.b16 %v1094
  %v1999 = vunpack.c.l.b16 %v1095
  %v2000 = vunpack.c.h.b16 %v1095
  %v2001 = vunpack.c.l.b16 %v1096
  %v2002 = vunpack.c.h.b16 %v1096
  %v2003 = vunpack.c.l.b16 %v1097
  %v2004 = vunpack.c.h.b16 %v1097
  %v2005 = vunpack.c.l.b16 %v1098
  %v2006 = vunpack.c.h.b16 %v1098
  %v2007 = vunpack.c.l.b16 %v1099
  %v2008 = vunpack.c.h.b16 %v1099
  %v2009 = vunpack.c.l.b16 %v1100
  %v2010 = vunpack.c.h.b16 %v1100
  %v2011 = vunpack.c.l.b16 %v1101
  %v2012 = vunpack.c.h.b16 %v1101
  %v2013 = vunpack.c.l.b16 %v1102
  %v2014 = vunpack.c.h.b16 %v1102
  %v2015 = vunpack.c.l.b16 %v1103
  %v2016 = vunpack.c.h.b16 %v1103
  %v2017 = vunpack.c.l.b16 %v1104
  %v2018 = vunpack.c.h.b16 %v1104
  %v2019 = vunpack.c.l.b16 %v1105
  %v2020 = vunpack.c.h.b16 %v1105
  %v2021 = vunpack.c.l.b16 %v1106
  %v2022 = vunpack.c.h.b16 %v1106
  %v2023 = vunpack.c.l.b16 %v1107
  %v2024 = vunpack.c.h.b16 %v1107
  %v2025 = vunpack.c.l.b16 %v1108
  %v2026 = vunpack.c.h.b16 %v1108
  %v2027 = vunpack.c.l.b16 %v1109
  %v2028 = vunpack.c.h.b16 %v1109
  %v2029 = vunpack.c.l.b16 %v1110
  %v2030 = vunpack.c.h.b16 %v1110
  %v2031 = vunpack.c.l.b16 %v1111
  %v2032 = vunpack.c.h.b16 %v1111
  %v2033 = vunpack.c.l.b16 %v1112
  %v2034 = vunpack.c.h.b16 %v1112
  %v2035 = vunpack.c.l.b16 %v1113
  %v2036 = vunpack.c.h.b16 %v1113
  %v2037 = vunpack.c.l.b16 %v1114
  %v2038 = vunpack.c.h.b16 %v1114
  %v2039 = vunpack.c.l.b16 %v1115
  %v2040 = vunpack.c.h.b16 %v1115
  %v2041 = vunpack.c.l.b16 %v1116
  %v2042 = vunpack.c.h.b16 %v1116
  %v2043 = vunpack.c.l.b16 %v1117
  %v2044 = vunpack.c.h.b16 %v1117
  %v2045 = vunpack.c.l.b16 %v1118
  %v2046 = vunpack.c.h.b16 %v1118
  %v2047 = vunpack.c.l.b16 %v1119
  %v2048 = vunpack.c.h.b16 %v1119
  %v2049 = vunpack.c.l.b16 %v1120
  %v2050 = vunpack.c.h.b16 %v1120
  %v2051 = vunpack.c.l.b16 %v1121
  %v2052 = vunpack.c.h.b16 %v1121
  %v2053 = vunpack.c.l.b16 %v1122
  %v2054 = vunpack.c.h.b16 %v1122
  %v2055 = vunpack.c.l.b16 %v1123
  %v2056 = vunpack.c.h.b16 %v1123
  %v2057 = vunpack.c.l.b16 %v1124
  %v2058 = vunpack.c.h.b16 %v1124
  %v2059 = vunpack.c.l.b16 %v1125
  %v2060 = vunpack.c.h.b16 %v1125
  %v2061 = vunpack.c.l.b16 %v1126
  %v2062 = vunpack.c.h.b16 %v1126
  %v2063 = vunpack.c.l.b16 %v1127
  %v2064 = vunpack.c.h.b16 %v1127
  %v2065 = vunpack.c.l.b16 %v1128
  %v2066 = vunpack.c.h.b16 %v1128
  %v2067 = vunpack.c.l.b16 %v1129
  %v2068 = vunpack.c.h.b16 %v1129
  %v2069 = vunpack.c.l.b16 %v1130
  %v2070 = vunpack.c.h.b16 %v1130
  %v2071 = vunpack.c.l.b16 %v1131
  %v2072 = vunpack.c.h.b16 %v1131
  %v2073 = vunpack.c.l.b16 %v1132
  %v2074 = vunpack.c.h.b16 %v1132
  %v2075 = vunpack.c.l.b16 %v1133
  %v2076 = vunpack.c.h.b16 %v1133
  %v2077 = vunpack.c.l.b16 %v1134
  %v2078 = vunpack.c.h.b16 %v1134
  %v2079 = vunpack.c.l.b16 %v1135
  %v2080 = vunpack.c.h.b16 %v1135
  %v2081 = vunpack.c.l.b16 %v1136
  %v2082 = vunpack.c.h.b16 %v1136
  %v2083 = vunpack.c.l.b16 %v1137
  %v2084 = vunpack.c.h.b16 %v1137
  %v2085 = vunpack.c.l.b16 %v1138
  %v2086 = vunpack.c.h.b16 %v1138
  %v2087 = vunpack.c.l.b16 %v1139
  %v2088 = vunpack.c.h.b16 %v1139
  %v2089 = vunpack.c.l.b16 %v1140
  %v2090 = vunpack.c.h.b16 %v1140
  %v2091 = vunpack.c.l.b16 %v1141
  %v2092 = vunpack.c.h.b16 %v1141
  %v2093 = vunpack.c.l.b16 %v1142
  %v2094 = vunpack.c.h.b16 %v1142
  %v2095 = vunpack.c.l.b16 %v1143
  %v2096 = vunpack.c.h.b16 %v1143
  %v2097 = vunpack.c.l.b16 %v1144
  %v2098 = vunpack.c.h.b16 %v1144
  %v2099 = vunpack.c.l.b16 %v1145
  %v2100 = vunpack.c.h.b16 %v1145
  %v2101 = vunpack.c.l.b16 %v1146
  %v2102 = vunpack.c.h.b16 %v1146
  %v2103 = vunpack.c.l.b16 %v1147
  %v2104 = vunpack.c.h.b16 %v1147
  %v2105 = vunpack.c.l.b16 %v1148
  %v2106 = vunpack.c.h.b16 %v1148
  %v2107 = vunpack.c.l.b16 %v1149
  %v2108 = vunpack.c.h.b16 %v1149
  %v2109 = vunpack.c.l.b16 %v1150
  %v2110 = vunpack.c.h.b16 %v1150
  %v2111 = vunpack.c.l.b16 %v1151
  %v2112 = vunpack.c.h.b16 %v1151
  %v2113 = vunpack.c.l.b16 %v1152
  %v2114 = vunpack.c.h.b16 %v1152
  %v2115 = vunpack.c.l.b16 %v1153
  %v2116 = vunpack.c.h.b16 %v1153
  %v2117 = vunpack.c.l.b16 %v1154
  %v2118 = vunpack.c.h.b16 %v1154
  %v2119 = vunpack.c.l.b16 %v1155
  %v2120 = vunpack.c.h.b16 %v1155
  %v2121 = vunpack.c.l.b16 %v1156
  %v2122 = vunpack.c.h.b16 %v1156
  %v2123 = vunpack.c.l.b16 %v1157
  %v2124 = vunpack.c.h.b16 %v1157
  %v2125 = vunpack.c.l.b16 %v1158
  %v2126 = vunpack.c.h.b16 %v1158
  %v2127 = vunpack.c.l.b16 %v1159
  %v2128 = vunpack.c.h.b16 %v1159
  %v2129 = vunpack.c.l.b16 %v1160
  %v2130 = vunpack.c.h.b16 %v1160
  %v2131 = vunpack.c.l.b16 %v1161
  %v2132 = vunpack.c.h.b16 %v1161
  %v2133 = vunpack.c.l.b16 %v1162
  %v2134 = vunpack.c.h.b16 %v1162
  %v2135 = vunpack.c.l.b16 %v1163
  %v2136 = vunpack.c.h.b16 %v1163
  %v2137 = vunpack.c.l.b16 %v1164
  %v2138 = vunpack.c.h.b16 %v1164
  %v2139 = vunpack.c.l.b16 %v1165
  %v2140 = vunpack.c.h.b16 %v1165
  %v2141 = vunpack.c.l.b16 %v1166
  %v2142 = vunpack.c.h.b16 %v1166
  %v2143 = vunpack.c.l.b16 %v1167
  %v2144 = vunpack.c.h.b16 %v1167
  %v2145 = vunpack.c.l.b16 %v1168
  %v2146 = vunpack.c.h.b16 %v1168
  %v2147 = vunpack.c.l.b16 %v1169
  %v2148 = vunpack.c.h.b16 %v1169
  %v2149 = vunpack.c.l.b16 %v1170
  %v2150 = vunpack.c.h.b16 %v1170
  %v2151 = vunpack.c.l.b16 %v1171
  %v2152 = vunpack.c.h.b16 %v1171
  %v2153 = vunpack.c.l.b16 %v1172
  %v2154 = vunpack.c.h.b16 %v1172
  %v2155 = vunpack.c.l.b16 %v1173
  %v2156 = vunpack.c.h.b16 %v1173
  %v2157 = vunpack.c.l.b16 %v1174
  %v2158 = vunpack.c.h.b16 %v1174
  %v2159 = vunpack.c.l.b16 %v1175
  %v2160 = vunpack.c.h.b16 %v1175
  %v2161 = vunpack.c.l.b16 %v1176
  %v2162 = vunpack.c.h.b16 %v1176
  %v2163 = vunpack.c.l.b16 %v1177
  %v2164 = vunpack.c.h.b16 %v1177
  %v2165 = vunpack.c.l.b16 %v1178
  %v2166 = vunpack.c.h.b16 %v1178
  %v2167 = vunpack.c.l.b16 %v1179
  %v2168 = vunpack.c.h.b16 %v1179
  %v2169 = vunpack.c.l.b16 %v1180
  %v2170 = vunpack.c.h.b16 %v1180
  %v2171 = vunpack.c.l.b16 %v1181
  %v2172 = vunpack.c.h.b16 %v1181
  %v2173 = vunpack.c.l.b16 %v1182
  %v2174 = vunpack.c.h.b16 %v1182
  %v2175 = vunpack.c.l.b16 %v1183
  %v2176 = vunpack.c.h.b16 %v1183
  %v2177 = vunpack.c.l.b16 %v1184
  %v2178 = vunpack.c.h.b16 %v1184
  %v2179 = vunpack.c.l.b16 %v1185
  %v2180 = vunpack.c.h.b16 %v1185
  %v2181 = vunpack.c.l.b16 %v1186
  %v2182 = vunpack.c.h.b16 %v1186
  %v2183 = vunpack.c.l.b16 %v1187
  %v2184 = vunpack.c.h.b16 %v1187
  %v2185 = vunpack.c.l.b16 %v1188
  %v2186 = vunpack.c.h.b16 %v1188
  %v2187 = vunpack.c.l.b16 %v1189
  %v2188 = vunpack.c.h.b16 %v1189
  %v2189 = vunpack.c.l.b16 %v1190
  %v2190 = vunpack.c.h.b16 %v1190
  %v2191 = vunpack.c.l.b16 %v1191
  %v2192 = vunpack.c.h.b16 %v1191
  %v2193 = vunpack.c.l.b16 %v1192
  %v2194 = vunpack.c.h.b16 %v1192
  %v2195 = vunpack.c.l.b16 %v1193
  %v2196 = vunpack.c.h.b16 %v1193
  %v2197 = vunpack.c.l.b16 %v1194
  %v2198 = vunpack.c.h.b16 %v1194
  %v2199 = vunpack.c.l.b16 %v1195
  %v2200 = vunpack.c.h.b16 %v1195
  %v2201 = vunpack.c.l.b16 %v1196
  %v2202 = vunpack.c.h.b16 %v1196
  %v2203 = vunpack.c.l.b16 %v1197
  %v2204 = vunpack.c.h.b16 %v1197
  %v2205 = vunpack.c.l.b16 %v1198
  %v2206 = vunpack.c.h.b16 %v1198
  %v2207 = vunpack.c.l.b16 %v1199
  %v2208 = vunpack.c.h.b16 %v1199
  %v2209 = vunpack.c.l.b16 %v1200
  %v2210 = vunpack.c.h.b16 %v1200
  %v2211 = vunpack.c.l.b16 %v1201
  %v2212 = vunpack.c.h.b16 %v1201
  %v2213 = vunpack.c.l.b16 %v1202
  %v2214 = vunpack.c.h.b16 %v1202
  %v2215 = vunpack.c.l.b16 %v1203
  %v2216 = vunpack.c.h.b16 %v1203
  %v2217 = vunpack.c.l.b16 %v1204
  %v2218 = vunpack.c.h.b16 %v1204
  %v2219 = vunpack.c.l.b16 %v1205
  %v2220 = vunpack.c.h.b16 %v1205
  %v2221 = vunpack.c.l.b16 %v1206
  %v2222 = vunpack.c.h.b16 %v1206
  %v2223 = vunpack.c.l.b16 %v1207
  %v2224 = vunpack.c.h.b16 %v1207
  %v2225 = vunpack.c.l.b16 %v1208
  %v2226 = vunpack.c.h.b16 %v1208
  %v2227 = vunpack.c.l.b16 %v1209
  %v2228 = vunpack.c.h.b16 %v1209
  %v2229 = vunpack.c.l.b16 %v1210
  %v2230 = vunpack.c.h.b16 %v1210
  %v2231 = vunpack.c.l.b16 %v1211
  %v2232 = vunpack.c.h.b16 %v1211
  %v2233 = vunpack.c.l.b16 %v1212
  %v2234 = vunpack.c.h.b16 %v1212
  %v2235 = vunpack.c.l.b16 %v1213
  %v2236 = vunpack.c.h.b16 %v1213
  %v2237 = vunpack.c.l.b16 %v1214
  %v2238 = vunpack.c.h.b16 %v1214
  %v2239 = vunpack.c.l.b16 %v1215
  %v2240 = vunpack.c.h.b16 %v1215
  %v2241 = vunpack.c.l.b16 %v1216
  %v2242 = vunpack.c.h.b16 %v1216
  %v2243 = vunpack.c.l.b16 %v1217
  %v2244 = vunpack.c.h.b16 %v1217
  %v2245 = vunpack.c.l.b16 %v1218
  %v2246 = vunpack.c.h.b16 %v1218
  %v2247 = vunpack.c.l.b16 %v1219
  %v2248 = vunpack.c.h.b16 %v1219
  %v2249 = vunpack.c.l.b16 %v1220
  %v2250 = vunpack.c.h.b16 %v1220
  %v2251 = vunpack.c.l.b16 %v1221
  %v2252 = vunpack.c.h.b16 %v1221
  %v2253 = vunpack.c.l.b16 %v1222
  %v2254 = vunpack.c.h.b16 %v1222
  %v2255 = vunpack.c.l.b16 %v1223
  %v2256 = vunpack.c.h.b16 %v1223
  %v2257 = vunpack.c.l.b16 %v1224
  %v2258 = vunpack.c.h.b16 %v1224
  %v2259 = vunpack.c.l.b16 %v1225
  %v2260 = vunpack.c.h.b16 %v1225
  %v2261 = vunpack.c.l.b16 %v1226
  %v2262 = vunpack.c.h.b16 %v1226
  %v2263 = vunpack.c.l.b16 %v1227
  %v2264 = vunpack.c.h.b16 %v1227
  %v2265 = vunpack.c.l.b16 %v1228
  %v2266 = vunpack.c.h.b16 %v1228
  %v2267 = vunpack.c.l.b16 %v1229
  %v2268 = vunpack.c.h.b16 %v1229
  %v2269 = vunpack.c.l.b16 %v1230
  %v2270 = vunpack.c.h.b16 %v1230
  %v2271 = vunpack.c.l.b16 %v1231
  %v2272 = vunpack.c.h.b16 %v1231
  %v2273 = vunpack.c.l.b16 %v1232
  %v2274 = vunpack.c.h.b16 %v1232
  %v2275 = vunpack.c.l.b16 %v1233
  %v2276 = vunpack.c.h.b16 %v1233
  %v2277 = vunpack.c.l.b16 %v1234
  %v2278 = vunpack.c.h.b16 %v1234
  %v2279 = vunpack.c.l.b16 %v1235
  %v2280 = vunpack.c.h.b16 %v1235
  %v2281 = vunpack.c.l.b16 %v1236
  %v2282 = vunpack.c.h.b16 %v1236
  %v2283 = vunpack.c.l.b16 %v1237
  %v2284 = vunpack.c.h.b16 %v1237
  %v2285 = vunpack.c.l.b16 %v1238
  %v2286 = vunpack.c.h.b16 %v1238
  %v2287 = vunpack.c.l.b16 %v1239
  %v2288 = vunpack.c.h.b16 %v1239
  %v2289 = vunpack.c.l.b16 %v1240
  %v2290 = vunpack.c.h.b16 %v1240
  %v2291 = vunpack.c.l.b16 %v1241
  %v2292 = vunpack.c.h.b16 %v1241
  %v2293 = vunpack.c.l.b16 %v1242
  %v2294 = vunpack.c.h.b16 %v1242
  %v2295 = vunpack.c.l.b16 %v1243
  %v2296 = vunpack.c.h.b16 %v1243
  %v2297 = vunpack.c.l.b16 %v1244
  %v2298 = vunpack.c.h.b16 %v1244
  %v2299 = vunpack.c.l.b16 %v1245
  %v2300 = vunpack.c.h.b16 %v1245
  %v2301 = vunpack.c.l.b16 %v1246
  %v2302 = vunpack.c.h.b16 %v1246
  %v2303 = vunpack.c.l.b16 %v1247
  %v2304 = vunpack.c.h.b16 %v1247
  %v2305 = vunpack.c.l.b16 %v1248
  %v2306 = vunpack.c.h.b16 %v1248
  %v2307 = vunpack.c.l.b16 %v1249
  %v2308 = vunpack.c.h.b16 %v1249
  %v2309 = vunpack.c.l.b16 %v1250
  %v2310 = vunpack.c.h.b16 %v1250
  %v2311 = vunpack.c.l.b16 %v1251
  %v2312 = vunpack.c.h.b16 %v1251
  %v2313 = vunpack.c.l.b16 %v1252
  %v2314 = vunpack.c.h.b16 %v1252
  %v2315 = vunpack.c.l.b16 %v1253
  %v2316 = vunpack.c.h.b16 %v1253
  %v2317 = vunpack.c.l.b16 %v1254
  %v2318 = vunpack.c.h.b16 %v1254
  %v2319 = vunpack.c.l.b16 %v1255
  %v2320 = vunpack.c.h.b16 %v1255
  %v2321 = vunpack.c.l.b16 %v1256
  %v2322 = vunpack.c.h.b16 %v1256
  %v2323 = vunpack.c.l.b16 %v1257
  %v2324 = vunpack.c.h.b16 %v1257
  %v2325 = vunpack.c.l.b16 %v1258
  %v2326 = vunpack.c.h.b16 %v1258
  %v2327 = vunpack.c.l.b16 %v1259
  %v2328 = vunpack.c.h.b16 %v1259
  %v2329 = vunpack.c.l.b16 %v1260
  %v2330 = vunpack.c.h.b16 %v1260
  %v2331 = vunpack.c.l.b16 %v1261
  %v2332 = vunpack.c.h.b16 %v1261
  %v2333 = vunpack.c.l.b16 %v1262
  %v2334 = vunpack.c.h.b16 %v1262
  %v2335 = vunpack.c.l.b16 %v1263
  %v2336 = vunpack.c.h.b16 %v1263
  %v2337 = vunpack.c.l.b16 %v1264
  %v2338 = vunpack.c.h.b16 %v1264
  %v2339 = vunpack.c.l.b16 %v1265
  %v2340 = vunpack.c.h.b16 %v1265
  %v2341 = vunpack.c.l.b16 %v1266
  %v2342 = vunpack.c.h.b16 %v1266
  %v2343 = vunpack.c.l.b16 %v1267
  %v2344 = vunpack.c.h.b16 %v1267
  %v2345 = vunpack.c.l.b16 %v1268
  %v2346 = vunpack.c.h.b16 %v1268
  %v2347 = vunpack.c.l.b16 %v1269
  %v2348 = vunpack.c.h.b16 %v1269
  %v2349 = vunpack.c.l.b16 %v1270
  %v2350 = vunpack.c.h.b16 %v1270
  %v2351 = vunpack.c.l.b16 %v1271
  %v2352 = vunpack.c.h.b16 %v1271
  %v2353 = vunpack.c.l.b16 %v1272
  %v2354 = vunpack.c.h.b16 %v1272
  %v2355 = vunpack.c.l.b16 %v1273
  %v2356 = vunpack.c.h.b16 %v1273
  %v2357 = vunpack.c.l.b16 %v1274
  %v2358 = vunpack.c.h.b16 %v1274
  %v2359 = vunpack.c.l.b16 %v1275
  %v2360 = vunpack.c.h.b16 %v1275
  %v2361 = vunpack.c.l.b16 %v1276
  %v2362 = vunpack.c.h.b16 %v1276
  %v2363 = vunpack.c.l.b16 %v1277
  %v2364 = vunpack.c.h.b16 %v1277
  %v2365 = vunpack.c.l.b16 %v1278
  %v2366 = vunpack.c.h.b16 %v1278
  %v2367 = vunpack.c.l.b16 %v1279
  %v2368 = vunpack.c.h.b16 %v1279
  %v2369 = vunpack.c.l.b16 %v1280
  %v2370 = vunpack.c.h.b16 %v1280
  %v2371 = vunpack.c.l.b16 %v1281
  %v2372 = vunpack.c.h.b16 %v1281
  %v2373 = vunpack.c.l.b16 %v1282
  %v2374 = vunpack.c.h.b16 %v1282
  %v2375 = vunpack.c.l.b16 %v1283
  %v2376 = vunpack.c.h.b16 %v1283
  %v2377 = vunpack.c.l.b16 %v1284
  %v2378 = vunpack.c.h.b16 %v1284
  %v2379 = vunpack.c.l.b16 %v1285
  %v2380 = vunpack.c.h.b16 %v1285
  %v2381 = vunpack.c.l.b16 %v1286
  %v2382 = vunpack.c.h.b16 %v1286
  %v2383 = vunpack.c.l.b16 %v1287
  %v2384 = vunpack.c.h.b16 %v1287
  %v2385 = vunpack.c.l.b16 %v1288
  %v2386 = vunpack.c.h.b16 %v1288
  %v2387 = vunpack.c.l.b16 %v1289
  %v2388 = vunpack.c.h.b16 %v1289
  %v2389 = vunpack.c.l.b16 %v1290
  %v2390 = vunpack.c.h.b16 %v1290
  %v2391 = vunpack.c.l.b16 %v1291
  %v2392 = vunpack.c.h.b16 %v1291
  %v2393 = vunpack.c.l.b16 %v1292
  %v2394 = vunpack.c.h.b16 %v1292
  %v2395 = vunpack.c.l.b16 %v1293
  %v2396 = vunpack.c.h.b16 %v1293
  %v2397 = vunpack.c.l.b16 %v1294
  %v2398 = vunpack.c.h.b16 %v1294
  %v2399 = vunpack.c.l.b16 %v1295
  %v2400 = vunpack.c.h.b16 %v1295
  %v2401 = vunpack.c.l.b16 %v1296
  %v2402 = vunpack.c.h.b16 %v1296
  %v2403 = vunpack.c.l.b16 %v1297
  %v2404 = vunpack.c.h.b16 %v1297
  %v2405 = vunpack.c.l.b16 %v1298
  %v2406 = vunpack.c.h.b16 %v1298
  %v2407 = vunpack.c.l.b16 %v1299
  %v2408 = vunpack.c.h.b16 %v1299
  %v2409 = vunpack.c.l.b16 %v1300
  %v2410 = vunpack.c.h.b16 %v1300
  %v2411 = vunpack.c.l.b16 %v1301
  %v2412 = vunpack.c.h.b16 %v1301
  %v2413 = vunpack.c.l.b16 %v1302
  %v2414 = vunpack.c.h.b16 %v1302
  %v2415 = vunpack.c.l.b16 %v1303
  %v2416 = vunpack.c.h.b16 %v1303
  %v2417 = vunpack.c.l.b16 %v1304
  %v2418 = vunpack.c.h.b16 %v1304
  %v2419 = vunpack.c.l.b16 %v1305
  %v2420 = vunpack.c.h.b16 %v1305
  %v2421 = vunpack.c.l.b16 %v1306
  %v2422 = vunpack.c.h.b16 %v1306
  %v2423 = vunpack.c.l.b16 %v1307
  %v2424 = vunpack.c.h.b16 %v1307
  %v2425 = vunpack.c.l.b16 %v1308
  %v2426 = vunpack.c.h.b16 %v1308
  %v2427 = vunpack.c.l.b16 %v1309
  %v2428 = vunpack.c.h.b16 %v1309
  %v2429 = vunpack.c.l.b16 %v1310
  %v2430 = vunpack.c.h.b16 %v1310
  %v2431 = vunpack.c.l.b16 %v1311
  %v2432 = vunpack.c.h.b16 %v1311
  %v2433 = vunpack.c.l.b16 %v1312
  %v2434 = vunpack.c.h.b16 %v1312
  %v2435 = vunpack.c.l.b16 %v1313
  %v2436 = vunpack.c.h.b16 %v1313
  %v2437 = vunpack.c.l.b16 %v1314
  %v2438 = vunpack.c.h.b16 %v1314
  %v2439 = vunpack.c.l.b16 %v1315
  %v2440 = vunpack.c.h.b16 %v1315
  %v2441 = vunpack.c.l.b16 %v1316
  %v2442 = vunpack.c.h.b16 %v1316
  %v2443 = vunpack.c.l.b16 %v1317
  %v2444 = vunpack.c.h.b16 %v1317
  %v2445 = vunpack.c.l.b16 %v1318
  %v2446 = vunpack.c.h.b16 %v1318
  %v2447 = vunpack.c.l.b16 %v1319
  %v2448 = vunpack.c.h.b16 %v1319
  %v2449 = vunpack.c.l.b16 %v1320
  %v2450 = vunpack.c.h.b16 %v1320
  %v2451 = vunpack.c.l.b16 %v1321
  %v2452 = vunpack.c.h.b16 %v1321
  %v2453 = vunpack.c.l.b16 %v1322
  %v2454 = vunpack.c.h.b16 %v1322
  %v2455 = vunpack.c.l.b16 %v1323
  %v2456 = vunpack.c.h.b16 %v1323
  %v2457 = vunpack.c.l.b16 %v1324
  %v2458 = vunpack.c.h.b16 %v1324
  %v2459 = vunpack.c.l.b16 %v1325
  %v2460 = vunpack.c.h.b16 %v1325
  %v2461 = vunpack.c.l.b16 %v1326
  %v2462 = vunpack.c.h.b16 %v1326
  %v2463 = vunpack.c.l.b16 %v1327
  %v2464 = vunpack.c.h.b16 %v1327
  %v2465 = vunpack.c.l.b16 %v1328
  %v2466 = vunpack.c.h.b16 %v1328
  %v2467 = vunpack.c.l.b16 %v1329
  %v2468 = vunpack.c.h.b16 %v1329
  %v2469 = vunpack.c.l.b16 %v1330
  %v2470 = vunpack.c.h.b16 %v1330
  %v2471 = vunpack.c.l.b16 %v1331
  %v2472 = vunpack.c.h.b16 %v1331
  %v2473 = vunpack.c.l.b16 %v1332
  %v2474 = vunpack.c.h.b16 %v1332
  %v2475 = vunpack.c.l.b16 %v1333
  %v2476 = vunpack.c.h.b16 %v1333
  %v2477 = vunpack.c.l.b16 %v1334
  %v2478 = vunpack.c.h.b16 %v1334
  %v2479 = vunpack.c.l.b16 %v1335
  %v2480 = vunpack.c.h.b16 %v1335
  %v2481 = vunpack.c.l.b16 %v1336
  %v2482 = vunpack.c.h.b16 %v1336
  %v2483 = vunpack.c.l.b16 %v1337
  %v2484 = vunpack.c.h.b16 %v1337
  %v2485 = vunpack.c.l.b16 %v1338
  %v2486 = vunpack.c.h.b16 %v1338
  %v2487 = vunpack.c.l.b16 %v1339
  %v2488 = vunpack.c.h.b16 %v1339
  %v2489 = vunpack.c.l.b16 %v1340
  %v2490 = vunpack.c.h.b16 %v1340
  %v2491 = vunpack.c.l.b16 %v1341
  %v2492 = vunpack.c.h.b16 %v1341
  %v2493 = vunpack.c.l.b16 %v1342
  %v2494 = vunpack.c.h.b16 %v1342
  %v2495 = vunpack.c.l.b16 %v1343
  %v2496 = vunpack.c.h.b16 %v1343
  %v2497 = vunpack.c.l.b16 %v1344
  %v2498 = vunpack.c.h.b16 %v1344
  %v2499 = vunpack.c.l.b16 %v1345
  %v2500 = vunpack.c.h.b16 %v1345
  %v2501 = vunpack.c.l.b16 %v1346
  %v2502 = vunpack.c.h.b16 %v1346
  %v2503 = vunpack.c.l.b16 %v1347
  %v2504 = vunpack.c.h.b16 %v1347
  %v2505 = vunpack.c.l.b16 %v1348
  %v2506 = vunpack.c.h.b16 %v1348
  %v2507 = vunpack.c.l.b16 %v1349
  %v2508 = vunpack.c.h.b16 %v1349
  %v2509 = vunpack.c.l.b16 %v1350
  %v2510 = vunpack.c.h.b16 %v1350
  %v2511 = vunpack.c.l.b16 %v1351
  %v2512 = vunpack.c.h.b16 %v1351
  %v2513 = vunpack.c.l.b16 %v1352
  %v2514 = vunpack.c.h.b16 %v1352
  %v2515 = vunpack.c.l.b16 %v1353
  %v2516 = vunpack.c.h.b16 %v1353
  %v2517 = vunpack.c.l.b16 %v1354
  %v2518 = vunpack.c.h.b16 %v1354
  %v2519 = vunpack.c.l.b16 %v1355
  %v2520 = vunpack.c.h.b16 %v1355
  %v2521 = vunpack.c.l.b16 %v1356
  %v2522 = vunpack.c.h.b16 %v1356
  %v2523 = vunpack.c.l.b16 %v1357
  %v2524 = vunpack.c.h.b16 %v1357
  %v2525 = vunpack.c.l.b16 %v1358
  %v2526 = vunpack.c.h.b16 %v1358
  %v2527 = vunpack.c.l.b16 %v1359
  %v2528 = vunpack.c.h.b16 %v1359
  %v2529 = vunpack.c.l.b16 %v1360
  %v2530 = vunpack.c.h.b16 %v1360
  %v2531 = vunpack.c.l.b16 %v1361
  %v2532 = vunpack.c.h.b16 %v1361
  %v2533 = vunpack.c.l.b16 %v1362
  %v2534 = vunpack.c.h.b16 %v1362
  %v2535 = vunpack.c.l.b16 %v1363
  %v2536 = vunpack.c.h.b16 %v1363
  %v2537 = vunpack.c.l.b16 %v1364
  %v2538 = vunpack.c.h.b16 %v1364
  %v2539 = vunpack.c.l.b16 %v1365
  %v2540 = vunpack.c.h.b16 %v1365
  %v2541 = vunpack.c.l.b16 %v1366
  %v2542 = vunpack.c.h.b16 %v1366
  %v2543 = vunpack.c.l.b16 %v1367
  %v2544 = vunpack.c.h.b16 %v1367
  %v2545 = vunpack.c.l.b16 %v1368
  %v2546 = vunpack.c.h.b16 %v1368
  %v2547 = vunpack.c.l.b16 %v1369
  %v2548 = vunpack.c.h.b16 %v1369
  %v2549 = vunpack.c.l.b16 %v1370
  %v2550 = vunpack.c.h.b16 %v1370
  %v2551 = vunpack.c.l.b16 %v1371
  %v2552 = vunpack.c.h.b16 %v1371
  %v2553 = vunpack.c.l.b16 %v1372
  %v2554 = vunpack.c.h.b16 %v1372
  %v2555 = vunpack.c.l.b16 %v1373
  %v2556 = vunpack.c.h.b16 %v1373
  %v2557 = vunpack.c.l.b16 %v1374
  %v2558 = vunpack.c.h.b16 %v1374
  %v2559 = vpack.c.b16 %v1797, %v1791
  %v2560 = vpack.c.b16 %v1798, %v1792
  %v2561 = vpack.c.b16 %v1799, %v1793
  %v2562 = vpack.c.b16 %v1800, %v1794
  %v2563 = vpack.c.b16 %v1801, %v1795
  %v2564 = vpack.c.b16 %v1802, %v1796
  %v2565 = vpack.c.b16 %v1809, %v1803
  %v2566 = vpack.c.b16 %v1810, %v1804
  %v2567 = vpack.c.b16 %v1811, %v1805
  %v2568 = vpack.c.b16 %v1812, %v1806
  %v2569 = vpack.c.b16 %v1813, %v1807
  %v2570 = vpack.c.b16 %v1814, %v1808
  %v2571 = vpack.c.b16 %v1821, %v1815
  %v2572 = vpack.c.b16 %v1822, %v1816
  %v2573 = vpack.c.b16 %v1823, %v1817
  %v2574 = vpack.c.b16 %v1824, %v1818
  %v2575 = vpack.c.b16 %v1825, %v1819
  %v2576 = vpack.c.b16 %v1826, %v1820
  %v2577 = vpack.c.b16 %v1833, %v1827
  %v2578 = vpack.c.b16 %v1834, %v1828
  %v2579 = vpack.c.b16 %v1835, %v1829
  %v2580 = vpack.c.b16 %v1836, %v1830
  %v2581 = vpack.c.b16 %v1837, %v1831
  %v2582 = vpack.c.b16 %v1838, %v1832
  %v2583 = vpack.c.b16 %v1845, %v1839
  %v2584 = vpack.c.b16 %v1846, %v1840
  %v2585 = vpack.c.b16 %v1847, %v1841
  %v2586 = vpack.c.b16 %v1848, %v1842
  %v2587 = vpack.c.b16 %v1849, %v1843
  %v2588 = vpack.c.b16 %v1850, %v1844
  %v2589 = vpack.c.b16 %v1857, %v1851
  %v2590 = vpack.c.b16 %v1858, %v1852
  %v2591 = vpack.c.b16 %v1859, %v1853
  %v2592 = vpack.c.b16 %v1860, %v1854
  %v2593 = vpack.c.b16 %v1861, %v1855
  %v2594 = vpack.c.b16 %v1862, %v1856
  %v2595 = vpack.c.b16 %v1869, %v1863
  %v2596 = vpack.c.b16 %v1870, %v1864
  %v2597 = vpack.c.b16 %v1871, %v1865
  %v2598 = vpack.c.b16 %v1872, %v1866
  %v2599 = vpack.c.b16 %v1873, %v1867
  %v2600 = vpack.c.b16 %v1874, %v1868
  %v2601 = vpack.c.b16 %v1881, %v1875
  %v2602 = vpack.c.b16 %v1882, %v1876
  %v2603 = vpack.c.b16 %v1883, %v1877
  %v2604 = vpack.c.b16 %v1884, %v1878
  %v2605 = vpack.c.b16 %v1885, %v1879
  %v2606 = vpack.c.b16 %v1886, %v1880
  %v2607 = vpack.c.b16 %v1893, %v1887
  %v2608 = vpack.c.b16 %v1894, %v1888
  %v2609 = vpack.c.b16 %v1895, %v1889
  %v2610 = vpack.c.b16 %v1896, %v1890
  %v2611 = vpack.c.b16 %v1897, %v1891
  %v2612 = vpack.c.b16 %v1898, %v1892
  %v2613 = vpack.c.b16 %v1905, %v1899
  %v2614 = vpack.c.b16 %v1906, %v1900
  %v2615 = vpack.c.b16 %v1907, %v1901
  %v2616 = vpack.c.b16 %v1908, %v1902
  %v2617 = vpack.c.b16 %v1909, %v1903
  %v2618 = vpack.c.b16 %v1910, %v1904
  %v2619 = vpack.c.b16 %v1917, %v1911
  %v2620 = vpack.c.b16 %v1918, %v1912
  %v2621 = vpack.c.b16 %v1919, %v1913
  %v2622 = vpack.c.b16 %v1920, %v1914
  %v2623 = vpack.c.b16 %v1921, %v1915
  %v2624 = vpack.c.b16 %v1922, %v1916
  %v2625 = vpack.c.b16 %v1929, %v1923
  %v2626 = vpack.c.b16 %v1930, %v1924
  %v2627 = vpack.c.b16 %v1931, %v1925
  %v2628 = vpack.c.b16 %v1932, %v1926
  %v2629 = vpack.c.b16 %v1933, %v1927
  %v2630 = vpack.c.b16 %v1934, %v1928
  %v2631 = vpack.c.b16 %v1941, %v1935
  %v2632 = vpack.c.b16 %v1942, %v1936
  %v2633 = vpack.c.b16 %v1943, %v1937
  %v2634 = vpack.c.b16 %v1944, %v1938
  %v2635 = vpack.c.b16 %v1945, %v1939
  %v2636 = vpack.c.b16 %v1946, %v1940
  %v2637 = vpack.c.b16 %v1953, %v1947
  %v2638 = vpack.c.b16 %v1954, %v1948
  %v2639 = vpack.c.b16 %v1955, %v1949
  %v2640 = vpack.c.b16 %v1956, %v1950
  %v2641 = vpack.c.b16 %v1957, %v1951
  %v2642 = vpack.c.b16 %v1958, %v1952
  %v2643 = vpack.c.b16 %v1965, %v1959
  %v2644 = vpack.c.b16 %v1966, %v1960
  %v2645 = vpack.c.b16 %v1967, %v1961
  %v2646 = vpack.c.b16 %v1968, %v1962
  %v2647 = vpack.c.b16 %v1969, %v1963
  %v2648 = vpack.c.b16 %v1970, %v1964
  %v2649 = vpack.c.b16 %v1977, %v1971
  %v2650 = vpack.c.b16 %v1978, %v1972
  %v2651 = vpack.c.b16 %v1979, %v1973
  %v2652 = vpack.c.b16 %v1980, %v1974
  %v2653 = vpack.c.b16 %v1981, %v1975
  %v2654 = vpack.c.b16 %v1982, %v1976
  %v2655 = vpack.c.b16 %v1989, %v1983
  %v2656 = vpack.c.b16 %v1990, %v1984
  %v2657 = vpack.c.b16 %v1991, %v1985
  %v2658 = vpack.c.b16 %v1992, %v1986
  %v2659 = vpack.c.b16 %v1993, %v1987
  %v2660 = vpack.c.b16 %v1994, %v1988
  %v2661 = vpack.c.b16 %v2001, %v1995
  %v2662 = vpack.c.b16 %v2002, %v1996
  %v2663 = vpack.c.b16 %v2003, %v1997
  %v2664 = vpack.c.b16 %v2004, %v1998
  %v2665 = vpack.c.b16 %v2005, %v1999
  %v2666 = vpack.c.b16 %v2006, %v2000
  %v2667 = vpack.c.b16 %v2013, %v2007
  %v2668 = vpack.c.b16 %v2014, %v2008
  %v2669 = vpack.c.b16 %v2015, %v2009
  %v2670 = vpack.c.b16 %v2016, %v2010
  %v2671 = vpack.c.b16 %v2017, %v2011
  %v2672 = vpack.c.b16 %v2018, %v2012
  %v2673 = vpack.c.b16 %v2025, %v2019
  %v2674 = vpack.c.b16 %v2026, %v2020
  %v2675 = vpack.c.b16 %v2027, %v2021
  %v2676 = vpack.c.b16 %v2028, %v2022
  %v2677 = vpack.c.b16 %v2029, %v2023
  %v2678 = vpack.c.b16 %v2030, %v2024
  %v2679 = vpack.c.b16 %v2037, %v2031
  %v2680 = vpack.c.b16 %v2038, %v2032
  %v2681 = vpack.c.b16 %v2039, %v2033
  %v2682 = vpack.c.b16 %v2040, %v2034
  %v2683 = vpack.c.b16 %v2041, %v2035
  %v2684 = vpack.c.b16 %v2042, %v2036
  %v2685 = vpack.c.b16 %v2049, %v2043
  %v2686 = vpack.c.b16 %v2050, %v2044
  %v2687 = vpack.c.b16 %v2051, %v2045
  %v2688 = vpack.c.b16 %v2052, %v2046
  %v2689 = vpack.c.b16 %v2053, %v2047
  %v2690 = vpack.c.b16 %v2054, %v2048
  %v2691 = vpack.c.b16 %v2061, %v2055
  %v2692 = vpack.c.b16 %v2062, %v2056
  %v2693 = vpack.c.b16 %v2063, %v2057
  %v2694 = vpack.c.b16 %v2064, %v2058
  %v2695 = vpack.c.b16 %v2065, %v2059
  %v2696 = vpack.c.b16 %v2066, %v2060
  %v2697 = vpack.c.b16 %v2073, %v2067
  %v2698 = vpack.c.b16 %v2074, %v2068
  %v2699 = vpack.c.b16 %v2075, %v2069
  %v2700 = vpack.c.b16 %v2076, %v2070
  %v2701 = vpack.c.b16 %v2077, %v2071
  %v2702 = vpack.c.b16 %v2078, %v2072
  %v2703 = vpack.c.b16 %v2085, %v2079
  %v2704 = vpack.c.b16 %v2086, %v2080
  %v2705 = vpack.c.b16 %v2087, %v2081
  %v2706 = vpack.c.b16 %v2088, %v2082
  %v2707 = vpack.c.b16 %v2089, %v2083
  %v2708 = vpack.c.b16 %v2090, %v2084
  %v2709 = vpack.c.b16 %v2097, %v2091
  %v2710 = vpack.c.b16 %v2098, %v2092
  %v2711 = vpack.c.b16 %v2099, %v2093
  %v2712 = vpack.c.b16 %v2100, %v2094
  %v2713 = vpack.c.b16 %v2101, %v2095
  %v2714 = vpack.c.b16 %v2102, %v2096
  %v2715 = vpack.c.b16 %v2109, %v2103
  %v2716 = vpack.c.b16 %v2110, %v2104
  %v2717 = vpack.c.b16 %v2111, %v2105
  %v2718 = vpack.c.b16 %v2112, %v2106
  %v2719 = vpack.c.b16 %v2113, %v2107
  %v2720 = vpack.c.b16 %v2114, %v2108
  %v2721 = vpack.c.b16 %v2121, %v2115
  %v2722 = vpack.c.b16 %v2122, %v2116
  %v2723 = vpack.c.b16 %v2123, %v2117
  %v2724 = vpack.c.b16 %v2124, %v2118
  %v2725 = vpack.c.b16 %v2125, %v2119
  %v2726 = vpack.c.b16 %v2126, %v2120
  %v2727 = vpack.c.b16 %v2133, %v2127
  %v2728 = vpack.c.b16 %v2134, %v2128
  %v2729 = vpack.c.b16 %v2135, %v2129
  %v2730 = vpack.c.b16 %v2136, %v2130
  %v2731 = vpack.c.b16 %v2137, %v2131
  %v2732 = vpack.c.b16 %v2138, %v2132
  %v2733 = vpack.c.b16 %v2145, %v2139
  %v2734 = vpack.c.b16 %v2146, %v2140
  %v2735 = vpack.c.b16 %v2147, %v2141
  %v2736 = vpack.c.b16 %v2148, %v2142
  %v2737 = vpack.c.b16 %v2149, %v2143
  %v2738 = vpack.c.b16 %v2150, %v2144
  %v2739 = vpack.c.b16 %v2157, %v2151
  %v2740 = vpack.c.b16 %v2158, %v2152
  %v2741 = vpack.c.b16 %v2159, %v2153
  %v2742 = vpack.c.b16 %v2160, %v2154
  %v2743 = vpack.c.b16 %v2161, %v2155
  %v2744 = vpack.c.b16 %v2162, %v2156
  %v2745 = vpack.c.b16 %v2169, %v2163
  %v2746 = vpack.c.b16 %v2170, %v2164
  %v2747 = vpack.c.b16 %v2171, %v2165
  %v2748 = vpack.c.b16 %v2172, %v2166
  %v2749 = vpack.c.b16 %v2173, %v2167
  %v2750 = vpack.c.b16 %v2174, %v2168
  %v2751 = vpack.c.b16 %v2181, %v2175
  %v2752 = vpack.c.b16 %v2182, %v2176
  %v2753 = vpack.c.b16 %v2183, %v2177
  %v2754 = vpack.c.b16 %v2184, %v2178
  %v2755 = vpack.c.b16 %v2185, %v2179
  %v2756 = vpack.c.b16 %v2186, %v2180
  %v2757 = vpack.c.b16 %v2193, %v2187
  %v2758 = vpack.c.b16 %v2194, %v2188
  %v2759 = vpack.c.b16 %v2195, %v2189
  %v2760 = vpack.c.b16 %v2196, %v2190
  %v2761 = vpack.c.b16 %v2197, %v2191
  %v2762 = vpack.c.b16 %v2198, %v2192
  %v2763 = vpack.c.b16 %v2205, %v2199
  %v2764 = vpack.c.b16 %v2206, %v2200
  %v2765 = vpack.c.b16 %v2207, %v2201
  %v2766 = vpack.c.b16 %v2208, %v2202
  %v2767 = vpack.c.b16 %v2209, %v2203
  %v2768 = vpack.c.b16 %v2210, %v2204
  %v2769 = vpack.c.b16 %v2217, %v2211
  %v2770 = vpack.c.b16 %v2218, %v2212
  %v2771 = vpack.c.b16 %v2219, %v2213
  %v2772 = vpack.c.b16 %v2220, %v2214
  %v2773 = vpack.c.b16 %v2221, %v2215
  %v2774 = vpack.c.b16 %v2222, %v2216
  %v2775 = vpack.c.b16 %v2229, %v2223
  %v2776 = vpack.c.b16 %v2230, %v2224
  %v2777 = vpack.c.b16 %v2231, %v2225
  %v2778 = vpack.c.b16 %v2232, %v2226
  %v2779 = vpack.c.b16 %v2233, %v2227
  %v2780 = vpack.c.b16 %v2234, %v2228
  %v2781 = vpack.c.b16 %v2241, %v2235
  %v2782 = vpack.c.b16 %v2242, %v2236
  %v2783 = vpack.c.b16 %v2243, %v2237
  %v2784 = vpack.c.b16 %v2244, %v2238
  %v2785 = vpack.c.b16 %v2245, %v2239
  %v2786 = vpack.c.b16 %v2246, %v2240
  %v2787 = vpack.c.b16 %v2253, %v2247
  %v2788 = vpack.c.b16 %v2254, %v2248
  %v2789 = vpack.c.b16 %v2255, %v2249
  %v2790 = vpack.c.b16 %v2256, %v2250
  %v2791 = vpack.c.b16 %v2257, %v2251
  %v2792 = vpack.c.b16 %v2258, %v2252
  %v2793 = vpack.c.b16 %v2265, %v2259
  %v2794 = vpack.c.b16 %v2266, %v2260
  %v2795 = vpack.c.b16 %v2267, %v2261
  %v2796 = vpack.c.b16 %v2268, %v2262
  %v2797 = vpack.c.b16 %v2269, %v2263
  %v2798 = vpack.c.b16 %v2270, %v2264
  %v2799 = vpack.c.b16 %v2277, %v2271
  %v2800 = vpack.c.b16 %v2278, %v2272
  %v2801 = vpack.c.b16 %v2279, %v2273
  %v2802 = vpack.c.b16 %v2280, %v2274
  %v2803 = vpack.c.b16 %v2281, %v2275
  %v2804 = vpack.c.b16 %v2282, %v2276
  %v2805 = vpack.c.b16 %v2289, %v2283
  %v2806 = vpack.c.b16 %v2290, %v2284
  %v2807 = vpack.c.b16 %v2291, %v2285
  %v2808 = vpack.c.b16 %v2292, %v2286
  %v2809 = vpack.c.b16 %v2293, %v2287
  %v2810 = vpack.c.b16 %v2294, %v2288
  %v2811 = vpack.c.b16 %v2301, %v2295
  %v2812 = vpack.c.b16 %v2302, %v2296
  %v2813 = vpack.c.b16 %v2303, %v2297
  %v2814 = vpack.c.b16 %v2304, %v2298
  %v2815 = vpack.c.b16 %v2305, %v2299
  %v2816 = vpack.c.b16 %v2306, %v2300
  %v2817 = vpack.c.b16 %v2313, %v2307
  %v2818 = vpack.c.b16 %v2314, %v2308
  %v2819 = vpack.c.b16 %v2315, %v2309
  %v2820 = vpack.c.b16 %v2316, %v2310
  %v2821 = vpack.c.b16 %v2317, %v2311
  %v2822 = vpack.c.b16 %v2318, %v2312
  %v2823 = vpack.c.b16 %v2325, %v2319
  %v2824 = vpack.c.b16 %v2326, %v2320
  %v2825 = vpack.c.b16 %v2327, %v2321
  %v2826 = vpack.c.b16 %v2328, %v2322
  %v2827 = vpack.c.b16 %v2329, %v2323
  %v2828 = vpack.c.b16 %v2330, %v2324
  %v2829 = vpack.c.b16 %v2337, %v2331
  %v2830 = vpack.c.b16 %v2338, %v2332
  %v2831 = vpack.c.b16 %v2339, %v2333
  %v2832 = vpack.c.b16 %v2340, %v2334
  %v2833 = vpack.c.b16 %v2341, %v2335
  %v2834 = vpack.c.b16 %v2342, %v2336
  %v2835 = vpack.c.b16 %v2349, %v2343
  %v2836 = vpack.c.b16 %v2350, %v2344
  %v2837 = vpack.c.b16 %v2351, %v2345
  %v2838 = vpack.c.b16 %v2352, %v2346
  %v2839 = vpack.c.b16 %v2353, %v2347
  %v2840 = vpack.c.b16 %v2354, %v2348
  %v2841 = vpack.c.b16 %v2361, %v2355
  %v2842 = vpack.c.b16 %v2362, %v2356
  %v2843 = vpack.c.b16 %v2363, %v2357
  %v2844 = vpack.c.b16 %v2364, %v2358
  %v2845 = vpack.c.b16 %v2365, %v2359
  %v2846 = vpack.c.b16 %v2366, %v2360
  %v2847 = vpack.c.b16 %v2373, %v2367
  %v2848 = vpack.c.b16 %v2374, %v2368
  %v2849 = vpack.c.b16 %v2375, %v2369
  %v2850 = vpack.c.b16 %v2376, %v2370
  %v2851 = vpack.c.b16 %v2377, %v2371
  %v2852 = vpack.c.b16 %v2378, %v2372
  %v2853 = vpack.c.b16 %v2385, %v2379
  %v2854 = vpack.c.b16 %v2386, %v2380
  %v2855 = vpack.c.b16 %v2387, %v2381
  %v2856 = vpack.c.b16 %v2388, %v2382
  %v2857 = vpack.c.b16 %v2389, %v2383
  %v2858 = vpack.c.b16 %v2390, %v2384
  %v2859 = vpack.c.b16 %v2397, %v2391
  %v2860 = vpack.c.b16 %v2398, %v2392
  %v2861 = vpack.c.b16 %v2399, %v2393
  %v2862 = vpack.c.b16 %v2400, %v2394
  %v2863 = vpack.c.b16 %v2401, %v2395
  %v2864 = vpack.c.b16 %v2402, %v2396
  %v2865 = vpack.c.b16 %v2409, %v2403
  %v2866 = vpack.c.b16 %v2410, %v2404
  %v2867 = vpack.c.b16 %v2411, %v2405
  %v2868 = vpack.c.b16 %v2412, %v2406
  %v2869 = vpack.c.b16 %v2413, %v2407
  %v2870 = vpack.c.b16 %v2414, %v2408
  %v2871 = vpack.c.b16 %v2421, %v2415
  %v2872 = vpack.c.b16 %v2422, %v2416
  %v2873 = vpack.c.b16 %v2423, %v2417
  %v2874 = vpack.c.b16 %v2424, %v2418
  %v2875 = vpack.c.b16 %v2425, %v2419
  %v2876 = vpack.c.b16 %v2426, %v2420
  %v2877 = vpack.c.b16 %v2433, %v2427
  %v2878 = vpack.c.b16 %v2434, %v2428
  %v2879 = vpack.c.b16 %v2435, %v2429
  %v2880 = vpack.c.b16 %v2436, %v2430
  %v2881 = vpack.c.b16 %v2437, %v2431
  %v2882 = vpack.c.b16 %v2438, %v2432
  %v2883 = vpack.c.b16 %v2445, %v2439
  %v2884 = vpack.c.b16 %v2446, %v2440
  %v2885 = vpack.c.b16 %v2447, %v2441
  %v2886 = vpack.c.b16 %v2448, %v2442
  %v2887 = vpack.c.b16 %v2449, %v2443
  %v2888 = vpack.c.b16 %v2450, %v2444
  %v2889 = vpack.c.b16 %v2457, %v2451
  %v2890 = vpack.c.b16 %v2458, %v2452
  %v2891 = vpack.c.b16 %v2459, %v2453
  %v2892 = vpack.c.b16 %v2460, %v2454
  %v2893 = vpack.c.b16 %v2461, %v2455
  %v2894 = vpack.c.b16 %v2462, %v2456
  %v2895 = vpack.c.b16 %v2469, %v2463
  %v2896 = vpack.c.b16 %v2470, %v2464
  %v2897 = vpack.c.b16 %v2471, %v2465
  %v2898 = vpack.c.b16 %v2472, %v2466
  %v2899 = vpack.c.b16 %v2473, %v2467
  %v2900 = vpack.c.b16 %v2474, %v2468
  %v2901 = vpack.c.b16 %v2481, %v2475
  %v2902 = vpack.c.b16 %v2482, %v2476
  %v2903 = vpack.c.b16 %v2483, %v2477
  %v2904 = vpack.c.b16 %v2484, %v2478
  %v2905 = vpack.c.b16 %v2485, %v2479
  %v2906 = vpack.c.b16 %v2486, %v2480
  %v2907 = vpack.c.b16 %v2493, %v2487
  %v2908 = vpack.c.b16 %v2494, %v2488
  %v2909 = vpack.c.b16 %v2495, %v2489
  %v2910 = vpack.c.b16 %v2496, %v2490
  %v2911 = vpack.c.b16 %v2497, %v2491
  %v2912 = vpack.c.b16 %v2498, %v2492
  %v2913 = vpack.c.b16 %v2505, %v2499
  %v2914 = vpack.c.b16 %v2506, %v2500
  %v2915 = vpack.c.b16 %v2507, %v2501
  %v2916 = vpack.c.b16 %v2508, %v2502
  %v2917 = vpack.c.b16 %v2509, %v2503
  %v2918 = vpack.c.b16 %v2510, %v2504
  %v2919 = vpack.c.b16 %v2517, %v2511
  %v2920 = vpack.c.b16 %v2518, %v2512
  %v2921 = vpack.c.b16 %v2519, %v2513
  %v2922 = vpack.c.b16 %v2520, %v2514
  %v2923 = vpack.c.b16 %v2521, %v2515
  %v2924 = vpack.c.b16 %v2522, %v2516
  %v2925 = vpack.c.b16 %v2529, %v2523
  %v2926 = vpack.c.b16 %v2530, %v2524
  %v2927 = vpack.c.b16 %v2531, %v2525
  %v2928 = vpack.c.b16 %v2532, %v2526
  %v2929 = vpack.c.b16 %v2533, %v2527
  %v2930 = vpack.c.b16 %v2534, %v2528
  %v2931 = vpack.c.b16 %v2541, %v2535
  %v2932 = vpack.c.b16 %v2542, %v2536
  %v2933 = vpack.c.b16 %v2543, %v2537
  %v2934 = vpack.c.b16 %v2544, %v2538
  %v2935 = vpack.c.b16 %v2545, %v2539
  %v2936 = vpack.c.b16 %v2546, %v2540
  %v2937 = vpack.c.b16 %v2553, %v2547
  %v2938 = vpack.c.b16 %v2554, %v2548
  %v2939 = vpack.c.b16 %v2555, %v2549
  %v2940 = vpack.c.b16 %v2556, %v2550
  %v2941 = vpack.c.b16 %v2557, %v2551
  %v2942 = vpack.c.b16 %v2558, %v2552
  %3327 = vmatprep.subr.bf16.mxu0 %v2560
  %3328 = vmatpush1.bf16.msra.mxu0 %v2559
  %3329 = vmatprep.subr.bf16.mxu0 %v2566
  %3330 = vmatpush1.bf16.msra.mxu0 %v2565
  %3331 = vmatprep.subr.bf16.mxu0 %v2572
  %3332 = vmatpush1.bf16.msra.mxu0 %v2571
  %3333 = vmatprep.subr.bf16.mxu0 %v2578
  %3334 = vmatpush1.bf16.msra.mxu0 %v2577
  %3335 = vmatprep.subr.bf16.mxu0 %v2584
  %3336 = vmatpush1.bf16.msra.mxu0 %v2583
  %3337 = vmatprep.subr.bf16.mxu0 %v2590
  %3338 = vmatpush1.bf16.msra.mxu0 %v2589
  %3339 = vmatprep.subr.bf16.mxu0 %v2596
  %3340 = vmatpush1.bf16.msra.mxu0 %v2595
  %3341 = vmatprep.subr.bf16.mxu0 %v2602
  %3342 = vmatpush1.bf16.msra.mxu0 %v2601
  %3343 = vmatprep.subr.bf16.mxu0 %v2608
  %3344 = vmatpush1.bf16.msra.mxu0 %v2607
  %3345 = vmatprep.subr.bf16.mxu0 %v2614
  %3346 = vmatpush1.bf16.msra.mxu0 %v2613
  %3347 = vmatprep.subr.bf16.mxu0 %v2620
  %3348 = vmatpush1.bf16.msra.mxu0 %v2619
  %3349 = vmatprep.subr.bf16.mxu0 %v2626
  %3350 = vmatpush1.bf16.msra.mxu0 %v2625
  %3351 = vmatprep.subr.bf16.mxu0 %v2632
  %3352 = vmatpush1.bf16.msra.mxu0 %v2631
  %3353 = vmatprep.subr.bf16.mxu0 %v2638
  %3354 = vmatpush1.bf16.msra.mxu0 %v2637
  %3355 = vmatprep.subr.bf16.mxu0 %v2644
  %3356 = vmatpush1.bf16.msra.mxu0 %v2643
  %3357 = vmatprep.subr.bf16.mxu0 %v2650
  %3358 = vmatpush1.bf16.msra.mxu0 %v2649
  %3359 = vmatprep.mubr.bf16.mxu0 %v984
  %3360 = vmatmul.mubr.bf16.gmra.mrb[0].mxu0 %v983
  %v3361 = vpop.f32.mrb[0].mxu0
  %v3362 = vadd.f32 %v1380, %v3361
  %v3363 = vpop.f32.mrb[0].mxu0
  %v3364 = vadd.f32 %v1384, %v3363
  %v3365 = vpop.f32.mrb[0].mxu0
  %v3366 = vpop.f32.mrb[0].mxu0
  %3367 = vdwg.mxu0
  %3368 = vmatprep.subr.bf16.mxu0 %v2656
  %3369 = vmatpush1.bf16.msra.mxu0 %v2655
  %3370 = vmatprep.subr.bf16.mxu0 %v2662
  %3371 = vmatpush1.bf16.msra.mxu0 %v2661
  %3372 = vmatprep.subr.bf16.mxu0 %v2668
  %3373 = vmatpush1.bf16.msra.mxu0 %v2667
  %3374 = vmatprep.subr.bf16.mxu0 %v2674
  %3375 = vmatpush1.bf16.msra.mxu0 %v2673
  %3376 = vmatprep.subr.bf16.mxu0 %v2680
  %3377 = vmatpush1.bf16.msra.mxu0 %v2679
  %3378 = vmatprep.subr.bf16.mxu0 %v2686
  %3379 = vmatpush1.bf16.msra.mxu0 %v2685
  %3380 = vmatprep.subr.bf16.mxu0 %v2692
  %3381 = vmatpush1.bf16.msra.mxu0 %v2691
  %3382 = vmatprep.subr.bf16.mxu0 %v2698
  %3383 = vmatpush1.bf16.msra.mxu0 %v2697
  %3384 = vmatprep.subr.bf16.mxu0 %v2704
  %3385 = vmatpush1.bf16.msra.mxu0 %v2703
  %3386 = vmatprep.subr.bf16.mxu0 %v2710
  %3387 = vmatpush1.bf16.msra.mxu0 %v2709
  %3388 = vmatprep.subr.bf16.mxu0 %v2716
  %3389 = vmatpush1.bf16.msra.mxu0 %v2715
  %3390 = vmatprep.subr.bf16.mxu0 %v2722
  %3391 = vmatpush1.bf16.msra.mxu0 %v2721
  %3392 = vmatprep.subr.bf16.mxu0 %v2728
  %3393 = vmatpush1.bf16.msra.mxu0 %v2727
  %3394 = vmatprep.subr.bf16.mxu0 %v2734
  %3395 = vmatpush1.bf16.msra.mxu0 %v2733
  %3396 = vmatprep.subr.bf16.mxu0 %v2740
  %3397 = vmatpush1.bf16.msra.mxu0 %v2739
  %3398 = vmatprep.subr.bf16.mxu0 %v2746
  %3399 = vmatpush1.bf16.msra.mxu0 %v2745
  %3400 = vmatprep.mubr.bf16.mxu0 %v986
  %3401 = vmatmul.mubr.bf16.gmra.mrb[0].mxu0 %v985
  %v3402 = vpop.f32.mrb[0].mxu0
  %v3403 = vadd.f32 %v3362, %v3402
  %v3404 = vpop.f32.mrb[0].mxu0
  %v3405 = vadd.f32 %v3364, %v3404
  %v3406 = vpop.f32.mrb[0].mxu0
  %v3407 = vpop.f32.mrb[0].mxu0
  %3408 = vdwg.mxu0
  %3409 = vmatprep.subr.bf16.mxu0 %v2752
  %3410 = vmatpush1.bf16.msra.mxu0 %v2751
  %3411 = vmatprep.subr.bf16.mxu0 %v2758
  %3412 = vmatpush1.bf16.msra.mxu0 %v2757
  %3413 = vmatprep.subr.bf16.mxu0 %v2764
  %3414 = vmatpush1.bf16.msra.mxu0 %v2763
  %3415 = vmatprep.subr.bf16.mxu0 %v2770
  %3416 = vmatpush1.bf16.msra.mxu0 %v2769
  %3417 = vmatprep.subr.bf16.mxu0 %v2776
  %3418 = vmatpush1.bf16.msra.mxu0 %v2775
  %3419 = vmatprep.subr.bf16.mxu0 %v2782
  %3420 = vmatpush1.bf16.msra.mxu0 %v2781
  %3421 = vmatprep.subr.bf16.mxu0 %v2788
  %3422 = vmatpush1.bf16.msra.mxu0 %v2787
  %3423 = vmatprep.subr.bf16.mxu0 %v2794
  %3424 = vmatpush1.bf16.msra.mxu0 %v2793
  %3425 = vmatprep.subr.bf16.mxu0 %v2800
  %3426 = vmatpush1.bf16.msra.mxu0 %v2799
  %3427 = vmatprep.subr.bf16.mxu0 %v2806
  %3428 = vmatpush1.bf16.msra.mxu0 %v2805
  %3429 = vmatprep.subr.bf16.mxu0 %v2812
  %3430 = vmatpush1.bf16.msra.mxu0 %v2811
  %3431 = vmatprep.subr.bf16.mxu0 %v2818
  %3432 = vmatpush1.bf16.msra.mxu0 %v2817
  %3433 = vmatprep.subr.bf16.mxu0 %v2824
  %3434 = vmatpush1.bf16.msra.mxu0 %v2823
  %3435 = vmatprep.subr.bf16.mxu0 %v2830
  %3436 = vmatpush1.bf16.msra.mxu0 %v2829
  %3437 = vmatprep.subr.bf16.mxu0 %v2836
  %3438 = vmatpush1.bf16.msra.mxu0 %v2835
  %3439 = vmatprep.subr.bf16.mxu0 %v2842
  %3440 = vmatpush1.bf16.msra.mxu0 %v2841
  %3441 = vmatprep.mubr.bf16.mxu0 %v988
  %3442 = vmatmul.mubr.bf16.gmra.mrb[0].mxu0 %v987
  %v3443 = vpop.f32.mrb[0].mxu0
  %v3444 = vadd.f32 %v3403, %v3443
  %v3445 = vpop.f32.mrb[0].mxu0
  %v3446 = vadd.f32 %v3405, %v3445
  %v3447 = vpop.f32.mrb[0].mxu0
  %v3448 = vpop.f32.mrb[0].mxu0
  %3449 = vdwg.mxu0
  %3450 = vmatprep.subr.bf16.mxu0 %v2848
  %3451 = vmatpush1.bf16.msra.mxu0 %v2847
  %3452 = vmatprep.subr.bf16.mxu0 %v2854
  %3453 = vmatpush1.bf16.msra.mxu0 %v2853
  %3454 = vmatprep.subr.bf16.mxu0 %v2860
  %3455 = vmatpush1.bf16.msra.mxu0 %v2859
  %3456 = vmatprep.subr.bf16.mxu0 %v2866
  %3457 = vmatpush1.bf16.msra.mxu0 %v2865
  %3458 = vmatprep.subr.bf16.mxu0 %v2872
  %3459 = vmatpush1.bf16.msra.mxu0 %v2871
  %3460 = vmatprep.subr.bf16.mxu0 %v2878
  %3461 = vmatpush1.bf16.msra.mxu0 %v2877
  %3462 = vmatprep.subr.bf16.mxu0 %v2884
  %3463 = vmatpush1.bf16.msra.mxu0 %v2883
  %3464 = vmatprep.subr.bf16.mxu0 %v2890
  %3465 = vmatpush1.bf16.msra.mxu0 %v2889
  %3466 = vmatprep.subr.bf16.mxu0 %v2896
  %3467 = vmatpush1.bf16.msra.mxu0 %v2895
  %3468 = vmatprep.subr.bf16.mxu0 %v2902
  %3469 = vmatpush1.bf16.msra.mxu0 %v2901
  %3470 = vmatprep.subr.bf16.mxu0 %v2908
  %3471 = vmatpush1.bf16.msra.mxu0 %v2907
  %3472 = vmatprep.subr.bf16.mxu0 %v2914
  %3473 = vmatpush1.bf16.msra.mxu0 %v2913
  %3474 = vmatprep.subr.bf16.mxu0 %v2920
  %3475 = vmatpush1.bf16.msra.mxu0 %v2919
  %3476 = vmatprep.subr.bf16.mxu0 %v2926
  %3477 = vmatpush1.bf16.msra.mxu0 %v2925
  %3478 = vmatprep.subr.bf16.mxu0 %v2932
  %3479 = vmatpush1.bf16.msra.mxu0 %v2931
  %3480 = vmatprep.subr.bf16.mxu0 %v2938
  %3481 = vmatpush1.bf16.msra.mxu0 %v2937
  %3482 = vmatprep.mubr.bf16.mxu0 %v990
  %3483 = vmatmul.mubr.bf16.gmra.mrb[0].mxu0 %v989
  %v3484 = vpop.f32.mrb[0].mxu0
  %v3485 = vadd.f32 %v3444, %v3484
  %v3486 = vpop.f32.mrb[0].mxu0
  %v3487 = vadd.f32 %v3446, %v3486
  %v3488 = vpop.f32.mrb[0].mxu0
  %v3489 = vpop.f32.mrb[0].mxu0
  %3490 = vdwg.mxu0
  %3491 = vmatprep.subr.bf16.mxu0 %v2562
  %3492 = vmatpush1.bf16.msra.mxu0 %v2561
  %3493 = vmatprep.subr.bf16.mxu0 %v2568
  %3494 = vmatpush1.bf16.msra.mxu0 %v2567
  %3495 = vmatprep.subr.bf16.mxu0 %v2574
  %3496 = vmatpush1.bf16.msra.mxu0 %v2573
  %3497 = vmatprep.subr.bf16.mxu0 %v2580
  %3498 = vmatpush1.bf16.msra.mxu0 %v2579
  %3499 = vmatprep.subr.bf16.mxu0 %v2586
  %3500 = vmatpush1.bf16.msra.mxu0 %v2585
  %3501 = vmatprep.subr.bf16.mxu0 %v2592
  %3502 = vmatpush1.bf16.msra.mxu0 %v2591
  %3503 = vmatprep.subr.bf16.mxu0 %v2598
  %3504 = vmatpush1.bf16.msra.mxu0 %v2597
  %3505 = vmatprep.subr.bf16.mxu0 %v2604
  %3506 = vmatpush1.bf16.msra.mxu0 %v2603
  %3507 = vmatprep.subr.bf16.mxu0 %v2610
  %3508 = vmatpush1.bf16.msra.mxu0 %v2609
  %3509 = vmatprep.subr.bf16.mxu0 %v2616
  %3510 = vmatpush1.bf16.msra.mxu0 %v2615
  %3511 = vmatprep.subr.bf16.mxu0 %v2622
  %3512 = vmatpush1.bf16.msra.mxu0 %v2621
  %3513 = vmatprep.subr.bf16.mxu0 %v2628
  %3514 = vmatpush1.bf16.msra.mxu0 %v2627
  %3515 = vmatprep.subr.bf16.mxu0 %v2634
  %3516 = vmatpush1.bf16.msra.mxu0 %v2633
  %3517 = vmatprep.subr.bf16.mxu0 %v2640
  %3518 = vmatpush1.bf16.msra.mxu0 %v2639
  %3519 = vmatprep.subr.bf16.mxu0 %v2646
  %3520 = vmatpush1.bf16.msra.mxu0 %v2645
  %3521 = vmatprep.subr.bf16.mxu0 %v2652
  %3522 = vmatpush1.bf16.msra.mxu0 %v2651
  %3523 = vmatprep.mubr.bf16.mxu0 %v984
  %3524 = vmatmul.mubr.bf16.gmra.mrb[0].mxu0 %v983
  %v3525 = vpop.f32.mrb[0].mxu0
  %v3526 = vadd.f32 %v1388, %v3525
  %v3527 = vpop.f32.mrb[0].mxu0
  %v3528 = vadd.f32 %v1392, %v3527
  %v3529 = vpop.f32.mrb[0].mxu0
  %v3530 = vpop.f32.mrb[0].mxu0
  %3531 = vdwg.mxu0
  %3532 = vmatprep.subr.bf16.mxu0 %v2658
  %3533 = vmatpush1.bf16.msra.mxu0 %v2657
  %3534 = vmatprep.subr.bf16.mxu0 %v2664
  %3535 = vmatpush1.bf16.msra.mxu0 %v2663
  %3536 = vmatprep.subr.bf16.mxu0 %v2670
  %3537 = vmatpush1.bf16.msra.mxu0 %v2669
  %3538 = vmatprep.subr.bf16.mxu0 %v2676
  %3539 = vmatpush1.bf16.msra.mxu0 %v2675
  %3540 = vmatprep.subr.bf16.mxu0 %v2682
  %3541 = vmatpush1.bf16.msra.mxu0 %v2681
  %3542 = vmatprep.subr.bf16.mxu0 %v2688
  %3543 = vmatpush1.bf16.msra.mxu0 %v2687
  %3544 = vmatprep.subr.bf16.mxu0 %v2694
  %3545 = vmatpush1.bf16.msra.mxu0 %v2693
  %3546 = vmatprep.subr.bf16.mxu0 %v2700
  %3547 = vmatpush1.bf16.msra.mxu0 %v2699
  %3548 = vmatprep.subr.bf16.mxu0 %v2706
  %3549 = vmatpush1.bf16.msra.mxu0 %v2705
  %3550 = vmatprep.subr.bf16.mxu0 %v2712
  %3551 = vmatpush1.bf16.msra.mxu0 %v2711
  %3552 = vmatprep.subr.bf16.mxu0 %v2718
  %3553 = vmatpush1.bf16.msra.mxu0 %v2717
  %3554 = vmatprep.subr.bf16.mxu0 %v2724
  %3555 = vmatpush1.bf16.msra.mxu0 %v2723
  %3556 = vmatprep.subr.bf16.mxu0 %v2730
  %3557 = vmatpush1.bf16.msra.mxu0 %v2729
  %3558 = vmatprep.subr.bf16.mxu0 %v2736
  %3559 = vmatpush1.bf16.msra.mxu0 %v2735
  %3560 = vmatprep.subr.bf16.mxu0 %v2742
  %3561 = vmatpush1.bf16.msra.mxu0 %v2741
  %3562 = vmatprep.subr.bf16.mxu0 %v2748
  %3563 = vmatpush1.bf16.msra.mxu0 %v2747
  %3564 = vmatprep.mubr.bf16.mxu0 %v986
  %3565 = vmatmul.mubr.bf16.gmra.mrb[0].mxu0 %v985
  %v3566 = vpop.f32.mrb[0].mxu0
  %v3567 = vadd.f32 %v3526, %v3566
  %v3568 = vpop.f32.mrb[0].mxu0
  %v3569 = vadd.f32 %v3528, %v3568
  %v3570 = vpop.f32.mrb[0].mxu0
  %v3571 = vpop.f32.mrb[0].mxu0
  %3572 = vdwg.mxu0
  %3573 = vmatprep.subr.bf16.mxu0 %v2754
  %3574 = vmatpush1.bf16.msra.mxu0 %v2753
  %3575 = vmatprep.subr.bf16.mxu0 %v2760
  %3576 = vmatpush1.bf16.msra.mxu0 %v2759
  %3577 = vmatprep.subr.bf16.mxu0 %v2766
  %3578 = vmatpush1.bf16.msra.mxu0 %v2765
  %3579 = vmatprep.subr.bf16.mxu0 %v2772
  %3580 = vmatpush1.bf16.msra.mxu0 %v2771
  %3581 = vmatprep.subr.bf16.mxu0 %v2778
  %3582 = vmatpush1.bf16.msra.mxu0 %v2777
  %3583 = vmatprep.subr.bf16.mxu0 %v2784
  %3584 = vmatpush1.bf16.msra.mxu0 %v2783
  %3585 = vmatprep.subr.bf16.mxu0 %v2790
  %3586 = vmatpush1.bf16.msra.mxu0 %v2789
  %3587 = vmatprep.subr.bf16.mxu0 %v2796
  %3588 = vmatpush1.bf16.msra.mxu0 %v2795
  %3589 = vmatprep.subr.bf16.mxu0 %v2802
  %3590 = vmatpush1.bf16.msra.mxu0 %v2801
  %3591 = vmatprep.subr.bf16.mxu0 %v2808
  %3592 = vmatpush1.bf16.msra.mxu0 %v2807
  %3593 = vmatprep.subr.bf16.mxu0 %v2814
  %3594 = vmatpush1.bf16.msra.mxu0 %v2813
  %3595 = vmatprep.subr.bf16.mxu0 %v2820
  %3596 = vmatpush1.bf16.msra.mxu0 %v2819
  %3597 = vmatprep.subr.bf16.mxu0 %v2826
  %3598 = vmatpush1.bf16.msra.mxu0 %v2825
  %3599 = vmatprep.subr.bf16.mxu0 %v2832
  %3600 = vmatpush1.bf16.msra.mxu0 %v2831
  %3601 = vmatprep.subr.bf16.mxu0 %v2838
  %3602 = vmatpush1.bf16.msra.mxu0 %v2837
  %3603 = vmatprep.subr.bf16.mxu0 %v2844
  %3604 = vmatpush1.bf16.msra.mxu0 %v2843
  %3605 = vmatprep.mubr.bf16.mxu0 %v988
  %3606 = vmatmul.mubr.bf16.gmra.mrb[0].mxu0 %v987
  %v3607 = vpop.f32.mrb[0].mxu0
  %v3608 = vadd.f32 %v3567, %v3607
  %v3609 = vpop.f32.mrb[0].mxu0
  %v3610 = vadd.f32 %v3569, %v3609
  %v3611 = vpop.f32.mrb[0].mxu0
  %v3612 = vpop.f32.mrb[0].mxu0
  %3613 = vdwg.mxu0
  %3614 = vmatprep.subr.bf16.mxu0 %v2850
  %3615 = vmatpush1.bf16.msra.mxu0 %v2849
  %3616 = vmatprep.subr.bf16.mxu0 %v2856
  %3617 = vmatpush1.bf16.msra.mxu0 %v2855
  %3618 = vmatprep.subr.bf16.mxu0 %v2862
  %3619 = vmatpush1.bf16.msra.mxu0 %v2861
  %3620 = vmatprep.subr.bf16.mxu0 %v2868
  %3621 = vmatpush1.bf16.msra.mxu0 %v2867
  %3622 = vmatprep.subr.bf16.mxu0 %v2874
  %3623 = vmatpush1.bf16.msra.mxu0 %v2873
  %3624 = vmatprep.subr.bf16.mxu0 %v2880
  %3625 = vmatpush1.bf16.msra.mxu0 %v2879
  %3626 = vmatprep.subr.bf16.mxu0 %v2886
  %3627 = vmatpush1.bf16.msra.mxu0 %v2885
  %3628 = vmatprep.subr.bf16.mxu0 %v2892
  %3629 = vmatpush1.bf16.msra.mxu0 %v2891
  %3630 = vmatprep.subr.bf16.mxu0 %v2898
  %3631 = vmatpush1.bf16.msra.mxu0 %v2897
  %3632 = vmatprep.subr.bf16.mxu0 %v2904
  %3633 = vmatpush1.bf16.msra.mxu0 %v2903
  %3634 = vmatprep.subr.bf16.mxu0 %v2910
  %3635 = vmatpush1.bf16.msra.mxu0 %v2909
  %3636 = vmatprep.subr.bf16.mxu0 %v2916
  %3637 = vmatpush1.bf16.msra.mxu0 %v2915
  %3638 = vmatprep.subr.bf16.mxu0 %v2922
  %3639 = vmatpush1.bf16.msra.mxu0 %v2921
  %3640 = vmatprep.subr.bf16.mxu0 %v2928
  %3641 = vmatpush1.bf16.msra.mxu0 %v2927
  %3642 = vmatprep.subr.bf16.mxu0 %v2934
  %3643 = vmatpush1.bf16.msra.mxu0 %v2933
  %3644 = vmatprep.subr.bf16.mxu0 %v2940
  %3645 = vmatpush1.bf16.msra.mxu0 %v2939
  %3646 = vmatprep.mubr.bf16.mxu0 %v990
  %3647 = vmatmul.mubr.bf16.gmra.mrb[0].mxu0 %v989
  %v3648 = vpop.f32.mrb[0].mxu0
  %v3649 = vadd.f32 %v3608, %v3648
  %v3650 = vpop.f32.mrb[0].mxu0
  %v3651 = vadd.f32 %v3610, %v3650
  %v3652 = vpop.f32.mrb[0].mxu0
  %v3653 = vpop.f32.mrb[0].mxu0
  %3654 = vdwg.mxu0
  %3655 = vmatprep.subr.bf16.mxu0 %v2564
  %3656 = vmatpush1.bf16.msra.mxu0 %v2563
  %3657 = vmatprep.subr.bf16.mxu0 %v2570
  %3658 = vmatpush1.bf16.msra.mxu0 %v2569
  %3659 = vmatprep.subr.bf16.mxu0 %v2576
  %3660 = vmatpush1.bf16.msra.mxu0 %v2575
  %3661 = vmatprep.subr.bf16.mxu0 %v2582
  %3662 = vmatpush1.bf16.msra.mxu0 %v2581
  %3663 = vmatprep.subr.bf16.mxu0 %v2588
  %3664 = vmatpush1.bf16.msra.mxu0 %v2587
  %3665 = vmatprep.subr.bf16.mxu0 %v2594
  %3666 = vmatpush1.bf16.msra.mxu0 %v2593
  %3667 = vmatprep.subr.bf16.mxu0 %v2600
  %3668 = vmatpush1.bf16.msra.mxu0 %v2599
  %3669 = vmatprep.subr.bf16.mxu0 %v2606
  %3670 = vmatpush1.bf16.msra.mxu0 %v2605
  %3671 = vmatprep.subr.bf16.mxu0 %v2612
  %3672 = vmatpush1.bf16.msra.mxu0 %v2611
  %3673 = vmatprep.subr.bf16.mxu0 %v2618
  %3674 = vmatpush1.bf16.msra.mxu0 %v2617
  %3675 = vmatprep.subr.bf16.mxu0 %v2624
  %3676 = vmatpush1.bf16.msra.mxu0 %v2623
  %3677 = vmatprep.subr.bf16.mxu0 %v2630
  %3678 = vmatpush1.bf16.msra.mxu0 %v2629
  %3679 = vmatprep.subr.bf16.mxu0 %v2636
  %3680 = vmatpush1.bf16.msra.mxu0 %v2635
  %3681 = vmatprep.subr.bf16.mxu0 %v2642
  %3682 = vmatpush1.bf16.msra.mxu0 %v2641
  %3683 = vmatprep.subr.bf16.mxu0 %v2648
  %3684 = vmatpush1.bf16.msra.mxu0 %v2647
  %3685 = vmatprep.subr.bf16.mxu0 %v2654
  %3686 = vmatpush1.bf16.msra.mxu0 %v2653
  %3687 = vmatprep.mubr.bf16.mxu0 %v984
  %3688 = vmatmul.mubr.bf16.gmra.mrb[0].mxu0 %v983
  %v3689 = vpop.f32.mrb[0].mxu0
  %v3690 = vadd.f32 %v1396, %v3689
  %v3691 = vpop.f32.mrb[0].mxu0
  %v3692 = vadd.f32 %v1400, %v3691
  %v3693 = vpop.f32.mrb[0].mxu0
  %v3694 = vpop.f32.mrb[0].mxu0
  %3695 = vdwg.mxu0
  %3696 = vmatprep.subr.bf16.mxu0 %v2660
  %3697 = vmatpush1.bf16.msra.mxu0 %v2659
  %3698 = vmatprep.subr.bf16.mxu0 %v2666
  %3699 = vmatpush1.bf16.msra.mxu0 %v2665
  %3700 = vmatprep.subr.bf16.mxu0 %v2672
  %3701 = vmatpush1.bf16.msra.mxu0 %v2671
  %3702 = vmatprep.subr.bf16.mxu0 %v2678
  %3703 = vmatpush1.bf16.msra.mxu0 %v2677
  %3704 = vmatprep.subr.bf16.mxu0 %v2684
  %3705 = vmatpush1.bf16.msra.mxu0 %v2683
  %3706 = vmatprep.subr.bf16.mxu0 %v2690
  %3707 = vmatpush1.bf16.msra.mxu0 %v2689
  %3708 = vmatprep.subr.bf16.mxu0 %v2696
  %3709 = vmatpush1.bf16.msra.mxu0 %v2695
  %3710 = vmatprep.subr.bf16.mxu0 %v2702
  %3711 = vmatpush1.bf16.msra.mxu0 %v2701
  %3712 = vmatprep.subr.bf16.mxu0 %v2708
  %3713 = vmatpush1.bf16.msra.mxu0 %v2707
  %3714 = vmatprep.subr.bf16.mxu0 %v2714
  %3715 = vmatpush1.bf16.msra.mxu0 %v2713
  %3716 = vmatprep.subr.bf16.mxu0 %v2720
  %3717 = vmatpush1.bf16.msra.mxu0 %v2719
  %3718 = vmatprep.subr.bf16.mxu0 %v2726
  %3719 = vmatpush1.bf16.msra.mxu0 %v2725
  %3720 = vmatprep.subr.bf16.mxu0 %v2732
  %3721 = vmatpush1.bf16.msra.mxu0 %v2731
  %3722 = vmatprep.subr.bf16.mxu0 %v2738
  %3723 = vmatpush1.bf16.msra.mxu0 %v2737
  %3724 = vmatprep.subr.bf16.mxu0 %v2744
  %3725 = vmatpush1.bf16.msra.mxu0 %v2743
  %3726 = vmatprep.subr.bf16.mxu0 %v2750
  %3727 = vmatpush1.bf16.msra.mxu0 %v2749
  %3728 = vmatprep.mubr.bf16.mxu0 %v986
  %3729 = vmatmul.mubr.bf16.gmra.mrb[0].mxu0 %v985
  %v3730 = vpop.f32.mrb[0].mxu0
  %v3731 = vadd.f32 %v3690, %v3730
  %v3732 = vpop.f32.mrb[0].mxu0
  %v3733 = vadd.f32 %v3692, %v3732
  %v3734 = vpop.f32.mrb[0].mxu0
  %v3735 = vpop.f32.mrb[0].mxu0
  %3736 = vdwg.mxu0
  %3737 = vmatprep.subr.bf16.mxu0 %v2756
  %3738 = vmatpush1.bf16.msra.mxu0 %v2755
  %3739 = vmatprep.subr.bf16.mxu0 %v2762
  %3740 = vmatpush1.bf16.msra.mxu0 %v2761
  %3741 = vmatprep.subr.bf16.mxu0 %v2768
  %3742 = vmatpush1.bf16.msra.mxu0 %v2767
  %3743 = vmatprep.subr.bf16.mxu0 %v2774
  %3744 = vmatpush1.bf16.msra.mxu0 %v2773
  %3745 = vmatprep.subr.bf16.mxu0 %v2780
  %3746 = vmatpush1.bf16.msra.mxu0 %v2779
  %3747 = vmatprep.subr.bf16.mxu0 %v2786
  %3748 = vmatpush1.bf16.msra.mxu0 %v2785
  %3749 = vmatprep.subr.bf16.mxu0 %v2792
  %3750 = vmatpush1.bf16.msra.mxu0 %v2791
  %3751 = vmatprep.subr.bf16.mxu0 %v2798
  %3752 = vmatpush1.bf16.msra.mxu0 %v2797
  %3753 = vmatprep.subr.bf16.mxu0 %v2804
  %3754 = vmatpush1.bf16.msra.mxu0 %v2803
  %3755 = vmatprep.subr.bf16.mxu0 %v2810
  %3756 = vmatpush1.bf16.msra.mxu0 %v2809
  %3757 = vmatprep.subr.bf16.mxu0 %v2816
  %3758 = vmatpush1.bf16.msra.mxu0 %v2815
  %3759 = vmatprep.subr.bf16.mxu0 %v2822
  %3760 = vmatpush1.bf16.msra.mxu0 %v2821
  %3761 = vmatprep.subr.bf16.mxu0 %v2828
  %3762 = vmatpush1.bf16.msra.mxu0 %v2827
  %3763 = vmatprep.subr.bf16.mxu0 %v2834
  %3764 = vmatpush1.bf16.msra.mxu0 %v2833
  %3765 = vmatprep.subr.bf16.mxu0 %v2840
  %3766 = vmatpush1.bf16.msra.mxu0 %v2839
  %3767 = vmatprep.subr.bf16.mxu0 %v2846
  %3768 = vmatpush1.bf16.msra.mxu0 %v2845
  %3769 = vmatprep.mubr.bf16.mxu0 %v988
  %3770 = vmatmul.mubr.bf16.gmra.mrb[0].mxu0 %v987
  %v3771 = vpop.f32.mrb[0].mxu0
  %v3772 = vadd.f32 %v3731, %v3771
  %v3773 = vpop.f32.mrb[0].mxu0
  %v3774 = vadd.f32 %v3733, %v3773
  %v3775 = vpop.f32.mrb[0].mxu0
  %v3776 = vpop.f32.mrb[0].mxu0
  %3777 = vdwg.mxu0
  %3778 = vmatprep.subr.bf16.mxu0 %v2852
  %3779 = vmatpush1.bf16.msra.mxu0 %v2851
  %3780 = vmatprep.subr.bf16.mxu0 %v2858
  %3781 = vmatpush1.bf16.msra.mxu0 %v2857
  %3782 = vmatprep.subr.bf16.mxu0 %v2864
  %3783 = vmatpush1.bf16.msra.mxu0 %v2863
  %3784 = vmatprep.subr.bf16.mxu0 %v2870
  %3785 = vmatpush1.bf16.msra.mxu0 %v2869
  %3786 = vmatprep.subr.bf16.mxu0 %v2876
  %3787 = vmatpush1.bf16.msra.mxu0 %v2875
  %3788 = vmatprep.subr.bf16.mxu0 %v2882
  %3789 = vmatpush1.bf16.msra.mxu0 %v2881
  %3790 = vmatprep.subr.bf16.mxu0 %v2888
  %3791 = vmatpush1.bf16.msra.mxu0 %v2887
  %3792 = vmatprep.subr.bf16.mxu0 %v2894
  %3793 = vmatpush1.bf16.msra.mxu0 %v2893
  %3794 = vmatprep.subr.bf16.mxu0 %v2900
  %3795 = vmatpush1.bf16.msra.mxu0 %v2899
  %3796 = vmatprep.subr.bf16.mxu0 %v2906
  %3797 = vmatpush1.bf16.msra.mxu0 %v2905
  %3798 = vmatprep.subr.bf16.mxu0 %v2912
  %3799 = vmatpush1.bf16.msra.mxu0 %v2911
  %3800 = vmatprep.subr.bf16.mxu0 %v2918
  %3801 = vmatpush1.bf16.msra.mxu0 %v2917
  %3802 = vmatprep.subr.bf16.mxu0 %v2924
  %3803 = vmatpush1.bf16.msra.mxu0 %v2923
  %3804 = vmatprep.subr.bf16.mxu0 %v2930
  %3805 = vmatpush1.bf16.msra.mxu0 %v2929
  %3806 = vmatprep.subr.bf16.mxu0 %v2936
  %3807 = vmatpush1.bf16.msra.mxu0 %v2935
  %3808 = vmatprep.subr.bf16.mxu0 %v2942
  %3809 = vmatpush1.bf16.msra.mxu0 %v2941
  %3810 = vmatprep.mubr.bf16.mxu0 %v990
  %3811 = vmatmul.mubr.bf16.gmra.mrb[0].mxu0 %v989
  %v3812 = vpop.f32.mrb[0].mxu0
  %v3813 = vadd.f32 %v3772, %v3812
  %v3814 = vpop.f32.mrb[0].mxu0
  %v3815 = vadd.f32 %v3774, %v3814
  %v3816 = vpop.f32.mrb[0].mxu0
  %v3817 = vpop.f32.mrb[0].mxu0
  %3818 = vdwg.mxu0
  %v3819 = vld [vmem:[%s9] sm:$0x3f]
  %v3820 = vld [vmem:[%s10] sm:$0x3f]
  %v3821 = vadd.f32 %v3485, %v3487
  %v3822 = vadd.f32 %v3821, %v3649
  %v3823 = vadd.f32 %v3822, %v3651
  %v3824 = vadd.f32 %v3823, %v3813
  %v3825 = vadd.f32 %v3824, %v3815
  %3826 = vadd.xlane.f32.xlu0 %v3825
  %v3827 = vpop.xlane.xlu0 %3826
  %v3828 = vrcp.pop 768.0
  %v3829 = vmul.f32 %v3827, %v3828
  %v3830 = vsub.f32 %v3485, %v3829
  %v3831 = vsub.f32 %v3487, %v3829
  %v3832 = vsub.f32 %v3649, %v3829
  %v3833 = vsub.f32 %v3651, %v3829
  %v3834 = vsub.f32 %v3813, %v3829
  %v3835 = vsub.f32 %v3815, %v3829
  %v3836 = vmul.f32 %v3830, %v3830
  %v3837 = vmul.f32 %v3831, %v3831
  %v3838 = vmul.f32 %v3832, %v3832
  %v3839 = vmul.f32 %v3833, %v3833
  %v3840 = vmul.f32 %v3834, %v3834
  %v3841 = vmul.f32 %v3835, %v3835
  %v3842 = vadd.f32 %v3836, %v3837
  %v3843 = vadd.f32 %v3842, %v3838
  %v3844 = vadd.f32 %v3843, %v3839
  %v3845 = vadd.f32 %v3844, %v3840
  %v3846 = vadd.f32 %v3845, %v3841
  %3847 = vadd.xlane.f32.xlu0 %v3846
  %v3848 = vpop.xlane.xlu0 %3847
  %v3849 = vmul.f32 %v3848, %v3828
  %v3850 = vadd.f32 %v3849, 1e-05
  %v3851 = vrsqrt.pop %v3850
  %v3852 = vmul.f32 %v3830, %v3851
  %v3853 = vmul.f32 %v3831, %v3851
  %v3854 = vmul.f32 %v3832, %v3851
  %v3855 = vmul.f32 %v3833, %v3851
  %v3856 = vmul.f32 %v3834, %v3851
  %v3857 = vmul.f32 %v3835, %v3851
  %v3859 = vlaneseq
  %v3860 = vshrl.u32 %v3859, 7
  %v3861 = vsub.s32 0, %v3860
  %v3862 = vrot.slane %v3819, %v3861
  %v3863 = vlaneseq
  %v3864 = vshrl.u32 %v3863, 7
  %v3865 = vsub.s32 1, %v3864
  %v3866 = vrot.slane %v3819, %v3865
  %v3867 = vlaneseq
  %v3868 = vshrl.u32 %v3867, 7
  %v3869 = vsub.s32 2, %v3868
  %v3870 = vrot.slane %v3819, %v3869
  %v3871 = vlaneseq
  %v3872 = vshrl.u32 %v3871, 7
  %v3873 = vsub.s32 3, %v3872
  %v3874 = vrot.slane %v3819, %v3873
  %v3875 = vlaneseq
  %v3876 = vshrl.u32 %v3875, 7
  %v3877 = vsub.s32 4, %v3876
  %v3878 = vrot.slane %v3819, %v3877
  %v3879 = vlaneseq
  %v3880 = vshrl.u32 %v3879, 7
  %v3881 = vsub.s32 5, %v3880
  %v3882 = vrot.slane %v3819, %v3881
  %v3889 = vmul.f32 %v3852, %v3862
  %v3890 = vmul.f32 %v3853, %v3866
  %v3891 = vmul.f32 %v3854, %v3870
  %v3892 = vmul.f32 %v3855, %v3874
  %v3893 = vmul.f32 %v3856, %v3878
  %v3894 = vmul.f32 %v3857, %v3882
  %v3896 = vlaneseq
  %v3897 = vshrl.u32 %v3896, 7
  %v3898 = vsub.s32 0, %v3897
  %v3899 = vrot.slane %v3820, %v3898
  %v3900 = vlaneseq
  %v3901 = vshrl.u32 %v3900, 7
  %v3902 = vsub.s32 1, %v3901
  %v3903 = vrot.slane %v3820, %v3902
  %v3904 = vlaneseq
  %v3905 = vshrl.u32 %v3904, 7
  %v3906 = vsub.s32 2, %v3905
  %v3907 = vrot.slane %v3820, %v3906
  %v3908 = vlaneseq
  %v3909 = vshrl.u32 %v3908, 7
  %v3910 = vsub.s32 3, %v3909
  %v3911 = vrot.slane %v3820, %v3910
  %v3912 = vlaneseq
  %v3913 = vshrl.u32 %v3912, 7
  %v3914 = vsub.s32 4, %v3913
  %v3915 = vrot.slane %v3820, %v3914
  %v3916 = vlaneseq
  %v3917 = vshrl.u32 %v3916, 7
  %v3918 = vsub.s32 5, %v3917
  %v3919 = vrot.slane %v3820, %v3918
  %v3926 = vadd.f32 %v3889, %v3899
  %v3927 = vadd.f32 %v3890, %v3903
  %v3928 = vadd.f32 %v3891, %v3907
  %v3929 = vadd.f32 %v3892, %v3911
  %v3930 = vadd.f32 %v3893, %v3915
  %v3931 = vadd.f32 %v3894, %v3919
  %v3932 = vmax.f32 %v3926, 0.0
  %v3933 = vmax.f32 %v3927, 0.0
  %v3934 = vmax.f32 %v3928, 0.0
  %v3935 = vmax.f32 %v3929, 0.0
  %v3936 = vmax.f32 %v3930, 0.0
  %v3937 = vmax.f32 %v3931, 0.0
  %v3938 = vpack.c.bf16 %v3932, %v3932
  %v3939 = vpack.c.bf16 %v3933, %v3933
  %v3940 = vpack.c.bf16 %v3934, %v3934
  %v3941 = vpack.c.bf16 %v3935, %v3935
  %v3942 = vpack.c.bf16 %v3936, %v3936
  %v3943 = vpack.c.bf16 %v3937, %v3937
  %v3944 = vld [vmem:[%s11] sm:$0xff]
  %v3945 = vld [vmem:[%s11 + $0x8] sm:$0xff]
  %v3946 = vld [vmem:[%s11 + $0x10] sm:$0xff]
  %v3947 = vld [vmem:[%s11 + $0x18] sm:$0xff]
  %v3948 = vld [vmem:[%s11 + $0x20] sm:$0xff]
  %v3949 = vld [vmem:[%s11 + $0x28] sm:$0xff]
  %v3950 = vld [vmem:[%s11 + $0x30] sm:$0xff]
  %v3951 = vld [vmem:[%s11 + $0x38] sm:$0xff]
  %v3952 = vld [vmem:[%s11 + $0x40] sm:$0xff]
  %v3953 = vld [vmem:[%s11 + $0x48] sm:$0xff]
  %v3954 = vld [vmem:[%s11 + $0x50] sm:$0xff]
  %v3955 = vld [vmem:[%s11 + $0x58] sm:$0xff]
  %v3956 = vld [vmem:[%s11 + $0x60] sm:$0xff]
  %v3957 = vld [vmem:[%s11 + $0x68] sm:$0xff]
  %v3958 = vld [vmem:[%s11 + $0x70] sm:$0xff]
  %v3959 = vld [vmem:[%s11 + $0x78] sm:$0xff]
  %v3960 = vld [vmem:[%s11 + $0x80] sm:$0xff]
  %v3961 = vld [vmem:[%s11 + $0x88] sm:$0xff]
  %v3962 = vld [vmem:[%s11 + $0x90] sm:$0xff]
  %v3963 = vld [vmem:[%s11 + $0x98] sm:$0xff]
  %v3964 = vld [vmem:[%s11 + $0xa0] sm:$0xff]
  %v3965 = vld [vmem:[%s11 + $0xa8] sm:$0xff]
  %v3966 = vld [vmem:[%s11 + $0xb0] sm:$0xff]
  %v3967 = vld [vmem:[%s11 + $0xb8] sm:$0xff]
  %v3968 = vld [vmem:[%s11 + $0xc0] sm:$0xff]
  %v3969 = vld [vmem:[%s11 + $0xc8] sm:$0xff]
  %v3970 = vld [vmem:[%s11 + $0xd0] sm:$0xff]
  %v3971 = vld [vmem:[%s11 + $0xd8] sm:$0xff]
  %v3972 = vld [vmem:[%s11 + $0xe0] sm:$0xff]
  %v3973 = vld [vmem:[%s11 + $0xe8] sm:$0xff]
  %v3974 = vld [vmem:[%s11 + $0xf0] sm:$0xff]
  %v3975 = vld [vmem:[%s11 + $0xf8] sm:$0xff]
  %v3976 = vld [vmem:[%s11 + $0x100] sm:$0xff]
  %v3977 = vld [vmem:[%s11 + $0x108] sm:$0xff]
  %v3978 = vld [vmem:[%s11 + $0x110] sm:$0xff]
  %v3979 = vld [vmem:[%s11 + $0x118] sm:$0xff]
  %v3980 = vld [vmem:[%s11 + $0x120] sm:$0xff]
  %v3981 = vld [vmem:[%s11 + $0x128] sm:$0xff]
  %v3982 = vld [vmem:[%s11 + $0x130] sm:$0xff]
  %v3983 = vld [vmem:[%s11 + $0x138] sm:$0xff]
  %v3984 = vld [vmem:[%s11 + $0x140] sm:$0xff]
  %v3985 = vld [vmem:[%s11 + $0x148] sm:$0xff]
  %v3986 = vld [vmem:[%s11 + $0x150] sm:$0xff]
  %v3987 = vld [vmem:[%s11 + $0x158] sm:$0xff]
  %v3988 = vld [vmem:[%s11 + $0x160] sm:$0xff]
  %v3989 = vld [vmem:[%s11 + $0x168] sm:$0xff]
  %v3990 = vld [vmem:[%s11 + $0x170] sm:$0xff]
  %v3991 = vld [vmem:[%s11 + $0x178] sm:$0xff]
  %v3992 = vld [vmem:[%s11 + $0x180] sm:$0xff]
  %v3993 = vld [vmem:[%s11 + $0x188] sm:$0xff]
  %v3994 = vld [vmem:[%s11 + $0x190] sm:$0xff]
  %v3995 = vld [vmem:[%s11 + $0x198] sm:$0xff]
  %v3996 = vld [vmem:[%s11 + $0x1a0] sm:$0xff]
  %v3997 = vld [vmem:[%s11 + $0x1a8] sm:$0xff]
  %v3998 = vld [vmem:[%s11 + $0x1b0] sm:$0xff]
  %v3999 = vld [vmem:[%s11 + $0x1b8] sm:$0xff]
  %v4000 = vld [vmem:[%s11 + $0x1c0] sm:$0xff]
  %v4001 = vld [vmem:[%s11 + $0x1c8] sm:$0xff]
  %v4002 = vld [vmem:[%s11 + $0x1d0] sm:$0xff]
  %v4003 = vld [vmem:[%s11 + $0x1d8] sm:$0xff]
  %v4004 = vld [vmem:[%s11 + $0x1e0] sm:$0xff]
  %v4005 = vld [vmem:[%s11 + $0x1e8] sm:$0xff]
  %v4006 = vld [vmem:[%s11 + $0x1f0] sm:$0xff]
  %v4007 = vld [vmem:[%s11 + $0x1f8] sm:$0xff]
  %v4008 = vld [vmem:[%s11 + $0x200] sm:$0xff]
  %v4009 = vld [vmem:[%s11 + $0x208] sm:$0xff]
  %v4010 = vld [vmem:[%s11 + $0x210] sm:$0xff]
  %v4011 = vld [vmem:[%s11 + $0x218] sm:$0xff]
  %v4012 = vld [vmem:[%s11 + $0x220] sm:$0xff]
  %v4013 = vld [vmem:[%s11 + $0x228] sm:$0xff]
  %v4014 = vld [vmem:[%s11 + $0x230] sm:$0xff]
  %v4015 = vld [vmem:[%s11 + $0x238] sm:$0xff]
  %v4016 = vld [vmem:[%s11 + $0x240] sm:$0xff]
  %v4017 = vld [vmem:[%s11 + $0x248] sm:$0xff]
  %v4018 = vld [vmem:[%s11 + $0x250] sm:$0xff]
  %v4019 = vld [vmem:[%s11 + $0x258] sm:$0xff]
  %v4020 = vld [vmem:[%s11 + $0x260] sm:$0xff]
  %v4021 = vld [vmem:[%s11 + $0x268] sm:$0xff]
  %v4022 = vld [vmem:[%s11 + $0x270] sm:$0xff]
  %v4023 = vld [vmem:[%s11 + $0x278] sm:$0xff]
  %v4024 = vld [vmem:[%s11 + $0x280] sm:$0xff]
  %v4025 = vld [vmem:[%s11 + $0x288] sm:$0xff]
  %v4026 = vld [vmem:[%s11 + $0x290] sm:$0xff]
  %v4027 = vld [vmem:[%s11 + $0x298] sm:$0xff]
  %v4028 = vld [vmem:[%s11 + $0x2a0] sm:$0xff]
  %v4029 = vld [vmem:[%s11 + $0x2a8] sm:$0xff]
  %v4030 = vld [vmem:[%s11 + $0x2b0] sm:$0xff]
  %v4031 = vld [vmem:[%s11 + $0x2b8] sm:$0xff]
  %v4032 = vld [vmem:[%s11 + $0x2c0] sm:$0xff]
  %v4033 = vld [vmem:[%s11 + $0x2c8] sm:$0xff]
  %v4034 = vld [vmem:[%s11 + $0x2d0] sm:$0xff]
  %v4035 = vld [vmem:[%s11 + $0x2d8] sm:$0xff]
  %v4036 = vld [vmem:[%s11 + $0x2e0] sm:$0xff]
  %v4037 = vld [vmem:[%s11 + $0x2e8] sm:$0xff]
  %v4038 = vld [vmem:[%s11 + $0x2f0] sm:$0xff]
  %v4039 = vld [vmem:[%s11 + $0x2f8] sm:$0xff]
  %v4040 = vld [vmem:[%s11 + $0x300] sm:$0xff]
  %v4041 = vld [vmem:[%s11 + $0x308] sm:$0xff]
  %v4042 = vld [vmem:[%s11 + $0x310] sm:$0xff]
  %v4043 = vld [vmem:[%s11 + $0x318] sm:$0xff]
  %v4044 = vld [vmem:[%s11 + $0x320] sm:$0xff]
  %v4045 = vld [vmem:[%s11 + $0x328] sm:$0xff]
  %v4046 = vld [vmem:[%s11 + $0x330] sm:$0xff]
  %v4047 = vld [vmem:[%s11 + $0x338] sm:$0xff]
  %v4048 = vld [vmem:[%s11 + $0x340] sm:$0xff]
  %v4049 = vld [vmem:[%s11 + $0x348] sm:$0xff]
  %v4050 = vld [vmem:[%s11 + $0x350] sm:$0xff]
  %v4051 = vld [vmem:[%s11 + $0x358] sm:$0xff]
  %v4052 = vld [vmem:[%s11 + $0x360] sm:$0xff]
  %v4053 = vld [vmem:[%s11 + $0x368] sm:$0xff]
  %v4054 = vld [vmem:[%s11 + $0x370] sm:$0xff]
  %v4055 = vld [vmem:[%s11 + $0x378] sm:$0xff]
  %v4056 = vld [vmem:[%s11 + $0x380] sm:$0xff]
  %v4057 = vld [vmem:[%s11 + $0x388] sm:$0xff]
  %v4058 = vld [vmem:[%s11 + $0x390] sm:$0xff]
  %v4059 = vld [vmem:[%s11 + $0x398] sm:$0xff]
  %v4060 = vld [vmem:[%s11 + $0x3a0] sm:$0xff]
  %v4061 = vld [vmem:[%s11 + $0x3a8] sm:$0xff]
  %v4062 = vld [vmem:[%s11 + $0x3b0] sm:$0xff]
  %v4063 = vld [vmem:[%s11 + $0x3b8] sm:$0xff]
  %v4064 = vld [vmem:[%s11 + $0x3c0] sm:$0xff]
  %v4065 = vld [vmem:[%s11 + $0x3c8] sm:$0xff]
  %v4066 = vld [vmem:[%s11 + $0x3d0] sm:$0xff]
  %v4067 = vld [vmem:[%s11 + $0x3d8] sm:$0xff]
  %v4068 = vld [vmem:[%s11 + $0x3e0] sm:$0xff]
  %v4069 = vld [vmem:[%s11 + $0x3e8] sm:$0xff]
  %v4070 = vld [vmem:[%s11 + $0x3f0] sm:$0xff]
  %v4071 = vld [vmem:[%s11 + $0x3f8] sm:$0xff]
  %v4072 = vld [vmem:[%s11 + $0x400] sm:$0xff]
  %v4073 = vld [vmem:[%s11 + $0x408] sm:$0xff]
  %v4074 = vld [vmem:[%s11 + $0x410] sm:$0xff]
  %v4075 = vld [vmem:[%s11 + $0x418] sm:$0xff]
  %v4076 = vld [vmem:[%s11 + $0x420] sm:$0xff]
  %v4077 = vld [vmem:[%s11 + $0x428] sm:$0xff]
  %v4078 = vld [vmem:[%s11 + $0x430] sm:$0xff]
  %v4079 = vld [vmem:[%s11 + $0x438] sm:$0xff]
  %v4080 = vld [vmem:[%s11 + $0x440] sm:$0xff]
  %v4081 = vld [vmem:[%s11 + $0x448] sm:$0xff]
  %v4082 = vld [vmem:[%s11 + $0x450] sm:$0xff]
  %v4083 = vld [vmem:[%s11 + $0x458] sm:$0xff]
  %v4084 = vld [vmem:[%s11 + $0x460] sm:$0xff]
  %v4085 = vld [vmem:[%s11 + $0x468] sm:$0xff]
  %v4086 = vld [vmem:[%s11 + $0x470] sm:$0xff]
  %v4087 = vld [vmem:[%s11 + $0x478] sm:$0xff]
  %v4088 = vld [vmem:[%s11 + $0x480] sm:$0xff]
  %v4089 = vld [vmem:[%s11 + $0x488] sm:$0xff]
  %v4090 = vld [vmem:[%s11 + $0x490] sm:$0xff]
  %v4091 = vld [vmem:[%s11 + $0x498] sm:$0xff]
  %v4092 = vld [vmem:[%s11 + $0x4a0] sm:$0xff]
  %v4093 = vld [vmem:[%s11 + $0x4a8] sm:$0xff]
  %v4094 = vld [vmem:[%s11 + $0x4b0] sm:$0xff]
  %v4095 = vld [vmem:[%s11 + $0x4b8] sm:$0xff]
  %v4096 = vld [vmem:[%s11 + $0x4c0] sm:$0xff]
  %v4097 = vld [vmem:[%s11 + $0x4c8] sm:$0xff]
  %v4098 = vld [vmem:[%s11 + $0x4d0] sm:$0xff]
  %v4099 = vld [vmem:[%s11 + $0x4d8] sm:$0xff]
  %v4100 = vld [vmem:[%s11 + $0x4e0] sm:$0xff]
  %v4101 = vld [vmem:[%s11 + $0x4e8] sm:$0xff]
  %v4102 = vld [vmem:[%s11 + $0x4f0] sm:$0xff]
  %v4103 = vld [vmem:[%s11 + $0x4f8] sm:$0xff]
  %v4104 = vld [vmem:[%s11 + $0x500] sm:$0xff]
  %v4105 = vld [vmem:[%s11 + $0x508] sm:$0xff]
  %v4106 = vld [vmem:[%s11 + $0x510] sm:$0xff]
  %v4107 = vld [vmem:[%s11 + $0x518] sm:$0xff]
  %v4108 = vld [vmem:[%s11 + $0x520] sm:$0xff]
  %v4109 = vld [vmem:[%s11 + $0x528] sm:$0xff]
  %v4110 = vld [vmem:[%s11 + $0x530] sm:$0xff]
  %v4111 = vld [vmem:[%s11 + $0x538] sm:$0xff]
  %v4112 = vld [vmem:[%s11 + $0x540] sm:$0xff]
  %v4113 = vld [vmem:[%s11 + $0x548] sm:$0xff]
  %v4114 = vld [vmem:[%s11 + $0x550] sm:$0xff]
  %v4115 = vld [vmem:[%s11 + $0x558] sm:$0xff]
  %v4116 = vld [vmem:[%s11 + $0x560] sm:$0xff]
  %v4117 = vld [vmem:[%s11 + $0x568] sm:$0xff]
  %v4118 = vld [vmem:[%s11 + $0x570] sm:$0xff]
  %v4119 = vld [vmem:[%s11 + $0x578] sm:$0xff]
  %v4120 = vld [vmem:[%s11 + $0x580] sm:$0xff]
  %v4121 = vld [vmem:[%s11 + $0x588] sm:$0xff]
  %v4122 = vld [vmem:[%s11 + $0x590] sm:$0xff]
  %v4123 = vld [vmem:[%s11 + $0x598] sm:$0xff]
  %v4124 = vld [vmem:[%s11 + $0x5a0] sm:$0xff]
  %v4125 = vld [vmem:[%s11 + $0x5a8] sm:$0xff]
  %v4126 = vld [vmem:[%s11 + $0x5b0] sm:$0xff]
  %v4127 = vld [vmem:[%s11 + $0x5b8] sm:$0xff]
  %v4128 = vld [vmem:[%s11 + $0x5c0] sm:$0xff]
  %v4129 = vld [vmem:[%s11 + $0x5c8] sm:$0xff]
  %v4130 = vld [vmem:[%s11 + $0x5d0] sm:$0xff]
  %v4131 = vld [vmem:[%s11 + $0x5d8] sm:$0xff]
  %v4132 = vld [vmem:[%s11 + $0x5e0] sm:$0xff]
  %v4133 = vld [vmem:[%s11 + $0x5e8] sm:$0xff]
  %v4134 = vld [vmem:[%s11 + $0x5f0] sm:$0xff]
  %v4135 = vld [vmem:[%s11 + $0x5f8] sm:$0xff]
  %v4136 = vld [vmem:[%s12] sm:$0xf]
  %v4138 = vlaneseq
  %v4139 = vshrl.u32 %v4138, 7
  %v4140 = vsub.s32 0, %v4139
  %v4141 = vrot.slane %v4136, %v4140
  %v4142 = vlaneseq
  %v4143 = vshrl.u32 %v4142, 7
  %v4144 = vsub.s32 1, %v4143
  %v4145 = vrot.slane %v4136, %v4144
  %v4146 = vlaneseq
  %v4147 = vshrl.u32 %v4146, 7
  %v4148 = vsub.s32 2, %v4147
  %v4149 = vrot.slane %v4136, %v4148
  %v4150 = vlaneseq
  %v4151 = vshrl.u32 %v4150, 7
  %v4152 = vsub.s32 3, %v4151
  %v4153 = vrot.slane %v4136, %v4152
  %v4350 = vunpack.c.l.b16 %v3944
  %v4351 = vunpack.c.h.b16 %v3944
  %v4352 = vunpack.c.l.b16 %v3945
  %v4353 = vunpack.c.h.b16 %v3945
  %v4354 = vunpack.c.l.b16 %v3946
  %v4355 = vunpack.c.h.b16 %v3946
  %v4356 = vunpack.c.l.b16 %v3947
  %v4357 = vunpack.c.h.b16 %v3947
  %v4358 = vunpack.c.l.b16 %v3948
  %v4359 = vunpack.c.h.b16 %v3948
  %v4360 = vunpack.c.l.b16 %v3949
  %v4361 = vunpack.c.h.b16 %v3949
  %v4362 = vunpack.c.l.b16 %v3950
  %v4363 = vunpack.c.h.b16 %v3950
  %v4364 = vunpack.c.l.b16 %v3951
  %v4365 = vunpack.c.h.b16 %v3951
  %v4366 = vunpack.c.l.b16 %v3952
  %v4367 = vunpack.c.h.b16 %v3952
  %v4368 = vunpack.c.l.b16 %v3953
  %v4369 = vunpack.c.h.b16 %v3953
  %v4370 = vunpack.c.l.b16 %v3954
  %v4371 = vunpack.c.h.b16 %v3954
  %v4372 = vunpack.c.l.b16 %v3955
  %v4373 = vunpack.c.h.b16 %v3955
  %v4374 = vunpack.c.l.b16 %v3956
  %v4375 = vunpack.c.h.b16 %v3956
  %v4376 = vunpack.c.l.b16 %v3957
  %v4377 = vunpack.c.h.b16 %v3957
  %v4378 = vunpack.c.l.b16 %v3958
  %v4379 = vunpack.c.h.b16 %v3958
  %v4380 = vunpack.c.l.b16 %v3959
  %v4381 = vunpack.c.h.b16 %v3959
  %v4382 = vunpack.c.l.b16 %v3960
  %v4383 = vunpack.c.h.b16 %v3960
  %v4384 = vunpack.c.l.b16 %v3961
  %v4385 = vunpack.c.h.b16 %v3961
  %v4386 = vunpack.c.l.b16 %v3962
  %v4387 = vunpack.c.h.b16 %v3962
  %v4388 = vunpack.c.l.b16 %v3963
  %v4389 = vunpack.c.h.b16 %v3963
  %v4390 = vunpack.c.l.b16 %v3964
  %v4391 = vunpack.c.h.b16 %v3964
  %v4392 = vunpack.c.l.b16 %v3965
  %v4393 = vunpack.c.h.b16 %v3965
  %v4394 = vunpack.c.l.b16 %v3966
  %v4395 = vunpack.c.h.b16 %v3966
  %v4396 = vunpack.c.l.b16 %v3967
  %v4397 = vunpack.c.h.b16 %v3967
  %v4398 = vunpack.c.l.b16 %v3968
  %v4399 = vunpack.c.h.b16 %v3968
  %v4400 = vunpack.c.l.b16 %v3969
  %v4401 = vunpack.c.h.b16 %v3969
  %v4402 = vunpack.c.l.b16 %v3970
  %v4403 = vunpack.c.h.b16 %v3970
  %v4404 = vunpack.c.l.b16 %v3971
  %v4405 = vunpack.c.h.b16 %v3971
  %v4406 = vunpack.c.l.b16 %v3972
  %v4407 = vunpack.c.h.b16 %v3972
  %v4408 = vunpack.c.l.b16 %v3973
  %v4409 = vunpack.c.h.b16 %v3973
  %v4410 = vunpack.c.l.b16 %v3974
  %v4411 = vunpack.c.h.b16 %v3974
  %v4412 = vunpack.c.l.b16 %v3975
  %v4413 = vunpack.c.h.b16 %v3975
  %v4414 = vunpack.c.l.b16 %v3976
  %v4415 = vunpack.c.h.b16 %v3976
  %v4416 = vunpack.c.l.b16 %v3977
  %v4417 = vunpack.c.h.b16 %v3977
  %v4418 = vunpack.c.l.b16 %v3978
  %v4419 = vunpack.c.h.b16 %v3978
  %v4420 = vunpack.c.l.b16 %v3979
  %v4421 = vunpack.c.h.b16 %v3979
  %v4422 = vunpack.c.l.b16 %v3980
  %v4423 = vunpack.c.h.b16 %v3980
  %v4424 = vunpack.c.l.b16 %v3981
  %v4425 = vunpack.c.h.b16 %v3981
  %v4426 = vunpack.c.l.b16 %v3982
  %v4427 = vunpack.c.h.b16 %v3982
  %v4428 = vunpack.c.l.b16 %v3983
  %v4429 = vunpack.c.h.b16 %v3983
  %v4430 = vunpack.c.l.b16 %v3984
  %v4431 = vunpack.c.h.b16 %v3984
  %v4432 = vunpack.c.l.b16 %v3985
  %v4433 = vunpack.c.h.b16 %v3985
  %v4434 = vunpack.c.l.b16 %v3986
  %v4435 = vunpack.c.h.b16 %v3986
  %v4436 = vunpack.c.l.b16 %v3987
  %v4437 = vunpack.c.h.b16 %v3987
  %v4438 = vunpack.c.l.b16 %v3988
  %v4439 = vunpack.c.h.b16 %v3988
  %v4440 = vunpack.c.l.b16 %v3989
  %v4441 = vunpack.c.h.b16 %v3989
  %v4442 = vunpack.c.l.b16 %v3990
  %v4443 = vunpack.c.h.b16 %v3990
  %v4444 = vunpack.c.l.b16 %v3991
  %v4445 = vunpack.c.h.b16 %v3991
  %v4446 = vunpack.c.l.b16 %v3992
  %v4447 = vunpack.c.h.b16 %v3992
  %v4448 = vunpack.c.l.b16 %v3993
  %v4449 = vunpack.c.h.b16 %v3993
  %v4450 = vunpack.c.l.b16 %v3994
  %v4451 = vunpack.c.h.b16 %v3994
  %v4452 = vunpack.c.l.b16 %v3995
  %v4453 = vunpack.c.h.b16 %v3995
  %v4454 = vunpack.c.l.b16 %v3996
  %v4455 = vunpack.c.h.b16 %v3996
  %v4456 = vunpack.c.l.b16 %v3997
  %v4457 = vunpack.c.h.b16 %v3997
  %v4458 = vunpack.c.l.b16 %v3998
  %v4459 = vunpack.c.h.b16 %v3998
  %v4460 = vunpack.c.l.b16 %v3999
  %v4461 = vunpack.c.h.b16 %v3999
  %v4462 = vunpack.c.l.b16 %v4000
  %v4463 = vunpack.c.h.b16 %v4000
  %v4464 = vunpack.c.l.b16 %v4001
  %v4465 = vunpack.c.h.b16 %v4001
  %v4466 = vunpack.c.l.b16 %v4002
  %v4467 = vunpack.c.h.b16 %v4002
  %v4468 = vunpack.c.l.b16 %v4003
  %v4469 = vunpack.c.h.b16 %v4003
  %v4470 = vunpack.c.l.b16 %v4004
  %v4471 = vunpack.c.h.b16 %v4004
  %v4472 = vunpack.c.l.b16 %v4005
  %v4473 = vunpack.c.h.b16 %v4005
  %v4474 = vunpack.c.l.b16 %v4006
  %v4475 = vunpack.c.h.b16 %v4006
  %v4476 = vunpack.c.l.b16 %v4007
  %v4477 = vunpack.c.h.b16 %v4007
  %v4478 = vunpack.c.l.b16 %v4008
  %v4479 = vunpack.c.h.b16 %v4008
  %v4480 = vunpack.c.l.b16 %v4009
  %v4481 = vunpack.c.h.b16 %v4009
  %v4482 = vunpack.c.l.b16 %v4010
  %v4483 = vunpack.c.h.b16 %v4010
  %v4484 = vunpack.c.l.b16 %v4011
  %v4485 = vunpack.c.h.b16 %v4011
  %v4486 = vunpack.c.l.b16 %v4012
  %v4487 = vunpack.c.h.b16 %v4012
  %v4488 = vunpack.c.l.b16 %v4013
  %v4489 = vunpack.c.h.b16 %v4013
  %v4490 = vunpack.c.l.b16 %v4014
  %v4491 = vunpack.c.h.b16 %v4014
  %v4492 = vunpack.c.l.b16 %v4015
  %v4493 = vunpack.c.h.b16 %v4015
  %v4494 = vunpack.c.l.b16 %v4016
  %v4495 = vunpack.c.h.b16 %v4016
  %v4496 = vunpack.c.l.b16 %v4017
  %v4497 = vunpack.c.h.b16 %v4017
  %v4498 = vunpack.c.l.b16 %v4018
  %v4499 = vunpack.c.h.b16 %v4018
  %v4500 = vunpack.c.l.b16 %v4019
  %v4501 = vunpack.c.h.b16 %v4019
  %v4502 = vunpack.c.l.b16 %v4020
  %v4503 = vunpack.c.h.b16 %v4020
  %v4504 = vunpack.c.l.b16 %v4021
  %v4505 = vunpack.c.h.b16 %v4021
  %v4506 = vunpack.c.l.b16 %v4022
  %v4507 = vunpack.c.h.b16 %v4022
  %v4508 = vunpack.c.l.b16 %v4023
  %v4509 = vunpack.c.h.b16 %v4023
  %v4510 = vunpack.c.l.b16 %v4024
  %v4511 = vunpack.c.h.b16 %v4024
  %v4512 = vunpack.c.l.b16 %v4025
  %v4513 = vunpack.c.h.b16 %v4025
  %v4514 = vunpack.c.l.b16 %v4026
  %v4515 = vunpack.c.h.b16 %v4026
  %v4516 = vunpack.c.l.b16 %v4027
  %v4517 = vunpack.c.h.b16 %v4027
  %v4518 = vunpack.c.l.b16 %v4028
  %v4519 = vunpack.c.h.b16 %v4028
  %v4520 = vunpack.c.l.b16 %v4029
  %v4521 = vunpack.c.h.b16 %v4029
  %v4522 = vunpack.c.l.b16 %v4030
  %v4523 = vunpack.c.h.b16 %v4030
  %v4524 = vunpack.c.l.b16 %v4031
  %v4525 = vunpack.c.h.b16 %v4031
  %v4526 = vunpack.c.l.b16 %v4032
  %v4527 = vunpack.c.h.b16 %v4032
  %v4528 = vunpack.c.l.b16 %v4033
  %v4529 = vunpack.c.h.b16 %v4033
  %v4530 = vunpack.c.l.b16 %v4034
  %v4531 = vunpack.c.h.b16 %v4034
  %v4532 = vunpack.c.l.b16 %v4035
  %v4533 = vunpack.c.h.b16 %v4035
  %v4534 = vunpack.c.l.b16 %v4036
  %v4535 = vunpack.c.h.b16 %v4036
  %v4536 = vunpack.c.l.b16 %v4037
  %v4537 = vunpack.c.h.b16 %v4037
  %v4538 = vunpack.c.l.b16 %v4038
  %v4539 = vunpack.c.h.b16 %v4038
  %v4540 = vunpack.c.l.b16 %v4039
  %v4541 = vunpack.c.h.b16 %v4039
  %v4542 = vunpack.c.l.b16 %v4040
  %v4543 = vunpack.c.h.b16 %v4040
  %v4544 = vunpack.c.l.b16 %v4041
  %v4545 = vunpack.c.h.b16 %v4041
  %v4546 = vunpack.c.l.b16 %v4042
  %v4547 = vunpack.c.h.b16 %v4042
  %v4548 = vunpack.c.l.b16 %v4043
  %v4549 = vunpack.c.h.b16 %v4043
  %v4550 = vunpack.c.l.b16 %v4044
  %v4551 = vunpack.c.h.b16 %v4044
  %v4552 = vunpack.c.l.b16 %v4045
  %v4553 = vunpack.c.h.b16 %v4045
  %v4554 = vunpack.c.l.b16 %v4046
  %v4555 = vunpack.c.h.b16 %v4046
  %v4556 = vunpack.c.l.b16 %v4047
  %v4557 = vunpack.c.h.b16 %v4047
  %v4558 = vunpack.c.l.b16 %v4048
  %v4559 = vunpack.c.h.b16 %v4048
  %v4560 = vunpack.c.l.b16 %v4049
  %v4561 = vunpack.c.h.b16 %v4049
  %v4562 = vunpack.c.l.b16 %v4050
  %v4563 = vunpack.c.h.b16 %v4050
  %v4564 = vunpack.c.l.b16 %v4051
  %v4565 = vunpack.c.h.b16 %v4051
  %v4566 = vunpack.c.l.b16 %v4052
  %v4567 = vunpack.c.h.b16 %v4052
  %v4568 = vunpack.c.l.b16 %v4053
  %v4569 = vunpack.c.h.b16 %v4053
  %v4570 = vunpack.c.l.b16 %v4054
  %v4571 = vunpack.c.h.b16 %v4054
  %v4572 = vunpack.c.l.b16 %v4055
  %v4573 = vunpack.c.h.b16 %v4055
  %v4574 = vunpack.c.l.b16 %v4056
  %v4575 = vunpack.c.h.b16 %v4056
  %v4576 = vunpack.c.l.b16 %v4057
  %v4577 = vunpack.c.h.b16 %v4057
  %v4578 = vunpack.c.l.b16 %v4058
  %v4579 = vunpack.c.h.b16 %v4058
  %v4580 = vunpack.c.l.b16 %v4059
  %v4581 = vunpack.c.h.b16 %v4059
  %v4582 = vunpack.c.l.b16 %v4060
  %v4583 = vunpack.c.h.b16 %v4060
  %v4584 = vunpack.c.l.b16 %v4061
  %v4585 = vunpack.c.h.b16 %v4061
  %v4586 = vunpack.c.l.b16 %v4062
  %v4587 = vunpack.c.h.b16 %v4062
  %v4588 = vunpack.c.l.b16 %v4063
  %v4589 = vunpack.c.h.b16 %v4063
  %v4590 = vunpack.c.l.b16 %v4064
  %v4591 = vunpack.c.h.b16 %v4064
  %v4592 = vunpack.c.l.b16 %v4065
  %v4593 = vunpack.c.h.b16 %v4065
  %v4594 = vunpack.c.l.b16 %v4066
  %v4595 = vunpack.c.h.b16 %v4066
  %v4596 = vunpack.c.l.b16 %v4067
  %v4597 = vunpack.c.h.b16 %v4067
  %v4598 = vunpack.c.l.b16 %v4068
  %v4599 = vunpack.c.h.b16 %v4068
  %v4600 = vunpack.c.l.b16 %v4069
  %v4601 = vunpack.c.h.b16 %v4069
  %v4602 = vunpack.c.l.b16 %v4070
  %v4603 = vunpack.c.h.b16 %v4070
  %v4604 = vunpack.c.l.b16 %v4071
  %v4605 = vunpack.c.h.b16 %v4071
  %v4606 = vunpack.c.l.b16 %v4072
  %v4607 = vunpack.c.h.b16 %v4072
  %v4608 = vunpack.c.l.b16 %v4073
  %v4609 = vunpack.c.h.b16 %v4073
  %v4610 = vunpack.c.l.b16 %v4074
  %v4611 = vunpack.c.h.b16 %v4074
  %v4612 = vunpack.c.l.b16 %v4075
  %v4613 = vunpack.c.h.b16 %v4075
  %v4614 = vunpack.c.l.b16 %v4076
  %v4615 = vunpack.c.h.b16 %v4076
  %v4616 = vunpack.c.l.b16 %v4077
  %v4617 = vunpack.c.h.b16 %v4077
  %v4618 = vunpack.c.l.b16 %v4078
  %v4619 = vunpack.c.h.b16 %v4078
  %v4620 = vunpack.c.l.b16 %v4079
  %v4621 = vunpack.c.h.b16 %v4079
  %v4622 = vunpack.c.l.b16 %v4080
  %v4623 = vunpack.c.h.b16 %v4080
  %v4624 = vunpack.c.l.b16 %v4081
  %v4625 = vunpack.c.h.b16 %v4081
  %v4626 = vunpack.c.l.b16 %v4082
  %v4627 = vunpack.c.h.b16 %v4082
  %v4628 = vunpack.c.l.b16 %v4083
  %v4629 = vunpack.c.h.b16 %v4083
  %v4630 = vunpack.c.l.b16 %v4084
  %v4631 = vunpack.c.h.b16 %v4084
  %v4632 = vunpack.c.l.b16 %v4085
  %v4633 = vunpack.c.h.b16 %v4085
  %v4634 = vunpack.c.l.b16 %v4086
  %v4635 = vunpack.c.h.b16 %v4086
  %v4636 = vunpack.c.l.b16 %v4087
  %v4637 = vunpack.c.h.b16 %v4087
  %v4638 = vunpack.c.l.b16 %v4088
  %v4639 = vunpack.c.h.b16 %v4088
  %v4640 = vunpack.c.l.b16 %v4089
  %v4641 = vunpack.c.h.b16 %v4089
  %v4642 = vunpack.c.l.b16 %v4090
  %v4643 = vunpack.c.h.b16 %v4090
  %v4644 = vunpack.c.l.b16 %v4091
  %v4645 = vunpack.c.h.b16 %v4091
  %v4646 = vunpack.c.l.b16 %v4092
  %v4647 = vunpack.c.h.b16 %v4092
  %v4648 = vunpack.c.l.b16 %v4093
  %v4649 = vunpack.c.h.b16 %v4093
  %v4650 = vunpack.c.l.b16 %v4094
  %v4651 = vunpack.c.h.b16 %v4094
  %v4652 = vunpack.c.l.b16 %v4095
  %v4653 = vunpack.c.h.b16 %v4095
  %v4654 = vunpack.c.l.b16 %v4096
  %v4655 = vunpack.c.h.b16 %v4096
  %v4656 = vunpack.c.l.b16 %v4097
  %v4657 = vunpack.c.h.b16 %v4097
  %v4658 = vunpack.c.l.b16 %v4098
  %v4659 = vunpack.c.h.b16 %v4098
  %v4660 = vunpack.c.l.b16 %v4099
  %v4661 = vunpack.c.h.b16 %v4099
  %v4662 = vunpack.c.l.b16 %v4100
  %v4663 = vunpack.c.h.b16 %v4100
  %v4664 = vunpack.c.l.b16 %v4101
  %v4665 = vunpack.c.h.b16 %v4101
  %v4666 = vunpack.c.l.b16 %v4102
  %v4667 = vunpack.c.h.b16 %v4102
  %v4668 = vunpack.c.l.b16 %v4103
  %v4669 = vunpack.c.h.b16 %v4103
  %v4670 = vunpack.c.l.b16 %v4104
  %v4671 = vunpack.c.h.b16 %v4104
  %v4672 = vunpack.c.l.b16 %v4105
  %v4673 = vunpack.c.h.b16 %v4105
  %v4674 = vunpack.c.l.b16 %v4106
  %v4675 = vunpack.c.h.b16 %v4106
  %v4676 = vunpack.c.l.b16 %v4107
  %v4677 = vunpack.c.h.b16 %v4107
  %v4678 = vunpack.c.l.b16 %v4108
  %v4679 = vunpack.c.h.b16 %v4108
  %v4680 = vunpack.c.l.b16 %v4109
  %v4681 = vunpack.c.h.b16 %v4109
  %v4682 = vunpack.c.l.b16 %v4110
  %v4683 = vunpack.c.h.b16 %v4110
  %v4684 = vunpack.c.l.b16 %v4111
  %v4685 = vunpack.c.h.b16 %v4111
  %v4686 = vunpack.c.l.b16 %v4112
  %v4687 = vunpack.c.h.b16 %v4112
  %v4688 = vunpack.c.l.b16 %v4113
  %v4689 = vunpack.c.h.b16 %v4113
  %v4690 = vunpack.c.l.b16 %v4114
  %v4691 = vunpack.c.h.b16 %v4114
  %v4692 = vunpack.c.l.b16 %v4115
  %v4693 = vunpack.c.h.b16 %v4115
  %v4694 = vunpack.c.l.b16 %v4116
  %v4695 = vunpack.c.h.b16 %v4116
  %v4696 = vunpack.c.l.b16 %v4117
  %v4697 = vunpack.c.h.b16 %v4117
  %v4698 = vunpack.c.l.b16 %v4118
  %v4699 = vunpack.c.h.b16 %v4118
  %v4700 = vunpack.c.l.b16 %v4119
  %v4701 = vunpack.c.h.b16 %v4119
  %v4702 = vunpack.c.l.b16 %v4120
  %v4703 = vunpack.c.h.b16 %v4120
  %v4704 = vunpack.c.l.b16 %v4121
  %v4705 = vunpack.c.h.b16 %v4121
  %v4706 = vunpack.c.l.b16 %v4122
  %v4707 = vunpack.c.h.b16 %v4122
  %v4708 = vunpack.c.l.b16 %v4123
  %v4709 = vunpack.c.h.b16 %v4123
  %v4710 = vunpack.c.l.b16 %v4124
  %v4711 = vunpack.c.h.b16 %v4124
  %v4712 = vunpack.c.l.b16 %v4125
  %v4713 = vunpack.c.h.b16 %v4125
  %v4714 = vunpack.c.l.b16 %v4126
  %v4715 = vunpack.c.h.b16 %v4126
  %v4716 = vunpack.c.l.b16 %v4127
  %v4717 = vunpack.c.h.b16 %v4127
  %v4718 = vunpack.c.l.b16 %v4128
  %v4719 = vunpack.c.h.b16 %v4128
  %v4720 = vunpack.c.l.b16 %v4129
  %v4721 = vunpack.c.h.b16 %v4129
  %v4722 = vunpack.c.l.b16 %v4130
  %v4723 = vunpack.c.h.b16 %v4130
  %v4724 = vunpack.c.l.b16 %v4131
  %v4725 = vunpack.c.h.b16 %v4131
  %v4726 = vunpack.c.l.b16 %v4132
  %v4727 = vunpack.c.h.b16 %v4132
  %v4728 = vunpack.c.l.b16 %v4133
  %v4729 = vunpack.c.h.b16 %v4133
  %v4730 = vunpack.c.l.b16 %v4134
  %v4731 = vunpack.c.h.b16 %v4134
  %v4732 = vunpack.c.l.b16 %v4135
  %v4733 = vunpack.c.h.b16 %v4135
  %v4734 = vpack.c.b16 %v4354, %v4350
  %v4735 = vpack.c.b16 %v4355, %v4351
  %v4736 = vpack.c.b16 %v4356, %v4352
  %v4737 = vpack.c.b16 %v4357, %v4353
  %v4738 = vpack.c.b16 %v4362, %v4358
  %v4739 = vpack.c.b16 %v4363, %v4359
  %v4740 = vpack.c.b16 %v4364, %v4360
  %v4741 = vpack.c.b16 %v4365, %v4361
  %v4742 = vpack.c.b16 %v4370, %v4366
  %v4743 = vpack.c.b16 %v4371, %v4367
  %v4744 = vpack.c.b16 %v4372, %v4368
  %v4745 = vpack.c.b16 %v4373, %v4369
  %v4746 = vpack.c.b16 %v4378, %v4374
  %v4747 = vpack.c.b16 %v4379, %v4375
  %v4748 = vpack.c.b16 %v4380, %v4376
  %v4749 = vpack.c.b16 %v4381, %v4377
  %v4750 = vpack.c.b16 %v4386, %v4382
  %v4751 = vpack.c.b16 %v4387, %v4383
  %v4752 = vpack.c.b16 %v4388, %v4384
  %v4753 = vpack.c.b16 %v4389, %v4385
  %v4754 = vpack.c.b16 %v4394, %v4390
  %v4755 = vpack.c.b16 %v4395, %v4391
  %v4756 = vpack.c.b16 %v4396, %v4392
  %v4757 = vpack.c.b16 %v4397, %v4393
  %v4758 = vpack.c.b16 %v4402, %v4398
  %v4759 = vpack.c.b16 %v4403, %v4399
  %v4760 = vpack.c.b16 %v4404, %v4400
  %v4761 = vpack.c.b16 %v4405, %v4401
  %v4762 = vpack.c.b16 %v4410, %v4406
  %v4763 = vpack.c.b16 %v4411, %v4407
  %v4764 = vpack.c.b16 %v4412, %v4408
  %v4765 = vpack.c.b16 %v4413, %v4409
  %v4766 = vpack.c.b16 %v4418, %v4414
  %v4767 = vpack.c.b16 %v4419, %v4415
  %v4768 = vpack.c.b16 %v4420, %v4416
  %v4769 = vpack.c.b16 %v4421, %v4417
  %v4770 = vpack.c.b16 %v4426, %v4422
  %v4771 = vpack.c.b16 %v4427, %v4423
  %v4772 = vpack.c.b16 %v4428, %v4424
  %v4773 = vpack.c.b16 %v4429, %v4425
  %v4774 = vpack.c.b16 %v4434, %v4430
  %v4775 = vpack.c.b16 %v4435, %v4431
  %v4776 = vpack.c.b16 %v4436, %v4432
  %v4777 = vpack.c.b16 %v4437, %v4433
  %v4778 = vpack.c.b16 %v4442, %v4438
  %v4779 = vpack.c.b16 %v4443, %v4439
  %v4780 = vpack.c.b16 %v4444, %v4440
  %v4781 = vpack.c.b16 %v4445, %v4441
  %v4782 = vpack.c.b16 %v4450, %v4446
  %v4783 = vpack.c.b16 %v4451, %v4447
  %v4784 = vpack.c.b16 %v4452, %v4448
  %v4785 = vpack.c.b16 %v4453, %v4449
  %v4786 = vpack.c.b16 %v4458, %v4454
  %v4787 = vpack.c.b16 %v4459, %v4455
  %v4788 = vpack.c.b16 %v4460, %v4456
  %v4789 = vpack.c.b16 %v4461, %v4457
  %v4790 = vpack.c.b16 %v4466, %v4462
  %v4791 = vpack.c.b16 %v4467, %v4463
  %v4792 = vpack.c.b16 %v4468, %v4464
  %v4793 = vpack.c.b16 %v4469, %v4465
  %v4794 = vpack.c.b16 %v4474, %v4470
  %v4795 = vpack.c.b16 %v4475, %v4471
  %v4796 = vpack.c.b16 %v4476, %v4472
  %v4797 = vpack.c.b16 %v4477, %v4473
  %v4798 = vpack.c.b16 %v4482, %v4478
  %v4799 = vpack.c.b16 %v4483, %v4479
  %v4800 = vpack.c.b16 %v4484, %v4480
  %v4801 = vpack.c.b16 %v4485, %v4481
  %v4802 = vpack.c.b16 %v4490, %v4486
  %v4803 = vpack.c.b16 %v4491, %v4487
  %v4804 = vpack.c.b16 %v4492, %v4488
  %v4805 = vpack.c.b16 %v4493, %v4489
  %v4806 = vpack.c.b16 %v4498, %v4494
  %v4807 = vpack.c.b16 %v4499, %v4495
  %v4808 = vpack.c.b16 %v4500, %v4496
  %v4809 = vpack.c.b16 %v4501, %v4497
  %v4810 = vpack.c.b16 %v4506, %v4502
  %v4811 = vpack.c.b16 %v4507, %v4503
  %v4812 = vpack.c.b16 %v4508, %v4504
  %v4813 = vpack.c.b16 %v4509, %v4505
  %v4814 = vpack.c.b16 %v4514, %v4510
  %v4815 = vpack.c.b16 %v4515, %v4511
  %v4816 = vpack.c.b16 %v4516, %v4512
  %v4817 = vpack.c.b16 %v4517, %v4513
  %v4818 = vpack.c.b16 %v4522, %v4518
  %v4819 = vpack.c.b16 %v4523, %v4519
  %v4820 = vpack.c.b16 %v4524, %v4520
  %v4821 = vpack.c.b16 %v4525, %v4521
  %v4822 = vpack.c.b16 %v4530, %v4526
  %v4823 = vpack.c.b16 %v4531, %v4527
  %v4824 = vpack.c.b16 %v4532, %v4528
  %v4825 = vpack.c.b16 %v4533, %v4529
  %v4826 = vpack.c.b16 %v4538, %v4534
  %v4827 = vpack.c.b16 %v4539, %v4535
  %v4828 = vpack.c.b16 %v4540, %v4536
  %v4829 = vpack.c.b16 %v4541, %v4537
  %v4830 = vpack.c.b16 %v4546, %v4542
  %v4831 = vpack.c.b16 %v4547, %v4543
  %v4832 = vpack.c.b16 %v4548, %v4544
  %v4833 = vpack.c.b16 %v4549, %v4545
  %v4834 = vpack.c.b16 %v4554, %v4550
  %v4835 = vpack.c.b16 %v4555, %v4551
  %v4836 = vpack.c.b16 %v4556, %v4552
  %v4837 = vpack.c.b16 %v4557, %v4553
  %v4838 = vpack.c.b16 %v4562, %v4558
  %v4839 = vpack.c.b16 %v4563, %v4559
  %v4840 = vpack.c.b16 %v4564, %v4560
  %v4841 = vpack.c.b16 %v4565, %v4561
  %v4842 = vpack.c.b16 %v4570, %v4566
  %v4843 = vpack.c.b16 %v4571, %v4567
  %v4844 = vpack.c.b16 %v4572, %v4568
  %v4845 = vpack.c.b16 %v4573, %v4569
  %v4846 = vpack.c.b16 %v4578, %v4574
  %v4847 = vpack.c.b16 %v4579, %v4575
  %v4848 = vpack.c.b16 %v4580, %v4576
  %v4849 = vpack.c.b16 %v4581, %v4577
  %v4850 = vpack.c.b16 %v4586, %v4582
  %v4851 = vpack.c.b16 %v4587, %v4583
  %v4852 = vpack.c.b16 %v4588, %v4584
  %v4853 = vpack.c.b16 %v4589, %v4585
  %v4854 = vpack.c.b16 %v4594, %v4590
  %v4855 = vpack.c.b16 %v4595, %v4591
  %v4856 = vpack.c.b16 %v4596, %v4592
  %v4857 = vpack.c.b16 %v4597, %v4593
  %v4858 = vpack.c.b16 %v4602, %v4598
  %v4859 = vpack.c.b16 %v4603, %v4599
  %v4860 = vpack.c.b16 %v4604, %v4600
  %v4861 = vpack.c.b16 %v4605, %v4601
  %v4862 = vpack.c.b16 %v4610, %v4606
  %v4863 = vpack.c.b16 %v4611, %v4607
  %v4864 = vpack.c.b16 %v4612, %v4608
  %v4865 = vpack.c.b16 %v4613, %v4609
  %v4866 = vpack.c.b16 %v4618, %v4614
  %v4867 = vpack.c.b16 %v4619, %v4615
  %v4868 = vpack.c.b16 %v4620, %v4616
  %v4869 = vpack.c.b16 %v4621, %v4617
  %v4870 = vpack.c.b16 %v4626, %v4622
  %v4871 = vpack.c.b16 %v4627, %v4623
  %v4872 = vpack.c.b16 %v4628, %v4624
  %v4873 = vpack.c.b16 %v4629, %v4625
  %v4874 = vpack.c.b16 %v4634, %v4630
  %v4875 = vpack.c.b16 %v4635, %v4631
  %v4876 = vpack.c.b16 %v4636, %v4632
  %v4877 = vpack.c.b16 %v4637, %v4633
  %v4878 = vpack.c.b16 %v4642, %v4638
  %v4879 = vpack.c.b16 %v4643, %v4639
  %v4880 = vpack.c.b16 %v4644, %v4640
  %v4881 = vpack.c.b16 %v4645, %v4641
  %v4882 = vpack.c.b16 %v4650, %v4646
  %v4883 = vpack.c.b16 %v4651, %v4647
  %v4884 = vpack.c.b16 %v4652, %v4648
  %v4885 = vpack.c.b16 %v4653, %v4649
  %v4886 = vpack.c.b16 %v4658, %v4654
  %v4887 = vpack.c.b16 %v4659, %v4655
  %v4888 = vpack.c.b16 %v4660, %v4656
  %v4889 = vpack.c.b16 %v4661, %v4657
  %v4890 = vpack.c.b16 %v4666, %v4662
  %v4891 = vpack.c.b16 %v4667, %v4663
  %v4892 = vpack.c.b16 %v4668, %v4664
  %v4893 = vpack.c.b16 %v4669, %v4665
  %v4894 = vpack.c.b16 %v4674, %v4670
  %v4895 = vpack.c.b16 %v4675, %v4671
  %v4896 = vpack.c.b16 %v4676, %v4672
  %v4897 = vpack.c.b16 %v4677, %v4673
  %v4898 = vpack.c.b16 %v4682, %v4678
  %v4899 = vpack.c.b16 %v4683, %v4679
  %v4900 = vpack.c.b16 %v4684, %v4680
  %v4901 = vpack.c.b16 %v4685, %v4681
  %v4902 = vpack.c.b16 %v4690, %v4686
  %v4903 = vpack.c.b16 %v4691, %v4687
  %v4904 = vpack.c.b16 %v4692, %v4688
  %v4905 = vpack.c.b16 %v4693, %v4689
  %v4906 = vpack.c.b16 %v4698, %v4694
  %v4907 = vpack.c.b16 %v4699, %v4695
  %v4908 = vpack.c.b16 %v4700, %v4696
  %v4909 = vpack.c.b16 %v4701, %v4697
  %v4910 = vpack.c.b16 %v4706, %v4702
  %v4911 = vpack.c.b16 %v4707, %v4703
  %v4912 = vpack.c.b16 %v4708, %v4704
  %v4913 = vpack.c.b16 %v4709, %v4705
  %v4914 = vpack.c.b16 %v4714, %v4710
  %v4915 = vpack.c.b16 %v4715, %v4711
  %v4916 = vpack.c.b16 %v4716, %v4712
  %v4917 = vpack.c.b16 %v4717, %v4713
  %v4918 = vpack.c.b16 %v4722, %v4718
  %v4919 = vpack.c.b16 %v4723, %v4719
  %v4920 = vpack.c.b16 %v4724, %v4720
  %v4921 = vpack.c.b16 %v4725, %v4721
  %v4922 = vpack.c.b16 %v4730, %v4726
  %v4923 = vpack.c.b16 %v4731, %v4727
  %v4924 = vpack.c.b16 %v4732, %v4728
  %v4925 = vpack.c.b16 %v4733, %v4729
  %5118 = vmatprep.subr.bf16.mxu0 %v4735
  %5119 = vmatpush1.bf16.msra.mxu0 %v4734
  %5120 = vmatprep.subr.bf16.mxu0 %v4739
  %5121 = vmatpush1.bf16.msra.mxu0 %v4738
  %5122 = vmatprep.subr.bf16.mxu0 %v4743
  %5123 = vmatpush1.bf16.msra.mxu0 %v4742
  %5124 = vmatprep.subr.bf16.mxu0 %v4747
  %5125 = vmatpush1.bf16.msra.mxu0 %v4746
  %5126 = vmatprep.subr.bf16.mxu0 %v4751
  %5127 = vmatpush1.bf16.msra.mxu0 %v4750
  %5128 = vmatprep.subr.bf16.mxu0 %v4755
  %5129 = vmatpush1.bf16.msra.mxu0 %v4754
  %5130 = vmatprep.subr.bf16.mxu0 %v4759
  %5131 = vmatpush1.bf16.msra.mxu0 %v4758
  %5132 = vmatprep.subr.bf16.mxu0 %v4763
  %5133 = vmatpush1.bf16.msra.mxu0 %v4762
  %5134 = vmatprep.subr.bf16.mxu0 %v4767
  %5135 = vmatpush1.bf16.msra.mxu0 %v4766
  %5136 = vmatprep.subr.bf16.mxu0 %v4771
  %5137 = vmatpush1.bf16.msra.mxu0 %v4770
  %5138 = vmatprep.subr.bf16.mxu0 %v4775
  %5139 = vmatpush1.bf16.msra.mxu0 %v4774
  %5140 = vmatprep.subr.bf16.mxu0 %v4779
  %5141 = vmatpush1.bf16.msra.mxu0 %v4778
  %5142 = vmatprep.subr.bf16.mxu0 %v4783
  %5143 = vmatpush1.bf16.msra.mxu0 %v4782
  %5144 = vmatprep.subr.bf16.mxu0 %v4787
  %5145 = vmatpush1.bf16.msra.mxu0 %v4786
  %5146 = vmatprep.subr.bf16.mxu0 %v4791
  %5147 = vmatpush1.bf16.msra.mxu0 %v4790
  %5148 = vmatprep.subr.bf16.mxu0 %v4795
  %5149 = vmatpush1.bf16.msra.mxu0 %v4794
  %5150 = vmatprep.mubr.bf16.mxu0 %v3939
  %5151 = vmatmul.mubr.bf16.gmra.mrb[0].mxu0 %v3938
  %v5152 = vpop.f32.mrb[0].mxu0
  %v5153 = vadd.f32 %v4141, %v5152
  %v5154 = vpop.f32.mrb[0].mxu0
  %v5155 = vadd.f32 %v4145, %v5154
  %v5156 = vpop.f32.mrb[0].mxu0
  %v5157 = vpop.f32.mrb[0].mxu0
  %5158 = vdwg.mxu0
  %5159 = vmatprep.subr.bf16.mxu0 %v4799
  %5160 = vmatpush1.bf16.msra.mxu0 %v4798
  %5161 = vmatprep.subr.bf16.mxu0 %v4803
  %5162 = vmatpush1.bf16.msra.mxu0 %v4802
  %5163 = vmatprep.subr.bf16.mxu0 %v4807
  %5164 = vmatpush1.bf16.msra.mxu0 %v4806
  %5165 = vmatprep.subr.bf16.mxu0 %v4811
  %5166 = vmatpush1.bf16.msra.mxu0 %v4810
  %5167 = vmatprep.subr.bf16.mxu0 %v4815
  %5168 = vmatpush1.bf16.msra.mxu0 %v4814
  %5169 = vmatprep.subr.bf16.mxu0 %v4819
  %5170 = vmatpush1.bf16.msra.mxu0 %v4818
  %5171 = vmatprep.subr.bf16.mxu0 %v4823
  %5172 = vmatpush1.bf16.msra.mxu0 %v4822
  %5173 = vmatprep.subr.bf16.mxu0 %v4827
  %5174 = vmatpush1.bf16.msra.mxu0 %v4826
  %5175 = vmatprep.subr.bf16.mxu0 %v4831
  %5176 = vmatpush1.bf16.msra.mxu0 %v4830
  %5177 = vmatprep.subr.bf16.mxu0 %v4835
  %5178 = vmatpush1.bf16.msra.mxu0 %v4834
  %5179 = vmatprep.subr.bf16.mxu0 %v4839
  %5180 = vmatpush1.bf16.msra.mxu0 %v4838
  %5181 = vmatprep.subr.bf16.mxu0 %v4843
  %5182 = vmatpush1.bf16.msra.mxu0 %v4842
  %5183 = vmatprep.subr.bf16.mxu0 %v4847
  %5184 = vmatpush1.bf16.msra.mxu0 %v4846
  %5185 = vmatprep.subr.bf16.mxu0 %v4851
  %5186 = vmatpush1.bf16.msra.mxu0 %v4850
  %5187 = vmatprep.subr.bf16.mxu0 %v4855
  %5188 = vmatpush1.bf16.msra.mxu0 %v4854
  %5189 = vmatprep.subr.bf16.mxu0 %v4859
  %5190 = vmatpush1.bf16.msra.mxu0 %v4858
  %5191 = vmatprep.mubr.bf16.mxu0 %v3941
  %5192 = vmatmul.mubr.bf16.gmra.mrb[0].mxu0 %v3940
  %v5193 = vpop.f32.mrb[0].mxu0
  %v5194 = vadd.f32 %v5153, %v5193
  %v5195 = vpop.f32.mrb[0].mxu0
  %v5196 = vadd.f32 %v5155, %v5195
  %v5197 = vpop.f32.mrb[0].mxu0
  %v5198 = vpop.f32.mrb[0].mxu0
  %5199 = vdwg.mxu0
  %5200 = vmatprep.subr.bf16.mxu0 %v4863
  %5201 = vmatpush1.bf16.msra.mxu0 %v4862
  %5202 = vmatprep.subr.bf16.mxu0 %v4867
  %5203 = vmatpush1.bf16.msra.mxu0 %v4866
  %5204 = vmatprep.subr.bf16.mxu0 %v4871
  %5205 = vmatpush1.bf16.msra.mxu0 %v4870
  %5206 = vmatprep.subr.bf16.mxu0 %v4875
  %5207 = vmatpush1.bf16.msra.mxu0 %v4874
  %5208 = vmatprep.subr.bf16.mxu0 %v4879
  %5209 = vmatpush1.bf16.msra.mxu0 %v4878
  %5210 = vmatprep.subr.bf16.mxu0 %v4883
  %5211 = vmatpush1.bf16.msra.mxu0 %v4882
  %5212 = vmatprep.subr.bf16.mxu0 %v4887
  %5213 = vmatpush1.bf16.msra.mxu0 %v4886
  %5214 = vmatprep.subr.bf16.mxu0 %v4891
  %5215 = vmatpush1.bf16.msra.mxu0 %v4890
  %5216 = vmatprep.subr.bf16.mxu0 %v4895
  %5217 = vmatpush1.bf16.msra.mxu0 %v4894
  %5218 = vmatprep.subr.bf16.mxu0 %v4899
  %5219 = vmatpush1.bf16.msra.mxu0 %v4898
  %5220 = vmatprep.subr.bf16.mxu0 %v4903
  %5221 = vmatpush1.bf16.msra.mxu0 %v4902
  %5222 = vmatprep.subr.bf16.mxu0 %v4907
  %5223 = vmatpush1.bf16.msra.mxu0 %v4906
  %5224 = vmatprep.subr.bf16.mxu0 %v4911
  %5225 = vmatpush1.bf16.msra.mxu0 %v4910
  %5226 = vmatprep.subr.bf16.mxu0 %v4915
  %5227 = vmatpush1.bf16.msra.mxu0 %v4914
  %5228 = vmatprep.subr.bf16.mxu0 %v4919
  %5229 = vmatpush1.bf16.msra.mxu0 %v4918
  %5230 = vmatprep.subr.bf16.mxu0 %v4923
  %5231 = vmatpush1.bf16.msra.mxu0 %v4922
  %5232 = vmatprep.mubr.bf16.mxu0 %v3943
  %5233 = vmatmul.mubr.bf16.gmra.mrb[0].mxu0 %v3942
  %v5234 = vpop.f32.mrb[0].mxu0
  %v5235 = vadd.f32 %v5194, %v5234
  %v5236 = vpop.f32.mrb[0].mxu0
  %v5237 = vadd.f32 %v5196, %v5236
  %v5238 = vpop.f32.mrb[0].mxu0
  %v5239 = vpop.f32.mrb[0].mxu0
  %5240 = vdwg.mxu0
  %5241 = vmatprep.subr.bf16.mxu0 %v4737
  %5242 = vmatpush1.bf16.msra.mxu0 %v4736
  %5243 = vmatprep.subr.bf16.mxu0 %v4741
  %5244 = vmatpush1.bf16.msra.mxu0 %v4740
  %5245 = vmatprep.subr.bf16.mxu0 %v4745
  %5246 = vmatpush1.bf16.msra.mxu0 %v4744
  %5247 = vmatprep.subr.bf16.mxu0 %v4749
  %5248 = vmatpush1.bf16.msra.mxu0 %v4748
  %5249 = vmatprep.subr.bf16.mxu0 %v4753
  %5250 = vmatpush1.bf16.msra.mxu0 %v4752
  %5251 = vmatprep.subr.bf16.mxu0 %v4757
  %5252 = vmatpush1.bf16.msra.mxu0 %v4756
  %5253 = vmatprep.subr.bf16.mxu0 %v4761
  %5254 = vmatpush1.bf16.msra.mxu0 %v4760
  %5255 = vmatprep.subr.bf16.mxu0 %v4765
  %5256 = vmatpush1.bf16.msra.mxu0 %v4764
  %5257 = vmatprep.subr.bf16.mxu0 %v4769
  %5258 = vmatpush1.bf16.msra.mxu0 %v4768
  %5259 = vmatprep.subr.bf16.mxu0 %v4773
  %5260 = vmatpush1.bf16.msra.mxu0 %v4772
  %5261 = vmatprep.subr.bf16.mxu0 %v4777
  %5262 = vmatpush1.bf16.msra.mxu0 %v4776
  %5263 = vmatprep.subr.bf16.mxu0 %v4781
  %5264 = vmatpush1.bf16.msra.mxu0 %v4780
  %5265 = vmatprep.subr.bf16.mxu0 %v4785
  %5266 = vmatpush1.bf16.msra.mxu0 %v4784
  %5267 = vmatprep.subr.bf16.mxu0 %v4789
  %5268 = vmatpush1.bf16.msra.mxu0 %v4788
  %5269 = vmatprep.subr.bf16.mxu0 %v4793
  %5270 = vmatpush1.bf16.msra.mxu0 %v4792
  %5271 = vmatprep.subr.bf16.mxu0 %v4797
  %5272 = vmatpush1.bf16.msra.mxu0 %v4796
  %5273 = vmatprep.mubr.bf16.mxu0 %v3939
  %5274 = vmatmul.mubr.bf16.gmra.mrb[0].mxu0 %v3938
  %v5275 = vpop.f32.mrb[0].mxu0
  %v5276 = vadd.f32 %v4149, %v5275
  %v5277 = vpop.f32.mrb[0].mxu0
  %v5278 = vadd.f32 %v4153, %v5277
  %v5279 = vpop.f32.mrb[0].mxu0
  %v5280 = vpop.f32.mrb[0].mxu0
  %5281 = vdwg.mxu0
  %5282 = vmatprep.subr.bf16.mxu0 %v4801
  %5283 = vmatpush1.bf16.msra.mxu0 %v4800
  %5284 = vmatprep.subr.bf16.mxu0 %v4805
  %5285 = vmatpush1.bf16.msra.mxu0 %v4804
  %5286 = vmatprep.subr.bf16.mxu0 %v4809
  %5287 = vmatpush1.bf16.msra.mxu0 %v4808
  %5288 = vmatprep.subr.bf16.mxu0 %v4813
  %5289 = vmatpush1.bf16.msra.mxu0 %v4812
  %5290 = vmatprep.subr.bf16.mxu0 %v4817
  %5291 = vmatpush1.bf16.msra.mxu0 %v4816
  %5292 = vmatprep.subr.bf16.mxu0 %v4821
  %5293 = vmatpush1.bf16.msra.mxu0 %v4820
  %5294 = vmatprep.subr.bf16.mxu0 %v4825
  %5295 = vmatpush1.bf16.msra.mxu0 %v4824
  %5296 = vmatprep.subr.bf16.mxu0 %v4829
  %5297 = vmatpush1.bf16.msra.mxu0 %v4828
  %5298 = vmatprep.subr.bf16.mxu0 %v4833
  %5299 = vmatpush1.bf16.msra.mxu0 %v4832
  %5300 = vmatprep.subr.bf16.mxu0 %v4837
  %5301 = vmatpush1.bf16.msra.mxu0 %v4836
  %5302 = vmatprep.subr.bf16.mxu0 %v4841
  %5303 = vmatpush1.bf16.msra.mxu0 %v4840
  %5304 = vmatprep.subr.bf16.mxu0 %v4845
  %5305 = vmatpush1.bf16.msra.mxu0 %v4844
  %5306 = vmatprep.subr.bf16.mxu0 %v4849
  %5307 = vmatpush1.bf16.msra.mxu0 %v4848
  %5308 = vmatprep.subr.bf16.mxu0 %v4853
  %5309 = vmatpush1.bf16.msra.mxu0 %v4852
  %5310 = vmatprep.subr.bf16.mxu0 %v4857
  %5311 = vmatpush1.bf16.msra.mxu0 %v4856
  %5312 = vmatprep.subr.bf16.mxu0 %v4861
  %5313 = vmatpush1.bf16.msra.mxu0 %v4860
  %5314 = vmatprep.mubr.bf16.mxu0 %v3941
  %5315 = vmatmul.mubr.bf16.gmra.mrb[0].mxu0 %v3940
  %v5316 = vpop.f32.mrb[0].mxu0
  %v5317 = vadd.f32 %v5276, %v5316
  %v5318 = vpop.f32.mrb[0].mxu0
  %v5319 = vadd.f32 %v5278, %v5318
  %v5320 = vpop.f32.mrb[0].mxu0
  %v5321 = vpop.f32.mrb[0].mxu0
  %5322 = vdwg.mxu0
  %5323 = vmatprep.subr.bf16.mxu0 %v4865
  %5324 = vmatpush1.bf16.msra.mxu0 %v4864
  %5325 = vmatprep.subr.bf16.mxu0 %v4869
  %5326 = vmatpush1.bf16.msra.mxu0 %v4868
  %5327 = vmatprep.subr.bf16.mxu0 %v4873
  %5328 = vmatpush1.bf16.msra.mxu0 %v4872
  %5329 = vmatprep.subr.bf16.mxu0 %v4877
  %5330 = vmatpush1.bf16.msra.mxu0 %v4876
  %5331 = vmatprep.subr.bf16.mxu0 %v4881
  %5332 = vmatpush1.bf16.msra.mxu0 %v4880
  %5333 = vmatprep.subr.bf16.mxu0 %v4885
  %5334 = vmatpush1.bf16.msra.mxu0 %v4884
  %5335 = vmatprep.subr.bf16.mxu0 %v4889
  %5336 = vmatpush1.bf16.msra.mxu0 %v4888
  %5337 = vmatprep.subr.bf16.mxu0 %v4893
  %5338 = vmatpush1.bf16.msra.mxu0 %v4892
  %5339 = vmatprep.subr.bf16.mxu0 %v4897
  %5340 = vmatpush1.bf16.msra.mxu0 %v4896
  %5341 = vmatprep.subr.bf16.mxu0 %v4901
  %5342 = vmatpush1.bf16.msra.mxu0 %v4900
  %5343 = vmatprep.subr.bf16.mxu0 %v4905
  %5344 = vmatpush1.bf16.msra.mxu0 %v4904
  %5345 = vmatprep.subr.bf16.mxu0 %v4909
  %5346 = vmatpush1.bf16.msra.mxu0 %v4908
  %5347 = vmatprep.subr.bf16.mxu0 %v4913
  %5348 = vmatpush1.bf16.msra.mxu0 %v4912
  %5349 = vmatprep.subr.bf16.mxu0 %v4917
  %5350 = vmatpush1.bf16.msra.mxu0 %v4916
  %5351 = vmatprep.subr.bf16.mxu0 %v4921
  %5352 = vmatpush1.bf16.msra.mxu0 %v4920
  %5353 = vmatprep.subr.bf16.mxu0 %v4925
  %5354 = vmatpush1.bf16.msra.mxu0 %v4924
  %5355 = vmatprep.mubr.bf16.mxu0 %v3943
  %5356 = vmatmul.mubr.bf16.gmra.mrb[0].mxu0 %v3942
  %v5357 = vpop.f32.mrb[0].mxu0
  %v5358 = vadd.f32 %v5317, %v5357
  %v5359 = vpop.f32.mrb[0].mxu0
  %v5360 = vadd.f32 %v5319, %v5359
  %v5361 = vpop.f32.mrb[0].mxu0
  %v5362 = vpop.f32.mrb[0].mxu0
  %5363 = vdwg.mxu0
  %v5364 = vld [vmem:[%s13] sm:$0xf]
  %v5365 = vld [vmem:[%s14] sm:$0xf]
  %v5366 = vadd.f32 %v5235, %v5237
  %v5367 = vadd.f32 %v5366, %v5358
  %v5368 = vadd.f32 %v5367, %v5360
  %5369 = vadd.xlane.f32.xlu0 %v5368
  %v5370 = vpop.xlane.xlu0 %5369
  %v5371 = vrcp.pop 512.0
  %v5372 = vmul.f32 %v5370, %v5371
  %v5373 = vsub.f32 %v5235, %v5372
  %v5374 = vsub.f32 %v5237, %v5372
  %v5375 = vsub.f32 %v5358, %v5372
  %v5376 = vsub.f32 %v5360, %v5372
  %v5377 = vmul.f32 %v5373, %v5373
  %v5378 = vmul.f32 %v5374, %v5374
  %v5379 = vmul.f32 %v5375, %v5375
  %v5380 = vmul.f32 %v5376, %v5376
  %v5381 = vadd.f32 %v5377, %v5378
  %v5382 = vadd.f32 %v5381, %v5379
  %v5383 = vadd.f32 %v5382, %v5380
  %5384 = vadd.xlane.f32.xlu0 %v5383
  %v5385 = vpop.xlane.xlu0 %5384
  %v5386 = vmul.f32 %v5385, %v5371
  %v5387 = vadd.f32 %v5386, 1e-05
  %v5388 = vrsqrt.pop %v5387
  %v5389 = vmul.f32 %v5373, %v5388
  %v5390 = vmul.f32 %v5374, %v5388
  %v5391 = vmul.f32 %v5375, %v5388
  %v5392 = vmul.f32 %v5376, %v5388
  %v5394 = vlaneseq
  %v5395 = vshrl.u32 %v5394, 7
  %v5396 = vsub.s32 0, %v5395
  %v5397 = vrot.slane %v5364, %v5396
  %v5398 = vlaneseq
  %v5399 = vshrl.u32 %v5398, 7
  %v5400 = vsub.s32 1, %v5399
  %v5401 = vrot.slane %v5364, %v5400
  %v5402 = vlaneseq
  %v5403 = vshrl.u32 %v5402, 7
  %v5404 = vsub.s32 2, %v5403
  %v5405 = vrot.slane %v5364, %v5404
  %v5406 = vlaneseq
  %v5407 = vshrl.u32 %v5406, 7
  %v5408 = vsub.s32 3, %v5407
  %v5409 = vrot.slane %v5364, %v5408
  %v5414 = vmul.f32 %v5389, %v5397
  %v5415 = vmul.f32 %v5390, %v5401
  %v5416 = vmul.f32 %v5391, %v5405
  %v5417 = vmul.f32 %v5392, %v5409
  %v5419 = vlaneseq
  %v5420 = vshrl.u32 %v5419, 7
  %v5421 = vsub.s32 0, %v5420
  %v5422 = vrot.slane %v5365, %v5421
  %v5423 = vlaneseq
  %v5424 = vshrl.u32 %v5423, 7
  %v5425 = vsub.s32 1, %v5424
  %v5426 = vrot.slane %v5365, %v5425
  %v5427 = vlaneseq
  %v5428 = vshrl.u32 %v5427, 7
  %v5429 = vsub.s32 2, %v5428
  %v5430 = vrot.slane %v5365, %v5429
  %v5431 = vlaneseq
  %v5432 = vshrl.u32 %v5431, 7
  %v5433 = vsub.s32 3, %v5432
  %v5434 = vrot.slane %v5365, %v5433
  %v5439 = vadd.f32 %v5414, %v5422
  %v5440 = vadd.f32 %v5415, %v5426
  %v5441 = vadd.f32 %v5416, %v5430
  %v5442 = vadd.f32 %v5417, %v5434
  %v5443 = vmax.f32 %v5439, 0.0
  %v5444 = vmax.f32 %v5440, 0.0
  %v5445 = vmax.f32 %v5441, 0.0
  %v5446 = vmax.f32 %v5442, 0.0
  %v5447 = vpack.c.bf16 %v5443, %v5443
  %v5448 = vpack.c.bf16 %v5444, %v5444
  %v5449 = vpack.c.bf16 %v5445, %v5445
  %v5450 = vpack.c.bf16 %v5446, %v5446
  %v5451 = vld [vmem:[%s15] sm:$0xf]
  %v5452 = vld [vmem:[%s15 + $0x4] sm:$0xf]
  %v5453 = vld [vmem:[%s15 + $0x8] sm:$0xf]
  %v5454 = vld [vmem:[%s15 + $0xc] sm:$0xf]
  %v5455 = vld [vmem:[%s15 + $0x10] sm:$0xf]
  %v5456 = vld [vmem:[%s15 + $0x14] sm:$0xf]
  %v5457 = vld [vmem:[%s15 + $0x18] sm:$0xf]
  %v5458 = vld [vmem:[%s15 + $0x1c] sm:$0xf]
  %v5459 = vld [vmem:[%s15 + $0x20] sm:$0xf]
  %v5460 = vld [vmem:[%s15 + $0x24] sm:$0xf]
  %v5461 = vld [vmem:[%s15 + $0x28] sm:$0xf]
  %v5462 = vld [vmem:[%s15 + $0x2c] sm:$0xf]
  %v5463 = vld [vmem:[%s15 + $0x30] sm:$0xf]
  %v5464 = vld [vmem:[%s15 + $0x34] sm:$0xf]
  %v5465 = vld [vmem:[%s15 + $0x38] sm:$0xf]
  %v5466 = vld [vmem:[%s15 + $0x3c] sm:$0xf]
  %v5467 = vld [vmem:[%s15 + $0x40] sm:$0xf]
  %v5468 = vld [vmem:[%s15 + $0x44] sm:$0xf]
  %v5469 = vld [vmem:[%s15 + $0x48] sm:$0xf]
  %v5470 = vld [vmem:[%s15 + $0x4c] sm:$0xf]
  %v5471 = vld [vmem:[%s15 + $0x50] sm:$0xf]
  %v5472 = vld [vmem:[%s15 + $0x54] sm:$0xf]
  %v5473 = vld [vmem:[%s15 + $0x58] sm:$0xf]
  %v5474 = vld [vmem:[%s15 + $0x5c] sm:$0xf]
  %v5475 = vld [vmem:[%s15 + $0x60] sm:$0xf]
  %v5476 = vld [vmem:[%s15 + $0x64] sm:$0xf]
  %v5477 = vld [vmem:[%s15 + $0x68] sm:$0xf]
  %v5478 = vld [vmem:[%s15 + $0x6c] sm:$0xf]
  %v5479 = vld [vmem:[%s15 + $0x70] sm:$0xf]
  %v5480 = vld [vmem:[%s15 + $0x74] sm:$0xf]
  %v5481 = vld [vmem:[%s15 + $0x78] sm:$0xf]
  %v5482 = vld [vmem:[%s15 + $0x7c] sm:$0xf]
  %v5483 = vld [vmem:[%s15 + $0x80] sm:$0xf]
  %v5484 = vld [vmem:[%s15 + $0x84] sm:$0xf]
  %v5485 = vld [vmem:[%s15 + $0x88] sm:$0xf]
  %v5486 = vld [vmem:[%s15 + $0x8c] sm:$0xf]
  %v5487 = vld [vmem:[%s15 + $0x90] sm:$0xf]
  %v5488 = vld [vmem:[%s15 + $0x94] sm:$0xf]
  %v5489 = vld [vmem:[%s15 + $0x98] sm:$0xf]
  %v5490 = vld [vmem:[%s15 + $0x9c] sm:$0xf]
  %v5491 = vld [vmem:[%s15 + $0xa0] sm:$0xf]
  %v5492 = vld [vmem:[%s15 + $0xa4] sm:$0xf]
  %v5493 = vld [vmem:[%s15 + $0xa8] sm:$0xf]
  %v5494 = vld [vmem:[%s15 + $0xac] sm:$0xf]
  %v5495 = vld [vmem:[%s15 + $0xb0] sm:$0xf]
  %v5496 = vld [vmem:[%s15 + $0xb4] sm:$0xf]
  %v5497 = vld [vmem:[%s15 + $0xb8] sm:$0xf]
  %v5498 = vld [vmem:[%s15 + $0xbc] sm:$0xf]
  %v5499 = vld [vmem:[%s15 + $0xc0] sm:$0xf]
  %v5500 = vld [vmem:[%s15 + $0xc4] sm:$0xf]
  %v5501 = vld [vmem:[%s15 + $0xc8] sm:$0xf]
  %v5502 = vld [vmem:[%s15 + $0xcc] sm:$0xf]
  %v5503 = vld [vmem:[%s15 + $0xd0] sm:$0xf]
  %v5504 = vld [vmem:[%s15 + $0xd4] sm:$0xf]
  %v5505 = vld [vmem:[%s15 + $0xd8] sm:$0xf]
  %v5506 = vld [vmem:[%s15 + $0xdc] sm:$0xf]
  %v5507 = vld [vmem:[%s15 + $0xe0] sm:$0xf]
  %v5508 = vld [vmem:[%s15 + $0xe4] sm:$0xf]
  %v5509 = vld [vmem:[%s15 + $0xe8] sm:$0xf]
  %v5510 = vld [vmem:[%s15 + $0xec] sm:$0xf]
  %v5511 = vld [vmem:[%s15 + $0xf0] sm:$0xf]
  %v5512 = vld [vmem:[%s15 + $0xf4] sm:$0xf]
  %v5513 = vld [vmem:[%s15 + $0xf8] sm:$0xf]
  %v5514 = vld [vmem:[%s15 + $0xfc] sm:$0xf]
  %v5515 = vld [vmem:[%s16] sm:$0x1]
  %v5517 = vlaneseq
  %v5518 = vshrl.u32 %v5517, 7
  %v5519 = vsub.s32 0, %v5518
  %v5520 = vrot.slane %v5515, %v5519
  %v5586 = vunpack.c.l.b16 %v5451
  %v5587 = vunpack.c.l.b16 %v5452
  %v5588 = vunpack.c.l.b16 %v5453
  %v5589 = vunpack.c.l.b16 %v5454
  %v5590 = vunpack.c.l.b16 %v5455
  %v5591 = vunpack.c.l.b16 %v5456
  %v5592 = vunpack.c.l.b16 %v5457
  %v5593 = vunpack.c.l.b16 %v5458
  %v5594 = vunpack.c.l.b16 %v5459
  %v5595 = vunpack.c.l.b16 %v5460
  %v5596 = vunpack.c.l.b16 %v5461
  %v5597 = vunpack.c.l.b16 %v5462
  %v5598 = vunpack.c.l.b16 %v5463
  %v5599 = vunpack.c.l.b16 %v5464
  %v5600 = vunpack.c.l.b16 %v5465
  %v5601 = vunpack.c.l.b16 %v5466
  %v5602 = vunpack.c.l.b16 %v5467
  %v5603 = vunpack.c.l.b16 %v5468
  %v5604 = vunpack.c.l.b16 %v5469
  %v5605 = vunpack.c.l.b16 %v5470
  %v5606 = vunpack.c.l.b16 %v5471
  %v5607 = vunpack.c.l.b16 %v5472
  %v5608 = vunpack.c.l.b16 %v5473
  %v5609 = vunpack.c.l.b16 %v5474
  %v5610 = vunpack.c.l.b16 %v5475
  %v5611 = vunpack.c.l.b16 %v5476
  %v5612 = vunpack.c.l.b16 %v5477
  %v5613 = vunpack.c.l.b16 %v5478
  %v5614 = vunpack.c.l.b16 %v5479
  %v5615 = vunpack.c.l.b16 %v5480
  %v5616 = vunpack.c.l.b16 %v5481
  %v5617 = vunpack.c.l.b16 %v5482
  %v5618 = vunpack.c.l.b16 %v5483
  %v5619 = vunpack.c.l.b16 %v5484
  %v5620 = vunpack.c.l.b16 %v5485
  %v5621 = vunpack.c.l.b16 %v5486
  %v5622 = vunpack.c.l.b16 %v5487
  %v5623 = vunpack.c.l.b16 %v5488
  %v5624 = vunpack.c.l.b16 %v5489
  %v5625 = vunpack.c.l.b16 %v5490
  %v5626 = vunpack.c.l.b16 %v5491
  %v5627 = vunpack.c.l.b16 %v5492
  %v5628 = vunpack.c.l.b16 %v5493
  %v5629 = vunpack.c.l.b16 %v5494
  %v5630 = vunpack.c.l.b16 %v5495
  %v5631 = vunpack.c.l.b16 %v5496
  %v5632 = vunpack.c.l.b16 %v5497
  %v5633 = vunpack.c.l.b16 %v5498
  %v5634 = vunpack.c.l.b16 %v5499
  %v5635 = vunpack.c.l.b16 %v5500
  %v5636 = vunpack.c.l.b16 %v5501
  %v5637 = vunpack.c.l.b16 %v5502
  %v5638 = vunpack.c.l.b16 %v5503
  %v5639 = vunpack.c.l.b16 %v5504
  %v5640 = vunpack.c.l.b16 %v5505
  %v5641 = vunpack.c.l.b16 %v5506
  %v5642 = vunpack.c.l.b16 %v5507
  %v5643 = vunpack.c.l.b16 %v5508
  %v5644 = vunpack.c.l.b16 %v5509
  %v5645 = vunpack.c.l.b16 %v5510
  %v5646 = vunpack.c.l.b16 %v5511
  %v5647 = vunpack.c.l.b16 %v5512
  %v5648 = vunpack.c.l.b16 %v5513
  %v5649 = vunpack.c.l.b16 %v5514
  %v5650 = vpack.c.b16 %v5587, %v5586
  %v5651 = vpack.c.b16 %v5589, %v5588
  %v5652 = vpack.c.b16 %v5591, %v5590
  %v5653 = vpack.c.b16 %v5593, %v5592
  %v5654 = vpack.c.b16 %v5595, %v5594
  %v5655 = vpack.c.b16 %v5597, %v5596
  %v5656 = vpack.c.b16 %v5599, %v5598
  %v5657 = vpack.c.b16 %v5601, %v5600
  %v5658 = vpack.c.b16 %v5603, %v5602
  %v5659 = vpack.c.b16 %v5605, %v5604
  %v5660 = vpack.c.b16 %v5607, %v5606
  %v5661 = vpack.c.b16 %v5609, %v5608
  %v5662 = vpack.c.b16 %v5611, %v5610
  %v5663 = vpack.c.b16 %v5613, %v5612
  %v5664 = vpack.c.b16 %v5615, %v5614
  %v5665 = vpack.c.b16 %v5617, %v5616
  %v5666 = vpack.c.b16 %v5619, %v5618
  %v5667 = vpack.c.b16 %v5621, %v5620
  %v5668 = vpack.c.b16 %v5623, %v5622
  %v5669 = vpack.c.b16 %v5625, %v5624
  %v5670 = vpack.c.b16 %v5627, %v5626
  %v5671 = vpack.c.b16 %v5629, %v5628
  %v5672 = vpack.c.b16 %v5631, %v5630
  %v5673 = vpack.c.b16 %v5633, %v5632
  %v5674 = vpack.c.b16 %v5635, %v5634
  %v5675 = vpack.c.b16 %v5637, %v5636
  %v5676 = vpack.c.b16 %v5639, %v5638
  %v5677 = vpack.c.b16 %v5641, %v5640
  %v5678 = vpack.c.b16 %v5643, %v5642
  %v5679 = vpack.c.b16 %v5645, %v5644
  %v5680 = vpack.c.b16 %v5647, %v5646
  %v5681 = vpack.c.b16 %v5649, %v5648
  %5714 = vmatprep.subr.bf16.mxu0 0
  %5715 = vmatpush1.bf16.msra.mxu0 %v5650
  %5716 = vmatprep.subr.bf16.mxu0 0
  %5717 = vmatpush1.bf16.msra.mxu0 %v5651
  %5718 = vmatprep.subr.bf16.mxu0 0
  %5719 = vmatpush1.bf16.msra.mxu0 %v5652
  %5720 = vmatprep.subr.bf16.mxu0 0
  %5721 = vmatpush1.bf16.msra.mxu0 %v5653
  %5722 = vmatprep.subr.bf16.mxu0 0
  %5723 = vmatpush1.bf16.msra.mxu0 %v5654
  %5724 = vmatprep.subr.bf16.mxu0 0
  %5725 = vmatpush1.bf16.msra.mxu0 %v5655
  %5726 = vmatprep.subr.bf16.mxu0 0
  %5727 = vmatpush1.bf16.msra.mxu0 %v5656
  %5728 = vmatprep.subr.bf16.mxu0 0
  %5729 = vmatpush1.bf16.msra.mxu0 %v5657
  %5730 = vmatprep.subr.bf16.mxu0 0
  %5731 = vmatpush1.bf16.msra.mxu0 %v5658
  %5732 = vmatprep.subr.bf16.mxu0 0
  %5733 = vmatpush1.bf16.msra.mxu0 %v5659
  %5734 = vmatprep.subr.bf16.mxu0 0
  %5735 = vmatpush1.bf16.msra.mxu0 %v5660
  %5736 = vmatprep.subr.bf16.mxu0 0
  %5737 = vmatpush1.bf16.msra.mxu0 %v5661
  %5738 = vmatprep.subr.bf16.mxu0 0
  %5739 = vmatpush1.bf16.msra.mxu0 %v5662
  %5740 = vmatprep.subr.bf16.mxu0 0
  %5741 = vmatpush1.bf16.msra.mxu0 %v5663
  %5742 = vmatprep.subr.bf16.mxu0 0
  %5743 = vmatpush1.bf16.msra.mxu0 %v5664
  %5744 = vmatprep.subr.bf16.mxu0 0
  %5745 = vmatpush1.bf16.msra.mxu0 %v5665
  %5746 = vmatprep.mubr.bf16.mxu0 %v5448
  %5747 = vmatmul.mubr.bf16.gmra.mrb[0].mxu0 %v5447
  %v5748 = vpop.f32.mrb[0].mxu0
  %v5749 = vadd.f32 %v5520, %v5748
  %v5750 = vpop.f32.mrb[0].mxu0
  %v5751 = vpop.f32.mrb[0].mxu0
  %v5752 = vpop.f32.mrb[0].mxu0
  %5753 = vdwg.mxu0
  %5754 = vmatprep.subr.bf16.mxu0 0
  %5755 = vmatpush1.bf16.msra.mxu0 %v5666
  %5756 = vmatprep.subr.bf16.mxu0 0
  %5757 = vmatpush1.bf16.msra.mxu0 %v5667
  %5758 = vmatprep.subr.bf16.mxu0 0
  %5759 = vmatpush1.bf16.msra.mxu0 %v5668
  %5760 = vmatprep.subr.bf16.mxu0 0
  %5761 = vmatpush1.bf16.msra.mxu0 %v5669
  %5762 = vmatprep.subr.bf16.mxu0 0
  %5763 = vmatpush1.bf16.msra.mxu0 %v5670
  %5764 = vmatprep.subr.bf16.mxu0 0
  %5765 = vmatpush1.bf16.msra.mxu0 %v5671
  %5766 = vmatprep.subr.bf16.mxu0 0
  %5767 = vmatpush1.bf16.msra.mxu0 %v5672
  %5768 = vmatprep.subr.bf16.mxu0 0
  %5769 = vmatpush1.bf16.msra.mxu0 %v5673
  %5770 = vmatprep.subr.bf16.mxu0 0
  %5771 = vmatpush1.bf16.msra.mxu0 %v5674
  %5772 = vmatprep.subr.bf16.mxu0 0
  %5773 = vmatpush1.bf16.msra.mxu0 %v5675
  %5774 = vmatprep.subr.bf16.mxu0 0
  %5775 = vmatpush1.bf16.msra.mxu0 %v5676
  %5776 = vmatprep.subr.bf16.mxu0 0
  %5777 = vmatpush1.bf16.msra.mxu0 %v5677
  %5778 = vmatprep.subr.bf16.mxu0 0
  %5779 = vmatpush1.bf16.msra.mxu0 %v5678
  %5780 = vmatprep.subr.bf16.mxu0 0
  %5781 = vmatpush1.bf16.msra.mxu0 %v5679
  %5782 = vmatprep.subr.bf16.mxu0 0
  %5783 = vmatpush1.bf16.msra.mxu0 %v5680
  %5784 = vmatprep.subr.bf16.mxu0 0
  %5785 = vmatpush1.bf16.msra.mxu0 %v5681
  %5786 = vmatprep.mubr.bf16.mxu0 %v5450
  %5787 = vmatmul.mubr.bf16.gmra.mrb[0].mxu0 %v5449
  %v5788 = vpop.f32.mrb[0].mxu0
  %v5789 = vadd.f32 %v5749, %v5788
  %v5790 = vpop.f32.mrb[0].mxu0
  %v5791 = vpop.f32.mrb[0].mxu0
  %v5792 = vpop.f32.mrb[0].mxu0
  %5793 = vdwg.mxu0
  %v5794 = vlaneseq
  %v5795 = vand.u32 %v5794, 127
  %vm5796 = vcmp.lt.s32.totalorder %v5795, 3
  %v5797 = vsel %vm5796, %v5789, 0.0
  %vm5798 = vcmask 31744
  %v5799 = vsel %vm5798, %v5797, 0.0
  %5800 = vadd.xlane.f32.xlu0 %v5799
  %v5801 = vpop.xlane.xlu0 %5800
  %vm5802 = vcmp.eq.s32.totalorder %v5795, 3
  %v5803 = vmax.f32 %v5801, 0.0
  %v5804 = vmin.f32 %v5803, 1.0
  %v5805 = vsub.f32 1.0, %v5804
  %v5806 = vsel %vm5802, %v5805, %v5789
  %5807 = vst.msk [vmem:[%s17] sm:$0xff] %vm5798, %v5806
  // Predicated region
  $region70: #{sarcasm_forward.1} parent=0 // pred_check
    _
  $region71: #{sarcasm_forward.1} parent=0 // pred_check_branch
    %5809 = sbr.rel (0) target = $region73
  $region72: #{sarcasm_forward.1} parent=0 // pred_region
    _
  $region73: #{sarcasm_forward.1} parent=0 // pred_fallthru
    _
  // Predicated region
  $region74: #{sarcasm_forward.1} parent=0 // pred_check
    _
  $region75: #{sarcasm_forward.1} parent=0 // pred_check_branch
    %5811 = sbr.rel (0) target = $region77
  $region76: #{sarcasm_forward.1} parent=0 // pred_region
    _
  $region77: #{sarcasm_forward.1} parent=0 // pred_fallthru
    _

</llo_original>
